<compile_context>
chip_gen: v6e
topology: v6e:2x2x1
jax: 0.10.0
libtpu: 0.0.40
codegen_flags: <defaults>
</compile_context>

<pallas_src>
import functools

import jax
import jax.numpy as jnp
from jax.experimental import pallas as pl
from jax.experimental.pallas import tpu as pltpu


def _round_up(n, m):
    return ((n + m - 1) // m) * m


def _pick_channel_tile(c, cap=64):
    """Largest multiple-of-8 divisor of c (<= cap); else the full c."""
    if c % 8 != 0:
        return c
    best = 8
    for t in range(8, min(c, cap) + 1, 8):
        if c % t == 0:
            best = t
    return best


# ---------------------------------------------------------------------------
# Shared depthwise 7x7 stencil on a lane-dense (C, Np) tile.
# Shifts are lane rotations (XLU) + border masks; no padded copies, no
# strided 2-D window slices.
# ---------------------------------------------------------------------------
def _dw_stencil(x, w_ref, row, col, acc, *, ksize, H, W):
    # x      : (C, Np) f32, flattened (h*W + w) spatial layout
    # w_ref  : (C, K*K) per-channel taps, tap index = i*K + j
    # row/col: (1, Np) i32 spatial coordinate of each lane
    # acc    : (C, Np) f32 accumulator seed (folded BN shift / conv bias)
    _, Np = x.shape
    P = ksize // 2
    for i in range(ksize):
        di = i - P
        rmask = (row >= -di) & (row < H - di)
        for j in range(ksize):
            dj = j - P
            cmask = (col >= -dj) & (col < W - dj)
            off = di * W + dj
            shifted = x if off == 0 else pltpu.roll(x, (-off) % Np, axis=1)
            t = i * ksize + j
            tap = jnp.where(rmask & cmask, shifted, 0.0)
            acc = acc + tap * w_ref[:, t:t + 1].astype(jnp.float32)
    return acc


# ---------------------------------------------------------------------------
# K1 (fused): dwconv7x7 + BN1 + (f1|f2 stacked) + ReLU6*gate + g + BNg.
# ---------------------------------------------------------------------------
def _dw_bn_star_kernel(rc_ref, x_ref, w1_ref, t1_ref, w12_ref, b12_ref,
                       wg_ref, tg_ref, u_ref, *, ksize, H, W):
    _, C, Np = u_ref.shape
    x = x_ref[0].astype(jnp.float32)                       # (C, Np) lane-dense
    row = rc_ref[0:1, :]
    col = rc_ref[1:2, :]

    # Depthwise 7x7; BN1 scale folded into the taps, shift seeds the acc.
    y0 = jnp.broadcast_to(t1_ref[...].astype(jnp.float32), (C, Np))
    y = _dw_stencil(x, w1_ref, row, col, y0, ksize=ksize, H=H, W=W)

    # f1 & f2 as ONE stacked MXU matmul, then the "star" gating.
    a = (jnp.dot(w12_ref[...].astype(jnp.float32), y,
                 preferred_element_type=jnp.float32)
         + b12_ref[...].astype(jnp.float32))
    chp = w12_ref.shape[0] // 2                            # static
    z = jnp.clip(a[:chp], 0.0, 6.0) * a[chp:]              # ReLU6(x1) * x2

    # g (BNg scale folded into the weight) + BNg shift.
    u = (jnp.dot(wg_ref[...].astype(jnp.float32), z,
                 preferred_element_type=jnp.float32)
         + tg_ref[...].astype(jnp.float32))
    u_ref[...] = u[None].astype(u_ref.dtype)


def fused_dwconv_bn_star(x_flat, rc, w1f, t1, w12, b12, wgp, tg, *, H, W, K):
    B, C, Np = x_flat.shape
    ch2 = w12.shape[0]
    chp = ch2 // 2
    kk = K * K
    return pl.pallas_call(
        functools.partial(_dw_bn_star_kernel, ksize=K, H=H, W=W),
        out_shape=jax.ShapeDtypeStruct((B, C, Np), x_flat.dtype),
        grid=(B,),
        in_specs=[
            pl.BlockSpec((2, Np), lambda b: (0, 0)),          # row/col idx
            pl.BlockSpec((1, C, Np), lambda b: (b, 0, 0)),    # x (lane-dense)
            pl.BlockSpec((C, kk), lambda b: (0, 0)),          # dw1 taps (BN folded)
            pl.BlockSpec((C, 1), lambda b: (0, 0)),           # BN1 shift
            pl.BlockSpec((ch2, C), lambda b: (0, 0)),         # stacked f1/f2 W
            pl.BlockSpec((ch2, 1), lambda b: (0, 0)),         # stacked f1/f2 b
            pl.BlockSpec((C, chp), lambda b: (0, 0)),         # g W (BN folded)
            pl.BlockSpec((C, 1), lambda b: (0, 0)),           # BNg shift
        ],
        out_specs=pl.BlockSpec((1, C, Np), lambda b: (b, 0, 0)),
        compiler_params=pltpu.CompilerParams(dimension_semantics=("parallel",)),
    )(rc, x_flat, w1f, t1, w12, b12, wgp, tg)


# ---------------------------------------------------------------------------
# K3: dwconv2 7x7 + bias, fused DropPath scale + residual add (channel-tiled).
# ---------------------------------------------------------------------------
def _dw_droppath_res_kernel(scale_ref, rc_ref, u_ref, w_ref, b_ref, res_ref,
                            o_ref, *, ksize, H, W):
    _, tc, Np = o_ref.shape
    s = scale_ref[pl.program_id(0)]                        # per-sample scale (f32)
    u = u_ref[0].astype(jnp.float32)
    row = rc_ref[0:1, :]
    col = rc_ref[1:2, :]
    acc0 = jnp.broadcast_to(b_ref[...].astype(jnp.float32), (tc, Np))
    v = _dw_stencil(u, w_ref, row, col, acc0, ksize=ksize, H=H, W=W)
    o_ref[...] = (res_ref[0].astype(jnp.float32) + s * v)[None].astype(o_ref.dtype)


def dwconv2_droppath_residual(u_flat, rc, w2, b2, res_flat, dp_scale, *, H, W, K):
    B, C, Np = res_flat.shape
    kk = K * K
    tc = _pick_channel_tile(C)
    return pl.pallas_call(
        functools.partial(_dw_droppath_res_kernel, ksize=K, H=H, W=W),
        out_shape=jax.ShapeDtypeStruct((B, C, Np), res_flat.dtype),
        grid_spec=pltpu.PrefetchScalarGridSpec(
            num_scalar_prefetch=1,
            grid=(B, C // tc),
            in_specs=[
                pl.BlockSpec((2, Np), lambda b, c, sc: (0, 0)),
                pl.BlockSpec((1, tc, Np), lambda b, c, sc: (b, c, 0)),
                pl.BlockSpec((tc, kk), lambda b, c, sc: (c, 0)),
                pl.BlockSpec((tc, 1), lambda b, c, sc: (c, 0)),
                pl.BlockSpec((1, tc, Np), lambda b, c, sc: (b, c, 0)),
            ],
            out_specs=pl.BlockSpec((1, tc, Np), lambda b, c, sc: (b, c, 0)),
        ),
        compiler_params=pltpu.CompilerParams(
            dimension_semantics=("parallel", "parallel")),
    )(dp_scale.astype(jnp.float32), rc, u_flat, w2, b2, res_flat)


# ---------------------------------------------------------------------------
# Wrapper: full Star_Block forward.
# ---------------------------------------------------------------------------
def droppath_scale(key, batch, drop_prob, training):
    """Per-sample scale = floor(keep_prob + U[0,1)) / keep_prob (float32)."""
    if drop_prob == 0.0 or not training:
        return jnp.ones((batch,), jnp.float32)
    keep_prob = 1.0 - drop_prob
    u = jax.random.uniform(key, (batch,), dtype=jnp.float32)
    return jnp.floor(keep_prob + u) / keep_prob


def star_block_forward(x, p, dp_scale, eps=1e-5):
    B, C, H, W = x.shape
    K = p["dw1_w"].shape[-1]
    kk = K * K
    Ch = p["f1_w"].shape[0]
    f32 = jnp.float32

    # Fold BatchNorm (running stats) into conv weights; keep only the shifts.
    s1 = p["bn1_gamma"] / jnp.sqrt(p["bn1_var"] + eps)
    t1 = p["bn1_beta"] - p["bn1_mean"] * s1
    sg = p["bng_gamma"] / jnp.sqrt(p["bng_var"] + eps)
    tg = p["bng_beta"] - p["bng_mean"] * sg

    w1f = (p["dw1_w"].reshape(C, kk) * s1[:, None]).astype(f32)   # BN1 folded taps
    wgf = (p["g_w"] * sg[:, None]).astype(f32)                    # BNg folded g

    # Stack f1/f2 (rows padded to a sublane multiple so slices stay aligned).
    chp = max(8, _round_up(Ch, 8))
    w12 = jnp.zeros((2 * chp, C), f32)
    w12 = w12.at[:Ch].set(p["f1_w"]).at[chp:chp + Ch].set(p["f2_w"])
    b12 = jnp.zeros((2 * chp, 1), f32)
    b12 = b12.at[:Ch, 0].set(p["f1_b"]).at[chp:chp + Ch, 0].set(p["f2_b"])
    wgp = jnp.zeros((C, chp), f32).at[:, :Ch].set(wgf)

    # Lane-dense flattened spatial layout (free reshape), padded to 128 lanes.
    N = H * W
    Np = _round_up(N, 128)
    x_flat = x.reshape(B, C, N)
    if Np != N:
        x_flat = jnp.pad(x_flat, ((0, 0), (0, 0), (0, Np - N)))
    n = jnp.arange(Np, dtype=jnp.int32)
    rc = jnp.stack([n // W, n % W])                               # (2, Np) i32

    u_flat = fused_dwconv_bn_star(
        x_flat, rc, w1f, t1.reshape(C, 1).astype(f32), w12, b12, wgp,
        tg.reshape(C, 1).astype(f32), H=H, W=W, K=K)
    out_flat = dwconv2_droppath_residual(
        u_flat, rc, p["dw2_w"].reshape(C, kk).astype(f32),
        p["dw2_b"].reshape(C, 1).astype(f32), x_flat, dp_scale, H=H, W=W, K=K)
    return out_flat[..., :N].reshape(B, C, H, W)


# ---------------------------------------------------------------------------
# Pure-JAX reference (independent check).
# ---------------------------------------------------------------------------
def ref_star_block(x, p, dp_scale, eps=1e-5):
    C = x.shape[1]
    hi = jax.lax.Precision.HIGHEST

    def dw(v, w):
        P = w.shape[-1] // 2
        return jax.lax.conv_general_dilated(
            v, w[:, None, :, :], (1, 1), ((P, P), (P, P)),
            dimension_numbers=("NCHW", "OIHW", "NCHW"),
            feature_group_count=C, precision=hi)

    def bn(v, g, b, m, var):
        s = g / jnp.sqrt(var + eps)
        return v * s[None, :, None, None] + (b - m * s)[None, :, None, None]

    def pw(w, v):
        return jnp.einsum("oc,bchw->bohw", w, v, precision=hi)

    y = bn(dw(x, p["dw1_w"]), p["bn1_gamma"], p["bn1_beta"],
           p["bn1_mean"], p["bn1_var"])
    x1 = pw(p["f1_w"], y) + p["f1_b"][None, :, None, None]
    x2 = pw(p["f2_w"], y) + p["f2_b"][None, :, None, None]
    z = jnp.clip(x1, 0.0, 6.0) * x2
    u = bn(pw(p["g_w"], z), p["bng_gamma"], p["bng_beta"],
           p["bng_mean"], p["bng_var"])
    v = dw(u, p["dw2_w"]) + p["dw2_b"][None, :, None, None]
    return x + dp_scale[:, None, None, None] * v


if __name__ == "__main__":
    key = jax.random.PRNGKey(0)
    ks = jax.random.split(key, 20)

    B, dim, H, W = 2, 4, 16, 16
    mlp_ratio = 3
    hidden = mlp_ratio * dim
    drop_prob = 0.25

    x = jax.random.normal(ks[0], (B, dim, H, W), jnp.float32)

    params = {
        "dw1_w": 0.1 * jax.random.normal(ks[1], (dim, 7, 7), jnp.float32),
        "bn1_gamma": 1.0 + 0.1 * jax.random.normal(ks[2], (dim,), jnp.float32),
        "bn1_beta": 0.1 * jax.random.normal(ks[3], (dim,), jnp.float32),
        "bn1_mean": 0.1 * jax.random.normal(ks[4], (dim,), jnp.float32),
        "bn1_var": 0.5 + jnp.abs(jax.random.normal(ks[5], (dim,), jnp.float32)),
        "f1_w": 0.2 * jax.random.normal(ks[6], (hidden, dim), jnp.float32),
        "f1_b": 0.1 * jax.random.normal(ks[7], (hidden,), jnp.float32),
        "f2_w": 0.2 * jax.random.normal(ks[8], (hidden, dim), jnp.float32),
        "f2_b": 0.1 * jax.random.normal(ks[9], (hidden,), jnp.float32),
        "g_w": 0.2 * jax.random.normal(ks[10], (dim, hidden), jnp.float32),
        "bng_gamma": 1.0 + 0.1 * jax.random.normal(ks[11], (dim,), jnp.float32),
        "bng_beta": 0.1 * jax.random.normal(ks[12], (dim,), jnp.float32),
        "bng_mean": 0.1 * jax.random.normal(ks[13], (dim,), jnp.float32),
        "bng_var": 0.5 + jnp.abs(jax.random.normal(ks[14], (dim,), jnp.float32)),
        "dw2_w": 0.1 * jax.random.normal(ks[15], (dim, 7, 7), jnp.float32),
        "dw2_b": 0.1 * jax.random.normal(ks[16], (dim,), jnp.float32),
    }

    # Training-mode DropPath: per-sample scale fused into K3's epilogue.
    dp_scale = droppath_scale(ks[17], B, drop_prob, training=True)

    out = jax.block_until_ready(jax.jit(star_block_forward)(x, params, dp_scale))
    ref = ref_star_block(x, params, dp_scale)

    assert out.shape == x.shape and out.dtype == x.dtype
    err = float(jnp.max(jnp.abs(out - ref)))
    assert jnp.allclose(out, ref, atol=1e-4, rtol=1e-4), f"mismatch, max abs err={err}"

    print("KERNEL_OK")
</pallas_src>

<mosaic_0001>
module attributes {stable_mosaic.version = 11 : i64} {
  func.func @_dw_droppath_res_kernel(%arg0: i32, %arg1: i32, %arg2: memref<2xf32, #tpu.memory_space<smem>>, %arg3: memref<2x256xi32, #tpu.memory_space<vmem>>, %arg4: memref<1x4x256xf32, #tpu.memory_space<vmem>>, %arg5: memref<4x49xf32, #tpu.memory_space<vmem>>, %arg6: memref<4x1xf32, #tpu.memory_space<vmem>>, %arg7: memref<1x4x256xf32, #tpu.memory_space<vmem>>, %arg8: memref<1x4x256xf32, #tpu.memory_space<vmem>>) attributes {dimension_semantics = [#tpu.dimension_semantics<parallel>, #tpu.dimension_semantics<parallel>], iteration_bounds = array<i64: 2, 1>, scalar_prefetch = 1 : i64, scratch_operands = 0 : i64, tpu.core_type = #tpu.core_type<tc>, window_params = [{pipeline_mode = #tpu.pipeline_mode<synchronous>, transform_indices = @transform_0, window_bounds = array<i64: 2, 256>}, {transform_indices = @transform_1, window_bounds = array<i64: 1, 4, 256>}, {transform_indices = @transform_2, window_bounds = array<i64: 4, 49>}, {transform_indices = @transform_3, window_bounds = array<i64: 4, 1>}, {transform_indices = @transform_4, window_bounds = array<i64: 1, 4, 256>}, {transform_indices = @transform_5, window_bounds = array<i64: 1, 4, 256>}]} {
    %0 = arith.index_cast %arg0 : i32 to index
    %1 = memref.load %arg2[%0] : memref<2xf32, #tpu.memory_space<smem>>
    %c0 = arith.constant 0 : index
    %c0_0 = arith.constant 0 : index
    %c0_1 = arith.constant 0 : index
    %2 = vector.load %arg4[%c0, %c0_0, %c0_1] : memref<1x4x256xf32, #tpu.memory_space<vmem>>, vector<1x4x256xf32>
    %3 = vector.shape_cast %2 : vector<1x4x256xf32> to vector<4x256xf32>
    %c0_2 = arith.constant 0 : index
    %c0_3 = arith.constant 0 : index
    %4 = vector.load %arg3[%c0_2, %c0_3] : memref<2x256xi32, #tpu.memory_space<vmem>>, vector<1x256xi32>
    %c1 = arith.constant 1 : index
    %c0_4 = arith.constant 0 : index
    %5 = vector.load %arg3[%c1, %c0_4] : memref<2x256xi32, #tpu.memory_space<vmem>>, vector<1x256xi32>
    %c0_5 = arith.constant 0 : index
    %c0_6 = arith.constant 0 : index
    %6 = vector.load %arg6[%c0_5, %c0_6] : memref<4x1xf32, #tpu.memory_space<vmem>>, vector<4x1xf32>
    %7 = vector.shape_cast %6 : vector<4x1xf32> to vector<4x1xf32>
    %8 = vector.broadcast %7 : vector<4x1xf32> to vector<4x256xf32>
    %c3_i32 = arith.constant 3 : i32
    %9 = vector.broadcast %c3_i32 : i32 to vector<1x256xi32>
    %10 = arith.cmpi sge, %4, %9 : vector<1x256xi32>
    %c19_i32 = arith.constant 19 : i32
    %11 = vector.broadcast %c19_i32 : i32 to vector<1x256xi32>
    %12 = arith.cmpi slt, %4, %11 : vector<1x256xi32>
    %13 = arith.andi %10, %12 : vector<1x256xi1>
    %c3_i32_7 = arith.constant 3 : i32
    %14 = vector.broadcast %c3_i32_7 : i32 to vector<1x256xi32>
    %15 = arith.cmpi sge, %5, %14 : vector<1x256xi32>
    %c19_i32_8 = arith.constant 19 : i32
    %16 = vector.broadcast %c19_i32_8 : i32 to vector<1x256xi32>
    %17 = arith.cmpi slt, %5, %16 : vector<1x256xi32>
    %18 = arith.andi %15, %17 : vector<1x256xi1>
    %c51_i32 = arith.constant 51 : i32
    %19 = tpu.dynamic_rotate %3 by %c51_i32 dim 1 : vector<4x256xf32>, i32 -> vector<4x256xf32>
    %20 = arith.andi %13, %18 : vector<1x256xi1>
    %cst = arith.constant 0.000000e+00 : f32
    %21 = vector.shape_cast %20 : vector<1x256xi1> to vector<1x256xi1>
    %22 = vector.broadcast %21 : vector<1x256xi1> to vector<4x256xi1>
    %23 = vector.broadcast %cst : f32 to vector<4x256xf32>
    %24 = arith.select %22, %19, %23 : vector<4x256xi1>, vector<4x256xf32>
    %c0_9 = arith.constant 0 : index
    %c0_10 = arith.constant 0 : index
    %25 = vector.load %arg5[%c0_9, %c0_10] : memref<4x49xf32, #tpu.memory_space<vmem>>, vector<4x1xf32>
    %26 = vector.broadcast %25 : vector<4x1xf32> to vector<4x256xf32>
    %27 = arith.mulf %24, %26 : vector<4x256xf32>
    %28 = arith.addf %8, %27 : vector<4x256xf32>
    %c2_i32 = arith.constant 2 : i32
    %29 = vector.broadcast %c2_i32 : i32 to vector<1x256xi32>
    %30 = arith.cmpi sge, %5, %29 : vector<1x256xi32>
    %c18_i32 = arith.constant 18 : i32
    %31 = vector.broadcast %c18_i32 : i32 to vector<1x256xi32>
    %32 = arith.cmpi slt, %5, %31 : vector<1x256xi32>
    %33 = arith.andi %30, %32 : vector<1x256xi1>
    %c50_i32 = arith.constant 50 : i32
    %34 = tpu.dynamic_rotate %3 by %c50_i32 dim 1 : vector<4x256xf32>, i32 -> vector<4x256xf32>
    %35 = arith.andi %13, %33 : vector<1x256xi1>
    %cst_11 = arith.constant 0.000000e+00 : f32
    %36 = vector.shape_cast %35 : vector<1x256xi1> to vector<1x256xi1>
    %37 = vector.broadcast %36 : vector<1x256xi1> to vector<4x256xi1>
    %38 = vector.broadcast %cst_11 : f32 to vector<4x256xf32>
    %39 = arith.select %37, %34, %38 : vector<4x256xi1>, vector<4x256xf32>
    %c0_12 = arith.constant 0 : index
    %c1_13 = arith.constant 1 : index
    %40 = vector.load %arg5[%c0_12, %c1_13] : memref<4x49xf32, #tpu.memory_space<vmem>>, vector<4x1xf32>
    %41 = vector.broadcast %40 : vector<4x1xf32> to vector<4x256xf32>
    %42 = arith.mulf %39, %41 : vector<4x256xf32>
    %43 = arith.addf %28, %42 : vector<4x256xf32>
    %c1_i32 = arith.constant 1 : i32
    %44 = vector.broadcast %c1_i32 : i32 to vector<1x256xi32>
    %45 = arith.cmpi sge, %5, %44 : vector<1x256xi32>
    %c17_i32 = arith.constant 17 : i32
    %46 = vector.broadcast %c17_i32 : i32 to vector<1x256xi32>
    %47 = arith.cmpi slt, %5, %46 : vector<1x256xi32>
    %48 = arith.andi %45, %47 : vector<1x256xi1>
    %c49_i32 = arith.constant 49 : i32
    %49 = tpu.dynamic_rotate %3 by %c49_i32 dim 1 : vector<4x256xf32>, i32 -> vector<4x256xf32>
    %50 = arith.andi %13, %48 : vector<1x256xi1>
    %cst_14 = arith.constant 0.000000e+00 : f32
    %51 = vector.shape_cast %50 : vector<1x256xi1> to vector<1x256xi1>
    %52 = vector.broadcast %51 : vector<1x256xi1> to vector<4x256xi1>
    %53 = vector.broadcast %cst_14 : f32 to vector<4x256xf32>
    %54 = arith.select %52, %49, %53 : vector<4x256xi1>, vector<4x256xf32>
    %c0_15 = arith.constant 0 : index
    %c2 = arith.constant 2 : index
    %55 = vector.load %arg5[%c0_15, %c2] : memref<4x49xf32, #tpu.memory_space<vmem>>, vector<4x1xf32>
    %56 = vector.broadcast %55 : vector<4x1xf32> to vector<4x256xf32>
    %57 = arith.mulf %54, %56 : vector<4x256xf32>
    %58 = arith.addf %43, %57 : vector<4x256xf32>
    %c0_i32 = arith.constant 0 : i32
    %59 = vector.broadcast %c0_i32 : i32 to vector<1x256xi32>
    %60 = arith.cmpi sge, %5, %59 : vector<1x256xi32>
    %c16_i32 = arith.constant 16 : i32
    %61 = vector.broadcast %c16_i32 : i32 to vector<1x256xi32>
    %62 = arith.cmpi slt, %5, %61 : vector<1x256xi32>
    %63 = arith.andi %60, %62 : vector<1x256xi1>
    %c48_i32 = arith.constant 48 : i32
    %64 = tpu.dynamic_rotate %3 by %c48_i32 dim 1 : vector<4x256xf32>, i32 -> vector<4x256xf32>
    %65 = arith.andi %13, %63 : vector<1x256xi1>
    %cst_16 = arith.constant 0.000000e+00 : f32
    %66 = vector.shape_cast %65 : vector<1x256xi1> to vector<1x256xi1>
    %67 = vector.broadcast %66 : vector<1x256xi1> to vector<4x256xi1>
    %68 = vector.broadcast %cst_16 : f32 to vector<4x256xf32>
    %69 = arith.select %67, %64, %68 : vector<4x256xi1>, vector<4x256xf32>
    %c0_17 = arith.constant 0 : index
    %c3 = arith.constant 3 : index
    %70 = vector.load %arg5[%c0_17, %c3] : memref<4x49xf32, #tpu.memory_space<vmem>>, vector<4x1xf32>
    %71 = vector.broadcast %70 : vector<4x1xf32> to vector<4x256xf32>
    %72 = arith.mulf %69, %71 : vector<4x256xf32>
    %73 = arith.addf %58, %72 : vector<4x256xf32>
    %c-1_i32 = arith.constant -1 : i32
    %74 = vector.broadcast %c-1_i32 : i32 to vector<1x256xi32>
    %75 = arith.cmpi sge, %5, %74 : vector<1x256xi32>
    %c15_i32 = arith.constant 15 : i32
    %76 = vector.broadcast %c15_i32 : i32 to vector<1x256xi32>
    %77 = arith.cmpi slt, %5, %76 : vector<1x256xi32>
    %78 = arith.andi %75, %77 : vector<1x256xi1>
    %c47_i32 = arith.constant 47 : i32
    %79 = tpu.dynamic_rotate %3 by %c47_i32 dim 1 : vector<4x256xf32>, i32 -> vector<4x256xf32>
    %80 = arith.andi %13, %78 : vector<1x256xi1>
    %cst_18 = arith.constant 0.000000e+00 : f32
    %81 = vector.shape_cast %80 : vector<1x256xi1> to vector<1x256xi1>
    %82 = vector.broadcast %81 : vector<1x256xi1> to vector<4x256xi1>
    %83 = vector.broadcast %cst_18 : f32 to vector<4x256xf32>
    %84 = arith.select %82, %79, %83 : vector<4x256xi1>, vector<4x256xf32>
    %c0_19 = arith.constant 0 : index
    %c4 = arith.constant 4 : index
    %85 = vector.load %arg5[%c0_19, %c4] : memref<4x49xf32, #tpu.memory_space<vmem>>, vector<4x1xf32>
    %86 = vector.broadcast %85 : vector<4x1xf32> to vector<4x256xf32>
    %87 = arith.mulf %84, %86 : vector<4x256xf32>
    %88 = arith.addf %73, %87 : vector<4x256xf32>
    %c-2_i32 = arith.constant -2 : i32
    %89 = vector.broadcast %c-2_i32 : i32 to vector<1x256xi32>
    %90 = arith.cmpi sge, %5, %89 : vector<1x256xi32>
    %c14_i32 = arith.constant 14 : i32
    %91 = vector.broadcast %c14_i32 : i32 to vector<1x256xi32>
    %92 = arith.cmpi slt, %5, %91 : vector<1x256xi32>
    %93 = arith.andi %90, %92 : vector<1x256xi1>
    %c46_i32 = arith.constant 46 : i32
    %94 = tpu.dynamic_rotate %3 by %c46_i32 dim 1 : vector<4x256xf32>, i32 -> vector<4x256xf32>
    %95 = arith.andi %13, %93 : vector<1x256xi1>
    %cst_20 = arith.constant 0.000000e+00 : f32
    %96 = vector.shape_cast %95 : vector<1x256xi1> to vector<1x256xi1>
    %97 = vector.broadcast %96 : vector<1x256xi1> to vector<4x256xi1>
    %98 = vector.broadcast %cst_20 : f32 to vector<4x256xf32>
    %99 = arith.select %97, %94, %98 : vector<4x256xi1>, vector<4x256xf32>
    %c0_21 = arith.constant 0 : index
    %c5 = arith.constant 5 : index
    %100 = vector.load %arg5[%c0_21, %c5] : memref<4x49xf32, #tpu.memory_space<vmem>>, vector<4x1xf32>
    %101 = vector.broadcast %100 : vector<4x1xf32> to vector<4x256xf32>
    %102 = arith.mulf %99, %101 : vector<4x256xf32>
    %103 = arith.addf %88, %102 : vector<4x256xf32>
    %c-3_i32 = arith.constant -3 : i32
    %104 = vector.broadcast %c-3_i32 : i32 to vector<1x256xi32>
    %105 = arith.cmpi sge, %5, %104 : vector<1x256xi32>
    %c13_i32 = arith.constant 13 : i32
    %106 = vector.broadcast %c13_i32 : i32 to vector<1x256xi32>
    %107 = arith.cmpi slt, %5, %106 : vector<1x256xi32>
    %108 = arith.andi %105, %107 : vector<1x256xi1>
    %c45_i32 = arith.constant 45 : i32
    %109 = tpu.dynamic_rotate %3 by %c45_i32 dim 1 : vector<4x256xf32>, i32 -> vector<4x256xf32>
    %110 = arith.andi %13, %108 : vector<1x256xi1>
    %cst_22 = arith.constant 0.000000e+00 : f32
    %111 = vector.shape_cast %110 : vector<1x256xi1> to vector<1x256xi1>
    %112 = vector.broadcast %111 : vector<1x256xi1> to vector<4x256xi1>
    %113 = vector.broadcast %cst_22 : f32 to vector<4x256xf32>
    %114 = arith.select %112, %109, %113 : vector<4x256xi1>, vector<4x256xf32>
    %c0_23 = arith.constant 0 : index
    %c6 = arith.constant 6 : index
    %115 = vector.load %arg5[%c0_23, %c6] : memref<4x49xf32, #tpu.memory_space<vmem>>, vector<4x1xf32>
    %116 = vector.broadcast %115 : vector<4x1xf32> to vector<4x256xf32>
    %117 = arith.mulf %114, %116 : vector<4x256xf32>
    %118 = arith.addf %103, %117 : vector<4x256xf32>
    %c2_i32_24 = arith.constant 2 : i32
    %119 = vector.broadcast %c2_i32_24 : i32 to vector<1x256xi32>
    %120 = arith.cmpi sge, %4, %119 : vector<1x256xi32>
    %c18_i32_25 = arith.constant 18 : i32
    %121 = vector.broadcast %c18_i32_25 : i32 to vector<1x256xi32>
    %122 = arith.cmpi slt, %4, %121 : vector<1x256xi32>
    %123 = arith.andi %120, %122 : vector<1x256xi1>
    %c3_i32_26 = arith.constant 3 : i32
    %124 = vector.broadcast %c3_i32_26 : i32 to vector<1x256xi32>
    %125 = arith.cmpi sge, %5, %124 : vector<1x256xi32>
    %c19_i32_27 = arith.constant 19 : i32
    %126 = vector.broadcast %c19_i32_27 : i32 to vector<1x256xi32>
    %127 = arith.cmpi slt, %5, %126 : vector<1x256xi32>
    %128 = arith.andi %125, %127 : vector<1x256xi1>
    %c35_i32 = arith.constant 35 : i32
    %129 = tpu.dynamic_rotate %3 by %c35_i32 dim 1 : vector<4x256xf32>, i32 -> vector<4x256xf32>
    %130 = arith.andi %123, %128 : vector<1x256xi1>
    %cst_28 = arith.constant 0.000000e+00 : f32
    %131 = vector.shape_cast %130 : vector<1x256xi1> to vector<1x256xi1>
    %132 = vector.broadcast %131 : vector<1x256xi1> to vector<4x256xi1>
    %133 = vector.broadcast %cst_28 : f32 to vector<4x256xf32>
    %134 = arith.select %132, %129, %133 : vector<4x256xi1>, vector<4x256xf32>
    %c0_29 = arith.constant 0 : index
    %c7 = arith.constant 7 : index
    %135 = vector.load %arg5[%c0_29, %c7] : memref<4x49xf32, #tpu.memory_space<vmem>>, vector<4x1xf32>
    %136 = vector.broadcast %135 : vector<4x1xf32> to vector<4x256xf32>
    %137 = arith.mulf %134, %136 : vector<4x256xf32>
    %138 = arith.addf %118, %137 : vector<4x256xf32>
    %c2_i32_30 = arith.constant 2 : i32
    %139 = vector.broadcast %c2_i32_30 : i32 to vector<1x256xi32>
    %140 = arith.cmpi sge, %5, %139 : vector<1x256xi32>
    %c18_i32_31 = arith.constant 18 : i32
    %141 = vector.broadcast %c18_i32_31 : i32 to vector<1x256xi32>
    %142 = arith.cmpi slt, %5, %141 : vector<1x256xi32>
    %143 = arith.andi %140, %142 : vector<1x256xi1>
    %c34_i32 = arith.constant 34 : i32
    %144 = tpu.dynamic_rotate %3 by %c34_i32 dim 1 : vector<4x256xf32>, i32 -> vector<4x256xf32>
    %145 = arith.andi %123, %143 : vector<1x256xi1>
    %cst_32 = arith.constant 0.000000e+00 : f32
    %146 = vector.shape_cast %145 : vector<1x256xi1> to vector<1x256xi1>
    %147 = vector.broadcast %146 : vector<1x256xi1> to vector<4x256xi1>
    %148 = vector.broadcast %cst_32 : f32 to vector<4x256xf32>
    %149 = arith.select %147, %144, %148 : vector<4x256xi1>, vector<4x256xf32>
    %c0_33 = arith.constant 0 : index
    %c8 = arith.constant 8 : index
    %150 = vector.load %arg5[%c0_33, %c8] : memref<4x49xf32, #tpu.memory_space<vmem>>, vector<4x1xf32>
    %151 = vector.broadcast %150 : vector<4x1xf32> to vector<4x256xf32>
    %152 = arith.mulf %149, %151 : vector<4x256xf32>
    %153 = arith.addf %138, %152 : vector<4x256xf32>
    %c1_i32_34 = arith.constant 1 : i32
    %154 = vector.broadcast %c1_i32_34 : i32 to vector<1x256xi32>
    %155 = arith.cmpi sge, %5, %154 : vector<1x256xi32>
    %c17_i32_35 = arith.constant 17 : i32
    %156 = vector.broadcast %c17_i32_35 : i32 to vector<1x256xi32>
    %157 = arith.cmpi slt, %5, %156 : vector<1x256xi32>
    %158 = arith.andi %155, %157 : vector<1x256xi1>
    %c33_i32 = arith.constant 33 : i32
    %159 = tpu.dynamic_rotate %3 by %c33_i32 dim 1 : vector<4x256xf32>, i32 -> vector<4x256xf32>
    %160 = arith.andi %123, %158 : vector<1x256xi1>
    %cst_36 = arith.constant 0.000000e+00 : f32
    %161 = vector.shape_cast %160 : vector<1x256xi1> to vector<1x256xi1>
    %162 = vector.broadcast %161 : vector<1x256xi1> to vector<4x256xi1>
    %163 = vector.broadcast %cst_36 : f32 to vector<4x256xf32>
    %164 = arith.select %162, %159, %163 : vector<4x256xi1>, vector<4x256xf32>
    %c0_37 = arith.constant 0 : index
    %c9 = arith.constant 9 : index
    %165 = vector.load %arg5[%c0_37, %c9] : memref<4x49xf32, #tpu.memory_space<vmem>>, vector<4x1xf32>
    %166 = vector.broadcast %165 : vector<4x1xf32> to vector<4x256xf32>
    %167 = arith.mulf %164, %166 : vector<4x256xf32>
    %168 = arith.addf %153, %167 : vector<4x256xf32>
    %c0_i32_38 = arith.constant 0 : i32
    %169 = vector.broadcast %c0_i32_38 : i32 to vector<1x256xi32>
    %170 = arith.cmpi sge, %5, %169 : vector<1x256xi32>
    %c16_i32_39 = arith.constant 16 : i32
    %171 = vector.broadcast %c16_i32_39 : i32 to vector<1x256xi32>
    %172 = arith.cmpi slt, %5, %171 : vector<1x256xi32>
    %173 = arith.andi %170, %172 : vector<1x256xi1>
    %c32_i32 = arith.constant 32 : i32
    %174 = tpu.dynamic_rotate %3 by %c32_i32 dim 1 : vector<4x256xf32>, i32 -> vector<4x256xf32>
    %175 = arith.andi %123, %173 : vector<1x256xi1>
    %cst_40 = arith.constant 0.000000e+00 : f32
    %176 = vector.shape_cast %175 : vector<1x256xi1> to vector<1x256xi1>
    %177 = vector.broadcast %176 : vector<1x256xi1> to vector<4x256xi1>
    %178 = vector.broadcast %cst_40 : f32 to vector<4x256xf32>
    %179 = arith.select %177, %174, %178 : vector<4x256xi1>, vector<4x256xf32>
    %c0_41 = arith.constant 0 : index
    %c10 = arith.constant 10 : index
    %180 = vector.load %arg5[%c0_41, %c10] : memref<4x49xf32, #tpu.memory_space<vmem>>, vector<4x1xf32>
    %181 = vector.broadcast %180 : vector<4x1xf32> to vector<4x256xf32>
    %182 = arith.mulf %179, %181 : vector<4x256xf32>
    %183 = arith.addf %168, %182 : vector<4x256xf32>
    %c-1_i32_42 = arith.constant -1 : i32
    %184 = vector.broadcast %c-1_i32_42 : i32 to vector<1x256xi32>
    %185 = arith.cmpi sge, %5, %184 : vector<1x256xi32>
    %c15_i32_43 = arith.constant 15 : i32
    %186 = vector.broadcast %c15_i32_43 : i32 to vector<1x256xi32>
    %187 = arith.cmpi slt, %5, %186 : vector<1x256xi32>
    %188 = arith.andi %185, %187 : vector<1x256xi1>
    %c31_i32 = arith.constant 31 : i32
    %189 = tpu.dynamic_rotate %3 by %c31_i32 dim 1 : vector<4x256xf32>, i32 -> vector<4x256xf32>
    %190 = arith.andi %123, %188 : vector<1x256xi1>
    %cst_44 = arith.constant 0.000000e+00 : f32
    %191 = vector.shape_cast %190 : vector<1x256xi1> to vector<1x256xi1>
    %192 = vector.broadcast %191 : vector<1x256xi1> to vector<4x256xi1>
    %193 = vector.broadcast %cst_44 : f32 to vector<4x256xf32>
    %194 = arith.select %192, %189, %193 : vector<4x256xi1>, vector<4x256xf32>
    %c0_45 = arith.constant 0 : index
    %c11 = arith.constant 11 : index
    %195 = vector.load %arg5[%c0_45, %c11] : memref<4x49xf32, #tpu.memory_space<vmem>>, vector<4x1xf32>
    %196 = vector.broadcast %195 : vector<4x1xf32> to vector<4x256xf32>
    %197 = arith.mulf %194, %196 : vector<4x256xf32>
    %198 = arith.addf %183, %197 : vector<4x256xf32>
    %c-2_i32_46 = arith.constant -2 : i32
    %199 = vector.broadcast %c-2_i32_46 : i32 to vector<1x256xi32>
    %200 = arith.cmpi sge, %5, %199 : vector<1x256xi32>
    %c14_i32_47 = arith.constant 14 : i32
    %201 = vector.broadcast %c14_i32_47 : i32 to vector<1x256xi32>
    %202 = arith.cmpi slt, %5, %201 : vector<1x256xi32>
    %203 = arith.andi %200, %202 : vector<1x256xi1>
    %c30_i32 = arith.constant 30 : i32
    %204 = tpu.dynamic_rotate %3 by %c30_i32 dim 1 : vector<4x256xf32>, i32 -> vector<4x256xf32>
    %205 = arith.andi %123, %203 : vector<1x256xi1>
    %cst_48 = arith.constant 0.000000e+00 : f32
    %206 = vector.shape_cast %205 : vector<1x256xi1> to vector<1x256xi1>
    %207 = vector.broadcast %206 : vector<1x256xi1> to vector<4x256xi1>
    %208 = vector.broadcast %cst_48 : f32 to vector<4x256xf32>
    %209 = arith.select %207, %204, %208 : vector<4x256xi1>, vector<4x256xf32>
    %c0_49 = arith.constant 0 : index
    %c12 = arith.constant 12 : index
    %210 = vector.load %arg5[%c0_49, %c12] : memref<4x49xf32, #tpu.memory_space<vmem>>, vector<4x1xf32>
    %211 = vector.broadcast %210 : vector<4x1xf32> to vector<4x256xf32>
    %212 = arith.mulf %209, %211 : vector<4x256xf32>
    %213 = arith.addf %198, %212 : vector<4x256xf32>
    %c-3_i32_50 = arith.constant -3 : i32
    %214 = vector.broadcast %c-3_i32_50 : i32 to vector<1x256xi32>
    %215 = arith.cmpi sge, %5, %214 : vector<1x256xi32>
    %c13_i32_51 = arith.constant 13 : i32
    %216 = vector.broadcast %c13_i32_51 : i32 to vector<1x256xi32>
    %217 = arith.cmpi slt, %5, %216 : vector<1x256xi32>
    %218 = arith.andi %215, %217 : vector<1x256xi1>
    %c29_i32 = arith.constant 29 : i32
    %219 = tpu.dynamic_rotate %3 by %c29_i32 dim 1 : vector<4x256xf32>, i32 -> vector<4x256xf32>
    %220 = arith.andi %123, %218 : vector<1x256xi1>
    %cst_52 = arith.constant 0.000000e+00 : f32
    %221 = vector.shape_cast %220 : vector<1x256xi1> to vector<1x256xi1>
    %222 = vector.broadcast %221 : vector<1x256xi1> to vector<4x256xi1>
    %223 = vector.broadcast %cst_52 : f32 to vector<4x256xf32>
    %224 = arith.select %222, %219, %223 : vector<4x256xi1>, vector<4x256xf32>
    %c0_53 = arith.constant 0 : index
    %c13 = arith.constant 13 : index
    %225 = vector.load %arg5[%c0_53, %c13] : memref<4x49xf32, #tpu.memory_space<vmem>>, vector<4x1xf32>
    %226 = vector.broadcast %225 : vector<4x1xf32> to vector<4x256xf32>
    %227 = arith.mulf %224, %226 : vector<4x256xf32>
    %228 = arith.addf %213, %227 : vector<4x256xf32>
    %c1_i32_54 = arith.constant 1 : i32
    %229 = vector.broadcast %c1_i32_54 : i32 to vector<1x256xi32>
    %230 = arith.cmpi sge, %4, %229 : vector<1x256xi32>
    %c17_i32_55 = arith.constant 17 : i32
    %231 = vector.broadcast %c17_i32_55 : i32 to vector<1x256xi32>
    %232 = arith.cmpi slt, %4, %231 : vector<1x256xi32>
    %233 = arith.andi %230, %232 : vector<1x256xi1>
    %c3_i32_56 = arith.constant 3 : i32
    %234 = vector.broadcast %c3_i32_56 : i32 to vector<1x256xi32>
    %235 = arith.cmpi sge, %5, %234 : vector<1x256xi32>
    %c19_i32_57 = arith.constant 19 : i32
    %236 = vector.broadcast %c19_i32_57 : i32 to vector<1x256xi32>
    %237 = arith.cmpi slt, %5, %236 : vector<1x256xi32>
    %238 = arith.andi %235, %237 : vector<1x256xi1>
    %c19_i32_58 = arith.constant 19 : i32
    %239 = tpu.dynamic_rotate %3 by %c19_i32_58 dim 1 : vector<4x256xf32>, i32 -> vector<4x256xf32>
    %240 = arith.andi %233, %238 : vector<1x256xi1>
    %cst_59 = arith.constant 0.000000e+00 : f32
    %241 = vector.shape_cast %240 : vector<1x256xi1> to vector<1x256xi1>
    %242 = vector.broadcast %241 : vector<1x256xi1> to vector<4x256xi1>
    %243 = vector.broadcast %cst_59 : f32 to vector<4x256xf32>
    %244 = arith.select %242, %239, %243 : vector<4x256xi1>, vector<4x256xf32>
    %c0_60 = arith.constant 0 : index
    %c14 = arith.constant 14 : index
    %245 = vector.load %arg5[%c0_60, %c14] : memref<4x49xf32, #tpu.memory_space<vmem>>, vector<4x1xf32>
    %246 = vector.broadcast %245 : vector<4x1xf32> to vector<4x256xf32>
    %247 = arith.mulf %244, %246 : vector<4x256xf32>
    %248 = arith.addf %228, %247 : vector<4x256xf32>
    %c2_i32_61 = arith.constant 2 : i32
    %249 = vector.broadcast %c2_i32_61 : i32 to vector<1x256xi32>
    %250 = arith.cmpi sge, %5, %249 : vector<1x256xi32>
    %c18_i32_62 = arith.constant 18 : i32
    %251 = vector.broadcast %c18_i32_62 : i32 to vector<1x256xi32>
    %252 = arith.cmpi slt, %5, %251 : vector<1x256xi32>
    %253 = arith.andi %250, %252 : vector<1x256xi1>
    %c18_i32_63 = arith.constant 18 : i32
    %254 = tpu.dynamic_rotate %3 by %c18_i32_63 dim 1 : vector<4x256xf32>, i32 -> vector<4x256xf32>
    %255 = arith.andi %233, %253 : vector<1x256xi1>
    %cst_64 = arith.constant 0.000000e+00 : f32
    %256 = vector.shape_cast %255 : vector<1x256xi1> to vector<1x256xi1>
    %257 = vector.broadcast %256 : vector<1x256xi1> to vector<4x256xi1>
    %258 = vector.broadcast %cst_64 : f32 to vector<4x256xf32>
    %259 = arith.select %257, %254, %258 : vector<4x256xi1>, vector<4x256xf32>
    %c0_65 = arith.constant 0 : index
    %c15 = arith.constant 15 : index
    %260 = vector.load %arg5[%c0_65, %c15] : memref<4x49xf32, #tpu.memory_space<vmem>>, vector<4x1xf32>
    %261 = vector.broadcast %260 : vector<4x1xf32> to vector<4x256xf32>
    %262 = arith.mulf %259, %261 : vector<4x256xf32>
    %263 = arith.addf %248, %262 : vector<4x256xf32>
    %c1_i32_66 = arith.constant 1 : i32
    %264 = vector.broadcast %c1_i32_66 : i32 to vector<1x256xi32>
    %265 = arith.cmpi sge, %5, %264 : vector<1x256xi32>
    %c17_i32_67 = arith.constant 17 : i32
    %266 = vector.broadcast %c17_i32_67 : i32 to vector<1x256xi32>
    %267 = arith.cmpi slt, %5, %266 : vector<1x256xi32>
    %268 = arith.andi %265, %267 : vector<1x256xi1>
    %c17_i32_68 = arith.constant 17 : i32
    %269 = tpu.dynamic_rotate %3 by %c17_i32_68 dim 1 : vector<4x256xf32>, i32 -> vector<4x256xf32>
    %270 = arith.andi %233, %268 : vector<1x256xi1>
    %cst_69 = arith.constant 0.000000e+00 : f32
    %271 = vector.shape_cast %270 : vector<1x256xi1> to vector<1x256xi1>
    %272 = vector.broadcast %271 : vector<1x256xi1> to vector<4x256xi1>
    %273 = vector.broadcast %cst_69 : f32 to vector<4x256xf32>
    %274 = arith.select %272, %269, %273 : vector<4x256xi1>, vector<4x256xf32>
    %c0_70 = arith.constant 0 : index
    %c16 = arith.constant 16 : index
    %275 = vector.load %arg5[%c0_70, %c16] : memref<4x49xf32, #tpu.memory_space<vmem>>, vector<4x1xf32>
    %276 = vector.broadcast %275 : vector<4x1xf32> to vector<4x256xf32>
    %277 = arith.mulf %274, %276 : vector<4x256xf32>
    %278 = arith.addf %263, %277 : vector<4x256xf32>
    %c0_i32_71 = arith.constant 0 : i32
    %279 = vector.broadcast %c0_i32_71 : i32 to vector<1x256xi32>
    %280 = arith.cmpi sge, %5, %279 : vector<1x256xi32>
    %c16_i32_72 = arith.constant 16 : i32
    %281 = vector.broadcast %c16_i32_72 : i32 to vector<1x256xi32>
    %282 = arith.cmpi slt, %5, %281 : vector<1x256xi32>
    %283 = arith.andi %280, %282 : vector<1x256xi1>
    %c16_i32_73 = arith.constant 16 : i32
    %284 = tpu.dynamic_rotate %3 by %c16_i32_73 dim 1 : vector<4x256xf32>, i32 -> vector<4x256xf32>
    %285 = arith.andi %233, %283 : vector<1x256xi1>
    %cst_74 = arith.constant 0.000000e+00 : f32
    %286 = vector.shape_cast %285 : vector<1x256xi1> to vector<1x256xi1>
    %287 = vector.broadcast %286 : vector<1x256xi1> to vector<4x256xi1>
    %288 = vector.broadcast %cst_74 : f32 to vector<4x256xf32>
    %289 = arith.select %287, %284, %288 : vector<4x256xi1>, vector<4x256xf32>
    %c0_75 = arith.constant 0 : index
    %c17 = arith.constant 17 : index
    %290 = vector.load %arg5[%c0_75, %c17] : memref<4x49xf32, #tpu.memory_space<vmem>>, vector<4x1xf32>
    %291 = vector.broadcast %290 : vector<4x1xf32> to vector<4x256xf32>
    %292 = arith.mulf %289, %291 : vector<4x256xf32>
    %293 = arith.addf %278, %292 : vector<4x256xf32>
    %c-1_i32_76 = arith.constant -1 : i32
    %294 = vector.broadcast %c-1_i32_76 : i32 to vector<1x256xi32>
    %295 = arith.cmpi sge, %5, %294 : vector<1x256xi32>
    %c15_i32_77 = arith.constant 15 : i32
    %296 = vector.broadcast %c15_i32_77 : i32 to vector<1x256xi32>
    %297 = arith.cmpi slt, %5, %296 : vector<1x256xi32>
    %298 = arith.andi %295, %297 : vector<1x256xi1>
    %c15_i32_78 = arith.constant 15 : i32
    %299 = tpu.dynamic_rotate %3 by %c15_i32_78 dim 1 : vector<4x256xf32>, i32 -> vector<4x256xf32>
    %300 = arith.andi %233, %298 : vector<1x256xi1>
    %cst_79 = arith.constant 0.000000e+00 : f32
    %301 = vector.shape_cast %300 : vector<1x256xi1> to vector<1x256xi1>
    %302 = vector.broadcast %301 : vector<1x256xi1> to vector<4x256xi1>
    %303 = vector.broadcast %cst_79 : f32 to vector<4x256xf32>
    %304 = arith.select %302, %299, %303 : vector<4x256xi1>, vector<4x256xf32>
    %c0_80 = arith.constant 0 : index
    %c18 = arith.constant 18 : index
    %305 = vector.load %arg5[%c0_80, %c18] : memref<4x49xf32, #tpu.memory_space<vmem>>, vector<4x1xf32>
    %306 = vector.broadcast %305 : vector<4x1xf32> to vector<4x256xf32>
    %307 = arith.mulf %304, %306 : vector<4x256xf32>
    %308 = arith.addf %293, %307 : vector<4x256xf32>
    %c-2_i32_81 = arith.constant -2 : i32
    %309 = vector.broadcast %c-2_i32_81 : i32 to vector<1x256xi32>
    %310 = arith.cmpi sge, %5, %309 : vector<1x256xi32>
    %c14_i32_82 = arith.constant 14 : i32
    %311 = vector.broadcast %c14_i32_82 : i32 to vector<1x256xi32>
    %312 = arith.cmpi slt, %5, %311 : vector<1x256xi32>
    %313 = arith.andi %310, %312 : vector<1x256xi1>
    %c14_i32_83 = arith.constant 14 : i32
    %314 = tpu.dynamic_rotate %3 by %c14_i32_83 dim 1 : vector<4x256xf32>, i32 -> vector<4x256xf32>
    %315 = arith.andi %233, %313 : vector<1x256xi1>
    %cst_84 = arith.constant 0.000000e+00 : f32
    %316 = vector.shape_cast %315 : vector<1x256xi1> to vector<1x256xi1>
    %317 = vector.broadcast %316 : vector<1x256xi1> to vector<4x256xi1>
    %318 = vector.broadcast %cst_84 : f32 to vector<4x256xf32>
    %319 = arith.select %317, %314, %318 : vector<4x256xi1>, vector<4x256xf32>
    %c0_85 = arith.constant 0 : index
    %c19 = arith.constant 19 : index
    %320 = vector.load %arg5[%c0_85, %c19] : memref<4x49xf32, #tpu.memory_space<vmem>>, vector<4x1xf32>
    %321 = vector.broadcast %320 : vector<4x1xf32> to vector<4x256xf32>
    %322 = arith.mulf %319, %321 : vector<4x256xf32>
    %323 = arith.addf %308, %322 : vector<4x256xf32>
    %c-3_i32_86 = arith.constant -3 : i32
    %324 = vector.broadcast %c-3_i32_86 : i32 to vector<1x256xi32>
    %325 = arith.cmpi sge, %5, %324 : vector<1x256xi32>
    %c13_i32_87 = arith.constant 13 : i32
    %326 = vector.broadcast %c13_i32_87 : i32 to vector<1x256xi32>
    %327 = arith.cmpi slt, %5, %326 : vector<1x256xi32>
    %328 = arith.andi %325, %327 : vector<1x256xi1>
    %c13_i32_88 = arith.constant 13 : i32
    %329 = tpu.dynamic_rotate %3 by %c13_i32_88 dim 1 : vector<4x256xf32>, i32 -> vector<4x256xf32>
    %330 = arith.andi %233, %328 : vector<1x256xi1>
    %cst_89 = arith.constant 0.000000e+00 : f32
    %331 = vector.shape_cast %330 : vector<1x256xi1> to vector<1x256xi1>
    %332 = vector.broadcast %331 : vector<1x256xi1> to vector<4x256xi1>
    %333 = vector.broadcast %cst_89 : f32 to vector<4x256xf32>
    %334 = arith.select %332, %329, %333 : vector<4x256xi1>, vector<4x256xf32>
    %c0_90 = arith.constant 0 : index
    %c20 = arith.constant 20 : index
    %335 = vector.load %arg5[%c0_90, %c20] : memref<4x49xf32, #tpu.memory_space<vmem>>, vector<4x1xf32>
    %336 = vector.broadcast %335 : vector<4x1xf32> to vector<4x256xf32>
    %337 = arith.mulf %334, %336 : vector<4x256xf32>
    %338 = arith.addf %323, %337 : vector<4x256xf32>
    %c0_i32_91 = arith.constant 0 : i32
    %339 = vector.broadcast %c0_i32_91 : i32 to vector<1x256xi32>
    %340 = arith.cmpi sge, %4, %339 : vector<1x256xi32>
    %c16_i32_92 = arith.constant 16 : i32
    %341 = vector.broadcast %c16_i32_92 : i32 to vector<1x256xi32>
    %342 = arith.cmpi slt, %4, %341 : vector<1x256xi32>
    %343 = arith.andi %340, %342 : vector<1x256xi1>
    %c3_i32_93 = arith.constant 3 : i32
    %344 = vector.broadcast %c3_i32_93 : i32 to vector<1x256xi32>
    %345 = arith.cmpi sge, %5, %344 : vector<1x256xi32>
    %c19_i32_94 = arith.constant 19 : i32
    %346 = vector.broadcast %c19_i32_94 : i32 to vector<1x256xi32>
    %347 = arith.cmpi slt, %5, %346 : vector<1x256xi32>
    %348 = arith.andi %345, %347 : vector<1x256xi1>
    %c3_i32_95 = arith.constant 3 : i32
    %349 = tpu.dynamic_rotate %3 by %c3_i32_95 dim 1 : vector<4x256xf32>, i32 -> vector<4x256xf32>
    %350 = arith.andi %343, %348 : vector<1x256xi1>
    %cst_96 = arith.constant 0.000000e+00 : f32
    %351 = vector.shape_cast %350 : vector<1x256xi1> to vector<1x256xi1>
    %352 = vector.broadcast %351 : vector<1x256xi1> to vector<4x256xi1>
    %353 = vector.broadcast %cst_96 : f32 to vector<4x256xf32>
    %354 = arith.select %352, %349, %353 : vector<4x256xi1>, vector<4x256xf32>
    %c0_97 = arith.constant 0 : index
    %c21 = arith.constant 21 : index
    %355 = vector.load %arg5[%c0_97, %c21] : memref<4x49xf32, #tpu.memory_space<vmem>>, vector<4x1xf32>
    %356 = vector.broadcast %355 : vector<4x1xf32> to vector<4x256xf32>
    %357 = arith.mulf %354, %356 : vector<4x256xf32>
    %358 = arith.addf %338, %357 : vector<4x256xf32>
    %c2_i32_98 = arith.constant 2 : i32
    %359 = vector.broadcast %c2_i32_98 : i32 to vector<1x256xi32>
    %360 = arith.cmpi sge, %5, %359 : vector<1x256xi32>
    %c18_i32_99 = arith.constant 18 : i32
    %361 = vector.broadcast %c18_i32_99 : i32 to vector<1x256xi32>
    %362 = arith.cmpi slt, %5, %361 : vector<1x256xi32>
    %363 = arith.andi %360, %362 : vector<1x256xi1>
    %c2_i32_100 = arith.constant 2 : i32
    %364 = tpu.dynamic_rotate %3 by %c2_i32_100 dim 1 : vector<4x256xf32>, i32 -> vector<4x256xf32>
    %365 = arith.andi %343, %363 : vector<1x256xi1>
    %cst_101 = arith.constant 0.000000e+00 : f32
    %366 = vector.shape_cast %365 : vector<1x256xi1> to vector<1x256xi1>
    %367 = vector.broadcast %366 : vector<1x256xi1> to vector<4x256xi1>
    %368 = vector.broadcast %cst_101 : f32 to vector<4x256xf32>
    %369 = arith.select %367, %364, %368 : vector<4x256xi1>, vector<4x256xf32>
    %c0_102 = arith.constant 0 : index
    %c22 = arith.constant 22 : index
    %370 = vector.load %arg5[%c0_102, %c22] : memref<4x49xf32, #tpu.memory_space<vmem>>, vector<4x1xf32>
    %371 = vector.broadcast %370 : vector<4x1xf32> to vector<4x256xf32>
    %372 = arith.mulf %369, %371 : vector<4x256xf32>
    %373 = arith.addf %358, %372 : vector<4x256xf32>
    %c1_i32_103 = arith.constant 1 : i32
    %374 = vector.broadcast %c1_i32_103 : i32 to vector<1x256xi32>
    %375 = arith.cmpi sge, %5, %374 : vector<1x256xi32>
    %c17_i32_104 = arith.constant 17 : i32
    %376 = vector.broadcast %c17_i32_104 : i32 to vector<1x256xi32>
    %377 = arith.cmpi slt, %5, %376 : vector<1x256xi32>
    %378 = arith.andi %375, %377 : vector<1x256xi1>
    %c1_i32_105 = arith.constant 1 : i32
    %379 = tpu.dynamic_rotate %3 by %c1_i32_105 dim 1 : vector<4x256xf32>, i32 -> vector<4x256xf32>
    %380 = arith.andi %343, %378 : vector<1x256xi1>
    %cst_106 = arith.constant 0.000000e+00 : f32
    %381 = vector.shape_cast %380 : vector<1x256xi1> to vector<1x256xi1>
    %382 = vector.broadcast %381 : vector<1x256xi1> to vector<4x256xi1>
    %383 = vector.broadcast %cst_106 : f32 to vector<4x256xf32>
    %384 = arith.select %382, %379, %383 : vector<4x256xi1>, vector<4x256xf32>
    %c0_107 = arith.constant 0 : index
    %c23 = arith.constant 23 : index
    %385 = vector.load %arg5[%c0_107, %c23] : memref<4x49xf32, #tpu.memory_space<vmem>>, vector<4x1xf32>
    %386 = vector.broadcast %385 : vector<4x1xf32> to vector<4x256xf32>
    %387 = arith.mulf %384, %386 : vector<4x256xf32>
    %388 = arith.addf %373, %387 : vector<4x256xf32>
    %c0_i32_108 = arith.constant 0 : i32
    %389 = vector.broadcast %c0_i32_108 : i32 to vector<1x256xi32>
    %390 = arith.cmpi sge, %5, %389 : vector<1x256xi32>
    %c16_i32_109 = arith.constant 16 : i32
    %391 = vector.broadcast %c16_i32_109 : i32 to vector<1x256xi32>
    %392 = arith.cmpi slt, %5, %391 : vector<1x256xi32>
    %393 = arith.andi %390, %392 : vector<1x256xi1>
    %394 = arith.andi %343, %393 : vector<1x256xi1>
    %cst_110 = arith.constant 0.000000e+00 : f32
    %395 = vector.shape_cast %394 : vector<1x256xi1> to vector<1x256xi1>
    %396 = vector.broadcast %395 : vector<1x256xi1> to vector<4x256xi1>
    %397 = vector.broadcast %cst_110 : f32 to vector<4x256xf32>
    %398 = arith.select %396, %3, %397 : vector<4x256xi1>, vector<4x256xf32>
    %c0_111 = arith.constant 0 : index
    %c24 = arith.constant 24 : index
    %399 = vector.load %arg5[%c0_111, %c24] : memref<4x49xf32, #tpu.memory_space<vmem>>, vector<4x1xf32>
    %400 = vector.broadcast %399 : vector<4x1xf32> to vector<4x256xf32>
    %401 = arith.mulf %398, %400 : vector<4x256xf32>
    %402 = arith.addf %388, %401 : vector<4x256xf32>
    %c-1_i32_112 = arith.constant -1 : i32
    %403 = vector.broadcast %c-1_i32_112 : i32 to vector<1x256xi32>
    %404 = arith.cmpi sge, %5, %403 : vector<1x256xi32>
    %c15_i32_113 = arith.constant 15 : i32
    %405 = vector.broadcast %c15_i32_113 : i32 to vector<1x256xi32>
    %406 = arith.cmpi slt, %5, %405 : vector<1x256xi32>
    %407 = arith.andi %404, %406 : vector<1x256xi1>
    %c255_i32 = arith.constant 255 : i32
    %408 = tpu.dynamic_rotate %3 by %c255_i32 dim 1 : vector<4x256xf32>, i32 -> vector<4x256xf32>
    %409 = arith.andi %343, %407 : vector<1x256xi1>
    %cst_114 = arith.constant 0.000000e+00 : f32
    %410 = vector.shape_cast %409 : vector<1x256xi1> to vector<1x256xi1>
    %411 = vector.broadcast %410 : vector<1x256xi1> to vector<4x256xi1>
    %412 = vector.broadcast %cst_114 : f32 to vector<4x256xf32>
    %413 = arith.select %411, %408, %412 : vector<4x256xi1>, vector<4x256xf32>
    %c0_115 = arith.constant 0 : index
    %c25 = arith.constant 25 : index
    %414 = vector.load %arg5[%c0_115, %c25] : memref<4x49xf32, #tpu.memory_space<vmem>>, vector<4x1xf32>
    %415 = vector.broadcast %414 : vector<4x1xf32> to vector<4x256xf32>
    %416 = arith.mulf %413, %415 : vector<4x256xf32>
    %417 = arith.addf %402, %416 : vector<4x256xf32>
    %c-2_i32_116 = arith.constant -2 : i32
    %418 = vector.broadcast %c-2_i32_116 : i32 to vector<1x256xi32>
    %419 = arith.cmpi sge, %5, %418 : vector<1x256xi32>
    %c14_i32_117 = arith.constant 14 : i32
    %420 = vector.broadcast %c14_i32_117 : i32 to vector<1x256xi32>
    %421 = arith.cmpi slt, %5, %420 : vector<1x256xi32>
    %422 = arith.andi %419, %421 : vector<1x256xi1>
    %c254_i32 = arith.constant 254 : i32
    %423 = tpu.dynamic_rotate %3 by %c254_i32 dim 1 : vector<4x256xf32>, i32 -> vector<4x256xf32>
    %424 = arith.andi %343, %422 : vector<1x256xi1>
    %cst_118 = arith.constant 0.000000e+00 : f32
    %425 = vector.shape_cast %424 : vector<1x256xi1> to vector<1x256xi1>
    %426 = vector.broadcast %425 : vector<1x256xi1> to vector<4x256xi1>
    %427 = vector.broadcast %cst_118 : f32 to vector<4x256xf32>
    %428 = arith.select %426, %423, %427 : vector<4x256xi1>, vector<4x256xf32>
    %c0_119 = arith.constant 0 : index
    %c26 = arith.constant 26 : index
    %429 = vector.load %arg5[%c0_119, %c26] : memref<4x49xf32, #tpu.memory_space<vmem>>, vector<4x1xf32>
    %430 = vector.broadcast %429 : vector<4x1xf32> to vector<4x256xf32>
    %431 = arith.mulf %428, %430 : vector<4x256xf32>
    %432 = arith.addf %417, %431 : vector<4x256xf32>
    %c-3_i32_120 = arith.constant -3 : i32
    %433 = vector.broadcast %c-3_i32_120 : i32 to vector<1x256xi32>
    %434 = arith.cmpi sge, %5, %433 : vector<1x256xi32>
    %c13_i32_121 = arith.constant 13 : i32
    %435 = vector.broadcast %c13_i32_121 : i32 to vector<1x256xi32>
    %436 = arith.cmpi slt, %5, %435 : vector<1x256xi32>
    %437 = arith.andi %434, %436 : vector<1x256xi1>
    %c253_i32 = arith.constant 253 : i32
    %438 = tpu.dynamic_rotate %3 by %c253_i32 dim 1 : vector<4x256xf32>, i32 -> vector<4x256xf32>
    %439 = arith.andi %343, %437 : vector<1x256xi1>
    %cst_122 = arith.constant 0.000000e+00 : f32
    %440 = vector.shape_cast %439 : vector<1x256xi1> to vector<1x256xi1>
    %441 = vector.broadcast %440 : vector<1x256xi1> to vector<4x256xi1>
    %442 = vector.broadcast %cst_122 : f32 to vector<4x256xf32>
    %443 = arith.select %441, %438, %442 : vector<4x256xi1>, vector<4x256xf32>
    %c0_123 = arith.constant 0 : index
    %c27 = arith.constant 27 : index
    %444 = vector.load %arg5[%c0_123, %c27] : memref<4x49xf32, #tpu.memory_space<vmem>>, vector<4x1xf32>
    %445 = vector.broadcast %444 : vector<4x1xf32> to vector<4x256xf32>
    %446 = arith.mulf %443, %445 : vector<4x256xf32>
    %447 = arith.addf %432, %446 : vector<4x256xf32>
    %c-1_i32_124 = arith.constant -1 : i32
    %448 = vector.broadcast %c-1_i32_124 : i32 to vector<1x256xi32>
    %449 = arith.cmpi sge, %4, %448 : vector<1x256xi32>
    %c15_i32_125 = arith.constant 15 : i32
    %450 = vector.broadcast %c15_i32_125 : i32 to vector<1x256xi32>
    %451 = arith.cmpi slt, %4, %450 : vector<1x256xi32>
    %452 = arith.andi %449, %451 : vector<1x256xi1>
    %c3_i32_126 = arith.constant 3 : i32
    %453 = vector.broadcast %c3_i32_126 : i32 to vector<1x256xi32>
    %454 = arith.cmpi sge, %5, %453 : vector<1x256xi32>
    %c19_i32_127 = arith.constant 19 : i32
    %455 = vector.broadcast %c19_i32_127 : i32 to vector<1x256xi32>
    %456 = arith.cmpi slt, %5, %455 : vector<1x256xi32>
    %457 = arith.andi %454, %456 : vector<1x256xi1>
    %c243_i32 = arith.constant 243 : i32
    %458 = tpu.dynamic_rotate %3 by %c243_i32 dim 1 : vector<4x256xf32>, i32 -> vector<4x256xf32>
    %459 = arith.andi %452, %457 : vector<1x256xi1>
    %cst_128 = arith.constant 0.000000e+00 : f32
    %460 = vector.shape_cast %459 : vector<1x256xi1> to vector<1x256xi1>
    %461 = vector.broadcast %460 : vector<1x256xi1> to vector<4x256xi1>
    %462 = vector.broadcast %cst_128 : f32 to vector<4x256xf32>
    %463 = arith.select %461, %458, %462 : vector<4x256xi1>, vector<4x256xf32>
    %c0_129 = arith.constant 0 : index
    %c28 = arith.constant 28 : index
    %464 = vector.load %arg5[%c0_129, %c28] : memref<4x49xf32, #tpu.memory_space<vmem>>, vector<4x1xf32>
    %465 = vector.broadcast %464 : vector<4x1xf32> to vector<4x256xf32>
    %466 = arith.mulf %463, %465 : vector<4x256xf32>
    %467 = arith.addf %447, %466 : vector<4x256xf32>
    %c2_i32_130 = arith.constant 2 : i32
    %468 = vector.broadcast %c2_i32_130 : i32 to vector<1x256xi32>
    %469 = arith.cmpi sge, %5, %468 : vector<1x256xi32>
    %c18_i32_131 = arith.constant 18 : i32
    %470 = vector.broadcast %c18_i32_131 : i32 to vector<1x256xi32>
    %471 = arith.cmpi slt, %5, %470 : vector<1x256xi32>
    %472 = arith.andi %469, %471 : vector<1x256xi1>
    %c242_i32 = arith.constant 242 : i32
    %473 = tpu.dynamic_rotate %3 by %c242_i32 dim 1 : vector<4x256xf32>, i32 -> vector<4x256xf32>
    %474 = arith.andi %452, %472 : vector<1x256xi1>
    %cst_132 = arith.constant 0.000000e+00 : f32
    %475 = vector.shape_cast %474 : vector<1x256xi1> to vector<1x256xi1>
    %476 = vector.broadcast %475 : vector<1x256xi1> to vector<4x256xi1>
    %477 = vector.broadcast %cst_132 : f32 to vector<4x256xf32>
    %478 = arith.select %476, %473, %477 : vector<4x256xi1>, vector<4x256xf32>
    %c0_133 = arith.constant 0 : index
    %c29 = arith.constant 29 : index
    %479 = vector.load %arg5[%c0_133, %c29] : memref<4x49xf32, #tpu.memory_space<vmem>>, vector<4x1xf32>
    %480 = vector.broadcast %479 : vector<4x1xf32> to vector<4x256xf32>
    %481 = arith.mulf %478, %480 : vector<4x256xf32>
    %482 = arith.addf %467, %481 : vector<4x256xf32>
    %c1_i32_134 = arith.constant 1 : i32
    %483 = vector.broadcast %c1_i32_134 : i32 to vector<1x256xi32>
    %484 = arith.cmpi sge, %5, %483 : vector<1x256xi32>
    %c17_i32_135 = arith.constant 17 : i32
    %485 = vector.broadcast %c17_i32_135 : i32 to vector<1x256xi32>
    %486 = arith.cmpi slt, %5, %485 : vector<1x256xi32>
    %487 = arith.andi %484, %486 : vector<1x256xi1>
    %c241_i32 = arith.constant 241 : i32
    %488 = tpu.dynamic_rotate %3 by %c241_i32 dim 1 : vector<4x256xf32>, i32 -> vector<4x256xf32>
    %489 = arith.andi %452, %487 : vector<1x256xi1>
    %cst_136 = arith.constant 0.000000e+00 : f32
    %490 = vector.shape_cast %489 : vector<1x256xi1> to vector<1x256xi1>
    %491 = vector.broadcast %490 : vector<1x256xi1> to vector<4x256xi1>
    %492 = vector.broadcast %cst_136 : f32 to vector<4x256xf32>
    %493 = arith.select %491, %488, %492 : vector<4x256xi1>, vector<4x256xf32>
    %c0_137 = arith.constant 0 : index
    %c30 = arith.constant 30 : index
    %494 = vector.load %arg5[%c0_137, %c30] : memref<4x49xf32, #tpu.memory_space<vmem>>, vector<4x1xf32>
    %495 = vector.broadcast %494 : vector<4x1xf32> to vector<4x256xf32>
    %496 = arith.mulf %493, %495 : vector<4x256xf32>
    %497 = arith.addf %482, %496 : vector<4x256xf32>
    %c0_i32_138 = arith.constant 0 : i32
    %498 = vector.broadcast %c0_i32_138 : i32 to vector<1x256xi32>
    %499 = arith.cmpi sge, %5, %498 : vector<1x256xi32>
    %c16_i32_139 = arith.constant 16 : i32
    %500 = vector.broadcast %c16_i32_139 : i32 to vector<1x256xi32>
    %501 = arith.cmpi slt, %5, %500 : vector<1x256xi32>
    %502 = arith.andi %499, %501 : vector<1x256xi1>
    %c240_i32 = arith.constant 240 : i32
    %503 = tpu.dynamic_rotate %3 by %c240_i32 dim 1 : vector<4x256xf32>, i32 -> vector<4x256xf32>
    %504 = arith.andi %452, %502 : vector<1x256xi1>
    %cst_140 = arith.constant 0.000000e+00 : f32
    %505 = vector.shape_cast %504 : vector<1x256xi1> to vector<1x256xi1>
    %506 = vector.broadcast %505 : vector<1x256xi1> to vector<4x256xi1>
    %507 = vector.broadcast %cst_140 : f32 to vector<4x256xf32>
    %508 = arith.select %506, %503, %507 : vector<4x256xi1>, vector<4x256xf32>
    %c0_141 = arith.constant 0 : index
    %c31 = arith.constant 31 : index
    %509 = vector.load %arg5[%c0_141, %c31] : memref<4x49xf32, #tpu.memory_space<vmem>>, vector<4x1xf32>
    %510 = vector.broadcast %509 : vector<4x1xf32> to vector<4x256xf32>
    %511 = arith.mulf %508, %510 : vector<4x256xf32>
    %512 = arith.addf %497, %511 : vector<4x256xf32>
    %c-1_i32_142 = arith.constant -1 : i32
    %513 = vector.broadcast %c-1_i32_142 : i32 to vector<1x256xi32>
    %514 = arith.cmpi sge, %5, %513 : vector<1x256xi32>
    %c15_i32_143 = arith.constant 15 : i32
    %515 = vector.broadcast %c15_i32_143 : i32 to vector<1x256xi32>
    %516 = arith.cmpi slt, %5, %515 : vector<1x256xi32>
    %517 = arith.andi %514, %516 : vector<1x256xi1>
    %c239_i32 = arith.constant 239 : i32
    %518 = tpu.dynamic_rotate %3 by %c239_i32 dim 1 : vector<4x256xf32>, i32 -> vector<4x256xf32>
    %519 = arith.andi %452, %517 : vector<1x256xi1>
    %cst_144 = arith.constant 0.000000e+00 : f32
    %520 = vector.shape_cast %519 : vector<1x256xi1> to vector<1x256xi1>
    %521 = vector.broadcast %520 : vector<1x256xi1> to vector<4x256xi1>
    %522 = vector.broadcast %cst_144 : f32 to vector<4x256xf32>
    %523 = arith.select %521, %518, %522 : vector<4x256xi1>, vector<4x256xf32>
    %c0_145 = arith.constant 0 : index
    %c32 = arith.constant 32 : index
    %524 = vector.load %arg5[%c0_145, %c32] : memref<4x49xf32, #tpu.memory_space<vmem>>, vector<4x1xf32>
    %525 = vector.broadcast %524 : vector<4x1xf32> to vector<4x256xf32>
    %526 = arith.mulf %523, %525 : vector<4x256xf32>
    %527 = arith.addf %512, %526 : vector<4x256xf32>
    %c-2_i32_146 = arith.constant -2 : i32
    %528 = vector.broadcast %c-2_i32_146 : i32 to vector<1x256xi32>
    %529 = arith.cmpi sge, %5, %528 : vector<1x256xi32>
    %c14_i32_147 = arith.constant 14 : i32
    %530 = vector.broadcast %c14_i32_147 : i32 to vector<1x256xi32>
    %531 = arith.cmpi slt, %5, %530 : vector<1x256xi32>
    %532 = arith.andi %529, %531 : vector<1x256xi1>
    %c238_i32 = arith.constant 238 : i32
    %533 = tpu.dynamic_rotate %3 by %c238_i32 dim 1 : vector<4x256xf32>, i32 -> vector<4x256xf32>
    %534 = arith.andi %452, %532 : vector<1x256xi1>
    %cst_148 = arith.constant 0.000000e+00 : f32
    %535 = vector.shape_cast %534 : vector<1x256xi1> to vector<1x256xi1>
    %536 = vector.broadcast %535 : vector<1x256xi1> to vector<4x256xi1>
    %537 = vector.broadcast %cst_148 : f32 to vector<4x256xf32>
    %538 = arith.select %536, %533, %537 : vector<4x256xi1>, vector<4x256xf32>
    %c0_149 = arith.constant 0 : index
    %c33 = arith.constant 33 : index
    %539 = vector.load %arg5[%c0_149, %c33] : memref<4x49xf32, #tpu.memory_space<vmem>>, vector<4x1xf32>
    %540 = vector.broadcast %539 : vector<4x1xf32> to vector<4x256xf32>
    %541 = arith.mulf %538, %540 : vector<4x256xf32>
    %542 = arith.addf %527, %541 : vector<4x256xf32>
    %c-3_i32_150 = arith.constant -3 : i32
    %543 = vector.broadcast %c-3_i32_150 : i32 to vector<1x256xi32>
    %544 = arith.cmpi sge, %5, %543 : vector<1x256xi32>
    %c13_i32_151 = arith.constant 13 : i32
    %545 = vector.broadcast %c13_i32_151 : i32 to vector<1x256xi32>
    %546 = arith.cmpi slt, %5, %545 : vector<1x256xi32>
    %547 = arith.andi %544, %546 : vector<1x256xi1>
    %c237_i32 = arith.constant 237 : i32
    %548 = tpu.dynamic_rotate %3 by %c237_i32 dim 1 : vector<4x256xf32>, i32 -> vector<4x256xf32>
    %549 = arith.andi %452, %547 : vector<1x256xi1>
    %cst_152 = arith.constant 0.000000e+00 : f32
    %550 = vector.shape_cast %549 : vector<1x256xi1> to vector<1x256xi1>
    %551 = vector.broadcast %550 : vector<1x256xi1> to vector<4x256xi1>
    %552 = vector.broadcast %cst_152 : f32 to vector<4x256xf32>
    %553 = arith.select %551, %548, %552 : vector<4x256xi1>, vector<4x256xf32>
    %c0_153 = arith.constant 0 : index
    %c34 = arith.constant 34 : index
    %554 = vector.load %arg5[%c0_153, %c34] : memref<4x49xf32, #tpu.memory_space<vmem>>, vector<4x1xf32>
    %555 = vector.broadcast %554 : vector<4x1xf32> to vector<4x256xf32>
    %556 = arith.mulf %553, %555 : vector<4x256xf32>
    %557 = arith.addf %542, %556 : vector<4x256xf32>
    %c-2_i32_154 = arith.constant -2 : i32
    %558 = vector.broadcast %c-2_i32_154 : i32 to vector<1x256xi32>
    %559 = arith.cmpi sge, %4, %558 : vector<1x256xi32>
    %c14_i32_155 = arith.constant 14 : i32
    %560 = vector.broadcast %c14_i32_155 : i32 to vector<1x256xi32>
    %561 = arith.cmpi slt, %4, %560 : vector<1x256xi32>
    %562 = arith.andi %559, %561 : vector<1x256xi1>
    %c3_i32_156 = arith.constant 3 : i32
    %563 = vector.broadcast %c3_i32_156 : i32 to vector<1x256xi32>
    %564 = arith.cmpi sge, %5, %563 : vector<1x256xi32>
    %c19_i32_157 = arith.constant 19 : i32
    %565 = vector.broadcast %c19_i32_157 : i32 to vector<1x256xi32>
    %566 = arith.cmpi slt, %5, %565 : vector<1x256xi32>
    %567 = arith.andi %564, %566 : vector<1x256xi1>
    %c227_i32 = arith.constant 227 : i32
    %568 = tpu.dynamic_rotate %3 by %c227_i32 dim 1 : vector<4x256xf32>, i32 -> vector<4x256xf32>
    %569 = arith.andi %562, %567 : vector<1x256xi1>
    %cst_158 = arith.constant 0.000000e+00 : f32
    %570 = vector.shape_cast %569 : vector<1x256xi1> to vector<1x256xi1>
    %571 = vector.broadcast %570 : vector<1x256xi1> to vector<4x256xi1>
    %572 = vector.broadcast %cst_158 : f32 to vector<4x256xf32>
    %573 = arith.select %571, %568, %572 : vector<4x256xi1>, vector<4x256xf32>
    %c0_159 = arith.constant 0 : index
    %c35 = arith.constant 35 : index
    %574 = vector.load %arg5[%c0_159, %c35] : memref<4x49xf32, #tpu.memory_space<vmem>>, vector<4x1xf32>
    %575 = vector.broadcast %574 : vector<4x1xf32> to vector<4x256xf32>
    %576 = arith.mulf %573, %575 : vector<4x256xf32>
    %577 = arith.addf %557, %576 : vector<4x256xf32>
    %c2_i32_160 = arith.constant 2 : i32
    %578 = vector.broadcast %c2_i32_160 : i32 to vector<1x256xi32>
    %579 = arith.cmpi sge, %5, %578 : vector<1x256xi32>
    %c18_i32_161 = arith.constant 18 : i32
    %580 = vector.broadcast %c18_i32_161 : i32 to vector<1x256xi32>
    %581 = arith.cmpi slt, %5, %580 : vector<1x256xi32>
    %582 = arith.andi %579, %581 : vector<1x256xi1>
    %c226_i32 = arith.constant 226 : i32
    %583 = tpu.dynamic_rotate %3 by %c226_i32 dim 1 : vector<4x256xf32>, i32 -> vector<4x256xf32>
    %584 = arith.andi %562, %582 : vector<1x256xi1>
    %cst_162 = arith.constant 0.000000e+00 : f32
    %585 = vector.shape_cast %584 : vector<1x256xi1> to vector<1x256xi1>
    %586 = vector.broadcast %585 : vector<1x256xi1> to vector<4x256xi1>
    %587 = vector.broadcast %cst_162 : f32 to vector<4x256xf32>
    %588 = arith.select %586, %583, %587 : vector<4x256xi1>, vector<4x256xf32>
    %c0_163 = arith.constant 0 : index
    %c36 = arith.constant 36 : index
    %589 = vector.load %arg5[%c0_163, %c36] : memref<4x49xf32, #tpu.memory_space<vmem>>, vector<4x1xf32>
    %590 = vector.broadcast %589 : vector<4x1xf32> to vector<4x256xf32>
    %591 = arith.mulf %588, %590 : vector<4x256xf32>
    %592 = arith.addf %577, %591 : vector<4x256xf32>
    %c1_i32_164 = arith.constant 1 : i32
    %593 = vector.broadcast %c1_i32_164 : i32 to vector<1x256xi32>
    %594 = arith.cmpi sge, %5, %593 : vector<1x256xi32>
    %c17_i32_165 = arith.constant 17 : i32
    %595 = vector.broadcast %c17_i32_165 : i32 to vector<1x256xi32>
    %596 = arith.cmpi slt, %5, %595 : vector<1x256xi32>
    %597 = arith.andi %594, %596 : vector<1x256xi1>
    %c225_i32 = arith.constant 225 : i32
    %598 = tpu.dynamic_rotate %3 by %c225_i32 dim 1 : vector<4x256xf32>, i32 -> vector<4x256xf32>
    %599 = arith.andi %562, %597 : vector<1x256xi1>
    %cst_166 = arith.constant 0.000000e+00 : f32
    %600 = vector.shape_cast %599 : vector<1x256xi1> to vector<1x256xi1>
    %601 = vector.broadcast %600 : vector<1x256xi1> to vector<4x256xi1>
    %602 = vector.broadcast %cst_166 : f32 to vector<4x256xf32>
    %603 = arith.select %601, %598, %602 : vector<4x256xi1>, vector<4x256xf32>
    %c0_167 = arith.constant 0 : index
    %c37 = arith.constant 37 : index
    %604 = vector.load %arg5[%c0_167, %c37] : memref<4x49xf32, #tpu.memory_space<vmem>>, vector<4x1xf32>
    %605 = vector.broadcast %604 : vector<4x1xf32> to vector<4x256xf32>
    %606 = arith.mulf %603, %605 : vector<4x256xf32>
    %607 = arith.addf %592, %606 : vector<4x256xf32>
    %c0_i32_168 = arith.constant 0 : i32
    %608 = vector.broadcast %c0_i32_168 : i32 to vector<1x256xi32>
    %609 = arith.cmpi sge, %5, %608 : vector<1x256xi32>
    %c16_i32_169 = arith.constant 16 : i32
    %610 = vector.broadcast %c16_i32_169 : i32 to vector<1x256xi32>
    %611 = arith.cmpi slt, %5, %610 : vector<1x256xi32>
    %612 = arith.andi %609, %611 : vector<1x256xi1>
    %c224_i32 = arith.constant 224 : i32
    %613 = tpu.dynamic_rotate %3 by %c224_i32 dim 1 : vector<4x256xf32>, i32 -> vector<4x256xf32>
    %614 = arith.andi %562, %612 : vector<1x256xi1>
    %cst_170 = arith.constant 0.000000e+00 : f32
    %615 = vector.shape_cast %614 : vector<1x256xi1> to vector<1x256xi1>
    %616 = vector.broadcast %615 : vector<1x256xi1> to vector<4x256xi1>
    %617 = vector.broadcast %cst_170 : f32 to vector<4x256xf32>
    %618 = arith.select %616, %613, %617 : vector<4x256xi1>, vector<4x256xf32>
    %c0_171 = arith.constant 0 : index
    %c38 = arith.constant 38 : index
    %619 = vector.load %arg5[%c0_171, %c38] : memref<4x49xf32, #tpu.memory_space<vmem>>, vector<4x1xf32>
    %620 = vector.broadcast %619 : vector<4x1xf32> to vector<4x256xf32>
    %621 = arith.mulf %618, %620 : vector<4x256xf32>
    %622 = arith.addf %607, %621 : vector<4x256xf32>
    %c-1_i32_172 = arith.constant -1 : i32
    %623 = vector.broadcast %c-1_i32_172 : i32 to vector<1x256xi32>
    %624 = arith.cmpi sge, %5, %623 : vector<1x256xi32>
    %c15_i32_173 = arith.constant 15 : i32
    %625 = vector.broadcast %c15_i32_173 : i32 to vector<1x256xi32>
    %626 = arith.cmpi slt, %5, %625 : vector<1x256xi32>
    %627 = arith.andi %624, %626 : vector<1x256xi1>
    %c223_i32 = arith.constant 223 : i32
    %628 = tpu.dynamic_rotate %3 by %c223_i32 dim 1 : vector<4x256xf32>, i32 -> vector<4x256xf32>
    %629 = arith.andi %562, %627 : vector<1x256xi1>
    %cst_174 = arith.constant 0.000000e+00 : f32
    %630 = vector.shape_cast %629 : vector<1x256xi1> to vector<1x256xi1>
    %631 = vector.broadcast %630 : vector<1x256xi1> to vector<4x256xi1>
    %632 = vector.broadcast %cst_174 : f32 to vector<4x256xf32>
    %633 = arith.select %631, %628, %632 : vector<4x256xi1>, vector<4x256xf32>
    %c0_175 = arith.constant 0 : index
    %c39 = arith.constant 39 : index
    %634 = vector.load %arg5[%c0_175, %c39] : memref<4x49xf32, #tpu.memory_space<vmem>>, vector<4x1xf32>
    %635 = vector.broadcast %634 : vector<4x1xf32> to vector<4x256xf32>
    %636 = arith.mulf %633, %635 : vector<4x256xf32>
    %637 = arith.addf %622, %636 : vector<4x256xf32>
    %c-2_i32_176 = arith.constant -2 : i32
    %638 = vector.broadcast %c-2_i32_176 : i32 to vector<1x256xi32>
    %639 = arith.cmpi sge, %5, %638 : vector<1x256xi32>
    %c14_i32_177 = arith.constant 14 : i32
    %640 = vector.broadcast %c14_i32_177 : i32 to vector<1x256xi32>
    %641 = arith.cmpi slt, %5, %640 : vector<1x256xi32>
    %642 = arith.andi %639, %641 : vector<1x256xi1>
    %c222_i32 = arith.constant 222 : i32
    %643 = tpu.dynamic_rotate %3 by %c222_i32 dim 1 : vector<4x256xf32>, i32 -> vector<4x256xf32>
    %644 = arith.andi %562, %642 : vector<1x256xi1>
    %cst_178 = arith.constant 0.000000e+00 : f32
    %645 = vector.shape_cast %644 : vector<1x256xi1> to vector<1x256xi1>
    %646 = vector.broadcast %645 : vector<1x256xi1> to vector<4x256xi1>
    %647 = vector.broadcast %cst_178 : f32 to vector<4x256xf32>
    %648 = arith.select %646, %643, %647 : vector<4x256xi1>, vector<4x256xf32>
    %c0_179 = arith.constant 0 : index
    %c40 = arith.constant 40 : index
    %649 = vector.load %arg5[%c0_179, %c40] : memref<4x49xf32, #tpu.memory_space<vmem>>, vector<4x1xf32>
    %650 = vector.broadcast %649 : vector<4x1xf32> to vector<4x256xf32>
    %651 = arith.mulf %648, %650 : vector<4x256xf32>
    %652 = arith.addf %637, %651 : vector<4x256xf32>
    %c-3_i32_180 = arith.constant -3 : i32
    %653 = vector.broadcast %c-3_i32_180 : i32 to vector<1x256xi32>
    %654 = arith.cmpi sge, %5, %653 : vector<1x256xi32>
    %c13_i32_181 = arith.constant 13 : i32
    %655 = vector.broadcast %c13_i32_181 : i32 to vector<1x256xi32>
    %656 = arith.cmpi slt, %5, %655 : vector<1x256xi32>
    %657 = arith.andi %654, %656 : vector<1x256xi1>
    %c221_i32 = arith.constant 221 : i32
    %658 = tpu.dynamic_rotate %3 by %c221_i32 dim 1 : vector<4x256xf32>, i32 -> vector<4x256xf32>
    %659 = arith.andi %562, %657 : vector<1x256xi1>
    %cst_182 = arith.constant 0.000000e+00 : f32
    %660 = vector.shape_cast %659 : vector<1x256xi1> to vector<1x256xi1>
    %661 = vector.broadcast %660 : vector<1x256xi1> to vector<4x256xi1>
    %662 = vector.broadcast %cst_182 : f32 to vector<4x256xf32>
    %663 = arith.select %661, %658, %662 : vector<4x256xi1>, vector<4x256xf32>
    %c0_183 = arith.constant 0 : index
    %c41 = arith.constant 41 : index
    %664 = vector.load %arg5[%c0_183, %c41] : memref<4x49xf32, #tpu.memory_space<vmem>>, vector<4x1xf32>
    %665 = vector.broadcast %664 : vector<4x1xf32> to vector<4x256xf32>
    %666 = arith.mulf %663, %665 : vector<4x256xf32>
    %667 = arith.addf %652, %666 : vector<4x256xf32>
    %c-3_i32_184 = arith.constant -3 : i32
    %668 = vector.broadcast %c-3_i32_184 : i32 to vector<1x256xi32>
    %669 = arith.cmpi sge, %4, %668 : vector<1x256xi32>
    %c13_i32_185 = arith.constant 13 : i32
    %670 = vector.broadcast %c13_i32_185 : i32 to vector<1x256xi32>
    %671 = arith.cmpi slt, %4, %670 : vector<1x256xi32>
    %672 = arith.andi %669, %671 : vector<1x256xi1>
    %c3_i32_186 = arith.constant 3 : i32
    %673 = vector.broadcast %c3_i32_186 : i32 to vector<1x256xi32>
    %674 = arith.cmpi sge, %5, %673 : vector<1x256xi32>
    %c19_i32_187 = arith.constant 19 : i32
    %675 = vector.broadcast %c19_i32_187 : i32 to vector<1x256xi32>
    %676 = arith.cmpi slt, %5, %675 : vector<1x256xi32>
    %677 = arith.andi %674, %676 : vector<1x256xi1>
    %c211_i32 = arith.constant 211 : i32
    %678 = tpu.dynamic_rotate %3 by %c211_i32 dim 1 : vector<4x256xf32>, i32 -> vector<4x256xf32>
    %679 = arith.andi %672, %677 : vector<1x256xi1>
    %cst_188 = arith.constant 0.000000e+00 : f32
    %680 = vector.shape_cast %679 : vector<1x256xi1> to vector<1x256xi1>
    %681 = vector.broadcast %680 : vector<1x256xi1> to vector<4x256xi1>
    %682 = vector.broadcast %cst_188 : f32 to vector<4x256xf32>
    %683 = arith.select %681, %678, %682 : vector<4x256xi1>, vector<4x256xf32>
    %c0_189 = arith.constant 0 : index
    %c42 = arith.constant 42 : index
    %684 = vector.load %arg5[%c0_189, %c42] : memref<4x49xf32, #tpu.memory_space<vmem>>, vector<4x1xf32>
    %685 = vector.broadcast %684 : vector<4x1xf32> to vector<4x256xf32>
    %686 = arith.mulf %683, %685 : vector<4x256xf32>
    %687 = arith.addf %667, %686 : vector<4x256xf32>
    %c2_i32_190 = arith.constant 2 : i32
    %688 = vector.broadcast %c2_i32_190 : i32 to vector<1x256xi32>
    %689 = arith.cmpi sge, %5, %688 : vector<1x256xi32>
    %c18_i32_191 = arith.constant 18 : i32
    %690 = vector.broadcast %c18_i32_191 : i32 to vector<1x256xi32>
    %691 = arith.cmpi slt, %5, %690 : vector<1x256xi32>
    %692 = arith.andi %689, %691 : vector<1x256xi1>
    %c210_i32 = arith.constant 210 : i32
    %693 = tpu.dynamic_rotate %3 by %c210_i32 dim 1 : vector<4x256xf32>, i32 -> vector<4x256xf32>
    %694 = arith.andi %672, %692 : vector<1x256xi1>
    %cst_192 = arith.constant 0.000000e+00 : f32
    %695 = vector.shape_cast %694 : vector<1x256xi1> to vector<1x256xi1>
    %696 = vector.broadcast %695 : vector<1x256xi1> to vector<4x256xi1>
    %697 = vector.broadcast %cst_192 : f32 to vector<4x256xf32>
    %698 = arith.select %696, %693, %697 : vector<4x256xi1>, vector<4x256xf32>
    %c0_193 = arith.constant 0 : index
    %c43 = arith.constant 43 : index
    %699 = vector.load %arg5[%c0_193, %c43] : memref<4x49xf32, #tpu.memory_space<vmem>>, vector<4x1xf32>
    %700 = vector.broadcast %699 : vector<4x1xf32> to vector<4x256xf32>
    %701 = arith.mulf %698, %700 : vector<4x256xf32>
    %702 = arith.addf %687, %701 : vector<4x256xf32>
    %c1_i32_194 = arith.constant 1 : i32
    %703 = vector.broadcast %c1_i32_194 : i32 to vector<1x256xi32>
    %704 = arith.cmpi sge, %5, %703 : vector<1x256xi32>
    %c17_i32_195 = arith.constant 17 : i32
    %705 = vector.broadcast %c17_i32_195 : i32 to vector<1x256xi32>
    %706 = arith.cmpi slt, %5, %705 : vector<1x256xi32>
    %707 = arith.andi %704, %706 : vector<1x256xi1>
    %c209_i32 = arith.constant 209 : i32
    %708 = tpu.dynamic_rotate %3 by %c209_i32 dim 1 : vector<4x256xf32>, i32 -> vector<4x256xf32>
    %709 = arith.andi %672, %707 : vector<1x256xi1>
    %cst_196 = arith.constant 0.000000e+00 : f32
    %710 = vector.shape_cast %709 : vector<1x256xi1> to vector<1x256xi1>
    %711 = vector.broadcast %710 : vector<1x256xi1> to vector<4x256xi1>
    %712 = vector.broadcast %cst_196 : f32 to vector<4x256xf32>
    %713 = arith.select %711, %708, %712 : vector<4x256xi1>, vector<4x256xf32>
    %c0_197 = arith.constant 0 : index
    %c44 = arith.constant 44 : index
    %714 = vector.load %arg5[%c0_197, %c44] : memref<4x49xf32, #tpu.memory_space<vmem>>, vector<4x1xf32>
    %715 = vector.broadcast %714 : vector<4x1xf32> to vector<4x256xf32>
    %716 = arith.mulf %713, %715 : vector<4x256xf32>
    %717 = arith.addf %702, %716 : vector<4x256xf32>
    %c0_i32_198 = arith.constant 0 : i32
    %718 = vector.broadcast %c0_i32_198 : i32 to vector<1x256xi32>
    %719 = arith.cmpi sge, %5, %718 : vector<1x256xi32>
    %c16_i32_199 = arith.constant 16 : i32
    %720 = vector.broadcast %c16_i32_199 : i32 to vector<1x256xi32>
    %721 = arith.cmpi slt, %5, %720 : vector<1x256xi32>
    %722 = arith.andi %719, %721 : vector<1x256xi1>
    %c208_i32 = arith.constant 208 : i32
    %723 = tpu.dynamic_rotate %3 by %c208_i32 dim 1 : vector<4x256xf32>, i32 -> vector<4x256xf32>
    %724 = arith.andi %672, %722 : vector<1x256xi1>
    %cst_200 = arith.constant 0.000000e+00 : f32
    %725 = vector.shape_cast %724 : vector<1x256xi1> to vector<1x256xi1>
    %726 = vector.broadcast %725 : vector<1x256xi1> to vector<4x256xi1>
    %727 = vector.broadcast %cst_200 : f32 to vector<4x256xf32>
    %728 = arith.select %726, %723, %727 : vector<4x256xi1>, vector<4x256xf32>
    %c0_201 = arith.constant 0 : index
    %c45 = arith.constant 45 : index
    %729 = vector.load %arg5[%c0_201, %c45] : memref<4x49xf32, #tpu.memory_space<vmem>>, vector<4x1xf32>
    %730 = vector.broadcast %729 : vector<4x1xf32> to vector<4x256xf32>
    %731 = arith.mulf %728, %730 : vector<4x256xf32>
    %732 = arith.addf %717, %731 : vector<4x256xf32>
    %c-1_i32_202 = arith.constant -1 : i32
    %733 = vector.broadcast %c-1_i32_202 : i32 to vector<1x256xi32>
    %734 = arith.cmpi sge, %5, %733 : vector<1x256xi32>
    %c15_i32_203 = arith.constant 15 : i32
    %735 = vector.broadcast %c15_i32_203 : i32 to vector<1x256xi32>
    %736 = arith.cmpi slt, %5, %735 : vector<1x256xi32>
    %737 = arith.andi %734, %736 : vector<1x256xi1>
    %c207_i32 = arith.constant 207 : i32
    %738 = tpu.dynamic_rotate %3 by %c207_i32 dim 1 : vector<4x256xf32>, i32 -> vector<4x256xf32>
    %739 = arith.andi %672, %737 : vector<1x256xi1>
    %cst_204 = arith.constant 0.000000e+00 : f32
    %740 = vector.shape_cast %739 : vector<1x256xi1> to vector<1x256xi1>
    %741 = vector.broadcast %740 : vector<1x256xi1> to vector<4x256xi1>
    %742 = vector.broadcast %cst_204 : f32 to vector<4x256xf32>
    %743 = arith.select %741, %738, %742 : vector<4x256xi1>, vector<4x256xf32>
    %c0_205 = arith.constant 0 : index
    %c46 = arith.constant 46 : index
    %744 = vector.load %arg5[%c0_205, %c46] : memref<4x49xf32, #tpu.memory_space<vmem>>, vector<4x1xf32>
    %745 = vector.broadcast %744 : vector<4x1xf32> to vector<4x256xf32>
    %746 = arith.mulf %743, %745 : vector<4x256xf32>
    %747 = arith.addf %732, %746 : vector<4x256xf32>
    %c-2_i32_206 = arith.constant -2 : i32
    %748 = vector.broadcast %c-2_i32_206 : i32 to vector<1x256xi32>
    %749 = arith.cmpi sge, %5, %748 : vector<1x256xi32>
    %c14_i32_207 = arith.constant 14 : i32
    %750 = vector.broadcast %c14_i32_207 : i32 to vector<1x256xi32>
    %751 = arith.cmpi slt, %5, %750 : vector<1x256xi32>
    %752 = arith.andi %749, %751 : vector<1x256xi1>
    %c206_i32 = arith.constant 206 : i32
    %753 = tpu.dynamic_rotate %3 by %c206_i32 dim 1 : vector<4x256xf32>, i32 -> vector<4x256xf32>
    %754 = arith.andi %672, %752 : vector<1x256xi1>
    %cst_208 = arith.constant 0.000000e+00 : f32
    %755 = vector.shape_cast %754 : vector<1x256xi1> to vector<1x256xi1>
    %756 = vector.broadcast %755 : vector<1x256xi1> to vector<4x256xi1>
    %757 = vector.broadcast %cst_208 : f32 to vector<4x256xf32>
    %758 = arith.select %756, %753, %757 : vector<4x256xi1>, vector<4x256xf32>
    %c0_209 = arith.constant 0 : index
    %c47 = arith.constant 47 : index
    %759 = vector.load %arg5[%c0_209, %c47] : memref<4x49xf32, #tpu.memory_space<vmem>>, vector<4x1xf32>
    %760 = vector.broadcast %759 : vector<4x1xf32> to vector<4x256xf32>
    %761 = arith.mulf %758, %760 : vector<4x256xf32>
    %762 = arith.addf %747, %761 : vector<4x256xf32>
    %c-3_i32_210 = arith.constant -3 : i32
    %763 = vector.broadcast %c-3_i32_210 : i32 to vector<1x256xi32>
    %764 = arith.cmpi sge, %5, %763 : vector<1x256xi32>
    %c13_i32_211 = arith.constant 13 : i32
    %765 = vector.broadcast %c13_i32_211 : i32 to vector<1x256xi32>
    %766 = arith.cmpi slt, %5, %765 : vector<1x256xi32>
    %767 = arith.andi %764, %766 : vector<1x256xi1>
    %c205_i32 = arith.constant 205 : i32
    %768 = tpu.dynamic_rotate %3 by %c205_i32 dim 1 : vector<4x256xf32>, i32 -> vector<4x256xf32>
    %769 = arith.andi %672, %767 : vector<1x256xi1>
    %cst_212 = arith.constant 0.000000e+00 : f32
    %770 = vector.shape_cast %769 : vector<1x256xi1> to vector<1x256xi1>
    %771 = vector.broadcast %770 : vector<1x256xi1> to vector<4x256xi1>
    %772 = vector.broadcast %cst_212 : f32 to vector<4x256xf32>
    %773 = arith.select %771, %768, %772 : vector<4x256xi1>, vector<4x256xf32>
    %c0_213 = arith.constant 0 : index
    %c48 = arith.constant 48 : index
    %774 = vector.load %arg5[%c0_213, %c48] : memref<4x49xf32, #tpu.memory_space<vmem>>, vector<4x1xf32>
    %775 = vector.broadcast %774 : vector<4x1xf32> to vector<4x256xf32>
    %776 = arith.mulf %773, %775 : vector<4x256xf32>
    %777 = arith.addf %762, %776 : vector<4x256xf32>
    %c0_214 = arith.constant 0 : index
    %c0_215 = arith.constant 0 : index
    %c0_216 = arith.constant 0 : index
    %778 = vector.load %arg7[%c0_214, %c0_215, %c0_216] : memref<1x4x256xf32, #tpu.memory_space<vmem>>, vector<1x4x256xf32>
    %779 = vector.shape_cast %778 : vector<1x4x256xf32> to vector<4x256xf32>
    %780 = vector.broadcast %1 : f32 to vector<4x256xf32>
    %781 = arith.mulf %780, %777 : vector<4x256xf32>
    %782 = arith.addf %779, %781 : vector<4x256xf32>
    %783 = vector.shape_cast %782 : vector<4x256xf32> to vector<1x4x256xf32>
    %c0_217 = arith.constant 0 : index
    %c0_218 = arith.constant 0 : index
    %c0_219 = arith.constant 0 : index
    %784 = vector.load %arg8[%c0_217, %c0_218, %c0_219] : memref<1x4x256xf32, #tpu.memory_space<vmem>>, vector<1x4x256xf32>
    tpu.vector_store %arg8[%c0_217, %c0_218, %c0_219], %783 {strides = array<i32>} : memref<1x4x256xf32, #tpu.memory_space<vmem>>, vector<1x4x256xf32>,
    return
  }
  func.func @transform_0(%arg0: i32, %arg1: i32, %arg2: memref<2xf32, #tpu.memory_space<smem>>) -> (i32, i32) {
    %c0_i32 = arith.constant 0 : i32
    %c0_i32_0 = arith.constant 0 : i32
    %c0_i32_1 = arith.constant 0 : i32
    return %c0_i32, %c0_i32_0 : i32, i32
  }
  func.func @transform_1(%arg0: i32, %arg1: i32, %arg2: memref<2xf32, #tpu.memory_space<smem>>) -> (i32, i32, i32) {
    %c0_i32 = arith.constant 0 : i32
    %c0_i32_0 = arith.constant 0 : i32
    return %arg0, %arg1, %c0_i32 : i32, i32, i32
  }
  func.func @transform_2(%arg0: i32, %arg1: i32, %arg2: memref<2xf32, #tpu.memory_space<smem>>) -> (i32, i32) {
    %c0_i32 = arith.constant 0 : i32
    %c0_i32_0 = arith.constant 0 : i32
    return %arg1, %c0_i32 : i32, i32
  }
  func.func @transform_3(%arg0: i32, %arg1: i32, %arg2: memref<2xf32, #tpu.memory_space<smem>>) -> (i32, i32) {
    %c0_i32 = arith.constant 0 : i32
    %c0_i32_0 = arith.constant 0 : i32
    return %arg1, %c0_i32 : i32, i32
  }
  func.func @transform_4(%arg0: i32, %arg1: i32, %arg2: memref<2xf32, #tpu.memory_space<smem>>) -> (i32, i32, i32) {
    %c0_i32 = arith.constant 0 : i32
    %c0_i32_0 = arith.constant 0 : i32
    return %arg0, %arg1, %c0_i32 : i32, i32, i32
  }
  func.func @transform_5(%arg0: i32, %arg1: i32, %arg2: memref<2xf32, #tpu.memory_space<smem>>) -> (i32, i32, i32) {
    %c0_i32 = arith.constant 0 : i32
    %c0_i32_0 = arith.constant 0 : i32
    return %arg0, %arg1, %c0_i32 : i32, i32, i32
  }
}

module attributes {stable_mosaic.version = 11 : i64} {
  func.func @_dw_bn_star_kernel(%arg0: i32, %arg1: memref<2x256xi32, #tpu.memory_space<vmem>>, %arg2: memref<1x4x256xf32, #tpu.memory_space<vmem>>, %arg3: memref<4x49xf32, #tpu.memory_space<vmem>>, %arg4: memref<4x1xf32, #tpu.memory_space<vmem>>, %arg5: memref<32x4xf32, #tpu.memory_space<vmem>>, %arg6: memref<32x1xf32, #tpu.memory_space<vmem>>, %arg7: memref<4x16xf32, #tpu.memory_space<vmem>>, %arg8: memref<4x1xf32, #tpu.memory_space<vmem>>, %arg9: memref<1x4x256xf32, #tpu.memory_space<vmem>>) attributes {dimension_semantics = [#tpu.dimension_semantics<parallel>], iteration_bounds = array<i64: 2>, scalar_prefetch = 0 : i64, scratch_operands = 0 : i64, tpu.core_type = #tpu.core_type<tc>, window_params = [{pipeline_mode = #tpu.pipeline_mode<synchronous>, transform_indices = @transform_0, window_bounds = array<i64: 2, 256>}, {transform_indices = @transform_1, window_bounds = array<i64: 1, 4, 256>}, {pipeline_mode = #tpu.pipeline_mode<synchronous>, transform_indices = @transform_2, window_bounds = array<i64: 4, 49>}, {pipeline_mode = #tpu.pipeline_mode<synchronous>, transform_indices = @transform_3, window_bounds = array<i64: 4, 1>}, {pipeline_mode = #tpu.pipeline_mode<synchronous>, transform_indices = @transform_4, window_bounds = array<i64: 32, 4>}, {pipeline_mode = #tpu.pipeline_mode<synchronous>, transform_indices = @transform_5, window_bounds = array<i64: 32, 1>}, {pipeline_mode = #tpu.pipeline_mode<synchronous>, transform_indices = @transform_6, window_bounds = array<i64: 4, 16>}, {pipeline_mode = #tpu.pipeline_mode<synchronous>, transform_indices = @transform_7, window_bounds = array<i64: 4, 1>}, {transform_indices = @transform_8, window_bounds = array<i64: 1, 4, 256>}]} {
    %c0 = arith.constant 0 : index
    %c0_0 = arith.constant 0 : index
    %c0_1 = arith.constant 0 : index
    %0 = vector.load %arg2[%c0, %c0_0, %c0_1] : memref<1x4x256xf32, #tpu.memory_space<vmem>>, vector<1x4x256xf32>
    %1 = vector.shape_cast %0 : vector<1x4x256xf32> to vector<4x256xf32>
    %c0_2 = arith.constant 0 : index
    %c0_3 = arith.constant 0 : index
    %2 = vector.load %arg1[%c0_2, %c0_3] : memref<2x256xi32, #tpu.memory_space<vmem>>, vector<1x256xi32>
    %c1 = arith.constant 1 : index
    %c0_4 = arith.constant 0 : index
    %3 = vector.load %arg1[%c1, %c0_4] : memref<2x256xi32, #tpu.memory_space<vmem>>, vector<1x256xi32>
    %c0_5 = arith.constant 0 : index
    %c0_6 = arith.constant 0 : index
    %4 = vector.load %arg4[%c0_5, %c0_6] : memref<4x1xf32, #tpu.memory_space<vmem>>, vector<4x1xf32>
    %5 = vector.shape_cast %4 : vector<4x1xf32> to vector<4x1xf32>
    %6 = vector.broadcast %5 : vector<4x1xf32> to vector<4x256xf32>
    %c3_i32 = arith.constant 3 : i32
    %7 = vector.broadcast %c3_i32 : i32 to vector<1x256xi32>
    %8 = arith.cmpi sge, %2, %7 : vector<1x256xi32>
    %c19_i32 = arith.constant 19 : i32
    %9 = vector.broadcast %c19_i32 : i32 to vector<1x256xi32>
    %10 = arith.cmpi slt, %2, %9 : vector<1x256xi32>
    %11 = arith.andi %8, %10 : vector<1x256xi1>
    %c3_i32_7 = arith.constant 3 : i32
    %12 = vector.broadcast %c3_i32_7 : i32 to vector<1x256xi32>
    %13 = arith.cmpi sge, %3, %12 : vector<1x256xi32>
    %c19_i32_8 = arith.constant 19 : i32
    %14 = vector.broadcast %c19_i32_8 : i32 to vector<1x256xi32>
    %15 = arith.cmpi slt, %3, %14 : vector<1x256xi32>
    %16 = arith.andi %13, %15 : vector<1x256xi1>
    %c51_i32 = arith.constant 51 : i32
    %17 = tpu.dynamic_rotate %1 by %c51_i32 dim 1 : vector<4x256xf32>, i32 -> vector<4x256xf32>
    %18 = arith.andi %11, %16 : vector<1x256xi1>
    %cst = arith.constant 0.000000e+00 : f32
    %19 = vector.shape_cast %18 : vector<1x256xi1> to vector<1x256xi1>
    %20 = vector.broadcast %19 : vector<1x256xi1> to vector<4x256xi1>
    %21 = vector.broadcast %cst : f32 to vector<4x256xf32>
    %22 = arith.select %20, %17, %21 : vector<4x256xi1>, vector<4x256xf32>
    %c0_9 = arith.constant 0 : index
    %c0_10 = arith.constant 0 : index
    %23 = vector.load %arg3[%c0_9, %c0_10] : memref<4x49xf32, #tpu.memory_space<vmem>>, vector<4x1xf32>
    %24 = vector.broadcast %23 : vector<4x1xf32> to vector<4x256xf32>
    %25 = arith.mulf %22, %24 : vector<4x256xf32>
    %26 = arith.addf %6, %25 : vector<4x256xf32>
    %c2_i32 = arith.constant 2 : i32
    %27 = vector.broadcast %c2_i32 : i32 to vector<1x256xi32>
    %28 = arith.cmpi sge, %3, %27 : vector<1x256xi32>
    %c18_i32 = arith.constant 18 : i32
    %29 = vector.broadcast %c18_i32 : i32 to vector<1x256xi32>
    %30 = arith.cmpi slt, %3, %29 : vector<1x256xi32>
    %31 = arith.andi %28, %30 : vector<1x256xi1>
    %c50_i32 = arith.constant 50 : i32
    %32 = tpu.dynamic_rotate %1 by %c50_i32 dim 1 : vector<4x256xf32>, i32 -> vector<4x256xf32>
    %33 = arith.andi %11, %31 : vector<1x256xi1>
    %cst_11 = arith.constant 0.000000e+00 : f32
    %34 = vector.shape_cast %33 : vector<1x256xi1> to vector<1x256xi1>
    %35 = vector.broadcast %34 : vector<1x256xi1> to vector<4x256xi1>
    %36 = vector.broadcast %cst_11 : f32 to vector<4x256xf32>
    %37 = arith.select %35, %32, %36 : vector<4x256xi1>, vector<4x256xf32>
    %c0_12 = arith.constant 0 : index
    %c1_13 = arith.constant 1 : index
    %38 = vector.load %arg3[%c0_12, %c1_13] : memref<4x49xf32, #tpu.memory_space<vmem>>, vector<4x1xf32>
    %39 = vector.broadcast %38 : vector<4x1xf32> to vector<4x256xf32>
    %40 = arith.mulf %37, %39 : vector<4x256xf32>
    %41 = arith.addf %26, %40 : vector<4x256xf32>
    %c1_i32 = arith.constant 1 : i32
    %42 = vector.broadcast %c1_i32 : i32 to vector<1x256xi32>
    %43 = arith.cmpi sge, %3, %42 : vector<1x256xi32>
    %c17_i32 = arith.constant 17 : i32
    %44 = vector.broadcast %c17_i32 : i32 to vector<1x256xi32>
    %45 = arith.cmpi slt, %3, %44 : vector<1x256xi32>
    %46 = arith.andi %43, %45 : vector<1x256xi1>
    %c49_i32 = arith.constant 49 : i32
    %47 = tpu.dynamic_rotate %1 by %c49_i32 dim 1 : vector<4x256xf32>, i32 -> vector<4x256xf32>
    %48 = arith.andi %11, %46 : vector<1x256xi1>
    %cst_14 = arith.constant 0.000000e+00 : f32
    %49 = vector.shape_cast %48 : vector<1x256xi1> to vector<1x256xi1>
    %50 = vector.broadcast %49 : vector<1x256xi1> to vector<4x256xi1>
    %51 = vector.broadcast %cst_14 : f32 to vector<4x256xf32>
    %52 = arith.select %50, %47, %51 : vector<4x256xi1>, vector<4x256xf32>
    %c0_15 = arith.constant 0 : index
    %c2 = arith.constant 2 : index
    %53 = vector.load %arg3[%c0_15, %c2] : memref<4x49xf32, #tpu.memory_space<vmem>>, vector<4x1xf32>
    %54 = vector.broadcast %53 : vector<4x1xf32> to vector<4x256xf32>
    %55 = arith.mulf %52, %54 : vector<4x256xf32>
    %56 = arith.addf %41, %55 : vector<4x256xf32>
    %c0_i32 = arith.constant 0 : i32
    %57 = vector.broadcast %c0_i32 : i32 to vector<1x256xi32>
    %58 = arith.cmpi sge, %3, %57 : vector<1x256xi32>
    %c16_i32 = arith.constant 16 : i32
    %59 = vector.broadcast %c16_i32 : i32 to vector<1x256xi32>
    %60 = arith.cmpi slt, %3, %59 : vector<1x256xi32>
    %61 = arith.andi %58, %60 : vector<1x256xi1>
    %c48_i32 = arith.constant 48 : i32
    %62 = tpu.dynamic_rotate %1 by %c48_i32 dim 1 : vector<4x256xf32>, i32 -> vector<4x256xf32>
    %63 = arith.andi %11, %61 : vector<1x256xi1>
    %cst_16 = arith.constant 0.000000e+00 : f32
    %64 = vector.shape_cast %63 : vector<1x256xi1> to vector<1x256xi1>
    %65 = vector.broadcast %64 : vector<1x256xi1> to vector<4x256xi1>
    %66 = vector.broadcast %cst_16 : f32 to vector<4x256xf32>
    %67 = arith.select %65, %62, %66 : vector<4x256xi1>, vector<4x256xf32>
    %c0_17 = arith.constant 0 : index
    %c3 = arith.constant 3 : index
    %68 = vector.load %arg3[%c0_17, %c3] : memref<4x49xf32, #tpu.memory_space<vmem>>, vector<4x1xf32>
    %69 = vector.broadcast %68 : vector<4x1xf32> to vector<4x256xf32>
    %70 = arith.mulf %67, %69 : vector<4x256xf32>
    %71 = arith.addf %56, %70 : vector<4x256xf32>
    %c-1_i32 = arith.constant -1 : i32
    %72 = vector.broadcast %c-1_i32 : i32 to vector<1x256xi32>
    %73 = arith.cmpi sge, %3, %72 : vector<1x256xi32>
    %c15_i32 = arith.constant 15 : i32
    %74 = vector.broadcast %c15_i32 : i32 to vector<1x256xi32>
    %75 = arith.cmpi slt, %3, %74 : vector<1x256xi32>
    %76 = arith.andi %73, %75 : vector<1x256xi1>
    %c47_i32 = arith.constant 47 : i32
    %77 = tpu.dynamic_rotate %1 by %c47_i32 dim 1 : vector<4x256xf32>, i32 -> vector<4x256xf32>
    %78 = arith.andi %11, %76 : vector<1x256xi1>
    %cst_18 = arith.constant 0.000000e+00 : f32
    %79 = vector.shape_cast %78 : vector<1x256xi1> to vector<1x256xi1>
    %80 = vector.broadcast %79 : vector<1x256xi1> to vector<4x256xi1>
    %81 = vector.broadcast %cst_18 : f32 to vector<4x256xf32>
    %82 = arith.select %80, %77, %81 : vector<4x256xi1>, vector<4x256xf32>
    %c0_19 = arith.constant 0 : index
    %c4 = arith.constant 4 : index
    %83 = vector.load %arg3[%c0_19, %c4] : memref<4x49xf32, #tpu.memory_space<vmem>>, vector<4x1xf32>
    %84 = vector.broadcast %83 : vector<4x1xf32> to vector<4x256xf32>
    %85 = arith.mulf %82, %84 : vector<4x256xf32>
    %86 = arith.addf %71, %85 : vector<4x256xf32>
    %c-2_i32 = arith.constant -2 : i32
    %87 = vector.broadcast %c-2_i32 : i32 to vector<1x256xi32>
    %88 = arith.cmpi sge, %3, %87 : vector<1x256xi32>
    %c14_i32 = arith.constant 14 : i32
    %89 = vector.broadcast %c14_i32 : i32 to vector<1x256xi32>
    %90 = arith.cmpi slt, %3, %89 : vector<1x256xi32>
    %91 = arith.andi %88, %90 : vector<1x256xi1>
    %c46_i32 = arith.constant 46 : i32
    %92 = tpu.dynamic_rotate %1 by %c46_i32 dim 1 : vector<4x256xf32>, i32 -> vector<4x256xf32>
    %93 = arith.andi %11, %91 : vector<1x256xi1>
    %cst_20 = arith.constant 0.000000e+00 : f32
    %94 = vector.shape_cast %93 : vector<1x256xi1> to vector<1x256xi1>
    %95 = vector.broadcast %94 : vector<1x256xi1> to vector<4x256xi1>
    %96 = vector.broadcast %cst_20 : f32 to vector<4x256xf32>
    %97 = arith.select %95, %92, %96 : vector<4x256xi1>, vector<4x256xf32>
    %c0_21 = arith.constant 0 : index
    %c5 = arith.constant 5 : index
    %98 = vector.load %arg3[%c0_21, %c5] : memref<4x49xf32, #tpu.memory_space<vmem>>, vector<4x1xf32>
    %99 = vector.broadcast %98 : vector<4x1xf32> to vector<4x256xf32>
    %100 = arith.mulf %97, %99 : vector<4x256xf32>
    %101 = arith.addf %86, %100 : vector<4x256xf32>
    %c-3_i32 = arith.constant -3 : i32
    %102 = vector.broadcast %c-3_i32 : i32 to vector<1x256xi32>
    %103 = arith.cmpi sge, %3, %102 : vector<1x256xi32>
    %c13_i32 = arith.constant 13 : i32
    %104 = vector.broadcast %c13_i32 : i32 to vector<1x256xi32>
    %105 = arith.cmpi slt, %3, %104 : vector<1x256xi32>
    %106 = arith.andi %103, %105 : vector<1x256xi1>
    %c45_i32 = arith.constant 45 : i32
    %107 = tpu.dynamic_rotate %1 by %c45_i32 dim 1 : vector<4x256xf32>, i32 -> vector<4x256xf32>
    %108 = arith.andi %11, %106 : vector<1x256xi1>
    %cst_22 = arith.constant 0.000000e+00 : f32
    %109 = vector.shape_cast %108 : vector<1x256xi1> to vector<1x256xi1>
    %110 = vector.broadcast %109 : vector<1x256xi1> to vector<4x256xi1>
    %111 = vector.broadcast %cst_22 : f32 to vector<4x256xf32>
    %112 = arith.select %110, %107, %111 : vector<4x256xi1>, vector<4x256xf32>
    %c0_23 = arith.constant 0 : index
    %c6 = arith.constant 6 : index
    %113 = vector.load %arg3[%c0_23, %c6] : memref<4x49xf32, #tpu.memory_space<vmem>>, vector<4x1xf32>
    %114 = vector.broadcast %113 : vector<4x1xf32> to vector<4x256xf32>
    %115 = arith.mulf %112, %114 : vector<4x256xf32>
    %116 = arith.addf %101, %115 : vector<4x256xf32>
    %c2_i32_24 = arith.constant 2 : i32
    %117 = vector.broadcast %c2_i32_24 : i32 to vector<1x256xi32>
    %118 = arith.cmpi sge, %2, %117 : vector<1x256xi32>
    %c18_i32_25 = arith.constant 18 : i32
    %119 = vector.broadcast %c18_i32_25 : i32 to vector<1x256xi32>
    %120 = arith.cmpi slt, %2, %119 : vector<1x256xi32>
    %121 = arith.andi %118, %120 : vector<1x256xi1>
    %c3_i32_26 = arith.constant 3 : i32
    %122 = vector.broadcast %c3_i32_26 : i32 to vector<1x256xi32>
    %123 = arith.cmpi sge, %3, %122 : vector<1x256xi32>
    %c19_i32_27 = arith.constant 19 : i32
    %124 = vector.broadcast %c19_i32_27 : i32 to vector<1x256xi32>
    %125 = arith.cmpi slt, %3, %124 : vector<1x256xi32>
    %126 = arith.andi %123, %125 : vector<1x256xi1>
    %c35_i32 = arith.constant 35 : i32
    %127 = tpu.dynamic_rotate %1 by %c35_i32 dim 1 : vector<4x256xf32>, i32 -> vector<4x256xf32>
    %128 = arith.andi %121, %126 : vector<1x256xi1>
    %cst_28 = arith.constant 0.000000e+00 : f32
    %129 = vector.shape_cast %128 : vector<1x256xi1> to vector<1x256xi1>
    %130 = vector.broadcast %129 : vector<1x256xi1> to vector<4x256xi1>
    %131 = vector.broadcast %cst_28 : f32 to vector<4x256xf32>
    %132 = arith.select %130, %127, %131 : vector<4x256xi1>, vector<4x256xf32>
    %c0_29 = arith.constant 0 : index
    %c7 = arith.constant 7 : index
    %133 = vector.load %arg3[%c0_29, %c7] : memref<4x49xf32, #tpu.memory_space<vmem>>, vector<4x1xf32>
    %134 = vector.broadcast %133 : vector<4x1xf32> to vector<4x256xf32>
    %135 = arith.mulf %132, %134 : vector<4x256xf32>
    %136 = arith.addf %116, %135 : vector<4x256xf32>
    %c2_i32_30 = arith.constant 2 : i32
    %137 = vector.broadcast %c2_i32_30 : i32 to vector<1x256xi32>
    %138 = arith.cmpi sge, %3, %137 : vector<1x256xi32>
    %c18_i32_31 = arith.constant 18 : i32
    %139 = vector.broadcast %c18_i32_31 : i32 to vector<1x256xi32>
    %140 = arith.cmpi slt, %3, %139 : vector<1x256xi32>
    %141 = arith.andi %138, %140 : vector<1x256xi1>
    %c34_i32 = arith.constant 34 : i32
    %142 = tpu.dynamic_rotate %1 by %c34_i32 dim 1 : vector<4x256xf32>, i32 -> vector<4x256xf32>
    %143 = arith.andi %121, %141 : vector<1x256xi1>
    %cst_32 = arith.constant 0.000000e+00 : f32
    %144 = vector.shape_cast %143 : vector<1x256xi1> to vector<1x256xi1>
    %145 = vector.broadcast %144 : vector<1x256xi1> to vector<4x256xi1>
    %146 = vector.broadcast %cst_32 : f32 to vector<4x256xf32>
    %147 = arith.select %145, %142, %146 : vector<4x256xi1>, vector<4x256xf32>
    %c0_33 = arith.constant 0 : index
    %c8 = arith.constant 8 : index
    %148 = vector.load %arg3[%c0_33, %c8] : memref<4x49xf32, #tpu.memory_space<vmem>>, vector<4x1xf32>
    %149 = vector.broadcast %148 : vector<4x1xf32> to vector<4x256xf32>
    %150 = arith.mulf %147, %149 : vector<4x256xf32>
    %151 = arith.addf %136, %150 : vector<4x256xf32>
    %c1_i32_34 = arith.constant 1 : i32
    %152 = vector.broadcast %c1_i32_34 : i32 to vector<1x256xi32>
    %153 = arith.cmpi sge, %3, %152 : vector<1x256xi32>
    %c17_i32_35 = arith.constant 17 : i32
    %154 = vector.broadcast %c17_i32_35 : i32 to vector<1x256xi32>
    %155 = arith.cmpi slt, %3, %154 : vector<1x256xi32>
    %156 = arith.andi %153, %155 : vector<1x256xi1>
    %c33_i32 = arith.constant 33 : i32
    %157 = tpu.dynamic_rotate %1 by %c33_i32 dim 1 : vector<4x256xf32>, i32 -> vector<4x256xf32>
    %158 = arith.andi %121, %156 : vector<1x256xi1>
    %cst_36 = arith.constant 0.000000e+00 : f32
    %159 = vector.shape_cast %158 : vector<1x256xi1> to vector<1x256xi1>
    %160 = vector.broadcast %159 : vector<1x256xi1> to vector<4x256xi1>
    %161 = vector.broadcast %cst_36 : f32 to vector<4x256xf32>
    %162 = arith.select %160, %157, %161 : vector<4x256xi1>, vector<4x256xf32>
    %c0_37 = arith.constant 0 : index
    %c9 = arith.constant 9 : index
    %163 = vector.load %arg3[%c0_37, %c9] : memref<4x49xf32, #tpu.memory_space<vmem>>, vector<4x1xf32>
    %164 = vector.broadcast %163 : vector<4x1xf32> to vector<4x256xf32>
    %165 = arith.mulf %162, %164 : vector<4x256xf32>
    %166 = arith.addf %151, %165 : vector<4x256xf32>
    %c0_i32_38 = arith.constant 0 : i32
    %167 = vector.broadcast %c0_i32_38 : i32 to vector<1x256xi32>
    %168 = arith.cmpi sge, %3, %167 : vector<1x256xi32>
    %c16_i32_39 = arith.constant 16 : i32
    %169 = vector.broadcast %c16_i32_39 : i32 to vector<1x256xi32>
    %170 = arith.cmpi slt, %3, %169 : vector<1x256xi32>
    %171 = arith.andi %168, %170 : vector<1x256xi1>
    %c32_i32 = arith.constant 32 : i32
    %172 = tpu.dynamic_rotate %1 by %c32_i32 dim 1 : vector<4x256xf32>, i32 -> vector<4x256xf32>
    %173 = arith.andi %121, %171 : vector<1x256xi1>
    %cst_40 = arith.constant 0.000000e+00 : f32
    %174 = vector.shape_cast %173 : vector<1x256xi1> to vector<1x256xi1>
    %175 = vector.broadcast %174 : vector<1x256xi1> to vector<4x256xi1>
    %176 = vector.broadcast %cst_40 : f32 to vector<4x256xf32>
    %177 = arith.select %175, %172, %176 : vector<4x256xi1>, vector<4x256xf32>
    %c0_41 = arith.constant 0 : index
    %c10 = arith.constant 10 : index
    %178 = vector.load %arg3[%c0_41, %c10] : memref<4x49xf32, #tpu.memory_space<vmem>>, vector<4x1xf32>
    %179 = vector.broadcast %178 : vector<4x1xf32> to vector<4x256xf32>
    %180 = arith.mulf %177, %179 : vector<4x256xf32>
    %181 = arith.addf %166, %180 : vector<4x256xf32>
    %c-1_i32_42 = arith.constant -1 : i32
    %182 = vector.broadcast %c-1_i32_42 : i32 to vector<1x256xi32>
    %183 = arith.cmpi sge, %3, %182 : vector<1x256xi32>
    %c15_i32_43 = arith.constant 15 : i32
    %184 = vector.broadcast %c15_i32_43 : i32 to vector<1x256xi32>
    %185 = arith.cmpi slt, %3, %184 : vector<1x256xi32>
    %186 = arith.andi %183, %185 : vector<1x256xi1>
    %c31_i32 = arith.constant 31 : i32
    %187 = tpu.dynamic_rotate %1 by %c31_i32 dim 1 : vector<4x256xf32>, i32 -> vector<4x256xf32>
    %188 = arith.andi %121, %186 : vector<1x256xi1>
    %cst_44 = arith.constant 0.000000e+00 : f32
    %189 = vector.shape_cast %188 : vector<1x256xi1> to vector<1x256xi1>
    %190 = vector.broadcast %189 : vector<1x256xi1> to vector<4x256xi1>
    %191 = vector.broadcast %cst_44 : f32 to vector<4x256xf32>
    %192 = arith.select %190, %187, %191 : vector<4x256xi1>, vector<4x256xf32>
    %c0_45 = arith.constant 0 : index
    %c11 = arith.constant 11 : index
    %193 = vector.load %arg3[%c0_45, %c11] : memref<4x49xf32, #tpu.memory_space<vmem>>, vector<4x1xf32>
    %194 = vector.broadcast %193 : vector<4x1xf32> to vector<4x256xf32>
    %195 = arith.mulf %192, %194 : vector<4x256xf32>
    %196 = arith.addf %181, %195 : vector<4x256xf32>
    %c-2_i32_46 = arith.constant -2 : i32
    %197 = vector.broadcast %c-2_i32_46 : i32 to vector<1x256xi32>
    %198 = arith.cmpi sge, %3, %197 : vector<1x256xi32>
    %c14_i32_47 = arith.constant 14 : i32
    %199 = vector.broadcast %c14_i32_47 : i32 to vector<1x256xi32>
    %200 = arith.cmpi slt, %3, %199 : vector<1x256xi32>
    %201 = arith.andi %198, %200 : vector<1x256xi1>
    %c30_i32 = arith.constant 30 : i32
    %202 = tpu.dynamic_rotate %1 by %c30_i32 dim 1 : vector<4x256xf32>, i32 -> vector<4x256xf32>
    %203 = arith.andi %121, %201 : vector<1x256xi1>
    %cst_48 = arith.constant 0.000000e+00 : f32
    %204 = vector.shape_cast %203 : vector<1x256xi1> to vector<1x256xi1>
    %205 = vector.broadcast %204 : vector<1x256xi1> to vector<4x256xi1>
    %206 = vector.broadcast %cst_48 : f32 to vector<4x256xf32>
    %207 = arith.select %205, %202, %206 : vector<4x256xi1>, vector<4x256xf32>
    %c0_49 = arith.constant 0 : index
    %c12 = arith.constant 12 : index
    %208 = vector.load %arg3[%c0_49, %c12] : memref<4x49xf32, #tpu.memory_space<vmem>>, vector<4x1xf32>
    %209 = vector.broadcast %208 : vector<4x1xf32> to vector<4x256xf32>
    %210 = arith.mulf %207, %209 : vector<4x256xf32>
    %211 = arith.addf %196, %210 : vector<4x256xf32>
    %c-3_i32_50 = arith.constant -3 : i32
    %212 = vector.broadcast %c-3_i32_50 : i32 to vector<1x256xi32>
    %213 = arith.cmpi sge, %3, %212 : vector<1x256xi32>
    %c13_i32_51 = arith.constant 13 : i32
    %214 = vector.broadcast %c13_i32_51 : i32 to vector<1x256xi32>
    %215 = arith.cmpi slt, %3, %214 : vector<1x256xi32>
    %216 = arith.andi %213, %215 : vector<1x256xi1>
    %c29_i32 = arith.constant 29 : i32
    %217 = tpu.dynamic_rotate %1 by %c29_i32 dim 1 : vector<4x256xf32>, i32 -> vector<4x256xf32>
    %218 = arith.andi %121, %216 : vector<1x256xi1>
    %cst_52 = arith.constant 0.000000e+00 : f32
    %219 = vector.shape_cast %218 : vector<1x256xi1> to vector<1x256xi1>
    %220 = vector.broadcast %219 : vector<1x256xi1> to vector<4x256xi1>
    %221 = vector.broadcast %cst_52 : f32 to vector<4x256xf32>
    %222 = arith.select %220, %217, %221 : vector<4x256xi1>, vector<4x256xf32>
    %c0_53 = arith.constant 0 : index
    %c13 = arith.constant 13 : index
    %223 = vector.load %arg3[%c0_53, %c13] : memref<4x49xf32, #tpu.memory_space<vmem>>, vector<4x1xf32>
    %224 = vector.broadcast %223 : vector<4x1xf32> to vector<4x256xf32>
    %225 = arith.mulf %222, %224 : vector<4x256xf32>
    %226 = arith.addf %211, %225 : vector<4x256xf32>
    %c1_i32_54 = arith.constant 1 : i32
    %227 = vector.broadcast %c1_i32_54 : i32 to vector<1x256xi32>
    %228 = arith.cmpi sge, %2, %227 : vector<1x256xi32>
    %c17_i32_55 = arith.constant 17 : i32
    %229 = vector.broadcast %c17_i32_55 : i32 to vector<1x256xi32>
    %230 = arith.cmpi slt, %2, %229 : vector<1x256xi32>
    %231 = arith.andi %228, %230 : vector<1x256xi1>
    %c3_i32_56 = arith.constant 3 : i32
    %232 = vector.broadcast %c3_i32_56 : i32 to vector<1x256xi32>
    %233 = arith.cmpi sge, %3, %232 : vector<1x256xi32>
    %c19_i32_57 = arith.constant 19 : i32
    %234 = vector.broadcast %c19_i32_57 : i32 to vector<1x256xi32>
    %235 = arith.cmpi slt, %3, %234 : vector<1x256xi32>
    %236 = arith.andi %233, %235 : vector<1x256xi1>
    %c19_i32_58 = arith.constant 19 : i32
    %237 = tpu.dynamic_rotate %1 by %c19_i32_58 dim 1 : vector<4x256xf32>, i32 -> vector<4x256xf32>
    %238 = arith.andi %231, %236 : vector<1x256xi1>
    %cst_59 = arith.constant 0.000000e+00 : f32
    %239 = vector.shape_cast %238 : vector<1x256xi1> to vector<1x256xi1>
    %240 = vector.broadcast %239 : vector<1x256xi1> to vector<4x256xi1>
    %241 = vector.broadcast %cst_59 : f32 to vector<4x256xf32>
    %242 = arith.select %240, %237, %241 : vector<4x256xi1>, vector<4x256xf32>
    %c0_60 = arith.constant 0 : index
    %c14 = arith.constant 14 : index
    %243 = vector.load %arg3[%c0_60, %c14] : memref<4x49xf32, #tpu.memory_space<vmem>>, vector<4x1xf32>
    %244 = vector.broadcast %243 : vector<4x1xf32> to vector<4x256xf32>
    %245 = arith.mulf %242, %244 : vector<4x256xf32>
    %246 = arith.addf %226, %245 : vector<4x256xf32>
    %c2_i32_61 = arith.constant 2 : i32
    %247 = vector.broadcast %c2_i32_61 : i32 to vector<1x256xi32>
    %248 = arith.cmpi sge, %3, %247 : vector<1x256xi32>
    %c18_i32_62 = arith.constant 18 : i32
    %249 = vector.broadcast %c18_i32_62 : i32 to vector<1x256xi32>
    %250 = arith.cmpi slt, %3, %249 : vector<1x256xi32>
    %251 = arith.andi %248, %250 : vector<1x256xi1>
    %c18_i32_63 = arith.constant 18 : i32
    %252 = tpu.dynamic_rotate %1 by %c18_i32_63 dim 1 : vector<4x256xf32>, i32 -> vector<4x256xf32>
    %253 = arith.andi %231, %251 : vector<1x256xi1>
    %cst_64 = arith.constant 0.000000e+00 : f32
    %254 = vector.shape_cast %253 : vector<1x256xi1> to vector<1x256xi1>
    %255 = vector.broadcast %254 : vector<1x256xi1> to vector<4x256xi1>
    %256 = vector.broadcast %cst_64 : f32 to vector<4x256xf32>
    %257 = arith.select %255, %252, %256 : vector<4x256xi1>, vector<4x256xf32>
    %c0_65 = arith.constant 0 : index
    %c15 = arith.constant 15 : index
    %258 = vector.load %arg3[%c0_65, %c15] : memref<4x49xf32, #tpu.memory_space<vmem>>, vector<4x1xf32>
    %259 = vector.broadcast %258 : vector<4x1xf32> to vector<4x256xf32>
    %260 = arith.mulf %257, %259 : vector<4x256xf32>
    %261 = arith.addf %246, %260 : vector<4x256xf32>
    %c1_i32_66 = arith.constant 1 : i32
    %262 = vector.broadcast %c1_i32_66 : i32 to vector<1x256xi32>
    %263 = arith.cmpi sge, %3, %262 : vector<1x256xi32>
    %c17_i32_67 = arith.constant 17 : i32
    %264 = vector.broadcast %c17_i32_67 : i32 to vector<1x256xi32>
    %265 = arith.cmpi slt, %3, %264 : vector<1x256xi32>
    %266 = arith.andi %263, %265 : vector<1x256xi1>
    %c17_i32_68 = arith.constant 17 : i32
    %267 = tpu.dynamic_rotate %1 by %c17_i32_68 dim 1 : vector<4x256xf32>, i32 -> vector<4x256xf32>
    %268 = arith.andi %231, %266 : vector<1x256xi1>
    %cst_69 = arith.constant 0.000000e+00 : f32
    %269 = vector.shape_cast %268 : vector<1x256xi1> to vector<1x256xi1>
    %270 = vector.broadcast %269 : vector<1x256xi1> to vector<4x256xi1>
    %271 = vector.broadcast %cst_69 : f32 to vector<4x256xf32>
    %272 = arith.select %270, %267, %271 : vector<4x256xi1>, vector<4x256xf32>
    %c0_70 = arith.constant 0 : index
    %c16 = arith.constant 16 : index
    %273 = vector.load %arg3[%c0_70, %c16] : memref<4x49xf32, #tpu.memory_space<vmem>>, vector<4x1xf32>
    %274 = vector.broadcast %273 : vector<4x1xf32> to vector<4x256xf32>
    %275 = arith.mulf %272, %274 : vector<4x256xf32>
    %276 = arith.addf %261, %275 : vector<4x256xf32>
    %c0_i32_71 = arith.constant 0 : i32
    %277 = vector.broadcast %c0_i32_71 : i32 to vector<1x256xi32>
    %278 = arith.cmpi sge, %3, %277 : vector<1x256xi32>
    %c16_i32_72 = arith.constant 16 : i32
    %279 = vector.broadcast %c16_i32_72 : i32 to vector<1x256xi32>
    %280 = arith.cmpi slt, %3, %279 : vector<1x256xi32>
    %281 = arith.andi %278, %280 : vector<1x256xi1>
    %c16_i32_73 = arith.constant 16 : i32
    %282 = tpu.dynamic_rotate %1 by %c16_i32_73 dim 1 : vector<4x256xf32>, i32 -> vector<4x256xf32>
    %283 = arith.andi %231, %281 : vector<1x256xi1>
    %cst_74 = arith.constant 0.000000e+00 : f32
    %284 = vector.shape_cast %283 : vector<1x256xi1> to vector<1x256xi1>
    %285 = vector.broadcast %284 : vector<1x256xi1> to vector<4x256xi1>
    %286 = vector.broadcast %cst_74 : f32 to vector<4x256xf32>
    %287 = arith.select %285, %282, %286 : vector<4x256xi1>, vector<4x256xf32>
    %c0_75 = arith.constant 0 : index
    %c17 = arith.constant 17 : index
    %288 = vector.load %arg3[%c0_75, %c17] : memref<4x49xf32, #tpu.memory_space<vmem>>, vector<4x1xf32>
    %289 = vector.broadcast %288 : vector<4x1xf32> to vector<4x256xf32>
    %290 = arith.mulf %287, %289 : vector<4x256xf32>
    %291 = arith.addf %276, %290 : vector<4x256xf32>
    %c-1_i32_76 = arith.constant -1 : i32
    %292 = vector.broadcast %c-1_i32_76 : i32 to vector<1x256xi32>
    %293 = arith.cmpi sge, %3, %292 : vector<1x256xi32>
    %c15_i32_77 = arith.constant 15 : i32
    %294 = vector.broadcast %c15_i32_77 : i32 to vector<1x256xi32>
    %295 = arith.cmpi slt, %3, %294 : vector<1x256xi32>
    %296 = arith.andi %293, %295 : vector<1x256xi1>
    %c15_i32_78 = arith.constant 15 : i32
    %297 = tpu.dynamic_rotate %1 by %c15_i32_78 dim 1 : vector<4x256xf32>, i32 -> vector<4x256xf32>
    %298 = arith.andi %231, %296 : vector<1x256xi1>
    %cst_79 = arith.constant 0.000000e+00 : f32
    %299 = vector.shape_cast %298 : vector<1x256xi1> to vector<1x256xi1>
    %300 = vector.broadcast %299 : vector<1x256xi1> to vector<4x256xi1>
    %301 = vector.broadcast %cst_79 : f32 to vector<4x256xf32>
    %302 = arith.select %300, %297, %301 : vector<4x256xi1>, vector<4x256xf32>
    %c0_80 = arith.constant 0 : index
    %c18 = arith.constant 18 : index
    %303 = vector.load %arg3[%c0_80, %c18] : memref<4x49xf32, #tpu.memory_space<vmem>>, vector<4x1xf32>
    %304 = vector.broadcast %303 : vector<4x1xf32> to vector<4x256xf32>
    %305 = arith.mulf %302, %304 : vector<4x256xf32>
    %306 = arith.addf %291, %305 : vector<4x256xf32>
    %c-2_i32_81 = arith.constant -2 : i32
    %307 = vector.broadcast %c-2_i32_81 : i32 to vector<1x256xi32>
    %308 = arith.cmpi sge, %3, %307 : vector<1x256xi32>
    %c14_i32_82 = arith.constant 14 : i32
    %309 = vector.broadcast %c14_i32_82 : i32 to vector<1x256xi32>
    %310 = arith.cmpi slt, %3, %309 : vector<1x256xi32>
    %311 = arith.andi %308, %310 : vector<1x256xi1>
    %c14_i32_83 = arith.constant 14 : i32
    %312 = tpu.dynamic_rotate %1 by %c14_i32_83 dim 1 : vector<4x256xf32>, i32 -> vector<4x256xf32>
    %313 = arith.andi %231, %311 : vector<1x256xi1>
    %cst_84 = arith.constant 0.000000e+00 : f32
    %314 = vector.shape_cast %313 : vector<1x256xi1> to vector<1x256xi1>
    %315 = vector.broadcast %314 : vector<1x256xi1> to vector<4x256xi1>
    %316 = vector.broadcast %cst_84 : f32 to vector<4x256xf32>
    %317 = arith.select %315, %312, %316 : vector<4x256xi1>, vector<4x256xf32>
    %c0_85 = arith.constant 0 : index
    %c19 = arith.constant 19 : index
    %318 = vector.load %arg3[%c0_85, %c19] : memref<4x49xf32, #tpu.memory_space<vmem>>, vector<4x1xf32>
    %319 = vector.broadcast %318 : vector<4x1xf32> to vector<4x256xf32>
    %320 = arith.mulf %317, %319 : vector<4x256xf32>
    %321 = arith.addf %306, %320 : vector<4x256xf32>
    %c-3_i32_86 = arith.constant -3 : i32
    %322 = vector.broadcast %c-3_i32_86 : i32 to vector<1x256xi32>
    %323 = arith.cmpi sge, %3, %322 : vector<1x256xi32>
    %c13_i32_87 = arith.constant 13 : i32
    %324 = vector.broadcast %c13_i32_87 : i32 to vector<1x256xi32>
    %325 = arith.cmpi slt, %3, %324 : vector<1x256xi32>
    %326 = arith.andi %323, %325 : vector<1x256xi1>
    %c13_i32_88 = arith.constant 13 : i32
    %327 = tpu.dynamic_rotate %1 by %c13_i32_88 dim 1 : vector<4x256xf32>, i32 -> vector<4x256xf32>
    %328 = arith.andi %231, %326 : vector<1x256xi1>
    %cst_89 = arith.constant 0.000000e+00 : f32
    %329 = vector.shape_cast %328 : vector<1x256xi1> to vector<1x256xi1>
    %330 = vector.broadcast %329 : vector<1x256xi1> to vector<4x256xi1>
    %331 = vector.broadcast %cst_89 : f32 to vector<4x256xf32>
    %332 = arith.select %330, %327, %331 : vector<4x256xi1>, vector<4x256xf32>
    %c0_90 = arith.constant 0 : index
    %c20 = arith.constant 20 : index
    %333 = vector.load %arg3[%c0_90, %c20] : memref<4x49xf32, #tpu.memory_space<vmem>>, vector<4x1xf32>
    %334 = vector.broadcast %333 : vector<4x1xf32> to vector<4x256xf32>
    %335 = arith.mulf %332, %334 : vector<4x256xf32>
    %336 = arith.addf %321, %335 : vector<4x256xf32>
    %c0_i32_91 = arith.constant 0 : i32
    %337 = vector.broadcast %c0_i32_91 : i32 to vector<1x256xi32>
    %338 = arith.cmpi sge, %2, %337 : vector<1x256xi32>
    %c16_i32_92 = arith.constant 16 : i32
    %339 = vector.broadcast %c16_i32_92 : i32 to vector<1x256xi32>
    %340 = arith.cmpi slt, %2, %339 : vector<1x256xi32>
    %341 = arith.andi %338, %340 : vector<1x256xi1>
    %c3_i32_93 = arith.constant 3 : i32
    %342 = vector.broadcast %c3_i32_93 : i32 to vector<1x256xi32>
    %343 = arith.cmpi sge, %3, %342 : vector<1x256xi32>
    %c19_i32_94 = arith.constant 19 : i32
    %344 = vector.broadcast %c19_i32_94 : i32 to vector<1x256xi32>
    %345 = arith.cmpi slt, %3, %344 : vector<1x256xi32>
    %346 = arith.andi %343, %345 : vector<1x256xi1>
    %c3_i32_95 = arith.constant 3 : i32
    %347 = tpu.dynamic_rotate %1 by %c3_i32_95 dim 1 : vector<4x256xf32>, i32 -> vector<4x256xf32>
    %348 = arith.andi %341, %346 : vector<1x256xi1>
    %cst_96 = arith.constant 0.000000e+00 : f32
    %349 = vector.shape_cast %348 : vector<1x256xi1> to vector<1x256xi1>
    %350 = vector.broadcast %349 : vector<1x256xi1> to vector<4x256xi1>
    %351 = vector.broadcast %cst_96 : f32 to vector<4x256xf32>
    %352 = arith.select %350, %347, %351 : vector<4x256xi1>, vector<4x256xf32>
    %c0_97 = arith.constant 0 : index
    %c21 = arith.constant 21 : index
    %353 = vector.load %arg3[%c0_97, %c21] : memref<4x49xf32, #tpu.memory_space<vmem>>, vector<4x1xf32>
    %354 = vector.broadcast %353 : vector<4x1xf32> to vector<4x256xf32>
    %355 = arith.mulf %352, %354 : vector<4x256xf32>
    %356 = arith.addf %336, %355 : vector<4x256xf32>
    %c2_i32_98 = arith.constant 2 : i32
    %357 = vector.broadcast %c2_i32_98 : i32 to vector<1x256xi32>
    %358 = arith.cmpi sge, %3, %357 : vector<1x256xi32>
    %c18_i32_99 = arith.constant 18 : i32
    %359 = vector.broadcast %c18_i32_99 : i32 to vector<1x256xi32>
    %360 = arith.cmpi slt, %3, %359 : vector<1x256xi32>
    %361 = arith.andi %358, %360 : vector<1x256xi1>
    %c2_i32_100 = arith.constant 2 : i32
    %362 = tpu.dynamic_rotate %1 by %c2_i32_100 dim 1 : vector<4x256xf32>, i32 -> vector<4x256xf32>
    %363 = arith.andi %341, %361 : vector<1x256xi1>
    %cst_101 = arith.constant 0.000000e+00 : f32
    %364 = vector.shape_cast %363 : vector<1x256xi1> to vector<1x256xi1>
    %365 = vector.broadcast %364 : vector<1x256xi1> to vector<4x256xi1>
    %366 = vector.broadcast %cst_101 : f32 to vector<4x256xf32>
    %367 = arith.select %365, %362, %366 : vector<4x256xi1>, vector<4x256xf32>
    %c0_102 = arith.constant 0 : index
    %c22 = arith.constant 22 : index
    %368 = vector.load %arg3[%c0_102, %c22] : memref<4x49xf32, #tpu.memory_space<vmem>>, vector<4x1xf32>
    %369 = vector.broadcast %368 : vector<4x1xf32> to vector<4x256xf32>
    %370 = arith.mulf %367, %369 : vector<4x256xf32>
    %371 = arith.addf %356, %370 : vector<4x256xf32>
    %c1_i32_103 = arith.constant 1 : i32
    %372 = vector.broadcast %c1_i32_103 : i32 to vector<1x256xi32>
    %373 = arith.cmpi sge, %3, %372 : vector<1x256xi32>
    %c17_i32_104 = arith.constant 17 : i32
    %374 = vector.broadcast %c17_i32_104 : i32 to vector<1x256xi32>
    %375 = arith.cmpi slt, %3, %374 : vector<1x256xi32>
    %376 = arith.andi %373, %375 : vector<1x256xi1>
    %c1_i32_105 = arith.constant 1 : i32
    %377 = tpu.dynamic_rotate %1 by %c1_i32_105 dim 1 : vector<4x256xf32>, i32 -> vector<4x256xf32>
    %378 = arith.andi %341, %376 : vector<1x256xi1>
    %cst_106 = arith.constant 0.000000e+00 : f32
    %379 = vector.shape_cast %378 : vector<1x256xi1> to vector<1x256xi1>
    %380 = vector.broadcast %379 : vector<1x256xi1> to vector<4x256xi1>
    %381 = vector.broadcast %cst_106 : f32 to vector<4x256xf32>
    %382 = arith.select %380, %377, %381 : vector<4x256xi1>, vector<4x256xf32>
    %c0_107 = arith.constant 0 : index
    %c23 = arith.constant 23 : index
    %383 = vector.load %arg3[%c0_107, %c23] : memref<4x49xf32, #tpu.memory_space<vmem>>, vector<4x1xf32>
    %384 = vector.broadcast %383 : vector<4x1xf32> to vector<4x256xf32>
    %385 = arith.mulf %382, %384 : vector<4x256xf32>
    %386 = arith.addf %371, %385 : vector<4x256xf32>
    %c0_i32_108 = arith.constant 0 : i32
    %387 = vector.broadcast %c0_i32_108 : i32 to vector<1x256xi32>
    %388 = arith.cmpi sge, %3, %387 : vector<1x256xi32>
    %c16_i32_109 = arith.constant 16 : i32
    %389 = vector.broadcast %c16_i32_109 : i32 to vector<1x256xi32>
    %390 = arith.cmpi slt, %3, %389 : vector<1x256xi32>
    %391 = arith.andi %388, %390 : vector<1x256xi1>
    %392 = arith.andi %341, %391 : vector<1x256xi1>
    %cst_110 = arith.constant 0.000000e+00 : f32
    %393 = vector.shape_cast %392 : vector<1x256xi1> to vector<1x256xi1>
    %394 = vector.broadcast %393 : vector<1x256xi1> to vector<4x256xi1>
    %395 = vector.broadcast %cst_110 : f32 to vector<4x256xf32>
    %396 = arith.select %394, %1, %395 : vector<4x256xi1>, vector<4x256xf32>
    %c0_111 = arith.constant 0 : index
    %c24 = arith.constant 24 : index
    %397 = vector.load %arg3[%c0_111, %c24] : memref<4x49xf32, #tpu.memory_space<vmem>>, vector<4x1xf32>
    %398 = vector.broadcast %397 : vector<4x1xf32> to vector<4x256xf32>
    %399 = arith.mulf %396, %398 : vector<4x256xf32>
    %400 = arith.addf %386, %399 : vector<4x256xf32>
    %c-1_i32_112 = arith.constant -1 : i32
    %401 = vector.broadcast %c-1_i32_112 : i32 to vector<1x256xi32>
    %402 = arith.cmpi sge, %3, %401 : vector<1x256xi32>
    %c15_i32_113 = arith.constant 15 : i32
    %403 = vector.broadcast %c15_i32_113 : i32 to vector<1x256xi32>
    %404 = arith.cmpi slt, %3, %403 : vector<1x256xi32>
    %405 = arith.andi %402, %404 : vector<1x256xi1>
    %c255_i32 = arith.constant 255 : i32
    %406 = tpu.dynamic_rotate %1 by %c255_i32 dim 1 : vector<4x256xf32>, i32 -> vector<4x256xf32>
    %407 = arith.andi %341, %405 : vector<1x256xi1>
    %cst_114 = arith.constant 0.000000e+00 : f32
    %408 = vector.shape_cast %407 : vector<1x256xi1> to vector<1x256xi1>
    %409 = vector.broadcast %408 : vector<1x256xi1> to vector<4x256xi1>
    %410 = vector.broadcast %cst_114 : f32 to vector<4x256xf32>
    %411 = arith.select %409, %406, %410 : vector<4x256xi1>, vector<4x256xf32>
    %c0_115 = arith.constant 0 : index
    %c25 = arith.constant 25 : index
    %412 = vector.load %arg3[%c0_115, %c25] : memref<4x49xf32, #tpu.memory_space<vmem>>, vector<4x1xf32>
    %413 = vector.broadcast %412 : vector<4x1xf32> to vector<4x256xf32>
    %414 = arith.mulf %411, %413 : vector<4x256xf32>
    %415 = arith.addf %400, %414 : vector<4x256xf32>
    %c-2_i32_116 = arith.constant -2 : i32
    %416 = vector.broadcast %c-2_i32_116 : i32 to vector<1x256xi32>
    %417 = arith.cmpi sge, %3, %416 : vector<1x256xi32>
    %c14_i32_117 = arith.constant 14 : i32
    %418 = vector.broadcast %c14_i32_117 : i32 to vector<1x256xi32>
    %419 = arith.cmpi slt, %3, %418 : vector<1x256xi32>
    %420 = arith.andi %417, %419 : vector<1x256xi1>
    %c254_i32 = arith.constant 254 : i32
    %421 = tpu.dynamic_rotate %1 by %c254_i32 dim 1 : vector<4x256xf32>, i32 -> vector<4x256xf32>
    %422 = arith.andi %341, %420 : vector<1x256xi1>
    %cst_118 = arith.constant 0.000000e+00 : f32
    %423 = vector.shape_cast %422 : vector<1x256xi1> to vector<1x256xi1>
    %424 = vector.broadcast %423 : vector<1x256xi1> to vector<4x256xi1>
    %425 = vector.broadcast %cst_118 : f32 to vector<4x256xf32>
    %426 = arith.select %424, %421, %425 : vector<4x256xi1>, vector<4x256xf32>
    %c0_119 = arith.constant 0 : index
    %c26 = arith.constant 26 : index
    %427 = vector.load %arg3[%c0_119, %c26] : memref<4x49xf32, #tpu.memory_space<vmem>>, vector<4x1xf32>
    %428 = vector.broadcast %427 : vector<4x1xf32> to vector<4x256xf32>
    %429 = arith.mulf %426, %428 : vector<4x256xf32>
    %430 = arith.addf %415, %429 : vector<4x256xf32>
    %c-3_i32_120 = arith.constant -3 : i32
    %431 = vector.broadcast %c-3_i32_120 : i32 to vector<1x256xi32>
    %432 = arith.cmpi sge, %3, %431 : vector<1x256xi32>
    %c13_i32_121 = arith.constant 13 : i32
    %433 = vector.broadcast %c13_i32_121 : i32 to vector<1x256xi32>
    %434 = arith.cmpi slt, %3, %433 : vector<1x256xi32>
    %435 = arith.andi %432, %434 : vector<1x256xi1>
    %c253_i32 = arith.constant 253 : i32
    %436 = tpu.dynamic_rotate %1 by %c253_i32 dim 1 : vector<4x256xf32>, i32 -> vector<4x256xf32>
    %437 = arith.andi %341, %435 : vector<1x256xi1>
    %cst_122 = arith.constant 0.000000e+00 : f32
    %438 = vector.shape_cast %437 : vector<1x256xi1> to vector<1x256xi1>
    %439 = vector.broadcast %438 : vector<1x256xi1> to vector<4x256xi1>
    %440 = vector.broadcast %cst_122 : f32 to vector<4x256xf32>
    %441 = arith.select %439, %436, %440 : vector<4x256xi1>, vector<4x256xf32>
    %c0_123 = arith.constant 0 : index
    %c27 = arith.constant 27 : index
    %442 = vector.load %arg3[%c0_123, %c27] : memref<4x49xf32, #tpu.memory_space<vmem>>, vector<4x1xf32>
    %443 = vector.broadcast %442 : vector<4x1xf32> to vector<4x256xf32>
    %444 = arith.mulf %441, %443 : vector<4x256xf32>
    %445 = arith.addf %430, %444 : vector<4x256xf32>
    %c-1_i32_124 = arith.constant -1 : i32
    %446 = vector.broadcast %c-1_i32_124 : i32 to vector<1x256xi32>
    %447 = arith.cmpi sge, %2, %446 : vector<1x256xi32>
    %c15_i32_125 = arith.constant 15 : i32
    %448 = vector.broadcast %c15_i32_125 : i32 to vector<1x256xi32>
    %449 = arith.cmpi slt, %2, %448 : vector<1x256xi32>
    %450 = arith.andi %447, %449 : vector<1x256xi1>
    %c3_i32_126 = arith.constant 3 : i32
    %451 = vector.broadcast %c3_i32_126 : i32 to vector<1x256xi32>
    %452 = arith.cmpi sge, %3, %451 : vector<1x256xi32>
    %c19_i32_127 = arith.constant 19 : i32
    %453 = vector.broadcast %c19_i32_127 : i32 to vector<1x256xi32>
    %454 = arith.cmpi slt, %3, %453 : vector<1x256xi32>
    %455 = arith.andi %452, %454 : vector<1x256xi1>
    %c243_i32 = arith.constant 243 : i32
    %456 = tpu.dynamic_rotate %1 by %c243_i32 dim 1 : vector<4x256xf32>, i32 -> vector<4x256xf32>
    %457 = arith.andi %450, %455 : vector<1x256xi1>
    %cst_128 = arith.constant 0.000000e+00 : f32
    %458 = vector.shape_cast %457 : vector<1x256xi1> to vector<1x256xi1>
    %459 = vector.broadcast %458 : vector<1x256xi1> to vector<4x256xi1>
    %460 = vector.broadcast %cst_128 : f32 to vector<4x256xf32>
    %461 = arith.select %459, %456, %460 : vector<4x256xi1>, vector<4x256xf32>
    %c0_129 = arith.constant 0 : index
    %c28 = arith.constant 28 : index
    %462 = vector.load %arg3[%c0_129, %c28] : memref<4x49xf32, #tpu.memory_space<vmem>>, vector<4x1xf32>
    %463 = vector.broadcast %462 : vector<4x1xf32> to vector<4x256xf32>
    %464 = arith.mulf %461, %463 : vector<4x256xf32>
    %465 = arith.addf %445, %464 : vector<4x256xf32>
    %c2_i32_130 = arith.constant 2 : i32
    %466 = vector.broadcast %c2_i32_130 : i32 to vector<1x256xi32>
    %467 = arith.cmpi sge, %3, %466 : vector<1x256xi32>
    %c18_i32_131 = arith.constant 18 : i32
    %468 = vector.broadcast %c18_i32_131 : i32 to vector<1x256xi32>
    %469 = arith.cmpi slt, %3, %468 : vector<1x256xi32>
    %470 = arith.andi %467, %469 : vector<1x256xi1>
    %c242_i32 = arith.constant 242 : i32
    %471 = tpu.dynamic_rotate %1 by %c242_i32 dim 1 : vector<4x256xf32>, i32 -> vector<4x256xf32>
    %472 = arith.andi %450, %470 : vector<1x256xi1>
    %cst_132 = arith.constant 0.000000e+00 : f32
    %473 = vector.shape_cast %472 : vector<1x256xi1> to vector<1x256xi1>
    %474 = vector.broadcast %473 : vector<1x256xi1> to vector<4x256xi1>
    %475 = vector.broadcast %cst_132 : f32 to vector<4x256xf32>
    %476 = arith.select %474, %471, %475 : vector<4x256xi1>, vector<4x256xf32>
    %c0_133 = arith.constant 0 : index
    %c29 = arith.constant 29 : index
    %477 = vector.load %arg3[%c0_133, %c29] : memref<4x49xf32, #tpu.memory_space<vmem>>, vector<4x1xf32>
    %478 = vector.broadcast %477 : vector<4x1xf32> to vector<4x256xf32>
    %479 = arith.mulf %476, %478 : vector<4x256xf32>
    %480 = arith.addf %465, %479 : vector<4x256xf32>
    %c1_i32_134 = arith.constant 1 : i32
    %481 = vector.broadcast %c1_i32_134 : i32 to vector<1x256xi32>
    %482 = arith.cmpi sge, %3, %481 : vector<1x256xi32>
    %c17_i32_135 = arith.constant 17 : i32
    %483 = vector.broadcast %c17_i32_135 : i32 to vector<1x256xi32>
    %484 = arith.cmpi slt, %3, %483 : vector<1x256xi32>
    %485 = arith.andi %482, %484 : vector<1x256xi1>
    %c241_i32 = arith.constant 241 : i32
    %486 = tpu.dynamic_rotate %1 by %c241_i32 dim 1 : vector<4x256xf32>, i32 -> vector<4x256xf32>
    %487 = arith.andi %450, %485 : vector<1x256xi1>
    %cst_136 = arith.constant 0.000000e+00 : f32
    %488 = vector.shape_cast %487 : vector<1x256xi1> to vector<1x256xi1>
    %489 = vector.broadcast %488 : vector<1x256xi1> to vector<4x256xi1>
    %490 = vector.broadcast %cst_136 : f32 to vector<4x256xf32>
    %491 = arith.select %489, %486, %490 : vector<4x256xi1>, vector<4x256xf32>
    %c0_137 = arith.constant 0 : index
    %c30 = arith.constant 30 : index
    %492 = vector.load %arg3[%c0_137, %c30] : memref<4x49xf32, #tpu.memory_space<vmem>>, vector<4x1xf32>
    %493 = vector.broadcast %492 : vector<4x1xf32> to vector<4x256xf32>
    %494 = arith.mulf %491, %493 : vector<4x256xf32>
    %495 = arith.addf %480, %494 : vector<4x256xf32>
    %c0_i32_138 = arith.constant 0 : i32
    %496 = vector.broadcast %c0_i32_138 : i32 to vector<1x256xi32>
    %497 = arith.cmpi sge, %3, %496 : vector<1x256xi32>
    %c16_i32_139 = arith.constant 16 : i32
    %498 = vector.broadcast %c16_i32_139 : i32 to vector<1x256xi32>
    %499 = arith.cmpi slt, %3, %498 : vector<1x256xi32>
    %500 = arith.andi %497, %499 : vector<1x256xi1>
    %c240_i32 = arith.constant 240 : i32
    %501 = tpu.dynamic_rotate %1 by %c240_i32 dim 1 : vector<4x256xf32>, i32 -> vector<4x256xf32>
    %502 = arith.andi %450, %500 : vector<1x256xi1>
    %cst_140 = arith.constant 0.000000e+00 : f32
    %503 = vector.shape_cast %502 : vector<1x256xi1> to vector<1x256xi1>
    %504 = vector.broadcast %503 : vector<1x256xi1> to vector<4x256xi1>
    %505 = vector.broadcast %cst_140 : f32 to vector<4x256xf32>
    %506 = arith.select %504, %501, %505 : vector<4x256xi1>, vector<4x256xf32>
    %c0_141 = arith.constant 0 : index
    %c31 = arith.constant 31 : index
    %507 = vector.load %arg3[%c0_141, %c31] : memref<4x49xf32, #tpu.memory_space<vmem>>, vector<4x1xf32>
    %508 = vector.broadcast %507 : vector<4x1xf32> to vector<4x256xf32>
    %509 = arith.mulf %506, %508 : vector<4x256xf32>
    %510 = arith.addf %495, %509 : vector<4x256xf32>
    %c-1_i32_142 = arith.constant -1 : i32
    %511 = vector.broadcast %c-1_i32_142 : i32 to vector<1x256xi32>
    %512 = arith.cmpi sge, %3, %511 : vector<1x256xi32>
    %c15_i32_143 = arith.constant 15 : i32
    %513 = vector.broadcast %c15_i32_143 : i32 to vector<1x256xi32>
    %514 = arith.cmpi slt, %3, %513 : vector<1x256xi32>
    %515 = arith.andi %512, %514 : vector<1x256xi1>
    %c239_i32 = arith.constant 239 : i32
    %516 = tpu.dynamic_rotate %1 by %c239_i32 dim 1 : vector<4x256xf32>, i32 -> vector<4x256xf32>
    %517 = arith.andi %450, %515 : vector<1x256xi1>
    %cst_144 = arith.constant 0.000000e+00 : f32
    %518 = vector.shape_cast %517 : vector<1x256xi1> to vector<1x256xi1>
    %519 = vector.broadcast %518 : vector<1x256xi1> to vector<4x256xi1>
    %520 = vector.broadcast %cst_144 : f32 to vector<4x256xf32>
    %521 = arith.select %519, %516, %520 : vector<4x256xi1>, vector<4x256xf32>
    %c0_145 = arith.constant 0 : index
    %c32 = arith.constant 32 : index
    %522 = vector.load %arg3[%c0_145, %c32] : memref<4x49xf32, #tpu.memory_space<vmem>>, vector<4x1xf32>
    %523 = vector.broadcast %522 : vector<4x1xf32> to vector<4x256xf32>
    %524 = arith.mulf %521, %523 : vector<4x256xf32>
    %525 = arith.addf %510, %524 : vector<4x256xf32>
    %c-2_i32_146 = arith.constant -2 : i32
    %526 = vector.broadcast %c-2_i32_146 : i32 to vector<1x256xi32>
    %527 = arith.cmpi sge, %3, %526 : vector<1x256xi32>
    %c14_i32_147 = arith.constant 14 : i32
    %528 = vector.broadcast %c14_i32_147 : i32 to vector<1x256xi32>
    %529 = arith.cmpi slt, %3, %528 : vector<1x256xi32>
    %530 = arith.andi %527, %529 : vector<1x256xi1>
    %c238_i32 = arith.constant 238 : i32
    %531 = tpu.dynamic_rotate %1 by %c238_i32 dim 1 : vector<4x256xf32>, i32 -> vector<4x256xf32>
    %532 = arith.andi %450, %530 : vector<1x256xi1>
    %cst_148 = arith.constant 0.000000e+00 : f32
    %533 = vector.shape_cast %532 : vector<1x256xi1> to vector<1x256xi1>
    %534 = vector.broadcast %533 : vector<1x256xi1> to vector<4x256xi1>
    %535 = vector.broadcast %cst_148 : f32 to vector<4x256xf32>
    %536 = arith.select %534, %531, %535 : vector<4x256xi1>, vector<4x256xf32>
    %c0_149 = arith.constant 0 : index
    %c33 = arith.constant 33 : index
    %537 = vector.load %arg3[%c0_149, %c33] : memref<4x49xf32, #tpu.memory_space<vmem>>, vector<4x1xf32>
    %538 = vector.broadcast %537 : vector<4x1xf32> to vector<4x256xf32>
    %539 = arith.mulf %536, %538 : vector<4x256xf32>
    %540 = arith.addf %525, %539 : vector<4x256xf32>
    %c-3_i32_150 = arith.constant -3 : i32
    %541 = vector.broadcast %c-3_i32_150 : i32 to vector<1x256xi32>
    %542 = arith.cmpi sge, %3, %541 : vector<1x256xi32>
    %c13_i32_151 = arith.constant 13 : i32
    %543 = vector.broadcast %c13_i32_151 : i32 to vector<1x256xi32>
    %544 = arith.cmpi slt, %3, %543 : vector<1x256xi32>
    %545 = arith.andi %542, %544 : vector<1x256xi1>
    %c237_i32 = arith.constant 237 : i32
    %546 = tpu.dynamic_rotate %1 by %c237_i32 dim 1 : vector<4x256xf32>, i32 -> vector<4x256xf32>
    %547 = arith.andi %450, %545 : vector<1x256xi1>
    %cst_152 = arith.constant 0.000000e+00 : f32
    %548 = vector.shape_cast %547 : vector<1x256xi1> to vector<1x256xi1>
    %549 = vector.broadcast %548 : vector<1x256xi1> to vector<4x256xi1>
    %550 = vector.broadcast %cst_152 : f32 to vector<4x256xf32>
    %551 = arith.select %549, %546, %550 : vector<4x256xi1>, vector<4x256xf32>
    %c0_153 = arith.constant 0 : index
    %c34 = arith.constant 34 : index
    %552 = vector.load %arg3[%c0_153, %c34] : memref<4x49xf32, #tpu.memory_space<vmem>>, vector<4x1xf32>
    %553 = vector.broadcast %552 : vector<4x1xf32> to vector<4x256xf32>
    %554 = arith.mulf %551, %553 : vector<4x256xf32>
    %555 = arith.addf %540, %554 : vector<4x256xf32>
    %c-2_i32_154 = arith.constant -2 : i32
    %556 = vector.broadcast %c-2_i32_154 : i32 to vector<1x256xi32>
    %557 = arith.cmpi sge, %2, %556 : vector<1x256xi32>
    %c14_i32_155 = arith.constant 14 : i32
    %558 = vector.broadcast %c14_i32_155 : i32 to vector<1x256xi32>
    %559 = arith.cmpi slt, %2, %558 : vector<1x256xi32>
    %560 = arith.andi %557, %559 : vector<1x256xi1>
    %c3_i32_156 = arith.constant 3 : i32
    %561 = vector.broadcast %c3_i32_156 : i32 to vector<1x256xi32>
    %562 = arith.cmpi sge, %3, %561 : vector<1x256xi32>
    %c19_i32_157 = arith.constant 19 : i32
    %563 = vector.broadcast %c19_i32_157 : i32 to vector<1x256xi32>
    %564 = arith.cmpi slt, %3, %563 : vector<1x256xi32>
    %565 = arith.andi %562, %564 : vector<1x256xi1>
    %c227_i32 = arith.constant 227 : i32
    %566 = tpu.dynamic_rotate %1 by %c227_i32 dim 1 : vector<4x256xf32>, i32 -> vector<4x256xf32>
    %567 = arith.andi %560, %565 : vector<1x256xi1>
    %cst_158 = arith.constant 0.000000e+00 : f32
    %568 = vector.shape_cast %567 : vector<1x256xi1> to vector<1x256xi1>
    %569 = vector.broadcast %568 : vector<1x256xi1> to vector<4x256xi1>
    %570 = vector.broadcast %cst_158 : f32 to vector<4x256xf32>
    %571 = arith.select %569, %566, %570 : vector<4x256xi1>, vector<4x256xf32>
    %c0_159 = arith.constant 0 : index
    %c35 = arith.constant 35 : index
    %572 = vector.load %arg3[%c0_159, %c35] : memref<4x49xf32, #tpu.memory_space<vmem>>, vector<4x1xf32>
    %573 = vector.broadcast %572 : vector<4x1xf32> to vector<4x256xf32>
    %574 = arith.mulf %571, %573 : vector<4x256xf32>
    %575 = arith.addf %555, %574 : vector<4x256xf32>
    %c2_i32_160 = arith.constant 2 : i32
    %576 = vector.broadcast %c2_i32_160 : i32 to vector<1x256xi32>
    %577 = arith.cmpi sge, %3, %576 : vector<1x256xi32>
    %c18_i32_161 = arith.constant 18 : i32
    %578 = vector.broadcast %c18_i32_161 : i32 to vector<1x256xi32>
    %579 = arith.cmpi slt, %3, %578 : vector<1x256xi32>
    %580 = arith.andi %577, %579 : vector<1x256xi1>
    %c226_i32 = arith.constant 226 : i32
    %581 = tpu.dynamic_rotate %1 by %c226_i32 dim 1 : vector<4x256xf32>, i32 -> vector<4x256xf32>
    %582 = arith.andi %560, %580 : vector<1x256xi1>
    %cst_162 = arith.constant 0.000000e+00 : f32
    %583 = vector.shape_cast %582 : vector<1x256xi1> to vector<1x256xi1>
    %584 = vector.broadcast %583 : vector<1x256xi1> to vector<4x256xi1>
    %585 = vector.broadcast %cst_162 : f32 to vector<4x256xf32>
    %586 = arith.select %584, %581, %585 : vector<4x256xi1>, vector<4x256xf32>
    %c0_163 = arith.constant 0 : index
    %c36 = arith.constant 36 : index
    %587 = vector.load %arg3[%c0_163, %c36] : memref<4x49xf32, #tpu.memory_space<vmem>>, vector<4x1xf32>
    %588 = vector.broadcast %587 : vector<4x1xf32> to vector<4x256xf32>
    %589 = arith.mulf %586, %588 : vector<4x256xf32>
    %590 = arith.addf %575, %589 : vector<4x256xf32>
    %c1_i32_164 = arith.constant 1 : i32
    %591 = vector.broadcast %c1_i32_164 : i32 to vector<1x256xi32>
    %592 = arith.cmpi sge, %3, %591 : vector<1x256xi32>
    %c17_i32_165 = arith.constant 17 : i32
    %593 = vector.broadcast %c17_i32_165 : i32 to vector<1x256xi32>
    %594 = arith.cmpi slt, %3, %593 : vector<1x256xi32>
    %595 = arith.andi %592, %594 : vector<1x256xi1>
    %c225_i32 = arith.constant 225 : i32
    %596 = tpu.dynamic_rotate %1 by %c225_i32 dim 1 : vector<4x256xf32>, i32 -> vector<4x256xf32>
    %597 = arith.andi %560, %595 : vector<1x256xi1>
    %cst_166 = arith.constant 0.000000e+00 : f32
    %598 = vector.shape_cast %597 : vector<1x256xi1> to vector<1x256xi1>
    %599 = vector.broadcast %598 : vector<1x256xi1> to vector<4x256xi1>
    %600 = vector.broadcast %cst_166 : f32 to vector<4x256xf32>
    %601 = arith.select %599, %596, %600 : vector<4x256xi1>, vector<4x256xf32>
    %c0_167 = arith.constant 0 : index
    %c37 = arith.constant 37 : index
    %602 = vector.load %arg3[%c0_167, %c37] : memref<4x49xf32, #tpu.memory_space<vmem>>, vector<4x1xf32>
    %603 = vector.broadcast %602 : vector<4x1xf32> to vector<4x256xf32>
    %604 = arith.mulf %601, %603 : vector<4x256xf32>
    %605 = arith.addf %590, %604 : vector<4x256xf32>
    %c0_i32_168 = arith.constant 0 : i32
    %606 = vector.broadcast %c0_i32_168 : i32 to vector<1x256xi32>
    %607 = arith.cmpi sge, %3, %606 : vector<1x256xi32>
    %c16_i32_169 = arith.constant 16 : i32
    %608 = vector.broadcast %c16_i32_169 : i32 to vector<1x256xi32>
    %609 = arith.cmpi slt, %3, %608 : vector<1x256xi32>
    %610 = arith.andi %607, %609 : vector<1x256xi1>
    %c224_i32 = arith.constant 224 : i32
    %611 = tpu.dynamic_rotate %1 by %c224_i32 dim 1 : vector<4x256xf32>, i32 -> vector<4x256xf32>
    %612 = arith.andi %560, %610 : vector<1x256xi1>
    %cst_170 = arith.constant 0.000000e+00 : f32
    %613 = vector.shape_cast %612 : vector<1x256xi1> to vector<1x256xi1>
    %614 = vector.broadcast %613 : vector<1x256xi1> to vector<4x256xi1>
    %615 = vector.broadcast %cst_170 : f32 to vector<4x256xf32>
    %616 = arith.select %614, %611, %615 : vector<4x256xi1>, vector<4x256xf32>
    %c0_171 = arith.constant 0 : index
    %c38 = arith.constant 38 : index
    %617 = vector.load %arg3[%c0_171, %c38] : memref<4x49xf32, #tpu.memory_space<vmem>>, vector<4x1xf32>
    %618 = vector.broadcast %617 : vector<4x1xf32> to vector<4x256xf32>
    %619 = arith.mulf %616, %618 : vector<4x256xf32>
    %620 = arith.addf %605, %619 : vector<4x256xf32>
    %c-1_i32_172 = arith.constant -1 : i32
    %621 = vector.broadcast %c-1_i32_172 : i32 to vector<1x256xi32>
    %622 = arith.cmpi sge, %3, %621 : vector<1x256xi32>
    %c15_i32_173 = arith.constant 15 : i32
    %623 = vector.broadcast %c15_i32_173 : i32 to vector<1x256xi32>
    %624 = arith.cmpi slt, %3, %623 : vector<1x256xi32>
    %625 = arith.andi %622, %624 : vector<1x256xi1>
    %c223_i32 = arith.constant 223 : i32
    %626 = tpu.dynamic_rotate %1 by %c223_i32 dim 1 : vector<4x256xf32>, i32 -> vector<4x256xf32>
    %627 = arith.andi %560, %625 : vector<1x256xi1>
    %cst_174 = arith.constant 0.000000e+00 : f32
    %628 = vector.shape_cast %627 : vector<1x256xi1> to vector<1x256xi1>
    %629 = vector.broadcast %628 : vector<1x256xi1> to vector<4x256xi1>
    %630 = vector.broadcast %cst_174 : f32 to vector<4x256xf32>
    %631 = arith.select %629, %626, %630 : vector<4x256xi1>, vector<4x256xf32>
    %c0_175 = arith.constant 0 : index
    %c39 = arith.constant 39 : index
    %632 = vector.load %arg3[%c0_175, %c39] : memref<4x49xf32, #tpu.memory_space<vmem>>, vector<4x1xf32>
    %633 = vector.broadcast %632 : vector<4x1xf32> to vector<4x256xf32>
    %634 = arith.mulf %631, %633 : vector<4x256xf32>
    %635 = arith.addf %620, %634 : vector<4x256xf32>
    %c-2_i32_176 = arith.constant -2 : i32
    %636 = vector.broadcast %c-2_i32_176 : i32 to vector<1x256xi32>
    %637 = arith.cmpi sge, %3, %636 : vector<1x256xi32>
    %c14_i32_177 = arith.constant 14 : i32
    %638 = vector.broadcast %c14_i32_177 : i32 to vector<1x256xi32>
    %639 = arith.cmpi slt, %3, %638 : vector<1x256xi32>
    %640 = arith.andi %637, %639 : vector<1x256xi1>
    %c222_i32 = arith.constant 222 : i32
    %641 = tpu.dynamic_rotate %1 by %c222_i32 dim 1 : vector<4x256xf32>, i32 -> vector<4x256xf32>
    %642 = arith.andi %560, %640 : vector<1x256xi1>
    %cst_178 = arith.constant 0.000000e+00 : f32
    %643 = vector.shape_cast %642 : vector<1x256xi1> to vector<1x256xi1>
    %644 = vector.broadcast %643 : vector<1x256xi1> to vector<4x256xi1>
    %645 = vector.broadcast %cst_178 : f32 to vector<4x256xf32>
    %646 = arith.select %644, %641, %645 : vector<4x256xi1>, vector<4x256xf32>
    %c0_179 = arith.constant 0 : index
    %c40 = arith.constant 40 : index
    %647 = vector.load %arg3[%c0_179, %c40] : memref<4x49xf32, #tpu.memory_space<vmem>>, vector<4x1xf32>
    %648 = vector.broadcast %647 : vector<4x1xf32> to vector<4x256xf32>
    %649 = arith.mulf %646, %648 : vector<4x256xf32>
    %650 = arith.addf %635, %649 : vector<4x256xf32>
    %c-3_i32_180 = arith.constant -3 : i32
    %651 = vector.broadcast %c-3_i32_180 : i32 to vector<1x256xi32>
    %652 = arith.cmpi sge, %3, %651 : vector<1x256xi32>
    %c13_i32_181 = arith.constant 13 : i32
    %653 = vector.broadcast %c13_i32_181 : i32 to vector<1x256xi32>
    %654 = arith.cmpi slt, %3, %653 : vector<1x256xi32>
    %655 = arith.andi %652, %654 : vector<1x256xi1>
    %c221_i32 = arith.constant 221 : i32
    %656 = tpu.dynamic_rotate %1 by %c221_i32 dim 1 : vector<4x256xf32>, i32 -> vector<4x256xf32>
    %657 = arith.andi %560, %655 : vector<1x256xi1>
    %cst_182 = arith.constant 0.000000e+00 : f32
    %658 = vector.shape_cast %657 : vector<1x256xi1> to vector<1x256xi1>
    %659 = vector.broadcast %658 : vector<1x256xi1> to vector<4x256xi1>
    %660 = vector.broadcast %cst_182 : f32 to vector<4x256xf32>
    %661 = arith.select %659, %656, %660 : vector<4x256xi1>, vector<4x256xf32>
    %c0_183 = arith.constant 0 : index
    %c41 = arith.constant 41 : index
    %662 = vector.load %arg3[%c0_183, %c41] : memref<4x49xf32, #tpu.memory_space<vmem>>, vector<4x1xf32>
    %663 = vector.broadcast %662 : vector<4x1xf32> to vector<4x256xf32>
    %664 = arith.mulf %661, %663 : vector<4x256xf32>
    %665 = arith.addf %650, %664 : vector<4x256xf32>
    %c-3_i32_184 = arith.constant -3 : i32
    %666 = vector.broadcast %c-3_i32_184 : i32 to vector<1x256xi32>
    %667 = arith.cmpi sge, %2, %666 : vector<1x256xi32>
    %c13_i32_185 = arith.constant 13 : i32
    %668 = vector.broadcast %c13_i32_185 : i32 to vector<1x256xi32>
    %669 = arith.cmpi slt, %2, %668 : vector<1x256xi32>
    %670 = arith.andi %667, %669 : vector<1x256xi1>
    %c3_i32_186 = arith.constant 3 : i32
    %671 = vector.broadcast %c3_i32_186 : i32 to vector<1x256xi32>
    %672 = arith.cmpi sge, %3, %671 : vector<1x256xi32>
    %c19_i32_187 = arith.constant 19 : i32
    %673 = vector.broadcast %c19_i32_187 : i32 to vector<1x256xi32>
    %674 = arith.cmpi slt, %3, %673 : vector<1x256xi32>
    %675 = arith.andi %672, %674 : vector<1x256xi1>
    %c211_i32 = arith.constant 211 : i32
    %676 = tpu.dynamic_rotate %1 by %c211_i32 dim 1 : vector<4x256xf32>, i32 -> vector<4x256xf32>
    %677 = arith.andi %670, %675 : vector<1x256xi1>
    %cst_188 = arith.constant 0.000000e+00 : f32
    %678 = vector.shape_cast %677 : vector<1x256xi1> to vector<1x256xi1>
    %679 = vector.broadcast %678 : vector<1x256xi1> to vector<4x256xi1>
    %680 = vector.broadcast %cst_188 : f32 to vector<4x256xf32>
    %681 = arith.select %679, %676, %680 : vector<4x256xi1>, vector<4x256xf32>
    %c0_189 = arith.constant 0 : index
    %c42 = arith.constant 42 : index
    %682 = vector.load %arg3[%c0_189, %c42] : memref<4x49xf32, #tpu.memory_space<vmem>>, vector<4x1xf32>
    %683 = vector.broadcast %682 : vector<4x1xf32> to vector<4x256xf32>
    %684 = arith.mulf %681, %683 : vector<4x256xf32>
    %685 = arith.addf %665, %684 : vector<4x256xf32>
    %c2_i32_190 = arith.constant 2 : i32
    %686 = vector.broadcast %c2_i32_190 : i32 to vector<1x256xi32>
    %687 = arith.cmpi sge, %3, %686 : vector<1x256xi32>
    %c18_i32_191 = arith.constant 18 : i32
    %688 = vector.broadcast %c18_i32_191 : i32 to vector<1x256xi32>
    %689 = arith.cmpi slt, %3, %688 : vector<1x256xi32>
    %690 = arith.andi %687, %689 : vector<1x256xi1>
    %c210_i32 = arith.constant 210 : i32
    %691 = tpu.dynamic_rotate %1 by %c210_i32 dim 1 : vector<4x256xf32>, i32 -> vector<4x256xf32>
    %692 = arith.andi %670, %690 : vector<1x256xi1>
    %cst_192 = arith.constant 0.000000e+00 : f32
    %693 = vector.shape_cast %692 : vector<1x256xi1> to vector<1x256xi1>
    %694 = vector.broadcast %693 : vector<1x256xi1> to vector<4x256xi1>
    %695 = vector.broadcast %cst_192 : f32 to vector<4x256xf32>
    %696 = arith.select %694, %691, %695 : vector<4x256xi1>, vector<4x256xf32>
    %c0_193 = arith.constant 0 : index
    %c43 = arith.constant 43 : index
    %697 = vector.load %arg3[%c0_193, %c43] : memref<4x49xf32, #tpu.memory_space<vmem>>, vector<4x1xf32>
    %698 = vector.broadcast %697 : vector<4x1xf32> to vector<4x256xf32>
    %699 = arith.mulf %696, %698 : vector<4x256xf32>
    %700 = arith.addf %685, %699 : vector<4x256xf32>
    %c1_i32_194 = arith.constant 1 : i32
    %701 = vector.broadcast %c1_i32_194 : i32 to vector<1x256xi32>
    %702 = arith.cmpi sge, %3, %701 : vector<1x256xi32>
    %c17_i32_195 = arith.constant 17 : i32
    %703 = vector.broadcast %c17_i32_195 : i32 to vector<1x256xi32>
    %704 = arith.cmpi slt, %3, %703 : vector<1x256xi32>
    %705 = arith.andi %702, %704 : vector<1x256xi1>
    %c209_i32 = arith.constant 209 : i32
    %706 = tpu.dynamic_rotate %1 by %c209_i32 dim 1 : vector<4x256xf32>, i32 -> vector<4x256xf32>
    %707 = arith.andi %670, %705 : vector<1x256xi1>
    %cst_196 = arith.constant 0.000000e+00 : f32
    %708 = vector.shape_cast %707 : vector<1x256xi1> to vector<1x256xi1>
    %709 = vector.broadcast %708 : vector<1x256xi1> to vector<4x256xi1>
    %710 = vector.broadcast %cst_196 : f32 to vector<4x256xf32>
    %711 = arith.select %709, %706, %710 : vector<4x256xi1>, vector<4x256xf32>
    %c0_197 = arith.constant 0 : index
    %c44 = arith.constant 44 : index
    %712 = vector.load %arg3[%c0_197, %c44] : memref<4x49xf32, #tpu.memory_space<vmem>>, vector<4x1xf32>
    %713 = vector.broadcast %712 : vector<4x1xf32> to vector<4x256xf32>
    %714 = arith.mulf %711, %713 : vector<4x256xf32>
    %715 = arith.addf %700, %714 : vector<4x256xf32>
    %c0_i32_198 = arith.constant 0 : i32
    %716 = vector.broadcast %c0_i32_198 : i32 to vector<1x256xi32>
    %717 = arith.cmpi sge, %3, %716 : vector<1x256xi32>
    %c16_i32_199 = arith.constant 16 : i32
    %718 = vector.broadcast %c16_i32_199 : i32 to vector<1x256xi32>
    %719 = arith.cmpi slt, %3, %718 : vector<1x256xi32>
    %720 = arith.andi %717, %719 : vector<1x256xi1>
    %c208_i32 = arith.constant 208 : i32
    %721 = tpu.dynamic_rotate %1 by %c208_i32 dim 1 : vector<4x256xf32>, i32 -> vector<4x256xf32>
    %722 = arith.andi %670, %720 : vector<1x256xi1>
    %cst_200 = arith.constant 0.000000e+00 : f32
    %723 = vector.shape_cast %722 : vector<1x256xi1> to vector<1x256xi1>
    %724 = vector.broadcast %723 : vector<1x256xi1> to vector<4x256xi1>
    %725 = vector.broadcast %cst_200 : f32 to vector<4x256xf32>
    %726 = arith.select %724, %721, %725 : vector<4x256xi1>, vector<4x256xf32>
    %c0_201 = arith.constant 0 : index
    %c45 = arith.constant 45 : index
    %727 = vector.load %arg3[%c0_201, %c45] : memref<4x49xf32, #tpu.memory_space<vmem>>, vector<4x1xf32>
    %728 = vector.broadcast %727 : vector<4x1xf32> to vector<4x256xf32>
    %729 = arith.mulf %726, %728 : vector<4x256xf32>
    %730 = arith.addf %715, %729 : vector<4x256xf32>
    %c-1_i32_202 = arith.constant -1 : i32
    %731 = vector.broadcast %c-1_i32_202 : i32 to vector<1x256xi32>
    %732 = arith.cmpi sge, %3, %731 : vector<1x256xi32>
    %c15_i32_203 = arith.constant 15 : i32
    %733 = vector.broadcast %c15_i32_203 : i32 to vector<1x256xi32>
    %734 = arith.cmpi slt, %3, %733 : vector<1x256xi32>
    %735 = arith.andi %732, %734 : vector<1x256xi1>
    %c207_i32 = arith.constant 207 : i32
    %736 = tpu.dynamic_rotate %1 by %c207_i32 dim 1 : vector<4x256xf32>, i32 -> vector<4x256xf32>
    %737 = arith.andi %670, %735 : vector<1x256xi1>
    %cst_204 = arith.constant 0.000000e+00 : f32
    %738 = vector.shape_cast %737 : vector<1x256xi1> to vector<1x256xi1>
    %739 = vector.broadcast %738 : vector<1x256xi1> to vector<4x256xi1>
    %740 = vector.broadcast %cst_204 : f32 to vector<4x256xf32>
    %741 = arith.select %739, %736, %740 : vector<4x256xi1>, vector<4x256xf32>
    %c0_205 = arith.constant 0 : index
    %c46 = arith.constant 46 : index
    %742 = vector.load %arg3[%c0_205, %c46] : memref<4x49xf32, #tpu.memory_space<vmem>>, vector<4x1xf32>
    %743 = vector.broadcast %742 : vector<4x1xf32> to vector<4x256xf32>
    %744 = arith.mulf %741, %743 : vector<4x256xf32>
    %745 = arith.addf %730, %744 : vector<4x256xf32>
    %c-2_i32_206 = arith.constant -2 : i32
    %746 = vector.broadcast %c-2_i32_206 : i32 to vector<1x256xi32>
    %747 = arith.cmpi sge, %3, %746 : vector<1x256xi32>
    %c14_i32_207 = arith.constant 14 : i32
    %748 = vector.broadcast %c14_i32_207 : i32 to vector<1x256xi32>
    %749 = arith.cmpi slt, %3, %748 : vector<1x256xi32>
    %750 = arith.andi %747, %749 : vector<1x256xi1>
    %c206_i32 = arith.constant 206 : i32
    %751 = tpu.dynamic_rotate %1 by %c206_i32 dim 1 : vector<4x256xf32>, i32 -> vector<4x256xf32>
    %752 = arith.andi %670, %750 : vector<1x256xi1>
    %cst_208 = arith.constant 0.000000e+00 : f32
    %753 = vector.shape_cast %752 : vector<1x256xi1> to vector<1x256xi1>
    %754 = vector.broadcast %753 : vector<1x256xi1> to vector<4x256xi1>
    %755 = vector.broadcast %cst_208 : f32 to vector<4x256xf32>
    %756 = arith.select %754, %751, %755 : vector<4x256xi1>, vector<4x256xf32>
    %c0_209 = arith.constant 0 : index
    %c47 = arith.constant 47 : index
    %757 = vector.load %arg3[%c0_209, %c47] : memref<4x49xf32, #tpu.memory_space<vmem>>, vector<4x1xf32>
    %758 = vector.broadcast %757 : vector<4x1xf32> to vector<4x256xf32>
    %759 = arith.mulf %756, %758 : vector<4x256xf32>
    %760 = arith.addf %745, %759 : vector<4x256xf32>
    %c-3_i32_210 = arith.constant -3 : i32
    %761 = vector.broadcast %c-3_i32_210 : i32 to vector<1x256xi32>
    %762 = arith.cmpi sge, %3, %761 : vector<1x256xi32>
    %c13_i32_211 = arith.constant 13 : i32
    %763 = vector.broadcast %c13_i32_211 : i32 to vector<1x256xi32>
    %764 = arith.cmpi slt, %3, %763 : vector<1x256xi32>
    %765 = arith.andi %762, %764 : vector<1x256xi1>
    %c205_i32 = arith.constant 205 : i32
    %766 = tpu.dynamic_rotate %1 by %c205_i32 dim 1 : vector<4x256xf32>, i32 -> vector<4x256xf32>
    %767 = arith.andi %670, %765 : vector<1x256xi1>
    %cst_212 = arith.constant 0.000000e+00 : f32
    %768 = vector.shape_cast %767 : vector<1x256xi1> to vector<1x256xi1>
    %769 = vector.broadcast %768 : vector<1x256xi1> to vector<4x256xi1>
    %770 = vector.broadcast %cst_212 : f32 to vector<4x256xf32>
    %771 = arith.select %769, %766, %770 : vector<4x256xi1>, vector<4x256xf32>
    %c0_213 = arith.constant 0 : index
    %c48 = arith.constant 48 : index
    %772 = vector.load %arg3[%c0_213, %c48] : memref<4x49xf32, #tpu.memory_space<vmem>>, vector<4x1xf32>
    %773 = vector.broadcast %772 : vector<4x1xf32> to vector<4x256xf32>
    %774 = arith.mulf %771, %773 : vector<4x256xf32>
    %775 = arith.addf %760, %774 : vector<4x256xf32>
    %c0_214 = arith.constant 0 : index
    %c0_215 = arith.constant 0 : index
    %776 = vector.load %arg5[%c0_214, %c0_215] : memref<32x4xf32, #tpu.memory_space<vmem>>, vector<32x4xf32>
    %cst_216 = arith.constant dense<0.000000e+00> : vector<32x256xf32>
    %777 = tpu.matmul %776, %775, %cst_216 {dimension_numbers = #tpu.dot_dimension_numbers<[1], [0], [0], [1], [0, 0, 1, 1], [], []>} : vector<32x4xf32>, vector<4x256xf32>, vector<32x256xf32> -> vector<32x256xf32>
    %c0_217 = arith.constant 0 : index
    %c0_218 = arith.constant 0 : index
    %778 = vector.load %arg6[%c0_217, %c0_218] : memref<32x1xf32, #tpu.memory_space<vmem>>, vector<32x1xf32>
    %779 = vector.broadcast %778 : vector<32x1xf32> to vector<32x256xf32>
    %780 = arith.addf %777, %779 : vector<32x256xf32>
    %781 = vector.extract_strided_slice %780 {offsets = [0, 0], sizes = [16, 256], strides = [1, 1]} : vector<32x256xf32> to vector<16x256xf32>
    %cst_219 = arith.constant 0.000000e+00 : f32
    %cst_220 = arith.constant 6.000000e+00 : f32
    %782 = vector.broadcast %cst_219 : f32 to vector<16x256xf32>
    %783 = arith.maximumf %782, %781 : vector<16x256xf32>
    %784 = vector.broadcast %cst_220 : f32 to vector<16x256xf32>
    %785 = arith.minimumf %784, %783 : vector<16x256xf32>
    %786 = vector.extract_strided_slice %780 {offsets = [16, 0], sizes = [16, 256], strides = [1, 1]} : vector<32x256xf32> to vector<16x256xf32>
    %787 = arith.mulf %785, %786 : vector<16x256xf32>
    %c0_221 = arith.constant 0 : index
    %c0_222 = arith.constant 0 : index
    %788 = vector.load %arg7[%c0_221, %c0_222] : memref<4x16xf32, #tpu.memory_space<vmem>>, vector<4x16xf32>
    %cst_223 = arith.constant dense<0.000000e+00> : vector<4x256xf32>
    %789 = tpu.matmul %788, %787, %cst_223 {dimension_numbers = #tpu.dot_dimension_numbers<[1], [0], [0], [1], [0, 0, 1, 1], [], []>} : vector<4x16xf32>, vector<16x256xf32>, vector<4x256xf32> -> vector<4x256xf32>
    %c0_224 = arith.constant 0 : index
    %c0_225 = arith.constant 0 : index
    %790 = vector.load %arg8[%c0_224, %c0_225] : memref<4x1xf32, #tpu.memory_space<vmem>>, vector<4x1xf32>
    %791 = vector.broadcast %790 : vector<4x1xf32> to vector<4x256xf32>
    %792 = arith.addf %789, %791 : vector<4x256xf32>
    %793 = vector.shape_cast %792 : vector<4x256xf32> to vector<1x4x256xf32>
    %c0_226 = arith.constant 0 : index
    %c0_227 = arith.constant 0 : index
    %c0_228 = arith.constant 0 : index
    %794 = vector.load %arg9[%c0_226, %c0_227, %c0_228] : memref<1x4x256xf32, #tpu.memory_space<vmem>>, vector<1x4x256xf32>
    tpu.vector_store %arg9[%c0_226, %c0_227, %c0_228], %793 {strides = array<i32>} : memref<1x4x256xf32, #tpu.memory_space<vmem>>, vector<1x4x256xf32>,
    return
  }
  func.func @transform_0(%arg0: i32) -> (i32, i32) {
    %c0_i32 = arith.constant 0 : i32
    %c0_i32_0 = arith.constant 0 : i32
    %c0_i32_1 = arith.constant 0 : i32
    return %c0_i32, %c0_i32_0 : i32, i32
  }
  func.func @transform_1(%arg0: i32) -> (i32, i32, i32) {
    %c0_i32 = arith.constant 0 : i32
    %c0_i32_0 = arith.constant 0 : i32
    %c0_i32_1 = arith.constant 0 : i32
    return %arg0, %c0_i32, %c0_i32_0 : i32, i32, i32
  }
  func.func @transform_2(%arg0: i32) -> (i32, i32) {
    %c0_i32 = arith.constant 0 : i32
    %c0_i32_0 = arith.constant 0 : i32
    %c0_i32_1 = arith.constant 0 : i32
    return %c0_i32, %c0_i32_0 : i32, i32
  }
  func.func @transform_3(%arg0: i32) -> (i32, i32) {
    %c0_i32 = arith.constant 0 : i32
    %c0_i32_0 = arith.constant 0 : i32
    %c0_i32_1 = arith.constant 0 : i32
    return %c0_i32, %c0_i32_0 : i32, i32
  }
  func.func @transform_4(%arg0: i32) -> (i32, i32) {
    %c0_i32 = arith.constant 0 : i32
    %c0_i32_0 = arith.constant 0 : i32
    %c0_i32_1 = arith.constant 0 : i32
    return %c0_i32, %c0_i32_0 : i32, i32
  }
  func.func @transform_5(%arg0: i32) -> (i32, i32) {
    %c0_i32 = arith.constant 0 : i32
    %c0_i32_0 = arith.constant 0 : i32
    %c0_i32_1 = arith.constant 0 : i32
    return %c0_i32, %c0_i32_0 : i32, i32
  }
  func.func @transform_6(%arg0: i32) -> (i32, i32) {
    %c0_i32 = arith.constant 0 : i32
    %c0_i32_0 = arith.constant 0 : i32
    %c0_i32_1 = arith.constant 0 : i32
    return %c0_i32, %c0_i32_0 : i32, i32
  }
  func.func @transform_7(%arg0: i32) -> (i32, i32) {
    %c0_i32 = arith.constant 0 : i32
    %c0_i32_0 = arith.constant 0 : i32
    %c0_i32_1 = arith.constant 0 : i32
    return %c0_i32, %c0_i32_0 : i32, i32
  }
  func.func @transform_8(%arg0: i32) -> (i32, i32, i32) {
    %c0_i32 = arith.constant 0 : i32
    %c0_i32_0 = arith.constant 0 : i32
    %c0_i32_1 = arith.constant 0 : i32
    return %arg0, %c0_i32, %c0_i32_0 : i32, i32, i32
  }
}

</mosaic_0001>

<llo_original>
// kernel: star_block_forward.3
$region0: #{star_block_forward.3}
  #allocation0 [shape = 'u32[]', space=smem, size = 0x4, offset = 0x4, fixed_abs, tag = 'smem constant byte address 0x4 - core index']
  #allocation1 [shape = 'u32[144,128]{1,0:T(1,128)}', space=vmem, size = 0x12000, scoped, tag = 'internal scratch']
  #allocation2 [shape = 's32[1]{0}', space=sflag, size = 0x4, scoped, tag = 'scoped memory for star_block_forward.3']
  #allocation3 [shape = 'u8[512]{0}', space=smem, size = 0x200, scoped, tag = 'prefetched SMEM operand 0']
  %s0 = inlined_call_operand.vmem [shape: f32[2], index: 0, kind: input, shape index: {}]
  %s1 = inlined_call_operand.vmem [shape: s32[2,256], index: 1, kind: input, shape index: {}]
  %s2 = inlined_call_operand.vmem [shape: f32[2,4,256], index: 2, kind: input, shape index: {}]
  %s3 = inlined_call_operand.vmem [shape: f32[4,49], index: 3, kind: input, shape index: {}]
  %s4 = inlined_call_operand.vmem [shape: f32[4,1], index: 4, kind: input, shape index: {}]
  %s5 = inlined_call_operand.vmem [shape: f32[2,4,256], index: 5, kind: input, shape index: {}]
  %s6 = inlined_call_operand.vmem [shape: f32[2,4,256], index: 6, kind: output, shape index: {}]
  %s7 = sld [smem:[#allocation0]]
  $region53: #{star_block_forward.3} parent=0
    _
  %s9 = ssub.s32 1, %s7
  %s10 = scalar_select 0, %s9, %s7
  %s11 = sshll.u32 %s0, 4
  %s12 = int_to_ptr.vmem [resolvable:$true] %s11
  %14 = dma.vmem_to_smem %s12, 16, [#allocation3], [#allocation2]
  %15 = dma.done [#allocation2], 16
  %16 = sfence
  loop: start=0, step=1, limit=4
  $region2: #{star_block_forward.3} parent=0 // loop_pre_header
    _
  $region3: #{star_block_forward.3} parent=0 // loop_header
    %s18 = sphi 0, %s22
    %p19 = scmp.ge.s32.totalorder %s18, 4
    %s25 = sphi 0, %s37
    %s26 = sphi 0, %s33
    %s27 = sphi 0, %s25
    %s28 = sphi 0, %s26
    %s29 = sphi 0, %s27
    %s30 = sphi 0, %s28
    %s38 = sphi 0, %s38
    %s40 = sphi 0, %s38
    %s41 = sphi 0, %s40
    %s55 = sphi 0, %s41
    %s63 = sphi 0, %s65
    %s66 = sphi 0, %s63
    %s67 = sphi 0, %s66
    %s83 = sphi 0, %s67
    %s89 = sphi 0, %s91
    %s92 = sphi 0, %s89
    %s93 = sphi 0, %s92
    %s109 = sphi 0, %s93
    %s115 = sphi 0, %s117
    %s118 = sphi 0, %s115
    %s119 = sphi 0, %s118
    %s135 = sphi 0, %s119
    %s143 = sphi 0, %s145
    %s146 = sphi 0, %s143
    %s147 = sphi 0, %s146
    %s163 = sphi 0, %s147
    %s171 = sphi 0, %s173
    %s174 = sphi 0, %s171
    %s175 = sphi 0, %s174
    %s191 = sphi 0, %s175
  $region4: #{star_block_forward.3} parent=0 // loop_header_branch
    %21 = sbr.rel (%p19) target = $region8
  $region5: #{star_block_forward.3} parent=0 // loop_body
    %s23 = ssub.s32 %s18, 1
    %s24 = ssub.s32 %s18, 2
    %s31 = sadd.s32 1, %s26
    %p32 = scmp.ge.s32.totalorder %s31, 1
    %s33 = scalar_select %p32, 0, %s31
    %s34 = sadd.s32 1, %s25
    %s35 = scalar_select %p32, %s34, %s25
    %p36 = scmp.ge.s32.totalorder %s35, 2
    %s37 = scalar_select %p36, 0, %s35
    %s39 = sadd.s32 %s38, 1
    %p42 = scmp.eq.s32.totalorder %s18, 1
    %p43 = scmp.ne.s32.totalorder %s38, %s40
    %p44 = scmp.eq.s32.totalorder %s18, 0
    %p45 = por %p43, %p44
    %p46 = scmp.ne.s32.totalorder %s38, %s40
    %p47 = scmp.eq.s32.totalorder %s23, 1
    %p48 = por %p46, %p47
    %p49 = scmp.ne.s32.totalorder %s40, %s41
    %p50 = scmp.eq.s32.totalorder %s23, 0
    %p51 = por %p49, %p50
    %p52 = scmp.ne.s32.totalorder %s40, %s41
    %p53 = scmp.eq.s32.totalorder %s24, 1
    %p54 = por %p52, %p53
    %p56 = scmp.ne.s32.totalorder %s41, %s55
    %p57 = scmp.eq.s32.totalorder %s24, 0
    %p58 = por %p56, %p57
    %s59 = ssub.s32 %s25, %s37
    %s60 = ssub.s32 %s26, %s33
    %s61 = sor.u32 %s59, %s60
    %p62 = scmp.eq.s32.totalorder %s61, 0
    %s64 = sadd.s32 %s63, 1
    %s65 = scalar_select %p62, %s63, %s64
    %p68 = pneg %p62
    %p69 = scmp.eq.s32.totalorder %s18, 1
    %p70 = por %p68, %p69
    %p71 = scmp.ne.s32.totalorder %s63, %s66
    %p72 = scmp.eq.s32.totalorder %s18, 0
    %p73 = por %p71, %p72
    %p74 = scmp.ne.s32.totalorder %s63, %s66
    %p75 = scmp.eq.s32.totalorder %s23, 1
    %p76 = por %p74, %p75
    %p77 = scmp.ne.s32.totalorder %s66, %s67
    %p78 = scmp.eq.s32.totalorder %s23, 0
    %p79 = por %p77, %p78
    %p80 = scmp.ne.s32.totalorder %s66, %s67
    %p81 = scmp.eq.s32.totalorder %s24, 1
    %p82 = por %p80, %p81
    %p84 = scmp.ne.s32.totalorder %s67, %s83
    %p85 = scmp.eq.s32.totalorder %s24, 0
    %p86 = por %p84, %p85
    %s87 = ssub.s32 %s26, %s33
    %p88 = scmp.eq.s32.totalorder %s87, 0
    %s90 = sadd.s32 %s89, 1
    %s91 = scalar_select %p88, %s89, %s90
    %p94 = pneg %p88
    %p95 = scmp.eq.s32.totalorder %s18, 1
    %p96 = por %p94, %p95
    %p97 = scmp.ne.s32.totalorder %s89, %s92
    %p98 = scmp.eq.s32.totalorder %s18, 0
    %p99 = por %p97, %p98
    %p100 = scmp.ne.s32.totalorder %s89, %s92
    %p101 = scmp.eq.s32.totalorder %s23, 1
    %p102 = por %p100, %p101
    %p103 = scmp.ne.s32.totalorder %s92, %s93
    %p104 = scmp.eq.s32.totalorder %s23, 0
    %p105 = por %p103, %p104
    %p106 = scmp.ne.s32.totalorder %s92, %s93
    %p107 = scmp.eq.s32.totalorder %s24, 1
    %p108 = por %p106, %p107
    %p110 = scmp.ne.s32.totalorder %s93, %s109
    %p111 = scmp.eq.s32.totalorder %s24, 0
    %p112 = por %p110, %p111
    %s113 = ssub.s32 %s26, %s33
    %p114 = scmp.eq.s32.totalorder %s113, 0
    %s116 = sadd.s32 %s115, 1
    %s117 = scalar_select %p114, %s115, %s116
    %p120 = pneg %p114
    %p121 = scmp.eq.s32.totalorder %s18, 1
    %p122 = por %p120, %p121
    %p123 = scmp.ne.s32.totalorder %s115, %s118
    %p124 = scmp.eq.s32.totalorder %s18, 0
    %p125 = por %p123, %p124
    %p126 = scmp.ne.s32.totalorder %s115, %s118
    %p127 = scmp.eq.s32.totalorder %s23, 1
    %p128 = por %p126, %p127
    %p129 = scmp.ne.s32.totalorder %s118, %s119
    %p130 = scmp.eq.s32.totalorder %s23, 0
    %p131 = por %p129, %p130
    %p132 = scmp.ne.s32.totalorder %s118, %s119
    %p133 = scmp.eq.s32.totalorder %s24, 1
    %p134 = por %p132, %p133
    %p136 = scmp.ne.s32.totalorder %s119, %s135
    %p137 = scmp.eq.s32.totalorder %s24, 0
    %p138 = por %p136, %p137
    %s139 = ssub.s32 %s25, %s37
    %s140 = ssub.s32 %s26, %s33
    %s141 = sor.u32 %s139, %s140
    %p142 = scmp.eq.s32.totalorder %s141, 0
    %s144 = sadd.s32 %s143, 1
    %s145 = scalar_select %p142, %s143, %s144
    %p148 = pneg %p142
    %p149 = scmp.eq.s32.totalorder %s18, 1
    %p150 = por %p148, %p149
    %p151 = scmp.ne.s32.totalorder %s143, %s146
    %p152 = scmp.eq.s32.totalorder %s18, 0
    %p153 = por %p151, %p152
    %p154 = scmp.ne.s32.totalorder %s143, %s146
    %p155 = scmp.eq.s32.totalorder %s23, 1
    %p156 = por %p154, %p155
    %p157 = scmp.ne.s32.totalorder %s146, %s147
    %p158 = scmp.eq.s32.totalorder %s23, 0
    %p159 = por %p157, %p158
    %p160 = scmp.ne.s32.totalorder %s146, %s147
    %p161 = scmp.eq.s32.totalorder %s24, 1
    %p162 = por %p160, %p161
    %p164 = scmp.ne.s32.totalorder %s147, %s163
    %p165 = scmp.eq.s32.totalorder %s24, 0
    %p166 = por %p164, %p165
    %s167 = ssub.s32 %s25, %s37
    %s168 = ssub.s32 %s26, %s33
    %s169 = sor.u32 %s167, %s168
    %p170 = scmp.eq.s32.totalorder %s169, 0
    %s172 = sadd.s32 %s171, 1
    %s173 = scalar_select %p170, %s171, %s172
    %p176 = pneg %p170
    %p177 = scmp.eq.s32.totalorder %s18, 1
    %p178 = por %p176, %p177
    %p179 = scmp.ne.s32.totalorder %s171, %s174
    %p180 = scmp.eq.s32.totalorder %s18, 0
    %p181 = por %p179, %p180
    %p182 = scmp.ne.s32.totalorder %s171, %s174
    %p183 = scmp.eq.s32.totalorder %s23, 1
    %p184 = por %p182, %p183
    %p185 = scmp.ne.s32.totalorder %s174, %s175
    %p186 = scmp.eq.s32.totalorder %s23, 0
    %p187 = por %p185, %p186
    %p188 = scmp.ne.s32.totalorder %s174, %s175
    %p189 = scmp.eq.s32.totalorder %s24, 1
    %p190 = por %p188, %p189
    %p192 = scmp.ne.s32.totalorder %s175, %s191
    %p193 = scmp.eq.s32.totalorder %s24, 0
    %p194 = por %p192, %p193
    %p195 = scmp.le.s32.totalorder 1, %s18
    %p196 = scmp.lt.s32.totalorder %s18, 3
    %p197 = pnand %p195, %p196
    %p198 = pneg %p197
    // Predicated region
    $region9: #{star_block_forward.3} parent=5 // pred_check
      _
    $region10: #{star_block_forward.3} parent=5 // pred_check_branch
      %200 = sbr.rel (%p197) target = $region12
    $region11: #{star_block_forward.3} parent=5 // pred_region
      %s201 = ssub.s32 %s18, 1
      // Predicated region
      $region13: #{star_block_forward.3} parent=11 // pred_check
        %p202 = pneg %p51
      $region14: #{star_block_forward.3} parent=11 // pred_check_branch
        %204 = sbr.rel (%p202) target = $region16
      $region15: #{star_block_forward.3} parent=11 // pred_region
        _
      $region16: #{star_block_forward.3} parent=11 // pred_fallthru
        _
      // Predicated region
      $region17: #{star_block_forward.3} parent=11 // pred_check
        %p205 = pneg %p105
      $region18: #{star_block_forward.3} parent=11 // pred_check_branch
        %207 = sbr.rel (%p205) target = $region20
      $region19: #{star_block_forward.3} parent=11 // pred_region
        %p208 = scmp.lt.s32.totalorder %s28, 0
        %s209 = scalar_select %p208, %s28, 0
        %s210 = smul.addr %s209, 4
        %s211 = scalar_lea.vmem %s3, %s210
      $region20: #{star_block_forward.3} parent=11 // pred_fallthru
        _
      // Predicated region
      $region21: #{star_block_forward.3} parent=11 // pred_check
        %p212 = pneg %p131
      $region22: #{star_block_forward.3} parent=11 // pred_check_branch
        %214 = sbr.rel (%p212) target = $region24
      $region23: #{star_block_forward.3} parent=11 // pred_region
        %p215 = scmp.lt.s32.totalorder %s28, 0
        %s216 = scalar_select %p215, %s28, 0
        %s217 = smul.addr %s216, 4
        %s218 = scalar_lea.vmem %s4, %s217
      $region24: #{star_block_forward.3} parent=11 // pred_fallthru
        _
    $region12: #{star_block_forward.3} parent=5 // pred_fallthru
      _
    %p219 = scmp.lt.s32.totalorder %s18, 2
    // Predicated region
    $region25: #{star_block_forward.3} parent=5 // pred_check
      %p220 = pneg %p219
    $region26: #{star_block_forward.3} parent=5 // pred_check_branch
      %222 = sbr.rel (%p220) target = $region28
    $region27: #{star_block_forward.3} parent=5 // pred_region
      // Predicated region
      $region29: #{star_block_forward.3} parent=27 // pred_check
        %p223 = pneg %p73
      $region30: #{star_block_forward.3} parent=27 // pred_check_branch
        %225 = sbr.rel (%p223) target = $region32
      $region31: #{star_block_forward.3} parent=27 // pred_region
        %p226 = scmp.lt.s32.totalorder %s25, 1
        %s227 = scalar_select %p226, %s25, 1
        %p228 = scmp.lt.s32.totalorder %s26, 0
        %s229 = scalar_select %p228, %s26, 0
        %s230 = smul.addr %s229, 2
        %s231 = smul.addr %s227, 2
        %s232 = sadd.s32 %s230, %s231
        %s233 = smul.addr %s232, 4
        %s234 = scalar_lea.vmem %s2, %s233
      $region32: #{star_block_forward.3} parent=27 // pred_fallthru
        _
      // Predicated region
      $region33: #{star_block_forward.3} parent=27 // pred_check
        %p235 = pneg %p153
      $region34: #{star_block_forward.3} parent=27 // pred_check_branch
        %237 = sbr.rel (%p235) target = $region36
      $region35: #{star_block_forward.3} parent=27 // pred_region
        %p238 = scmp.lt.s32.totalorder %s25, 1
        %s239 = scalar_select %p238, %s25, 1
        %p240 = scmp.lt.s32.totalorder %s26, 0
        %s241 = scalar_select %p240, %s26, 0
        %s242 = smul.addr %s241, 2
        %s243 = smul.addr %s239, 2
        %s244 = sadd.s32 %s242, %s243
        %s245 = smul.addr %s244, 4
        %s246 = scalar_lea.vmem %s5, %s245
      $region36: #{star_block_forward.3} parent=27 // pred_fallthru
        _
    $region28: #{star_block_forward.3} parent=5 // pred_fallthru
      _
    %p247 = scmp.le.s32.totalorder 1, %s18
    %p248 = scmp.lt.s32.totalorder %s18, 3
    %p249 = pnand %p247, %p248
    %p250 = pneg %p249
    // Predicated region
    $region37: #{star_block_forward.3} parent=5 // pred_check
      _
    $region38: #{star_block_forward.3} parent=5 // pred_check_branch
      %252 = sbr.rel (%p249) target = $region40
    $region39: #{star_block_forward.3} parent=5 // pred_region
      %s253 = ssub.s32 %s18, 1
      %p254 = pneg %p51
      %p255 = pneg %p48
      %p256 = scmp.lt.s32.totalorder %s27, 1
      %s257 = scalar_select %p256, %s27, 1
      %p258 = scmp.lt.s32.totalorder %s28, 0
      %s259 = scalar_select %p258, %s28, 0
      %s260 = smul.addr %s259, 2
      %s261 = smul.addr %s257, 2
      %s262 = sadd.s32 %s260, %s261
      %s263 = smul.addr %s262, 4
      %s264 = scalar_lea.vmem %s2, %s263
      %p265 = pneg %p79
      %p266 = pneg %p76
      %p267 = scmp.lt.s32.totalorder %s28, 0
      %s268 = scalar_select %p267, %s28, 0
      %s269 = smul.addr %s268, 4
      %s270 = scalar_lea.vmem %s3, %s269
      %p271 = pneg %p105
      %p272 = pneg %p102
      %p273 = scmp.lt.s32.totalorder %s28, 0
      %s274 = scalar_select %p273, %s28, 0
      %s275 = smul.addr %s274, 4
      %s276 = scalar_lea.vmem %s4, %s275
      %p277 = pneg %p131
      %p278 = pneg %p128
      %p279 = scmp.lt.s32.totalorder %s27, 1
      %s280 = scalar_select %p279, %s27, 1
      %p281 = scmp.lt.s32.totalorder %s28, 0
      %s282 = scalar_select %p281, %s28, 0
      %s283 = smul.addr %s282, 2
      %s284 = smul.addr %s280, 2
      %s285 = sadd.s32 %s283, %s284
      %s286 = smul.addr %s285, 4
      %s287 = scalar_lea.vmem %s5, %s286
      %p288 = pneg %p159
      %p289 = pneg %p156
      %p290 = pneg %p187
      %p291 = pneg %p184
      %p292 = scmp.lt.s32.totalorder %s27, 1
      %s293 = scalar_select %p292, %s27, 1
      %p294 = scmp.lt.s32.totalorder %s28, 0
      %s295 = scalar_select %p294, %s28, 0
      %s296 = smul.addr %s295, 2
      %s297 = smul.addr %s293, 2
      %s298 = sadd.s32 %s296, %s297
      %s299 = smul.addr %s298, 4
      %s300 = scalar_lea.vmem %s6, %s299
      %p301 = scmp.lt.s32.totalorder %s27, 1
      %s302 = scalar_select %p301, %s27, 1
      %p303 = scmp.lt.s32.totalorder %s28, 0
      %s304 = scalar_select %p303, %s28, 0
      %s305 = smul.addr %s304, 2
      %s306 = smul.addr %s302, 2
      %s307 = sadd.s32 %s305, %s306
      %s308 = smul.addr %s307, 4
      %s309 = scalar_lea.vmem %s2, %s308
      %p310 = scmp.lt.s32.totalorder %s28, 0
      %s311 = scalar_select %p310, %s28, 0
      %s312 = smul.addr %s311, 4
      %s313 = scalar_lea.vmem %s3, %s312
      %p314 = scmp.lt.s32.totalorder %s28, 0
      %s315 = scalar_select %p314, %s28, 0
      %s316 = smul.addr %s315, 4
      %s317 = scalar_lea.vmem %s4, %s316
      %p318 = scmp.lt.s32.totalorder %s27, 1
      %s319 = scalar_select %p318, %s27, 1
      %p320 = scmp.lt.s32.totalorder %s28, 0
      %s321 = scalar_select %p320, %s28, 0
      %s322 = smul.addr %s321, 2
      %s323 = smul.addr %s319, 2
      %s324 = sadd.s32 %s322, %s323
      %s325 = smul.addr %s324, 4
      %s326 = scalar_lea.vmem %s5, %s325
      %p327 = scmp.lt.s32.totalorder %s27, 1
      %s328 = scalar_select %p327, %s27, 1
      %p329 = scmp.lt.s32.totalorder %s28, 0
      %s330 = scalar_select %p329, %s28, 0
      %s331 = smul.addr %s330, 2
      %s332 = smul.addr %s328, 2
      %s333 = sadd.s32 %s331, %s332
      %s334 = smul.addr %s333, 4
      %s335 = scalar_lea.vmem %s6, %s334
      %s336 = sld [smem:[#allocation3 + %s27]]
      %v337 = vld [vmem:[%s309] sm:$0xff]
      %v338 = vld [vmem:[%s1] ss:$2 sm:$0x3]
      %s339 = scalar_lea.vmem %s1, 1
      %v340 = vld [vmem:[%s339] ss:$2 sm:$0x3]
      %v341 = vld [vmem:[%s317] sm:$0xf]
      %343 = vset.pattern.permute.xlu0 0
      %344 = vperm.xlu0 %343, %v341
      %v345 = vpop.permute.xlu0 %344
      %vm347 = vcmp.ge.s32.totalorder %v338, 3
      %vm348 = vcmp.lt.s32.totalorder %v338, 19
      %vm349 = vmand %vm347, %vm348
      %vm350 = vcmp.ge.s32.totalorder %v340, 3
      %vm351 = vcmp.lt.s32.totalorder %v340, 19
      %vm352 = vmand %vm350, %vm351
      %v354 = vcombine.high %v337, %v337
      %356 = vrot.lane.b32.xlu0 %v337, 51
      %v357 = vpop.permute.xlu0 %356
      %358 = vrot.lane.b32.xlu0 %v354, 51
      %v359 = vpop.permute.xlu0 %358
      %v360 = vlaneseq
      %v361 = vand.u32 %v360, 127
      %vm362 = vcmp.lt.s32.totalorder %v361, 51
      %v363 = vsel %vm362, %v357, %v359
      %v364 = vsel %vm362, %v359, %v357
      %vm365 = vmand %vm349, %vm352
      %v366 = vsel %vm365, 1, 0
      %v367 = vlaneseq
      %v368 = vshrl.u32 %v367, 7
      %v369 = vsub.s32 0, %v368
      %v370 = vrot.slane %v366, %v369
      %v371 = vlaneseq
      %v372 = vshrl.u32 %v371, 7
      %v373 = vsub.s32 1, %v372
      %v374 = vrot.slane %v366, %v373
      %vm375 = vcmp.eq.s32.totalorder %v370, 1
      %vm376 = vcmp.eq.s32.totalorder %v374, 1
      %v377 = vsel %vm375, %v364, 0.0
      %v378 = vsel %vm376, %v363, 0.0
      %v379 = vld [vmem:[%s313] sm:$0xf]
      %381 = vset.pattern.permute.xlu0 0
      %382 = vperm.xlu0 %381, %v379
      %v383 = vpop.permute.xlu0 %382
      %v385 = vmul.f32 %v377, %v383
      %v386 = vmul.f32 %v378, %v383
      %v387 = vadd.f32 %v345, %v385
      %v388 = vadd.f32 %v345, %v386
      %vm389 = vcmp.ge.s32.totalorder %v340, 2
      %vm390 = vcmp.lt.s32.totalorder %v340, 18
      %vm391 = vmand %vm389, %vm390
      %392 = vrot.lane.b32.xlu0 %v337, 50
      %v393 = vpop.permute.xlu0 %392
      %394 = vrot.lane.b32.xlu0 %v354, 50
      %v395 = vpop.permute.xlu0 %394
      %vm396 = vcmp.lt.s32.totalorder %v361, 50
      %v397 = vsel %vm396, %v393, %v395
      %v398 = vsel %vm396, %v395, %v393
      %vm399 = vmand %vm349, %vm391
      %v400 = vsel %vm399, 1, 0
      %v401 = vlaneseq
      %v402 = vshrl.u32 %v401, 7
      %v403 = vsub.s32 0, %v402
      %v404 = vrot.slane %v400, %v403
      %v405 = vlaneseq
      %v406 = vshrl.u32 %v405, 7
      %v407 = vsub.s32 1, %v406
      %v408 = vrot.slane %v400, %v407
      %vm409 = vcmp.eq.s32.totalorder %v404, 1
      %vm410 = vcmp.eq.s32.totalorder %v408, 1
      %v411 = vsel %vm409, %v398, 0.0
      %v412 = vsel %vm410, %v397, 0.0
      %v413 = vld [vmem:[%s313] sm:$0xf]
      %415 = vset.pattern.permute.xlu0 1
      %416 = vperm.xlu0 %415, %v413
      %v417 = vpop.permute.xlu0 %416
      %v419 = vmul.f32 %v411, %v417
      %v420 = vmul.f32 %v412, %v417
      %v421 = vadd.f32 %v387, %v419
      %v422 = vadd.f32 %v388, %v420
      %vm423 = vcmp.ge.s32.totalorder %v340, 1
      %vm424 = vcmp.lt.s32.totalorder %v340, 17
      %vm425 = vmand %vm423, %vm424
      %426 = vrot.lane.b32.xlu0 %v337, 49
      %v427 = vpop.permute.xlu0 %426
      %428 = vrot.lane.b32.xlu0 %v354, 49
      %v429 = vpop.permute.xlu0 %428
      %vm430 = vcmp.lt.s32.totalorder %v361, 49
      %v431 = vsel %vm430, %v427, %v429
      %v432 = vsel %vm430, %v429, %v427
      %vm433 = vmand %vm349, %vm425
      %v434 = vsel %vm433, 1, 0
      %v435 = vlaneseq
      %v436 = vshrl.u32 %v435, 7
      %v437 = vsub.s32 0, %v436
      %v438 = vrot.slane %v434, %v437
      %v439 = vlaneseq
      %v440 = vshrl.u32 %v439, 7
      %v441 = vsub.s32 1, %v440
      %v442 = vrot.slane %v434, %v441
      %vm443 = vcmp.eq.s32.totalorder %v438, 1
      %vm444 = vcmp.eq.s32.totalorder %v442, 1
      %v445 = vsel %vm443, %v432, 0.0
      %v446 = vsel %vm444, %v431, 0.0
      %v447 = vld [vmem:[%s313] sm:$0xf]
      %449 = vset.pattern.permute.xlu0 2
      %450 = vperm.xlu0 %449, %v447
      %v451 = vpop.permute.xlu0 %450
      %v453 = vmul.f32 %v445, %v451
      %v454 = vmul.f32 %v446, %v451
      %v455 = vadd.f32 %v421, %v453
      %v456 = vadd.f32 %v422, %v454
      %vm457 = vcmp.ge.s32.totalorder %v340, 0
      %vm458 = vcmp.lt.s32.totalorder %v340, 16
      %vm459 = vmand %vm457, %vm458
      %460 = vrot.lane.b32.xlu0 %v337, 48
      %v461 = vpop.permute.xlu0 %460
      %462 = vrot.lane.b32.xlu0 %v354, 48
      %v463 = vpop.permute.xlu0 %462
      %vm464 = vcmp.lt.s32.totalorder %v361, 48
      %v465 = vsel %vm464, %v461, %v463
      %v466 = vsel %vm464, %v463, %v461
      %vm467 = vmand %vm349, %vm459
      %v468 = vsel %vm467, 1, 0
      %v469 = vlaneseq
      %v470 = vshrl.u32 %v469, 7
      %v471 = vsub.s32 0, %v470
      %v472 = vrot.slane %v468, %v471
      %v473 = vlaneseq
      %v474 = vshrl.u32 %v473, 7
      %v475 = vsub.s32 1, %v474
      %v476 = vrot.slane %v468, %v475
      %vm477 = vcmp.eq.s32.totalorder %v472, 1
      %vm478 = vcmp.eq.s32.totalorder %v476, 1
      %v479 = vsel %vm477, %v466, 0.0
      %v480 = vsel %vm478, %v465, 0.0
      %v481 = vld [vmem:[%s313] sm:$0xf]
      %483 = vset.pattern.permute.xlu0 3
      %484 = vperm.xlu0 %483, %v481
      %v485 = vpop.permute.xlu0 %484
      %v487 = vmul.f32 %v479, %v485
      %v488 = vmul.f32 %v480, %v485
      %v489 = vadd.f32 %v455, %v487
      %v490 = vadd.f32 %v456, %v488
      %vm491 = vcmp.ge.s32.totalorder %v340, 4294967295
      %vm492 = vcmp.lt.s32.totalorder %v340, 15
      %vm493 = vmand %vm491, %vm492
      %494 = vrot.lane.b32.xlu0 %v337, 47
      %v495 = vpop.permute.xlu0 %494
      %496 = vrot.lane.b32.xlu0 %v354, 47
      %v497 = vpop.permute.xlu0 %496
      %vm498 = vcmp.lt.s32.totalorder %v361, 47
      %v499 = vsel %vm498, %v495, %v497
      %v500 = vsel %vm498, %v497, %v495
      %vm501 = vmand %vm349, %vm493
      %v502 = vsel %vm501, 1, 0
      %v503 = vlaneseq
      %v504 = vshrl.u32 %v503, 7
      %v505 = vsub.s32 0, %v504
      %v506 = vrot.slane %v502, %v505
      %v507 = vlaneseq
      %v508 = vshrl.u32 %v507, 7
      %v509 = vsub.s32 1, %v508
      %v510 = vrot.slane %v502, %v509
      %vm511 = vcmp.eq.s32.totalorder %v506, 1
      %vm512 = vcmp.eq.s32.totalorder %v510, 1
      %v513 = vsel %vm511, %v500, 0.0
      %v514 = vsel %vm512, %v499, 0.0
      %v515 = vld [vmem:[%s313] sm:$0xf]
      %517 = vset.pattern.permute.xlu0 4
      %518 = vperm.xlu0 %517, %v515
      %v519 = vpop.permute.xlu0 %518
      %v521 = vmul.f32 %v513, %v519
      %v522 = vmul.f32 %v514, %v519
      %v523 = vadd.f32 %v489, %v521
      %v524 = vadd.f32 %v490, %v522
      %vm525 = vcmp.ge.s32.totalorder %v340, 4294967294
      %vm526 = vcmp.lt.s32.totalorder %v340, 14
      %vm527 = vmand %vm525, %vm526
      %528 = vrot.lane.b32.xlu0 %v337, 46
      %v529 = vpop.permute.xlu0 %528
      %530 = vrot.lane.b32.xlu0 %v354, 46
      %v531 = vpop.permute.xlu0 %530
      %vm532 = vcmp.lt.s32.totalorder %v361, 46
      %v533 = vsel %vm532, %v529, %v531
      %v534 = vsel %vm532, %v531, %v529
      %vm535 = vmand %vm349, %vm527
      %v536 = vsel %vm535, 1, 0
      %v537 = vlaneseq
      %v538 = vshrl.u32 %v537, 7
      %v539 = vsub.s32 0, %v538
      %v540 = vrot.slane %v536, %v539
      %v541 = vlaneseq
      %v542 = vshrl.u32 %v541, 7
      %v543 = vsub.s32 1, %v542
      %v544 = vrot.slane %v536, %v543
      %vm545 = vcmp.eq.s32.totalorder %v540, 1
      %vm546 = vcmp.eq.s32.totalorder %v544, 1
      %v547 = vsel %vm545, %v534, 0.0
      %v548 = vsel %vm546, %v533, 0.0
      %v549 = vld [vmem:[%s313] sm:$0xf]
      %551 = vset.pattern.permute.xlu0 5
      %552 = vperm.xlu0 %551, %v549
      %v553 = vpop.permute.xlu0 %552
      %v555 = vmul.f32 %v547, %v553
      %v556 = vmul.f32 %v548, %v553
      %v557 = vadd.f32 %v523, %v555
      %v558 = vadd.f32 %v524, %v556
      %vm559 = vcmp.ge.s32.totalorder %v340, 4294967293
      %vm560 = vcmp.lt.s32.totalorder %v340, 13
      %vm561 = vmand %vm559, %vm560
      %562 = vrot.lane.b32.xlu0 %v337, 45
      %v563 = vpop.permute.xlu0 %562
      %564 = vrot.lane.b32.xlu0 %v354, 45
      %v565 = vpop.permute.xlu0 %564
      %vm566 = vcmp.lt.s32.totalorder %v361, 45
      %v567 = vsel %vm566, %v563, %v565
      %v568 = vsel %vm566, %v565, %v563
      %vm569 = vmand %vm349, %vm561
      %v570 = vsel %vm569, 1, 0
      %v571 = vlaneseq
      %v572 = vshrl.u32 %v571, 7
      %v573 = vsub.s32 0, %v572
      %v574 = vrot.slane %v570, %v573
      %v575 = vlaneseq
      %v576 = vshrl.u32 %v575, 7
      %v577 = vsub.s32 1, %v576
      %v578 = vrot.slane %v570, %v577
      %vm579 = vcmp.eq.s32.totalorder %v574, 1
      %vm580 = vcmp.eq.s32.totalorder %v578, 1
      %v581 = vsel %vm579, %v568, 0.0
      %v582 = vsel %vm580, %v567, 0.0
      %v583 = vld [vmem:[%s313] sm:$0xf]
      %585 = vset.pattern.permute.xlu0 6
      %586 = vperm.xlu0 %585, %v583
      %v587 = vpop.permute.xlu0 %586
      %v589 = vmul.f32 %v581, %v587
      %v590 = vmul.f32 %v582, %v587
      %v591 = vadd.f32 %v557, %v589
      %v592 = vadd.f32 %v558, %v590
      %vm593 = vcmp.ge.s32.totalorder %v338, 2
      %vm594 = vcmp.lt.s32.totalorder %v338, 18
      %vm595 = vmand %vm593, %vm594
      %596 = vrot.lane.b32.xlu0 %v337, 35
      %v597 = vpop.permute.xlu0 %596
      %598 = vrot.lane.b32.xlu0 %v354, 35
      %v599 = vpop.permute.xlu0 %598
      %vm600 = vcmp.lt.s32.totalorder %v361, 35
      %v601 = vsel %vm600, %v597, %v599
      %v602 = vsel %vm600, %v599, %v597
      %vm603 = vmand %vm595, %vm352
      %v604 = vsel %vm603, 1, 0
      %v605 = vlaneseq
      %v606 = vshrl.u32 %v605, 7
      %v607 = vsub.s32 0, %v606
      %v608 = vrot.slane %v604, %v607
      %v609 = vlaneseq
      %v610 = vshrl.u32 %v609, 7
      %v611 = vsub.s32 1, %v610
      %v612 = vrot.slane %v604, %v611
      %vm613 = vcmp.eq.s32.totalorder %v608, 1
      %vm614 = vcmp.eq.s32.totalorder %v612, 1
      %v615 = vsel %vm613, %v602, 0.0
      %v616 = vsel %vm614, %v601, 0.0
      %v617 = vld [vmem:[%s313] sm:$0xf]
      %619 = vset.pattern.permute.xlu0 7
      %620 = vperm.xlu0 %619, %v617
      %v621 = vpop.permute.xlu0 %620
      %v623 = vmul.f32 %v615, %v621
      %v624 = vmul.f32 %v616, %v621
      %v625 = vadd.f32 %v591, %v623
      %v626 = vadd.f32 %v592, %v624
      %627 = vrot.lane.b32.xlu0 %v337, 34
      %v628 = vpop.permute.xlu0 %627
      %629 = vrot.lane.b32.xlu0 %v354, 34
      %v630 = vpop.permute.xlu0 %629
      %vm631 = vcmp.lt.s32.totalorder %v361, 34
      %v632 = vsel %vm631, %v628, %v630
      %v633 = vsel %vm631, %v630, %v628
      %vm634 = vmand %vm595, %vm391
      %v635 = vsel %vm634, 1, 0
      %v636 = vlaneseq
      %v637 = vshrl.u32 %v636, 7
      %v638 = vsub.s32 0, %v637
      %v639 = vrot.slane %v635, %v638
      %v640 = vlaneseq
      %v641 = vshrl.u32 %v640, 7
      %v642 = vsub.s32 1, %v641
      %v643 = vrot.slane %v635, %v642
      %vm644 = vcmp.eq.s32.totalorder %v639, 1
      %vm645 = vcmp.eq.s32.totalorder %v643, 1
      %v646 = vsel %vm644, %v633, 0.0
      %v647 = vsel %vm645, %v632, 0.0
      %v648 = vld [vmem:[%s313] sm:$0xf]
      %650 = vset.pattern.permute.xlu0 8
      %651 = vperm.xlu0 %650, %v648
      %v652 = vpop.permute.xlu0 %651
      %v654 = vmul.f32 %v646, %v652
      %v655 = vmul.f32 %v647, %v652
      %v656 = vadd.f32 %v625, %v654
      %v657 = vadd.f32 %v626, %v655
      %658 = vrot.lane.b32.xlu0 %v337, 33
      %v659 = vpop.permute.xlu0 %658
      %660 = vrot.lane.b32.xlu0 %v354, 33
      %v661 = vpop.permute.xlu0 %660
      %vm662 = vcmp.lt.s32.totalorder %v361, 33
      %v663 = vsel %vm662, %v659, %v661
      %v664 = vsel %vm662, %v661, %v659
      %vm665 = vmand %vm595, %vm425
      %v666 = vsel %vm665, 1, 0
      %v667 = vlaneseq
      %v668 = vshrl.u32 %v667, 7
      %v669 = vsub.s32 0, %v668
      %v670 = vrot.slane %v666, %v669
      %v671 = vlaneseq
      %v672 = vshrl.u32 %v671, 7
      %v673 = vsub.s32 1, %v672
      %v674 = vrot.slane %v666, %v673
      %vm675 = vcmp.eq.s32.totalorder %v670, 1
      %vm676 = vcmp.eq.s32.totalorder %v674, 1
      %v677 = vsel %vm675, %v664, 0.0
      %v678 = vsel %vm676, %v663, 0.0
      %v679 = vld [vmem:[%s313] sm:$0xf]
      %681 = vset.pattern.permute.xlu0 9
      %682 = vperm.xlu0 %681, %v679
      %v683 = vpop.permute.xlu0 %682
      %v685 = vmul.f32 %v677, %v683
      %v686 = vmul.f32 %v678, %v683
      %v687 = vadd.f32 %v656, %v685
      %v688 = vadd.f32 %v657, %v686
      %689 = vrot.lane.b32.xlu0 %v337, 32
      %v690 = vpop.permute.xlu0 %689
      %691 = vrot.lane.b32.xlu0 %v354, 32
      %v692 = vpop.permute.xlu0 %691
      %vm693 = vcmp.lt.s32.totalorder %v361, 32
      %v694 = vsel %vm693, %v690, %v692
      %v695 = vsel %vm693, %v692, %v690
      %vm696 = vmand %vm595, %vm459
      %v697 = vsel %vm696, 1, 0
      %v698 = vlaneseq
      %v699 = vshrl.u32 %v698, 7
      %v700 = vsub.s32 0, %v699
      %v701 = vrot.slane %v697, %v700
      %v702 = vlaneseq
      %v703 = vshrl.u32 %v702, 7
      %v704 = vsub.s32 1, %v703
      %v705 = vrot.slane %v697, %v704
      %vm706 = vcmp.eq.s32.totalorder %v701, 1
      %vm707 = vcmp.eq.s32.totalorder %v705, 1
      %v708 = vsel %vm706, %v695, 0.0
      %v709 = vsel %vm707, %v694, 0.0
      %v710 = vld [vmem:[%s313] sm:$0xf]
      %712 = vset.pattern.permute.xlu0 10
      %713 = vperm.xlu0 %712, %v710
      %v714 = vpop.permute.xlu0 %713
      %v716 = vmul.f32 %v708, %v714
      %v717 = vmul.f32 %v709, %v714
      %v718 = vadd.f32 %v687, %v716
      %v719 = vadd.f32 %v688, %v717
      %720 = vrot.lane.b32.xlu0 %v337, 31
      %v721 = vpop.permute.xlu0 %720
      %722 = vrot.lane.b32.xlu0 %v354, 31
      %v723 = vpop.permute.xlu0 %722
      %vm724 = vcmp.lt.s32.totalorder %v361, 31
      %v725 = vsel %vm724, %v721, %v723
      %v726 = vsel %vm724, %v723, %v721
      %vm727 = vmand %vm595, %vm493
      %v728 = vsel %vm727, 1, 0
      %v729 = vlaneseq
      %v730 = vshrl.u32 %v729, 7
      %v731 = vsub.s32 0, %v730
      %v732 = vrot.slane %v728, %v731
      %v733 = vlaneseq
      %v734 = vshrl.u32 %v733, 7
      %v735 = vsub.s32 1, %v734
      %v736 = vrot.slane %v728, %v735
      %vm737 = vcmp.eq.s32.totalorder %v732, 1
      %vm738 = vcmp.eq.s32.totalorder %v736, 1
      %v739 = vsel %vm737, %v726, 0.0
      %v740 = vsel %vm738, %v725, 0.0
      %v741 = vld [vmem:[%s313] sm:$0xf]
      %743 = vset.pattern.permute.xlu0 11
      %744 = vperm.xlu0 %743, %v741
      %v745 = vpop.permute.xlu0 %744
      %v747 = vmul.f32 %v739, %v745
      %v748 = vmul.f32 %v740, %v745
      %v749 = vadd.f32 %v718, %v747
      %v750 = vadd.f32 %v719, %v748
      %751 = vrot.lane.b32.xlu0 %v337, 30
      %v752 = vpop.permute.xlu0 %751
      %753 = vrot.lane.b32.xlu0 %v354, 30
      %v754 = vpop.permute.xlu0 %753
      %vm755 = vcmp.lt.s32.totalorder %v361, 30
      %v756 = vsel %vm755, %v752, %v754
      %v757 = vsel %vm755, %v754, %v752
      %vm758 = vmand %vm595, %vm527
      %v759 = vsel %vm758, 1, 0
      %v760 = vlaneseq
      %v761 = vshrl.u32 %v760, 7
      %v762 = vsub.s32 0, %v761
      %v763 = vrot.slane %v759, %v762
      %v764 = vlaneseq
      %v765 = vshrl.u32 %v764, 7
      %v766 = vsub.s32 1, %v765
      %v767 = vrot.slane %v759, %v766
      %vm768 = vcmp.eq.s32.totalorder %v763, 1
      %vm769 = vcmp.eq.s32.totalorder %v767, 1
      %v770 = vsel %vm768, %v757, 0.0
      %v771 = vsel %vm769, %v756, 0.0
      %v772 = vld [vmem:[%s313] sm:$0xf]
      %774 = vset.pattern.permute.xlu0 12
      %775 = vperm.xlu0 %774, %v772
      %v776 = vpop.permute.xlu0 %775
      %v778 = vmul.f32 %v770, %v776
      %v779 = vmul.f32 %v771, %v776
      %v780 = vadd.f32 %v749, %v778
      %v781 = vadd.f32 %v750, %v779
      %782 = vrot.lane.b32.xlu0 %v337, 29
      %v783 = vpop.permute.xlu0 %782
      %784 = vrot.lane.b32.xlu0 %v354, 29
      %v785 = vpop.permute.xlu0 %784
      %vm786 = vcmp.lt.s32.totalorder %v361, 29
      %v787 = vsel %vm786, %v783, %v785
      %v788 = vsel %vm786, %v785, %v783
      %vm789 = vmand %vm595, %vm561
      %v790 = vsel %vm789, 1, 0
      %v791 = vlaneseq
      %v792 = vshrl.u32 %v791, 7
      %v793 = vsub.s32 0, %v792
      %v794 = vrot.slane %v790, %v793
      %v795 = vlaneseq
      %v796 = vshrl.u32 %v795, 7
      %v797 = vsub.s32 1, %v796
      %v798 = vrot.slane %v790, %v797
      %vm799 = vcmp.eq.s32.totalorder %v794, 1
      %vm800 = vcmp.eq.s32.totalorder %v798, 1
      %v801 = vsel %vm799, %v788, 0.0
      %v802 = vsel %vm800, %v787, 0.0
      %v803 = vld [vmem:[%s313] sm:$0xf]
      %805 = vset.pattern.permute.xlu0 13
      %806 = vperm.xlu0 %805, %v803
      %v807 = vpop.permute.xlu0 %806
      %v809 = vmul.f32 %v801, %v807
      %v810 = vmul.f32 %v802, %v807
      %v811 = vadd.f32 %v780, %v809
      %v812 = vadd.f32 %v781, %v810
      %vm813 = vcmp.ge.s32.totalorder %v338, 1
      %vm814 = vcmp.lt.s32.totalorder %v338, 17
      %vm815 = vmand %vm813, %vm814
      %816 = vrot.lane.b32.xlu0 %v337, 19
      %v817 = vpop.permute.xlu0 %816
      %818 = vrot.lane.b32.xlu0 %v354, 19
      %v819 = vpop.permute.xlu0 %818
      %vm820 = vcmp.lt.s32.totalorder %v361, 19
      %v821 = vsel %vm820, %v817, %v819
      %v822 = vsel %vm820, %v819, %v817
      %vm823 = vmand %vm815, %vm352
      %v824 = vsel %vm823, 1, 0
      %v825 = vlaneseq
      %v826 = vshrl.u32 %v825, 7
      %v827 = vsub.s32 0, %v826
      %v828 = vrot.slane %v824, %v827
      %v829 = vlaneseq
      %v830 = vshrl.u32 %v829, 7
      %v831 = vsub.s32 1, %v830
      %v832 = vrot.slane %v824, %v831
      %vm833 = vcmp.eq.s32.totalorder %v828, 1
      %vm834 = vcmp.eq.s32.totalorder %v832, 1
      %v835 = vsel %vm833, %v822, 0.0
      %v836 = vsel %vm834, %v821, 0.0
      %v837 = vld [vmem:[%s313] sm:$0xf]
      %839 = vset.pattern.permute.xlu0 14
      %840 = vperm.xlu0 %839, %v837
      %v841 = vpop.permute.xlu0 %840
      %v843 = vmul.f32 %v835, %v841
      %v844 = vmul.f32 %v836, %v841
      %v845 = vadd.f32 %v811, %v843
      %v846 = vadd.f32 %v812, %v844
      %847 = vrot.lane.b32.xlu0 %v337, 18
      %v848 = vpop.permute.xlu0 %847
      %849 = vrot.lane.b32.xlu0 %v354, 18
      %v850 = vpop.permute.xlu0 %849
      %vm851 = vcmp.lt.s32.totalorder %v361, 18
      %v852 = vsel %vm851, %v848, %v850
      %v853 = vsel %vm851, %v850, %v848
      %vm854 = vmand %vm815, %vm391
      %v855 = vsel %vm854, 1, 0
      %v856 = vlaneseq
      %v857 = vshrl.u32 %v856, 7
      %v858 = vsub.s32 0, %v857
      %v859 = vrot.slane %v855, %v858
      %v860 = vlaneseq
      %v861 = vshrl.u32 %v860, 7
      %v862 = vsub.s32 1, %v861
      %v863 = vrot.slane %v855, %v862
      %vm864 = vcmp.eq.s32.totalorder %v859, 1
      %vm865 = vcmp.eq.s32.totalorder %v863, 1
      %v866 = vsel %vm864, %v853, 0.0
      %v867 = vsel %vm865, %v852, 0.0
      %v868 = vld [vmem:[%s313] sm:$0xf]
      %870 = vset.pattern.permute.xlu0 15
      %871 = vperm.xlu0 %870, %v868
      %v872 = vpop.permute.xlu0 %871
      %v874 = vmul.f32 %v866, %v872
      %v875 = vmul.f32 %v867, %v872
      %v876 = vadd.f32 %v845, %v874
      %v877 = vadd.f32 %v846, %v875
      %878 = vrot.lane.b32.xlu0 %v337, 17
      %v879 = vpop.permute.xlu0 %878
      %880 = vrot.lane.b32.xlu0 %v354, 17
      %v881 = vpop.permute.xlu0 %880
      %vm882 = vcmp.lt.s32.totalorder %v361, 17
      %v883 = vsel %vm882, %v879, %v881
      %v884 = vsel %vm882, %v881, %v879
      %vm885 = vmand %vm815, %vm425
      %v886 = vsel %vm885, 1, 0
      %v887 = vlaneseq
      %v888 = vshrl.u32 %v887, 7
      %v889 = vsub.s32 0, %v888
      %v890 = vrot.slane %v886, %v889
      %v891 = vlaneseq
      %v892 = vshrl.u32 %v891, 7
      %v893 = vsub.s32 1, %v892
      %v894 = vrot.slane %v886, %v893
      %vm895 = vcmp.eq.s32.totalorder %v890, 1
      %vm896 = vcmp.eq.s32.totalorder %v894, 1
      %v897 = vsel %vm895, %v884, 0.0
      %v898 = vsel %vm896, %v883, 0.0
      %v899 = vld [vmem:[%s313] sm:$0xf]
      %901 = vset.pattern.permute.xlu0 16
      %902 = vperm.xlu0 %901, %v899
      %v903 = vpop.permute.xlu0 %902
      %v905 = vmul.f32 %v897, %v903
      %v906 = vmul.f32 %v898, %v903
      %v907 = vadd.f32 %v876, %v905
      %v908 = vadd.f32 %v877, %v906
      %909 = vrot.lane.b32.xlu0 %v337, 16
      %v910 = vpop.permute.xlu0 %909
      %911 = vrot.lane.b32.xlu0 %v354, 16
      %v912 = vpop.permute.xlu0 %911
      %vm913 = vcmp.lt.s32.totalorder %v361, 16
      %v914 = vsel %vm913, %v910, %v912
      %v915 = vsel %vm913, %v912, %v910
      %vm916 = vmand %vm815, %vm459
      %v917 = vsel %vm916, 1, 0
      %v918 = vlaneseq
      %v919 = vshrl.u32 %v918, 7
      %v920 = vsub.s32 0, %v919
      %v921 = vrot.slane %v917, %v920
      %v922 = vlaneseq
      %v923 = vshrl.u32 %v922, 7
      %v924 = vsub.s32 1, %v923
      %v925 = vrot.slane %v917, %v924
      %vm926 = vcmp.eq.s32.totalorder %v921, 1
      %vm927 = vcmp.eq.s32.totalorder %v925, 1
      %v928 = vsel %vm926, %v915, 0.0
      %v929 = vsel %vm927, %v914, 0.0
      %v930 = vld [vmem:[%s313] sm:$0xf]
      %932 = vset.pattern.permute.xlu0 17
      %933 = vperm.xlu0 %932, %v930
      %v934 = vpop.permute.xlu0 %933
      %v936 = vmul.f32 %v928, %v934
      %v937 = vmul.f32 %v929, %v934
      %v938 = vadd.f32 %v907, %v936
      %v939 = vadd.f32 %v908, %v937
      %940 = vrot.lane.b32.xlu0 %v337, 15
      %v941 = vpop.permute.xlu0 %940
      %942 = vrot.lane.b32.xlu0 %v354, 15
      %v943 = vpop.permute.xlu0 %942
      %vm944 = vcmp.lt.s32.totalorder %v361, 15
      %v945 = vsel %vm944, %v941, %v943
      %v946 = vsel %vm944, %v943, %v941
      %vm947 = vmand %vm815, %vm493
      %v948 = vsel %vm947, 1, 0
      %v949 = vlaneseq
      %v950 = vshrl.u32 %v949, 7
      %v951 = vsub.s32 0, %v950
      %v952 = vrot.slane %v948, %v951
      %v953 = vlaneseq
      %v954 = vshrl.u32 %v953, 7
      %v955 = vsub.s32 1, %v954
      %v956 = vrot.slane %v948, %v955
      %vm957 = vcmp.eq.s32.totalorder %v952, 1
      %vm958 = vcmp.eq.s32.totalorder %v956, 1
      %v959 = vsel %vm957, %v946, 0.0
      %v960 = vsel %vm958, %v945, 0.0
      %v961 = vld [vmem:[%s313] sm:$0xf]
      %963 = vset.pattern.permute.xlu0 18
      %964 = vperm.xlu0 %963, %v961
      %v965 = vpop.permute.xlu0 %964
      %v967 = vmul.f32 %v959, %v965
      %v968 = vmul.f32 %v960, %v965
      %v969 = vadd.f32 %v938, %v967
      %v970 = vadd.f32 %v939, %v968
      %971 = vrot.lane.b32.xlu0 %v337, 14
      %v972 = vpop.permute.xlu0 %971
      %973 = vrot.lane.b32.xlu0 %v354, 14
      %v974 = vpop.permute.xlu0 %973
      %vm975 = vcmp.lt.s32.totalorder %v361, 14
      %v976 = vsel %vm975, %v972, %v974
      %v977 = vsel %vm975, %v974, %v972
      %vm978 = vmand %vm815, %vm527
      %v979 = vsel %vm978, 1, 0
      %v980 = vlaneseq
      %v981 = vshrl.u32 %v980, 7
      %v982 = vsub.s32 0, %v981
      %v983 = vrot.slane %v979, %v982
      %v984 = vlaneseq
      %v985 = vshrl.u32 %v984, 7
      %v986 = vsub.s32 1, %v985
      %v987 = vrot.slane %v979, %v986
      %vm988 = vcmp.eq.s32.totalorder %v983, 1
      %vm989 = vcmp.eq.s32.totalorder %v987, 1
      %v990 = vsel %vm988, %v977, 0.0
      %v991 = vsel %vm989, %v976, 0.0
      %v992 = vld [vmem:[%s313] sm:$0xf]
      %994 = vset.pattern.permute.xlu0 19
      %995 = vperm.xlu0 %994, %v992
      %v996 = vpop.permute.xlu0 %995
      %v998 = vmul.f32 %v990, %v996
      %v999 = vmul.f32 %v991, %v996
      %v1000 = vadd.f32 %v969, %v998
      %v1001 = vadd.f32 %v970, %v999
      %1002 = vrot.lane.b32.xlu0 %v337, 13
      %v1003 = vpop.permute.xlu0 %1002
      %1004 = vrot.lane.b32.xlu0 %v354, 13
      %v1005 = vpop.permute.xlu0 %1004
      %vm1006 = vcmp.lt.s32.totalorder %v361, 13
      %v1007 = vsel %vm1006, %v1003, %v1005
      %v1008 = vsel %vm1006, %v1005, %v1003
      %vm1009 = vmand %vm815, %vm561
      %v1010 = vsel %vm1009, 1, 0
      %v1011 = vlaneseq
      %v1012 = vshrl.u32 %v1011, 7
      %v1013 = vsub.s32 0, %v1012
      %v1014 = vrot.slane %v1010, %v1013
      %v1015 = vlaneseq
      %v1016 = vshrl.u32 %v1015, 7
      %v1017 = vsub.s32 1, %v1016
      %v1018 = vrot.slane %v1010, %v1017
      %vm1019 = vcmp.eq.s32.totalorder %v1014, 1
      %vm1020 = vcmp.eq.s32.totalorder %v1018, 1
      %v1021 = vsel %vm1019, %v1008, 0.0
      %v1022 = vsel %vm1020, %v1007, 0.0
      %v1023 = vld [vmem:[%s313] sm:$0xf]
      %1025 = vset.pattern.permute.xlu0 20
      %1026 = vperm.xlu0 %1025, %v1023
      %v1027 = vpop.permute.xlu0 %1026
      %v1029 = vmul.f32 %v1021, %v1027
      %v1030 = vmul.f32 %v1022, %v1027
      %v1031 = vadd.f32 %v1000, %v1029
      %v1032 = vadd.f32 %v1001, %v1030
      %vm1033 = vcmp.ge.s32.totalorder %v338, 0
      %vm1034 = vcmp.lt.s32.totalorder %v338, 16
      %vm1035 = vmand %vm1033, %vm1034
      %1036 = vrot.lane.b32.xlu0 %v337, 3
      %v1037 = vpop.permute.xlu0 %1036
      %1038 = vrot.lane.b32.xlu0 %v354, 3
      %v1039 = vpop.permute.xlu0 %1038
      %vm1040 = vcmp.lt.s32.totalorder %v361, 3
      %v1041 = vsel %vm1040, %v1037, %v1039
      %v1042 = vsel %vm1040, %v1039, %v1037
      %vm1043 = vmand %vm1035, %vm352
      %v1044 = vsel %vm1043, 1, 0
      %v1045 = vlaneseq
      %v1046 = vshrl.u32 %v1045, 7
      %v1047 = vsub.s32 0, %v1046
      %v1048 = vrot.slane %v1044, %v1047
      %v1049 = vlaneseq
      %v1050 = vshrl.u32 %v1049, 7
      %v1051 = vsub.s32 1, %v1050
      %v1052 = vrot.slane %v1044, %v1051
      %vm1053 = vcmp.eq.s32.totalorder %v1048, 1
      %vm1054 = vcmp.eq.s32.totalorder %v1052, 1
      %v1055 = vsel %vm1053, %v1042, 0.0
      %v1056 = vsel %vm1054, %v1041, 0.0
      %v1057 = vld [vmem:[%s313] sm:$0xf]
      %1059 = vset.pattern.permute.xlu0 21
      %1060 = vperm.xlu0 %1059, %v1057
      %v1061 = vpop.permute.xlu0 %1060
      %v1063 = vmul.f32 %v1055, %v1061
      %v1064 = vmul.f32 %v1056, %v1061
      %v1065 = vadd.f32 %v1031, %v1063
      %v1066 = vadd.f32 %v1032, %v1064
      %1067 = vrot.lane.b32.xlu0 %v337, 2
      %v1068 = vpop.permute.xlu0 %1067
      %1069 = vrot.lane.b32.xlu0 %v354, 2
      %v1070 = vpop.permute.xlu0 %1069
      %vm1071 = vcmp.lt.s32.totalorder %v361, 2
      %v1072 = vsel %vm1071, %v1068, %v1070
      %v1073 = vsel %vm1071, %v1070, %v1068
      %vm1074 = vmand %vm1035, %vm391
      %v1075 = vsel %vm1074, 1, 0
      %v1076 = vlaneseq
      %v1077 = vshrl.u32 %v1076, 7
      %v1078 = vsub.s32 0, %v1077
      %v1079 = vrot.slane %v1075, %v1078
      %v1080 = vlaneseq
      %v1081 = vshrl.u32 %v1080, 7
      %v1082 = vsub.s32 1, %v1081
      %v1083 = vrot.slane %v1075, %v1082
      %vm1084 = vcmp.eq.s32.totalorder %v1079, 1
      %vm1085 = vcmp.eq.s32.totalorder %v1083, 1
      %v1086 = vsel %vm1084, %v1073, 0.0
      %v1087 = vsel %vm1085, %v1072, 0.0
      %v1088 = vld [vmem:[%s313] sm:$0xf]
      %1090 = vset.pattern.permute.xlu0 22
      %1091 = vperm.xlu0 %1090, %v1088
      %v1092 = vpop.permute.xlu0 %1091
      %v1094 = vmul.f32 %v1086, %v1092
      %v1095 = vmul.f32 %v1087, %v1092
      %v1096 = vadd.f32 %v1065, %v1094
      %v1097 = vadd.f32 %v1066, %v1095
      %1098 = vrot.lane.b32.xlu0 %v337, 1
      %v1099 = vpop.permute.xlu0 %1098
      %1100 = vrot.lane.b32.xlu0 %v354, 1
      %v1101 = vpop.permute.xlu0 %1100
      %vm1102 = vcmp.lt.s32.totalorder %v361, 1
      %v1103 = vsel %vm1102, %v1099, %v1101
      %v1104 = vsel %vm1102, %v1101, %v1099
      %vm1105 = vmand %vm1035, %vm425
      %v1106 = vsel %vm1105, 1, 0
      %v1107 = vlaneseq
      %v1108 = vshrl.u32 %v1107, 7
      %v1109 = vsub.s32 0, %v1108
      %v1110 = vrot.slane %v1106, %v1109
      %v1111 = vlaneseq
      %v1112 = vshrl.u32 %v1111, 7
      %v1113 = vsub.s32 1, %v1112
      %v1114 = vrot.slane %v1106, %v1113
      %vm1115 = vcmp.eq.s32.totalorder %v1110, 1
      %vm1116 = vcmp.eq.s32.totalorder %v1114, 1
      %v1117 = vsel %vm1115, %v1104, 0.0
      %v1118 = vsel %vm1116, %v1103, 0.0
      %v1119 = vld [vmem:[%s313] sm:$0xf]
      %1121 = vset.pattern.permute.xlu0 23
      %1122 = vperm.xlu0 %1121, %v1119
      %v1123 = vpop.permute.xlu0 %1122
      %v1125 = vmul.f32 %v1117, %v1123
      %v1126 = vmul.f32 %v1118, %v1123
      %v1127 = vadd.f32 %v1096, %v1125
      %v1128 = vadd.f32 %v1097, %v1126
      %vm1129 = vmand %vm1035, %vm459
      %v1130 = vsel %vm1129, 1, 0
      %v1131 = vlaneseq
      %v1132 = vshrl.u32 %v1131, 7
      %v1133 = vsub.s32 0, %v1132
      %v1134 = vrot.slane %v1130, %v1133
      %v1135 = vlaneseq
      %v1136 = vshrl.u32 %v1135, 7
      %v1137 = vsub.s32 1, %v1136
      %v1138 = vrot.slane %v1130, %v1137
      %vm1139 = vcmp.eq.s32.totalorder %v1134, 1
      %vm1140 = vcmp.eq.s32.totalorder %v1138, 1
      %v1141 = vsel %vm1139, %v337, 0.0
      %v1142 = vsel %vm1140, %v354, 0.0
      %v1143 = vld [vmem:[%s313] sm:$0xf]
      %1145 = vset.pattern.permute.xlu0 24
      %1146 = vperm.xlu0 %1145, %v1143
      %v1147 = vpop.permute.xlu0 %1146
      %v1149 = vmul.f32 %v1141, %v1147
      %v1150 = vmul.f32 %v1142, %v1147
      %v1151 = vadd.f32 %v1127, %v1149
      %v1152 = vadd.f32 %v1128, %v1150
      %1153 = vrot.lane.b32.xlu0 %v337, 127
      %v1154 = vpop.permute.xlu0 %1153
      %1155 = vrot.lane.b32.xlu0 %v354, 127
      %v1156 = vpop.permute.xlu0 %1155
      %vm1157 = vcmp.lt.s32.totalorder %v361, 127
      %v1158 = vsel %vm1157, %v1154, %v1156
      %v1159 = vsel %vm1157, %v1156, %v1154
      %vm1160 = vmand %vm1035, %vm493
      %v1161 = vsel %vm1160, 1, 0
      %v1162 = vlaneseq
      %v1163 = vshrl.u32 %v1162, 7
      %v1164 = vsub.s32 0, %v1163
      %v1165 = vrot.slane %v1161, %v1164
      %v1166 = vlaneseq
      %v1167 = vshrl.u32 %v1166, 7
      %v1168 = vsub.s32 1, %v1167
      %v1169 = vrot.slane %v1161, %v1168
      %vm1170 = vcmp.eq.s32.totalorder %v1165, 1
      %vm1171 = vcmp.eq.s32.totalorder %v1169, 1
      %v1172 = vsel %vm1170, %v1158, 0.0
      %v1173 = vsel %vm1171, %v1159, 0.0
      %v1174 = vld [vmem:[%s313] sm:$0xf]
      %1176 = vset.pattern.permute.xlu0 25
      %1177 = vperm.xlu0 %1176, %v1174
      %v1178 = vpop.permute.xlu0 %1177
      %v1180 = vmul.f32 %v1172, %v1178
      %v1181 = vmul.f32 %v1173, %v1178
      %v1182 = vadd.f32 %v1151, %v1180
      %v1183 = vadd.f32 %v1152, %v1181
      %1184 = vrot.lane.b32.xlu0 %v337, 126
      %v1185 = vpop.permute.xlu0 %1184
      %1186 = vrot.lane.b32.xlu0 %v354, 126
      %v1187 = vpop.permute.xlu0 %1186
      %vm1188 = vcmp.lt.s32.totalorder %v361, 126
      %v1189 = vsel %vm1188, %v1185, %v1187
      %v1190 = vsel %vm1188, %v1187, %v1185
      %vm1191 = vmand %vm1035, %vm527
      %v1192 = vsel %vm1191, 1, 0
      %v1193 = vlaneseq
      %v1194 = vshrl.u32 %v1193, 7
      %v1195 = vsub.s32 0, %v1194
      %v1196 = vrot.slane %v1192, %v1195
      %v1197 = vlaneseq
      %v1198 = vshrl.u32 %v1197, 7
      %v1199 = vsub.s32 1, %v1198
      %v1200 = vrot.slane %v1192, %v1199
      %vm1201 = vcmp.eq.s32.totalorder %v1196, 1
      %vm1202 = vcmp.eq.s32.totalorder %v1200, 1
      %v1203 = vsel %vm1201, %v1189, 0.0
      %v1204 = vsel %vm1202, %v1190, 0.0
      %v1205 = vld [vmem:[%s313] sm:$0xf]
      %1207 = vset.pattern.permute.xlu0 26
      %1208 = vperm.xlu0 %1207, %v1205
      %v1209 = vpop.permute.xlu0 %1208
      %v1211 = vmul.f32 %v1203, %v1209
      %v1212 = vmul.f32 %v1204, %v1209
      %v1213 = vadd.f32 %v1182, %v1211
      %v1214 = vadd.f32 %v1183, %v1212
      %1215 = vrot.lane.b32.xlu0 %v337, 125
      %v1216 = vpop.permute.xlu0 %1215
      %1217 = vrot.lane.b32.xlu0 %v354, 125
      %v1218 = vpop.permute.xlu0 %1217
      %vm1219 = vcmp.lt.s32.totalorder %v361, 125
      %v1220 = vsel %vm1219, %v1216, %v1218
      %v1221 = vsel %vm1219, %v1218, %v1216
      %vm1222 = vmand %vm1035, %vm561
      %v1223 = vsel %vm1222, 1, 0
      %v1224 = vlaneseq
      %v1225 = vshrl.u32 %v1224, 7
      %v1226 = vsub.s32 0, %v1225
      %v1227 = vrot.slane %v1223, %v1226
      %v1228 = vlaneseq
      %v1229 = vshrl.u32 %v1228, 7
      %v1230 = vsub.s32 1, %v1229
      %v1231 = vrot.slane %v1223, %v1230
      %vm1232 = vcmp.eq.s32.totalorder %v1227, 1
      %vm1233 = vcmp.eq.s32.totalorder %v1231, 1
      %v1234 = vsel %vm1232, %v1220, 0.0
      %v1235 = vsel %vm1233, %v1221, 0.0
      %v1236 = vld [vmem:[%s313] sm:$0xf]
      %1238 = vset.pattern.permute.xlu0 27
      %1239 = vperm.xlu0 %1238, %v1236
      %v1240 = vpop.permute.xlu0 %1239
      %v1242 = vmul.f32 %v1234, %v1240
      %v1243 = vmul.f32 %v1235, %v1240
      %v1244 = vadd.f32 %v1213, %v1242
      %v1245 = vadd.f32 %v1214, %v1243
      %vm1246 = vcmp.ge.s32.totalorder %v338, 4294967295
      %vm1247 = vcmp.lt.s32.totalorder %v338, 15
      %vm1248 = vmand %vm1246, %vm1247
      %1249 = vrot.lane.b32.xlu0 %v337, 115
      %v1250 = vpop.permute.xlu0 %1249
      %1251 = vrot.lane.b32.xlu0 %v354, 115
      %v1252 = vpop.permute.xlu0 %1251
      %vm1253 = vcmp.lt.s32.totalorder %v361, 115
      %v1254 = vsel %vm1253, %v1250, %v1252
      %v1255 = vsel %vm1253, %v1252, %v1250
      %vm1256 = vmand %vm1248, %vm352
      %v1257 = vsel %vm1256, 1, 0
      %v1258 = vlaneseq
      %v1259 = vshrl.u32 %v1258, 7
      %v1260 = vsub.s32 0, %v1259
      %v1261 = vrot.slane %v1257, %v1260
      %v1262 = vlaneseq
      %v1263 = vshrl.u32 %v1262, 7
      %v1264 = vsub.s32 1, %v1263
      %v1265 = vrot.slane %v1257, %v1264
      %vm1266 = vcmp.eq.s32.totalorder %v1261, 1
      %vm1267 = vcmp.eq.s32.totalorder %v1265, 1
      %v1268 = vsel %vm1266, %v1254, 0.0
      %v1269 = vsel %vm1267, %v1255, 0.0
      %v1270 = vld [vmem:[%s313] sm:$0xf]
      %1272 = vset.pattern.permute.xlu0 28
      %1273 = vperm.xlu0 %1272, %v1270
      %v1274 = vpop.permute.xlu0 %1273
      %v1276 = vmul.f32 %v1268, %v1274
      %v1277 = vmul.f32 %v1269, %v1274
      %v1278 = vadd.f32 %v1244, %v1276
      %v1279 = vadd.f32 %v1245, %v1277
      %1280 = vrot.lane.b32.xlu0 %v337, 114
      %v1281 = vpop.permute.xlu0 %1280
      %1282 = vrot.lane.b32.xlu0 %v354, 114
      %v1283 = vpop.permute.xlu0 %1282
      %vm1284 = vcmp.lt.s32.totalorder %v361, 114
      %v1285 = vsel %vm1284, %v1281, %v1283
      %v1286 = vsel %vm1284, %v1283, %v1281
      %vm1287 = vmand %vm1248, %vm391
      %v1288 = vsel %vm1287, 1, 0
      %v1289 = vlaneseq
      %v1290 = vshrl.u32 %v1289, 7
      %v1291 = vsub.s32 0, %v1290
      %v1292 = vrot.slane %v1288, %v1291
      %v1293 = vlaneseq
      %v1294 = vshrl.u32 %v1293, 7
      %v1295 = vsub.s32 1, %v1294
      %v1296 = vrot.slane %v1288, %v1295
      %vm1297 = vcmp.eq.s32.totalorder %v1292, 1
      %vm1298 = vcmp.eq.s32.totalorder %v1296, 1
      %v1299 = vsel %vm1297, %v1285, 0.0
      %v1300 = vsel %vm1298, %v1286, 0.0
      %v1301 = vld [vmem:[%s313] sm:$0xf]
      %1303 = vset.pattern.permute.xlu0 29
      %1304 = vperm.xlu0 %1303, %v1301
      %v1305 = vpop.permute.xlu0 %1304
      %v1307 = vmul.f32 %v1299, %v1305
      %v1308 = vmul.f32 %v1300, %v1305
      %v1309 = vadd.f32 %v1278, %v1307
      %v1310 = vadd.f32 %v1279, %v1308
      %1311 = vrot.lane.b32.xlu0 %v337, 113
      %v1312 = vpop.permute.xlu0 %1311
      %1313 = vrot.lane.b32.xlu0 %v354, 113
      %v1314 = vpop.permute.xlu0 %1313
      %vm1315 = vcmp.lt.s32.totalorder %v361, 113
      %v1316 = vsel %vm1315, %v1312, %v1314
      %v1317 = vsel %vm1315, %v1314, %v1312
      %vm1318 = vmand %vm1248, %vm425
      %v1319 = vsel %vm1318, 1, 0
      %v1320 = vlaneseq
      %v1321 = vshrl.u32 %v1320, 7
      %v1322 = vsub.s32 0, %v1321
      %v1323 = vrot.slane %v1319, %v1322
      %v1324 = vlaneseq
      %v1325 = vshrl.u32 %v1324, 7
      %v1326 = vsub.s32 1, %v1325
      %v1327 = vrot.slane %v1319, %v1326
      %vm1328 = vcmp.eq.s32.totalorder %v1323, 1
      %vm1329 = vcmp.eq.s32.totalorder %v1327, 1
      %v1330 = vsel %vm1328, %v1316, 0.0
      %v1331 = vsel %vm1329, %v1317, 0.0
      %v1332 = vld [vmem:[%s313] sm:$0xf]
      %1334 = vset.pattern.permute.xlu0 30
      %1335 = vperm.xlu0 %1334, %v1332
      %v1336 = vpop.permute.xlu0 %1335
      %v1338 = vmul.f32 %v1330, %v1336
      %v1339 = vmul.f32 %v1331, %v1336
      %v1340 = vadd.f32 %v1309, %v1338
      %v1341 = vadd.f32 %v1310, %v1339
      %1342 = vrot.lane.b32.xlu0 %v337, 112
      %v1343 = vpop.permute.xlu0 %1342
      %1344 = vrot.lane.b32.xlu0 %v354, 112
      %v1345 = vpop.permute.xlu0 %1344
      %vm1346 = vcmp.lt.s32.totalorder %v361, 112
      %v1347 = vsel %vm1346, %v1343, %v1345
      %v1348 = vsel %vm1346, %v1345, %v1343
      %vm1349 = vmand %vm1248, %vm459
      %v1350 = vsel %vm1349, 1, 0
      %v1351 = vlaneseq
      %v1352 = vshrl.u32 %v1351, 7
      %v1353 = vsub.s32 0, %v1352
      %v1354 = vrot.slane %v1350, %v1353
      %v1355 = vlaneseq
      %v1356 = vshrl.u32 %v1355, 7
      %v1357 = vsub.s32 1, %v1356
      %v1358 = vrot.slane %v1350, %v1357
      %vm1359 = vcmp.eq.s32.totalorder %v1354, 1
      %vm1360 = vcmp.eq.s32.totalorder %v1358, 1
      %v1361 = vsel %vm1359, %v1347, 0.0
      %v1362 = vsel %vm1360, %v1348, 0.0
      %v1363 = vld [vmem:[%s313] sm:$0xf]
      %1365 = vset.pattern.permute.xlu0 31
      %1366 = vperm.xlu0 %1365, %v1363
      %v1367 = vpop.permute.xlu0 %1366
      %v1369 = vmul.f32 %v1361, %v1367
      %v1370 = vmul.f32 %v1362, %v1367
      %v1371 = vadd.f32 %v1340, %v1369
      %v1372 = vadd.f32 %v1341, %v1370
      %1373 = vrot.lane.b32.xlu0 %v337, 111
      %v1374 = vpop.permute.xlu0 %1373
      %1375 = vrot.lane.b32.xlu0 %v354, 111
      %v1376 = vpop.permute.xlu0 %1375
      %vm1377 = vcmp.lt.s32.totalorder %v361, 111
      %v1378 = vsel %vm1377, %v1374, %v1376
      %v1379 = vsel %vm1377, %v1376, %v1374
      %vm1380 = vmand %vm1248, %vm493
      %v1381 = vsel %vm1380, 1, 0
      %v1382 = vlaneseq
      %v1383 = vshrl.u32 %v1382, 7
      %v1384 = vsub.s32 0, %v1383
      %v1385 = vrot.slane %v1381, %v1384
      %v1386 = vlaneseq
      %v1387 = vshrl.u32 %v1386, 7
      %v1388 = vsub.s32 1, %v1387
      %v1389 = vrot.slane %v1381, %v1388
      %vm1390 = vcmp.eq.s32.totalorder %v1385, 1
      %vm1391 = vcmp.eq.s32.totalorder %v1389, 1
      %v1392 = vsel %vm1390, %v1378, 0.0
      %v1393 = vsel %vm1391, %v1379, 0.0
      %v1394 = vld [vmem:[%s313] sm:$0xf]
      %1396 = vset.pattern.permute.xlu0 32
      %1397 = vperm.xlu0 %1396, %v1394
      %v1398 = vpop.permute.xlu0 %1397
      %v1400 = vmul.f32 %v1392, %v1398
      %v1401 = vmul.f32 %v1393, %v1398
      %v1402 = vadd.f32 %v1371, %v1400
      %v1403 = vadd.f32 %v1372, %v1401
      %1404 = vrot.lane.b32.xlu0 %v337, 110
      %v1405 = vpop.permute.xlu0 %1404
      %1406 = vrot.lane.b32.xlu0 %v354, 110
      %v1407 = vpop.permute.xlu0 %1406
      %vm1408 = vcmp.lt.s32.totalorder %v361, 110
      %v1409 = vsel %vm1408, %v1405, %v1407
      %v1410 = vsel %vm1408, %v1407, %v1405
      %vm1411 = vmand %vm1248, %vm527
      %v1412 = vsel %vm1411, 1, 0
      %v1413 = vlaneseq
      %v1414 = vshrl.u32 %v1413, 7
      %v1415 = vsub.s32 0, %v1414
      %v1416 = vrot.slane %v1412, %v1415
      %v1417 = vlaneseq
      %v1418 = vshrl.u32 %v1417, 7
      %v1419 = vsub.s32 1, %v1418
      %v1420 = vrot.slane %v1412, %v1419
      %vm1421 = vcmp.eq.s32.totalorder %v1416, 1
      %vm1422 = vcmp.eq.s32.totalorder %v1420, 1
      %v1423 = vsel %vm1421, %v1409, 0.0
      %v1424 = vsel %vm1422, %v1410, 0.0
      %v1425 = vld [vmem:[%s313] sm:$0xf]
      %1427 = vset.pattern.permute.xlu0 33
      %1428 = vperm.xlu0 %1427, %v1425
      %v1429 = vpop.permute.xlu0 %1428
      %v1431 = vmul.f32 %v1423, %v1429
      %v1432 = vmul.f32 %v1424, %v1429
      %v1433 = vadd.f32 %v1402, %v1431
      %v1434 = vadd.f32 %v1403, %v1432
      %1435 = vrot.lane.b32.xlu0 %v337, 109
      %v1436 = vpop.permute.xlu0 %1435
      %1437 = vrot.lane.b32.xlu0 %v354, 109
      %v1438 = vpop.permute.xlu0 %1437
      %vm1439 = vcmp.lt.s32.totalorder %v361, 109
      %v1440 = vsel %vm1439, %v1436, %v1438
      %v1441 = vsel %vm1439, %v1438, %v1436
      %vm1442 = vmand %vm1248, %vm561
      %v1443 = vsel %vm1442, 1, 0
      %v1444 = vlaneseq
      %v1445 = vshrl.u32 %v1444, 7
      %v1446 = vsub.s32 0, %v1445
      %v1447 = vrot.slane %v1443, %v1446
      %v1448 = vlaneseq
      %v1449 = vshrl.u32 %v1448, 7
      %v1450 = vsub.s32 1, %v1449
      %v1451 = vrot.slane %v1443, %v1450
      %vm1452 = vcmp.eq.s32.totalorder %v1447, 1
      %vm1453 = vcmp.eq.s32.totalorder %v1451, 1
      %v1454 = vsel %vm1452, %v1440, 0.0
      %v1455 = vsel %vm1453, %v1441, 0.0
      %v1456 = vld [vmem:[%s313] sm:$0xf]
      %1458 = vset.pattern.permute.xlu0 34
      %1459 = vperm.xlu0 %1458, %v1456
      %v1460 = vpop.permute.xlu0 %1459
      %v1462 = vmul.f32 %v1454, %v1460
      %v1463 = vmul.f32 %v1455, %v1460
      %v1464 = vadd.f32 %v1433, %v1462
      %v1465 = vadd.f32 %v1434, %v1463
      %vm1466 = vcmp.ge.s32.totalorder %v338, 4294967294
      %vm1467 = vcmp.lt.s32.totalorder %v338, 14
      %vm1468 = vmand %vm1466, %vm1467
      %1469 = vrot.lane.b32.xlu0 %v337, 99
      %v1470 = vpop.permute.xlu0 %1469
      %1471 = vrot.lane.b32.xlu0 %v354, 99
      %v1472 = vpop.permute.xlu0 %1471
      %vm1473 = vcmp.lt.s32.totalorder %v361, 99
      %v1474 = vsel %vm1473, %v1470, %v1472
      %v1475 = vsel %vm1473, %v1472, %v1470
      %vm1476 = vmand %vm1468, %vm352
      %v1477 = vsel %vm1476, 1, 0
      %v1478 = vlaneseq
      %v1479 = vshrl.u32 %v1478, 7
      %v1480 = vsub.s32 0, %v1479
      %v1481 = vrot.slane %v1477, %v1480
      %v1482 = vlaneseq
      %v1483 = vshrl.u32 %v1482, 7
      %v1484 = vsub.s32 1, %v1483
      %v1485 = vrot.slane %v1477, %v1484
      %vm1486 = vcmp.eq.s32.totalorder %v1481, 1
      %vm1487 = vcmp.eq.s32.totalorder %v1485, 1
      %v1488 = vsel %vm1486, %v1474, 0.0
      %v1489 = vsel %vm1487, %v1475, 0.0
      %v1490 = vld [vmem:[%s313] sm:$0xf]
      %1492 = vset.pattern.permute.xlu0 35
      %1493 = vperm.xlu0 %1492, %v1490
      %v1494 = vpop.permute.xlu0 %1493
      %v1496 = vmul.f32 %v1488, %v1494
      %v1497 = vmul.f32 %v1489, %v1494
      %v1498 = vadd.f32 %v1464, %v1496
      %v1499 = vadd.f32 %v1465, %v1497
      %1500 = vrot.lane.b32.xlu0 %v337, 98
      %v1501 = vpop.permute.xlu0 %1500
      %1502 = vrot.lane.b32.xlu0 %v354, 98
      %v1503 = vpop.permute.xlu0 %1502
      %vm1504 = vcmp.lt.s32.totalorder %v361, 98
      %v1505 = vsel %vm1504, %v1501, %v1503
      %v1506 = vsel %vm1504, %v1503, %v1501
      %vm1507 = vmand %vm1468, %vm391
      %v1508 = vsel %vm1507, 1, 0
      %v1509 = vlaneseq
      %v1510 = vshrl.u32 %v1509, 7
      %v1511 = vsub.s32 0, %v1510
      %v1512 = vrot.slane %v1508, %v1511
      %v1513 = vlaneseq
      %v1514 = vshrl.u32 %v1513, 7
      %v1515 = vsub.s32 1, %v1514
      %v1516 = vrot.slane %v1508, %v1515
      %vm1517 = vcmp.eq.s32.totalorder %v1512, 1
      %vm1518 = vcmp.eq.s32.totalorder %v1516, 1
      %v1519 = vsel %vm1517, %v1505, 0.0
      %v1520 = vsel %vm1518, %v1506, 0.0
      %v1521 = vld [vmem:[%s313] sm:$0xf]
      %1523 = vset.pattern.permute.xlu0 36
      %1524 = vperm.xlu0 %1523, %v1521
      %v1525 = vpop.permute.xlu0 %1524
      %v1527 = vmul.f32 %v1519, %v1525
      %v1528 = vmul.f32 %v1520, %v1525
      %v1529 = vadd.f32 %v1498, %v1527
      %v1530 = vadd.f32 %v1499, %v1528
      %1531 = vrot.lane.b32.xlu0 %v337, 97
      %v1532 = vpop.permute.xlu0 %1531
      %1533 = vrot.lane.b32.xlu0 %v354, 97
      %v1534 = vpop.permute.xlu0 %1533
      %vm1535 = vcmp.lt.s32.totalorder %v361, 97
      %v1536 = vsel %vm1535, %v1532, %v1534
      %v1537 = vsel %vm1535, %v1534, %v1532
      %vm1538 = vmand %vm1468, %vm425
      %v1539 = vsel %vm1538, 1, 0
      %v1540 = vlaneseq
      %v1541 = vshrl.u32 %v1540, 7
      %v1542 = vsub.s32 0, %v1541
      %v1543 = vrot.slane %v1539, %v1542
      %v1544 = vlaneseq
      %v1545 = vshrl.u32 %v1544, 7
      %v1546 = vsub.s32 1, %v1545
      %v1547 = vrot.slane %v1539, %v1546
      %vm1548 = vcmp.eq.s32.totalorder %v1543, 1
      %vm1549 = vcmp.eq.s32.totalorder %v1547, 1
      %v1550 = vsel %vm1548, %v1536, 0.0
      %v1551 = vsel %vm1549, %v1537, 0.0
      %v1552 = vld [vmem:[%s313] sm:$0xf]
      %1554 = vset.pattern.permute.xlu0 37
      %1555 = vperm.xlu0 %1554, %v1552
      %v1556 = vpop.permute.xlu0 %1555
      %v1558 = vmul.f32 %v1550, %v1556
      %v1559 = vmul.f32 %v1551, %v1556
      %v1560 = vadd.f32 %v1529, %v1558
      %v1561 = vadd.f32 %v1530, %v1559
      %1562 = vrot.lane.b32.xlu0 %v337, 96
      %v1563 = vpop.permute.xlu0 %1562
      %1564 = vrot.lane.b32.xlu0 %v354, 96
      %v1565 = vpop.permute.xlu0 %1564
      %vm1566 = vcmp.lt.s32.totalorder %v361, 96
      %v1567 = vsel %vm1566, %v1563, %v1565
      %v1568 = vsel %vm1566, %v1565, %v1563
      %vm1569 = vmand %vm1468, %vm459
      %v1570 = vsel %vm1569, 1, 0
      %v1571 = vlaneseq
      %v1572 = vshrl.u32 %v1571, 7
      %v1573 = vsub.s32 0, %v1572
      %v1574 = vrot.slane %v1570, %v1573
      %v1575 = vlaneseq
      %v1576 = vshrl.u32 %v1575, 7
      %v1577 = vsub.s32 1, %v1576
      %v1578 = vrot.slane %v1570, %v1577
      %vm1579 = vcmp.eq.s32.totalorder %v1574, 1
      %vm1580 = vcmp.eq.s32.totalorder %v1578, 1
      %v1581 = vsel %vm1579, %v1567, 0.0
      %v1582 = vsel %vm1580, %v1568, 0.0
      %v1583 = vld [vmem:[%s313] sm:$0xf]
      %1585 = vset.pattern.permute.xlu0 38
      %1586 = vperm.xlu0 %1585, %v1583
      %v1587 = vpop.permute.xlu0 %1586
      %v1589 = vmul.f32 %v1581, %v1587
      %v1590 = vmul.f32 %v1582, %v1587
      %v1591 = vadd.f32 %v1560, %v1589
      %v1592 = vadd.f32 %v1561, %v1590
      %1593 = vrot.lane.b32.xlu0 %v337, 95
      %v1594 = vpop.permute.xlu0 %1593
      %1595 = vrot.lane.b32.xlu0 %v354, 95
      %v1596 = vpop.permute.xlu0 %1595
      %vm1597 = vcmp.lt.s32.totalorder %v361, 95
      %v1598 = vsel %vm1597, %v1594, %v1596
      %v1599 = vsel %vm1597, %v1596, %v1594
      %vm1600 = vmand %vm1468, %vm493
      %v1601 = vsel %vm1600, 1, 0
      %v1602 = vlaneseq
      %v1603 = vshrl.u32 %v1602, 7
      %v1604 = vsub.s32 0, %v1603
      %v1605 = vrot.slane %v1601, %v1604
      %v1606 = vlaneseq
      %v1607 = vshrl.u32 %v1606, 7
      %v1608 = vsub.s32 1, %v1607
      %v1609 = vrot.slane %v1601, %v1608
      %vm1610 = vcmp.eq.s32.totalorder %v1605, 1
      %vm1611 = vcmp.eq.s32.totalorder %v1609, 1
      %v1612 = vsel %vm1610, %v1598, 0.0
      %v1613 = vsel %vm1611, %v1599, 0.0
      %v1614 = vld [vmem:[%s313] sm:$0xf]
      %1616 = vset.pattern.permute.xlu0 39
      %1617 = vperm.xlu0 %1616, %v1614
      %v1618 = vpop.permute.xlu0 %1617
      %v1620 = vmul.f32 %v1612, %v1618
      %v1621 = vmul.f32 %v1613, %v1618
      %v1622 = vadd.f32 %v1591, %v1620
      %v1623 = vadd.f32 %v1592, %v1621
      %1624 = vrot.lane.b32.xlu0 %v337, 94
      %v1625 = vpop.permute.xlu0 %1624
      %1626 = vrot.lane.b32.xlu0 %v354, 94
      %v1627 = vpop.permute.xlu0 %1626
      %vm1628 = vcmp.lt.s32.totalorder %v361, 94
      %v1629 = vsel %vm1628, %v1625, %v1627
      %v1630 = vsel %vm1628, %v1627, %v1625
      %vm1631 = vmand %vm1468, %vm527
      %v1632 = vsel %vm1631, 1, 0
      %v1633 = vlaneseq
      %v1634 = vshrl.u32 %v1633, 7
      %v1635 = vsub.s32 0, %v1634
      %v1636 = vrot.slane %v1632, %v1635
      %v1637 = vlaneseq
      %v1638 = vshrl.u32 %v1637, 7
      %v1639 = vsub.s32 1, %v1638
      %v1640 = vrot.slane %v1632, %v1639
      %vm1641 = vcmp.eq.s32.totalorder %v1636, 1
      %vm1642 = vcmp.eq.s32.totalorder %v1640, 1
      %v1643 = vsel %vm1641, %v1629, 0.0
      %v1644 = vsel %vm1642, %v1630, 0.0
      %v1645 = vld [vmem:[%s313] sm:$0xf]
      %1647 = vset.pattern.permute.xlu0 40
      %1648 = vperm.xlu0 %1647, %v1645
      %v1649 = vpop.permute.xlu0 %1648
      %v1651 = vmul.f32 %v1643, %v1649
      %v1652 = vmul.f32 %v1644, %v1649
      %v1653 = vadd.f32 %v1622, %v1651
      %v1654 = vadd.f32 %v1623, %v1652
      %1655 = vrot.lane.b32.xlu0 %v337, 93
      %v1656 = vpop.permute.xlu0 %1655
      %1657 = vrot.lane.b32.xlu0 %v354, 93
      %v1658 = vpop.permute.xlu0 %1657
      %vm1659 = vcmp.lt.s32.totalorder %v361, 93
      %v1660 = vsel %vm1659, %v1656, %v1658
      %v1661 = vsel %vm1659, %v1658, %v1656
      %vm1662 = vmand %vm1468, %vm561
      %v1663 = vsel %vm1662, 1, 0
      %v1664 = vlaneseq
      %v1665 = vshrl.u32 %v1664, 7
      %v1666 = vsub.s32 0, %v1665
      %v1667 = vrot.slane %v1663, %v1666
      %v1668 = vlaneseq
      %v1669 = vshrl.u32 %v1668, 7
      %v1670 = vsub.s32 1, %v1669
      %v1671 = vrot.slane %v1663, %v1670
      %vm1672 = vcmp.eq.s32.totalorder %v1667, 1
      %vm1673 = vcmp.eq.s32.totalorder %v1671, 1
      %v1674 = vsel %vm1672, %v1660, 0.0
      %v1675 = vsel %vm1673, %v1661, 0.0
      %v1676 = vld [vmem:[%s313] sm:$0xf]
      %1678 = vset.pattern.permute.xlu0 41
      %1679 = vperm.xlu0 %1678, %v1676
      %v1680 = vpop.permute.xlu0 %1679
      %v1682 = vmul.f32 %v1674, %v1680
      %v1683 = vmul.f32 %v1675, %v1680
      %v1684 = vadd.f32 %v1653, %v1682
      %v1685 = vadd.f32 %v1654, %v1683
      %vm1686 = vcmp.ge.s32.totalorder %v338, 4294967293
      %vm1687 = vcmp.lt.s32.totalorder %v338, 13
      %vm1688 = vmand %vm1686, %vm1687
      %1689 = vrot.lane.b32.xlu0 %v337, 83
      %v1690 = vpop.permute.xlu0 %1689
      %1691 = vrot.lane.b32.xlu0 %v354, 83
      %v1692 = vpop.permute.xlu0 %1691
      %vm1693 = vcmp.lt.s32.totalorder %v361, 83
      %v1694 = vsel %vm1693, %v1690, %v1692
      %v1695 = vsel %vm1693, %v1692, %v1690
      %vm1696 = vmand %vm1688, %vm352
      %v1697 = vsel %vm1696, 1, 0
      %v1698 = vlaneseq
      %v1699 = vshrl.u32 %v1698, 7
      %v1700 = vsub.s32 0, %v1699
      %v1701 = vrot.slane %v1697, %v1700
      %v1702 = vlaneseq
      %v1703 = vshrl.u32 %v1702, 7
      %v1704 = vsub.s32 1, %v1703
      %v1705 = vrot.slane %v1697, %v1704
      %vm1706 = vcmp.eq.s32.totalorder %v1701, 1
      %vm1707 = vcmp.eq.s32.totalorder %v1705, 1
      %v1708 = vsel %vm1706, %v1694, 0.0
      %v1709 = vsel %vm1707, %v1695, 0.0
      %v1710 = vld [vmem:[%s313] sm:$0xf]
      %1712 = vset.pattern.permute.xlu0 42
      %1713 = vperm.xlu0 %1712, %v1710
      %v1714 = vpop.permute.xlu0 %1713
      %v1716 = vmul.f32 %v1708, %v1714
      %v1717 = vmul.f32 %v1709, %v1714
      %v1718 = vadd.f32 %v1684, %v1716
      %v1719 = vadd.f32 %v1685, %v1717
      %1720 = vrot.lane.b32.xlu0 %v337, 82
      %v1721 = vpop.permute.xlu0 %1720
      %1722 = vrot.lane.b32.xlu0 %v354, 82
      %v1723 = vpop.permute.xlu0 %1722
      %vm1724 = vcmp.lt.s32.totalorder %v361, 82
      %v1725 = vsel %vm1724, %v1721, %v1723
      %v1726 = vsel %vm1724, %v1723, %v1721
      %vm1727 = vmand %vm1688, %vm391
      %v1728 = vsel %vm1727, 1, 0
      %v1729 = vlaneseq
      %v1730 = vshrl.u32 %v1729, 7
      %v1731 = vsub.s32 0, %v1730
      %v1732 = vrot.slane %v1728, %v1731
      %v1733 = vlaneseq
      %v1734 = vshrl.u32 %v1733, 7
      %v1735 = vsub.s32 1, %v1734
      %v1736 = vrot.slane %v1728, %v1735
      %vm1737 = vcmp.eq.s32.totalorder %v1732, 1
      %vm1738 = vcmp.eq.s32.totalorder %v1736, 1
      %v1739 = vsel %vm1737, %v1725, 0.0
      %v1740 = vsel %vm1738, %v1726, 0.0
      %v1741 = vld [vmem:[%s313] sm:$0xf]
      %1743 = vset.pattern.permute.xlu0 43
      %1744 = vperm.xlu0 %1743, %v1741
      %v1745 = vpop.permute.xlu0 %1744
      %v1747 = vmul.f32 %v1739, %v1745
      %v1748 = vmul.f32 %v1740, %v1745
      %v1749 = vadd.f32 %v1718, %v1747
      %v1750 = vadd.f32 %v1719, %v1748
      %1751 = vrot.lane.b32.xlu0 %v337, 81
      %v1752 = vpop.permute.xlu0 %1751
      %1753 = vrot.lane.b32.xlu0 %v354, 81
      %v1754 = vpop.permute.xlu0 %1753
      %vm1755 = vcmp.lt.s32.totalorder %v361, 81
      %v1756 = vsel %vm1755, %v1752, %v1754
      %v1757 = vsel %vm1755, %v1754, %v1752
      %vm1758 = vmand %vm1688, %vm425
      %v1759 = vsel %vm1758, 1, 0
      %v1760 = vlaneseq
      %v1761 = vshrl.u32 %v1760, 7
      %v1762 = vsub.s32 0, %v1761
      %v1763 = vrot.slane %v1759, %v1762
      %v1764 = vlaneseq
      %v1765 = vshrl.u32 %v1764, 7
      %v1766 = vsub.s32 1, %v1765
      %v1767 = vrot.slane %v1759, %v1766
      %vm1768 = vcmp.eq.s32.totalorder %v1763, 1
      %vm1769 = vcmp.eq.s32.totalorder %v1767, 1
      %v1770 = vsel %vm1768, %v1756, 0.0
      %v1771 = vsel %vm1769, %v1757, 0.0
      %v1772 = vld [vmem:[%s313] sm:$0xf]
      %1774 = vset.pattern.permute.xlu0 44
      %1775 = vperm.xlu0 %1774, %v1772
      %v1776 = vpop.permute.xlu0 %1775
      %v1778 = vmul.f32 %v1770, %v1776
      %v1779 = vmul.f32 %v1771, %v1776
      %v1780 = vadd.f32 %v1749, %v1778
      %v1781 = vadd.f32 %v1750, %v1779
      %1782 = vrot.lane.b32.xlu0 %v337, 80
      %v1783 = vpop.permute.xlu0 %1782
      %1784 = vrot.lane.b32.xlu0 %v354, 80
      %v1785 = vpop.permute.xlu0 %1784
      %vm1786 = vcmp.lt.s32.totalorder %v361, 80
      %v1787 = vsel %vm1786, %v1783, %v1785
      %v1788 = vsel %vm1786, %v1785, %v1783
      %vm1789 = vmand %vm1688, %vm459
      %v1790 = vsel %vm1789, 1, 0
      %v1791 = vlaneseq
      %v1792 = vshrl.u32 %v1791, 7
      %v1793 = vsub.s32 0, %v1792
      %v1794 = vrot.slane %v1790, %v1793
      %v1795 = vlaneseq
      %v1796 = vshrl.u32 %v1795, 7
      %v1797 = vsub.s32 1, %v1796
      %v1798 = vrot.slane %v1790, %v1797
      %vm1799 = vcmp.eq.s32.totalorder %v1794, 1
      %vm1800 = vcmp.eq.s32.totalorder %v1798, 1
      %v1801 = vsel %vm1799, %v1787, 0.0
      %v1802 = vsel %vm1800, %v1788, 0.0
      %v1803 = vld [vmem:[%s313] sm:$0xf]
      %1805 = vset.pattern.permute.xlu0 45
      %1806 = vperm.xlu0 %1805, %v1803
      %v1807 = vpop.permute.xlu0 %1806
      %v1809 = vmul.f32 %v1801, %v1807
      %v1810 = vmul.f32 %v1802, %v1807
      %v1811 = vadd.f32 %v1780, %v1809
      %v1812 = vadd.f32 %v1781, %v1810
      %1813 = vrot.lane.b32.xlu0 %v337, 79
      %v1814 = vpop.permute.xlu0 %1813
      %1815 = vrot.lane.b32.xlu0 %v354, 79
      %v1816 = vpop.permute.xlu0 %1815
      %vm1817 = vcmp.lt.s32.totalorder %v361, 79
      %v1818 = vsel %vm1817, %v1814, %v1816
      %v1819 = vsel %vm1817, %v1816, %v1814
      %vm1820 = vmand %vm1688, %vm493
      %v1821 = vsel %vm1820, 1, 0
      %v1822 = vlaneseq
      %v1823 = vshrl.u32 %v1822, 7
      %v1824 = vsub.s32 0, %v1823
      %v1825 = vrot.slane %v1821, %v1824
      %v1826 = vlaneseq
      %v1827 = vshrl.u32 %v1826, 7
      %v1828 = vsub.s32 1, %v1827
      %v1829 = vrot.slane %v1821, %v1828
      %vm1830 = vcmp.eq.s32.totalorder %v1825, 1
      %vm1831 = vcmp.eq.s32.totalorder %v1829, 1
      %v1832 = vsel %vm1830, %v1818, 0.0
      %v1833 = vsel %vm1831, %v1819, 0.0
      %v1834 = vld [vmem:[%s313] sm:$0xf]
      %1836 = vset.pattern.permute.xlu0 46
      %1837 = vperm.xlu0 %1836, %v1834
      %v1838 = vpop.permute.xlu0 %1837
      %v1840 = vmul.f32 %v1832, %v1838
      %v1841 = vmul.f32 %v1833, %v1838
      %v1842 = vadd.f32 %v1811, %v1840
      %v1843 = vadd.f32 %v1812, %v1841
      %1844 = vrot.lane.b32.xlu0 %v337, 78
      %v1845 = vpop.permute.xlu0 %1844
      %1846 = vrot.lane.b32.xlu0 %v354, 78
      %v1847 = vpop.permute.xlu0 %1846
      %vm1848 = vcmp.lt.s32.totalorder %v361, 78
      %v1849 = vsel %vm1848, %v1845, %v1847
      %v1850 = vsel %vm1848, %v1847, %v1845
      %vm1851 = vmand %vm1688, %vm527
      %v1852 = vsel %vm1851, 1, 0
      %v1853 = vlaneseq
      %v1854 = vshrl.u32 %v1853, 7
      %v1855 = vsub.s32 0, %v1854
      %v1856 = vrot.slane %v1852, %v1855
      %v1857 = vlaneseq
      %v1858 = vshrl.u32 %v1857, 7
      %v1859 = vsub.s32 1, %v1858
      %v1860 = vrot.slane %v1852, %v1859
      %vm1861 = vcmp.eq.s32.totalorder %v1856, 1
      %vm1862 = vcmp.eq.s32.totalorder %v1860, 1
      %v1863 = vsel %vm1861, %v1849, 0.0
      %v1864 = vsel %vm1862, %v1850, 0.0
      %v1865 = vld [vmem:[%s313] sm:$0xf]
      %1867 = vset.pattern.permute.xlu0 47
      %1868 = vperm.xlu0 %1867, %v1865
      %v1869 = vpop.permute.xlu0 %1868
      %v1871 = vmul.f32 %v1863, %v1869
      %v1872 = vmul.f32 %v1864, %v1869
      %v1873 = vadd.f32 %v1842, %v1871
      %v1874 = vadd.f32 %v1843, %v1872
      %1875 = vrot.lane.b32.xlu0 %v337, 77
      %v1876 = vpop.permute.xlu0 %1875
      %1877 = vrot.lane.b32.xlu0 %v354, 77
      %v1878 = vpop.permute.xlu0 %1877
      %vm1879 = vcmp.lt.s32.totalorder %v361, 77
      %v1880 = vsel %vm1879, %v1876, %v1878
      %v1881 = vsel %vm1879, %v1878, %v1876
      %vm1882 = vmand %vm1688, %vm561
      %v1883 = vsel %vm1882, 1, 0
      %v1884 = vlaneseq
      %v1885 = vshrl.u32 %v1884, 7
      %v1886 = vsub.s32 0, %v1885
      %v1887 = vrot.slane %v1883, %v1886
      %v1888 = vlaneseq
      %v1889 = vshrl.u32 %v1888, 7
      %v1890 = vsub.s32 1, %v1889
      %v1891 = vrot.slane %v1883, %v1890
      %vm1892 = vcmp.eq.s32.totalorder %v1887, 1
      %vm1893 = vcmp.eq.s32.totalorder %v1891, 1
      %v1894 = vsel %vm1892, %v1880, 0.0
      %v1895 = vsel %vm1893, %v1881, 0.0
      %v1896 = vld [vmem:[%s313] sm:$0xf]
      %1898 = vset.pattern.permute.xlu0 48
      %1899 = vperm.xlu0 %1898, %v1896
      %v1900 = vpop.permute.xlu0 %1899
      %v1902 = vmul.f32 %v1894, %v1900
      %v1903 = vmul.f32 %v1895, %v1900
      %v1904 = vadd.f32 %v1873, %v1902
      %v1905 = vadd.f32 %v1874, %v1903
      %v1906 = vld [vmem:[%s326] sm:$0xff]
      %v1907 = vstv %s336
      %v1908 = vmul.f32 %v1907, %v1904
      %v1909 = vmul.f32 %v1907, %v1905
      %v1912 = vcombine.low %v1908, %v1909
      %v1914 = vadd.f32 %v1906, %v1912
      %1915 = vst [vmem:[%s335] sm:$0xff] %v1914
      %p1916 = scmp.lt.s32.totalorder %s27, 1
      %s1917 = scalar_select %p1916, %s27, 1
      %p1918 = scmp.lt.s32.totalorder %s28, 0
      %s1919 = scalar_select %p1918, %s28, 0
      %s1920 = smul.addr %s1919, 2
      %s1921 = smul.addr %s1917, 2
      %s1922 = sadd.s32 %s1920, %s1921
      %s1923 = smul.addr %s1922, 4
      %s1924 = scalar_lea.vmem %s6, %s1923
      // Predicated region
      $region41: #{star_block_forward.3} parent=39 // pred_check
        %p1925 = pneg %p184
      $region42: #{star_block_forward.3} parent=39 // pred_check_branch
        %1927 = sbr.rel (%p1925) target = $region44
      $region43: #{star_block_forward.3} parent=39 // pred_region
        _
      $region44: #{star_block_forward.3} parent=39 // pred_fallthru
        _
    $region40: #{star_block_forward.3} parent=5 // pred_fallthru
      _
    %p1928 = scmp.le.s32.totalorder 2, %s18
    // Predicated region
    $region45: #{star_block_forward.3} parent=5 // pred_check
      %p1929 = pneg %p1928
    $region46: #{star_block_forward.3} parent=5 // pred_check_branch
      %1931 = sbr.rel (%p1929) target = $region48
    $region47: #{star_block_forward.3} parent=5 // pred_region
      %s1932 = ssub.s32 %s18, 2
      // Predicated region
      $region49: #{star_block_forward.3} parent=47 // pred_check
        %p1933 = pneg %p190
      $region50: #{star_block_forward.3} parent=47 // pred_check_branch
        %1935 = sbr.rel (%p1933) target = $region52
      $region51: #{star_block_forward.3} parent=47 // pred_region
        %p1936 = scmp.lt.s32.totalorder %s29, 1
        %s1937 = scalar_select %p1936, %s29, 1
        %p1938 = scmp.lt.s32.totalorder %s30, 0
        %s1939 = scalar_select %p1938, %s30, 0
        %s1940 = smul.addr %s1939, 2
        %s1941 = smul.addr %s1937, 2
        %s1942 = sadd.s32 %s1940, %s1941
        %s1943 = smul.addr %s1942, 4
        %s1944 = scalar_lea.vmem %s6, %s1943
      $region52: #{star_block_forward.3} parent=47 // pred_fallthru
        _
    $region48: #{star_block_forward.3} parent=5 // pred_fallthru
      _
  $region6: #{star_block_forward.3} parent=0 // loop_footer
    %s22 = sadd.s32 1, %s18
  $region7: #{star_block_forward.3} parent=0 // loop_footer_branch
    %17 = sbr.rel target = $region3
  $region8: #{star_block_forward.3} parent=0 // loop_exit
    _

// kernel: star_block_forward.2
$region0: #{star_block_forward.2}
  #allocation0 [shape = 'u32[]', space=smem, size = 0x4, offset = 0x4, fixed_abs, tag = 'smem constant byte address 0x4 - core index']
  #allocation1 [shape = 'u32[144,128]{1,0:T(1,128)}', space=vmem, size = 0x12000, scoped, tag = 'internal scratch']
  %s0 = inlined_call_operand.vmem [shape: s32[2,256], index: 0, kind: input, shape index: {}]
  %s1 = inlined_call_operand.vmem [shape: f32[2,4,256], index: 1, kind: input, shape index: {}]
  %s2 = inlined_call_operand.vmem [shape: f32[4,49], index: 2, kind: input, shape index: {}]
  %s3 = inlined_call_operand.vmem [shape: f32[4,1], index: 3, kind: input, shape index: {}]
  %s4 = inlined_call_operand.vmem [shape: f32[32,4], index: 4, kind: input, shape index: {}]
  %s5 = inlined_call_operand.vmem [shape: f32[32,1], index: 5, kind: input, shape index: {}]
  %s6 = inlined_call_operand.vmem [shape: f32[4,16], index: 6, kind: input, shape index: {}]
  %s7 = inlined_call_operand.vmem [shape: f32[4,1], index: 7, kind: input, shape index: {}]
  %s8 = inlined_call_operand.vmem [shape: f32[2,4,256], index: 8, kind: output, shape index: {}]
  %s9 = sld [smem:[#allocation0]]
  $region65: #{star_block_forward.2} parent=0
    _
  %s11 = ssub.s32 1, %s9
  %s12 = scalar_select 0, %s11, %s9
  loop: start=0, step=1, limit=4
  $region2: #{star_block_forward.2} parent=0 // loop_pre_header
    _
  $region3: #{star_block_forward.2} parent=0 // loop_header
    %s14 = sphi 0, %s18
    %p15 = scmp.ge.s32.totalorder %s14, 4
    %s22 = sphi 0, %s22
    %s24 = sphi 0, %s22
    %s25 = sphi 0, %s24
    %s39 = sphi 0, %s25
    %s45 = sphi 0, %s47
    %s48 = sphi 0, %s45
    %s49 = sphi 0, %s48
    %s65 = sphi 0, %s49
    %s69 = sphi 0, %s69
    %s71 = sphi 0, %s69
    %s72 = sphi 0, %s71
    %s86 = sphi 0, %s72
    %s90 = sphi 0, %s90
    %s92 = sphi 0, %s90
    %s93 = sphi 0, %s92
    %s107 = sphi 0, %s93
    %s111 = sphi 0, %s111
    %s113 = sphi 0, %s111
    %s114 = sphi 0, %s113
    %s128 = sphi 0, %s114
    %s132 = sphi 0, %s132
    %s134 = sphi 0, %s132
    %s135 = sphi 0, %s134
    %s149 = sphi 0, %s135
    %s153 = sphi 0, %s153
    %s155 = sphi 0, %s153
    %s156 = sphi 0, %s155
    %s170 = sphi 0, %s156
    %s174 = sphi 0, %s174
    %s176 = sphi 0, %s174
    %s177 = sphi 0, %s176
    %s191 = sphi 0, %s177
    %s197 = sphi 0, %s199
    %s200 = sphi 0, %s197
    %s201 = sphi 0, %s200
    %s217 = sphi 0, %s201
  $region4: #{star_block_forward.2} parent=0 // loop_header_branch
    %17 = sbr.rel (%p15) target = $region8
  $region5: #{star_block_forward.2} parent=0 // loop_body
    %s19 = ssub.s32 %s14, 1
    %s20 = ssub.s32 %s14, 2
    %s21 = sadd.s32 %s14, 1
    %s23 = sadd.s32 %s22, 1
    %p26 = scmp.eq.s32.totalorder %s14, 1
    %p27 = scmp.ne.s32.totalorder %s22, %s24
    %p28 = scmp.eq.s32.totalorder %s14, 0
    %p29 = por %p27, %p28
    %p30 = scmp.ne.s32.totalorder %s22, %s24
    %p31 = scmp.eq.s32.totalorder %s19, 1
    %p32 = por %p30, %p31
    %p33 = scmp.ne.s32.totalorder %s24, %s25
    %p34 = scmp.eq.s32.totalorder %s19, 0
    %p35 = por %p33, %p34
    %p36 = scmp.ne.s32.totalorder %s24, %s25
    %p37 = scmp.eq.s32.totalorder %s20, 1
    %p38 = por %p36, %p37
    %p40 = scmp.ne.s32.totalorder %s25, %s39
    %p41 = scmp.eq.s32.totalorder %s20, 0
    %p42 = por %p40, %p41
    %s43 = ssub.s32 %s14, %s21
    %p44 = scmp.eq.s32.totalorder %s43, 0
    %s46 = sadd.s32 %s45, 1
    %s47 = scalar_select %p44, %s45, %s46
    %p50 = pneg %p44
    %p51 = scmp.eq.s32.totalorder %s14, 1
    %p52 = por %p50, %p51
    %p53 = scmp.ne.s32.totalorder %s45, %s48
    %p54 = scmp.eq.s32.totalorder %s14, 0
    %p55 = por %p53, %p54
    %p56 = scmp.ne.s32.totalorder %s45, %s48
    %p57 = scmp.eq.s32.totalorder %s19, 1
    %p58 = por %p56, %p57
    %p59 = scmp.ne.s32.totalorder %s48, %s49
    %p60 = scmp.eq.s32.totalorder %s19, 0
    %p61 = por %p59, %p60
    %p62 = scmp.ne.s32.totalorder %s48, %s49
    %p63 = scmp.eq.s32.totalorder %s20, 1
    %p64 = por %p62, %p63
    %p66 = scmp.ne.s32.totalorder %s49, %s65
    %p67 = scmp.eq.s32.totalorder %s20, 0
    %p68 = por %p66, %p67
    %s70 = sadd.s32 %s69, 1
    %p73 = scmp.eq.s32.totalorder %s14, 1
    %p74 = scmp.ne.s32.totalorder %s69, %s71
    %p75 = scmp.eq.s32.totalorder %s14, 0
    %p76 = por %p74, %p75
    %p77 = scmp.ne.s32.totalorder %s69, %s71
    %p78 = scmp.eq.s32.totalorder %s19, 1
    %p79 = por %p77, %p78
    %p80 = scmp.ne.s32.totalorder %s71, %s72
    %p81 = scmp.eq.s32.totalorder %s19, 0
    %p82 = por %p80, %p81
    %p83 = scmp.ne.s32.totalorder %s71, %s72
    %p84 = scmp.eq.s32.totalorder %s20, 1
    %p85 = por %p83, %p84
    %p87 = scmp.ne.s32.totalorder %s72, %s86
    %p88 = scmp.eq.s32.totalorder %s20, 0
    %p89 = por %p87, %p88
    %s91 = sadd.s32 %s90, 1
    %p94 = scmp.eq.s32.totalorder %s14, 1
    %p95 = scmp.ne.s32.totalorder %s90, %s92
    %p96 = scmp.eq.s32.totalorder %s14, 0
    %p97 = por %p95, %p96
    %p98 = scmp.ne.s32.totalorder %s90, %s92
    %p99 = scmp.eq.s32.totalorder %s19, 1
    %p100 = por %p98, %p99
    %p101 = scmp.ne.s32.totalorder %s92, %s93
    %p102 = scmp.eq.s32.totalorder %s19, 0
    %p103 = por %p101, %p102
    %p104 = scmp.ne.s32.totalorder %s92, %s93
    %p105 = scmp.eq.s32.totalorder %s20, 1
    %p106 = por %p104, %p105
    %p108 = scmp.ne.s32.totalorder %s93, %s107
    %p109 = scmp.eq.s32.totalorder %s20, 0
    %p110 = por %p108, %p109
    %s112 = sadd.s32 %s111, 1
    %p115 = scmp.eq.s32.totalorder %s14, 1
    %p116 = scmp.ne.s32.totalorder %s111, %s113
    %p117 = scmp.eq.s32.totalorder %s14, 0
    %p118 = por %p116, %p117
    %p119 = scmp.ne.s32.totalorder %s111, %s113
    %p120 = scmp.eq.s32.totalorder %s19, 1
    %p121 = por %p119, %p120
    %p122 = scmp.ne.s32.totalorder %s113, %s114
    %p123 = scmp.eq.s32.totalorder %s19, 0
    %p124 = por %p122, %p123
    %p125 = scmp.ne.s32.totalorder %s113, %s114
    %p126 = scmp.eq.s32.totalorder %s20, 1
    %p127 = por %p125, %p126
    %p129 = scmp.ne.s32.totalorder %s114, %s128
    %p130 = scmp.eq.s32.totalorder %s20, 0
    %p131 = por %p129, %p130
    %s133 = sadd.s32 %s132, 1
    %p136 = scmp.eq.s32.totalorder %s14, 1
    %p137 = scmp.ne.s32.totalorder %s132, %s134
    %p138 = scmp.eq.s32.totalorder %s14, 0
    %p139 = por %p137, %p138
    %p140 = scmp.ne.s32.totalorder %s132, %s134
    %p141 = scmp.eq.s32.totalorder %s19, 1
    %p142 = por %p140, %p141
    %p143 = scmp.ne.s32.totalorder %s134, %s135
    %p144 = scmp.eq.s32.totalorder %s19, 0
    %p145 = por %p143, %p144
    %p146 = scmp.ne.s32.totalorder %s134, %s135
    %p147 = scmp.eq.s32.totalorder %s20, 1
    %p148 = por %p146, %p147
    %p150 = scmp.ne.s32.totalorder %s135, %s149
    %p151 = scmp.eq.s32.totalorder %s20, 0
    %p152 = por %p150, %p151
    %s154 = sadd.s32 %s153, 1
    %p157 = scmp.eq.s32.totalorder %s14, 1
    %p158 = scmp.ne.s32.totalorder %s153, %s155
    %p159 = scmp.eq.s32.totalorder %s14, 0
    %p160 = por %p158, %p159
    %p161 = scmp.ne.s32.totalorder %s153, %s155
    %p162 = scmp.eq.s32.totalorder %s19, 1
    %p163 = por %p161, %p162
    %p164 = scmp.ne.s32.totalorder %s155, %s156
    %p165 = scmp.eq.s32.totalorder %s19, 0
    %p166 = por %p164, %p165
    %p167 = scmp.ne.s32.totalorder %s155, %s156
    %p168 = scmp.eq.s32.totalorder %s20, 1
    %p169 = por %p167, %p168
    %p171 = scmp.ne.s32.totalorder %s156, %s170
    %p172 = scmp.eq.s32.totalorder %s20, 0
    %p173 = por %p171, %p172
    %s175 = sadd.s32 %s174, 1
    %p178 = scmp.eq.s32.totalorder %s14, 1
    %p179 = scmp.ne.s32.totalorder %s174, %s176
    %p180 = scmp.eq.s32.totalorder %s14, 0
    %p181 = por %p179, %p180
    %p182 = scmp.ne.s32.totalorder %s174, %s176
    %p183 = scmp.eq.s32.totalorder %s19, 1
    %p184 = por %p182, %p183
    %p185 = scmp.ne.s32.totalorder %s176, %s177
    %p186 = scmp.eq.s32.totalorder %s19, 0
    %p187 = por %p185, %p186
    %p188 = scmp.ne.s32.totalorder %s176, %s177
    %p189 = scmp.eq.s32.totalorder %s20, 1
    %p190 = por %p188, %p189
    %p192 = scmp.ne.s32.totalorder %s177, %s191
    %p193 = scmp.eq.s32.totalorder %s20, 0
    %p194 = por %p192, %p193
    %s195 = ssub.s32 %s14, %s21
    %p196 = scmp.eq.s32.totalorder %s195, 0
    %s198 = sadd.s32 %s197, 1
    %s199 = scalar_select %p196, %s197, %s198
    %p202 = pneg %p196
    %p203 = scmp.eq.s32.totalorder %s14, 1
    %p204 = por %p202, %p203
    %p205 = scmp.ne.s32.totalorder %s197, %s200
    %p206 = scmp.eq.s32.totalorder %s14, 0
    %p207 = por %p205, %p206
    %p208 = scmp.ne.s32.totalorder %s197, %s200
    %p209 = scmp.eq.s32.totalorder %s19, 1
    %p210 = por %p208, %p209
    %p211 = scmp.ne.s32.totalorder %s200, %s201
    %p212 = scmp.eq.s32.totalorder %s19, 0
    %p213 = por %p211, %p212
    %p214 = scmp.ne.s32.totalorder %s200, %s201
    %p215 = scmp.eq.s32.totalorder %s20, 1
    %p216 = por %p214, %p215
    %p218 = scmp.ne.s32.totalorder %s201, %s217
    %p219 = scmp.eq.s32.totalorder %s20, 0
    %p220 = por %p218, %p219
    %p221 = scmp.le.s32.totalorder 1, %s14
    %p222 = scmp.lt.s32.totalorder %s14, 3
    %p223 = pnand %p221, %p222
    %p224 = pneg %p223
    // Predicated region
    $region9: #{star_block_forward.2} parent=5 // pred_check
      _
    $region10: #{star_block_forward.2} parent=5 // pred_check_branch
      %226 = sbr.rel (%p223) target = $region12
    $region11: #{star_block_forward.2} parent=5 // pred_region
      %s227 = ssub.s32 %s14, 1
      // Predicated region
      $region13: #{star_block_forward.2} parent=11 // pred_check
        %p228 = pneg %p35
      $region14: #{star_block_forward.2} parent=11 // pred_check_branch
        %230 = sbr.rel (%p228) target = $region16
      $region15: #{star_block_forward.2} parent=11 // pred_region
        _
      $region16: #{star_block_forward.2} parent=11 // pred_fallthru
        _
      // Predicated region
      $region17: #{star_block_forward.2} parent=11 // pred_check
        %p231 = pneg %p82
      $region18: #{star_block_forward.2} parent=11 // pred_check_branch
        %233 = sbr.rel (%p231) target = $region20
      $region19: #{star_block_forward.2} parent=11 // pred_region
        _
      $region20: #{star_block_forward.2} parent=11 // pred_fallthru
        _
      // Predicated region
      $region21: #{star_block_forward.2} parent=11 // pred_check
        %p234 = pneg %p103
      $region22: #{star_block_forward.2} parent=11 // pred_check_branch
        %236 = sbr.rel (%p234) target = $region24
      $region23: #{star_block_forward.2} parent=11 // pred_region
        _
      $region24: #{star_block_forward.2} parent=11 // pred_fallthru
        _
      // Predicated region
      $region25: #{star_block_forward.2} parent=11 // pred_check
        %p237 = pneg %p124
      $region26: #{star_block_forward.2} parent=11 // pred_check_branch
        %239 = sbr.rel (%p237) target = $region28
      $region27: #{star_block_forward.2} parent=11 // pred_region
        _
      $region28: #{star_block_forward.2} parent=11 // pred_fallthru
        _
      // Predicated region
      $region29: #{star_block_forward.2} parent=11 // pred_check
        %p240 = pneg %p145
      $region30: #{star_block_forward.2} parent=11 // pred_check_branch
        %242 = sbr.rel (%p240) target = $region32
      $region31: #{star_block_forward.2} parent=11 // pred_region
        _
      $region32: #{star_block_forward.2} parent=11 // pred_fallthru
        _
      // Predicated region
      $region33: #{star_block_forward.2} parent=11 // pred_check
        %p243 = pneg %p166
      $region34: #{star_block_forward.2} parent=11 // pred_check_branch
        %245 = sbr.rel (%p243) target = $region36
      $region35: #{star_block_forward.2} parent=11 // pred_region
        _
      $region36: #{star_block_forward.2} parent=11 // pred_fallthru
        _
      // Predicated region
      $region37: #{star_block_forward.2} parent=11 // pred_check
        %p246 = pneg %p187
      $region38: #{star_block_forward.2} parent=11 // pred_check_branch
        %248 = sbr.rel (%p246) target = $region40
      $region39: #{star_block_forward.2} parent=11 // pred_region
        _
      $region40: #{star_block_forward.2} parent=11 // pred_fallthru
        _
    $region12: #{star_block_forward.2} parent=5 // pred_fallthru
      _
    %p249 = scmp.lt.s32.totalorder %s14, 2
    // Predicated region
    $region41: #{star_block_forward.2} parent=5 // pred_check
      %p250 = pneg %p249
    $region42: #{star_block_forward.2} parent=5 // pred_check_branch
      %252 = sbr.rel (%p250) target = $region44
    $region43: #{star_block_forward.2} parent=5 // pred_region
      // Predicated region
      $region45: #{star_block_forward.2} parent=43 // pred_check
        %p253 = pneg %p55
      $region46: #{star_block_forward.2} parent=43 // pred_check_branch
        %255 = sbr.rel (%p253) target = $region48
      $region47: #{star_block_forward.2} parent=43 // pred_region
        %p256 = scmp.lt.s32.totalorder %s14, 1
        %s257 = scalar_select %p256, %s14, 1
        %s258 = smul.addr %s257, 2
        %s259 = smul.addr %s258, 4
        %s260 = scalar_lea.vmem %s1, %s259
      $region48: #{star_block_forward.2} parent=43 // pred_fallthru
        _
    $region44: #{star_block_forward.2} parent=5 // pred_fallthru
      _
    %p261 = scmp.le.s32.totalorder 1, %s14
    %p262 = scmp.lt.s32.totalorder %s14, 3
    %p263 = pnand %p261, %p262
    %p264 = pneg %p263
    // Predicated region
    $region49: #{star_block_forward.2} parent=5 // pred_check
      _
    $region50: #{star_block_forward.2} parent=5 // pred_check_branch
      %266 = sbr.rel (%p263) target = $region52
    $region51: #{star_block_forward.2} parent=5 // pred_region
      %s267 = ssub.s32 %s14, 1
      %p268 = pneg %p35
      %p269 = pneg %p32
      %p270 = scmp.lt.s32.totalorder %s19, 1
      %s271 = scalar_select %p270, %s19, 1
      %s272 = smul.addr %s271, 2
      %s273 = smul.addr %s272, 4
      %s274 = scalar_lea.vmem %s1, %s273
      %p275 = pneg %p61
      %p276 = pneg %p58
      %p277 = pneg %p82
      %p278 = pneg %p79
      %p279 = pneg %p103
      %p280 = pneg %p100
      %p281 = pneg %p124
      %p282 = pneg %p121
      %p283 = pneg %p145
      %p284 = pneg %p142
      %p285 = pneg %p166
      %p286 = pneg %p163
      %p287 = pneg %p187
      %p288 = pneg %p184
      %p289 = pneg %p213
      %p290 = pneg %p210
      %p291 = scmp.lt.s32.totalorder %s19, 1
      %s292 = scalar_select %p291, %s19, 1
      %s293 = smul.addr %s292, 2
      %s294 = smul.addr %s293, 4
      %s295 = scalar_lea.vmem %s8, %s294
      %p296 = scmp.lt.s32.totalorder %s19, 1
      %s297 = scalar_select %p296, %s19, 1
      %s298 = smul.addr %s297, 2
      %s299 = smul.addr %s298, 4
      %s300 = scalar_lea.vmem %s1, %s299
      %p301 = scmp.lt.s32.totalorder %s19, 1
      %s302 = scalar_select %p301, %s19, 1
      %s303 = smul.addr %s302, 2
      %s304 = smul.addr %s303, 4
      %s305 = scalar_lea.vmem %s8, %s304
      %v306 = vld [vmem:[%s300] sm:$0xff]
      %v307 = vld [vmem:[%s0] ss:$2 sm:$0x3]
      %s308 = scalar_lea.vmem %s0, 1
      %v309 = vld [vmem:[%s308] ss:$2 sm:$0x3]
      %v310 = vld [vmem:[%s3] sm:$0xf]
      %312 = vset.pattern.permute.xlu0 0
      %313 = vperm.xlu0 %312, %v310
      %v314 = vpop.permute.xlu0 %313
      %vm316 = vcmp.ge.s32.totalorder %v307, 3
      %vm317 = vcmp.lt.s32.totalorder %v307, 19
      %vm318 = vmand %vm316, %vm317
      %vm319 = vcmp.ge.s32.totalorder %v309, 3
      %vm320 = vcmp.lt.s32.totalorder %v309, 19
      %vm321 = vmand %vm319, %vm320
      %v323 = vcombine.high %v306, %v306
      %325 = vrot.lane.b32.xlu0 %v306, 51
      %v326 = vpop.permute.xlu0 %325
      %327 = vrot.lane.b32.xlu0 %v323, 51
      %v328 = vpop.permute.xlu0 %327
      %v329 = vlaneseq
      %v330 = vand.u32 %v329, 127
      %vm331 = vcmp.lt.s32.totalorder %v330, 51
      %v332 = vsel %vm331, %v326, %v328
      %v333 = vsel %vm331, %v328, %v326
      %vm334 = vmand %vm318, %vm321
      %v335 = vsel %vm334, 1, 0
      %v336 = vlaneseq
      %v337 = vshrl.u32 %v336, 7
      %v338 = vsub.s32 0, %v337
      %v339 = vrot.slane %v335, %v338
      %v340 = vlaneseq
      %v341 = vshrl.u32 %v340, 7
      %v342 = vsub.s32 1, %v341
      %v343 = vrot.slane %v335, %v342
      %vm344 = vcmp.eq.s32.totalorder %v339, 1
      %vm345 = vcmp.eq.s32.totalorder %v343, 1
      %v346 = vsel %vm344, %v333, 0.0
      %v347 = vsel %vm345, %v332, 0.0
      %v348 = vld [vmem:[%s2] sm:$0xf]
      %350 = vset.pattern.permute.xlu0 0
      %351 = vperm.xlu0 %350, %v348
      %v352 = vpop.permute.xlu0 %351
      %v354 = vmul.f32 %v346, %v352
      %v355 = vmul.f32 %v347, %v352
      %v356 = vadd.f32 %v314, %v354
      %v357 = vadd.f32 %v314, %v355
      %vm358 = vcmp.ge.s32.totalorder %v309, 2
      %vm359 = vcmp.lt.s32.totalorder %v309, 18
      %vm360 = vmand %vm358, %vm359
      %361 = vrot.lane.b32.xlu0 %v306, 50
      %v362 = vpop.permute.xlu0 %361
      %363 = vrot.lane.b32.xlu0 %v323, 50
      %v364 = vpop.permute.xlu0 %363
      %vm365 = vcmp.lt.s32.totalorder %v330, 50
      %v366 = vsel %vm365, %v362, %v364
      %v367 = vsel %vm365, %v364, %v362
      %vm368 = vmand %vm318, %vm360
      %v369 = vsel %vm368, 1, 0
      %v370 = vlaneseq
      %v371 = vshrl.u32 %v370, 7
      %v372 = vsub.s32 0, %v371
      %v373 = vrot.slane %v369, %v372
      %v374 = vlaneseq
      %v375 = vshrl.u32 %v374, 7
      %v376 = vsub.s32 1, %v375
      %v377 = vrot.slane %v369, %v376
      %vm378 = vcmp.eq.s32.totalorder %v373, 1
      %vm379 = vcmp.eq.s32.totalorder %v377, 1
      %v380 = vsel %vm378, %v367, 0.0
      %v381 = vsel %vm379, %v366, 0.0
      %v382 = vld [vmem:[%s2] sm:$0xf]
      %384 = vset.pattern.permute.xlu0 1
      %385 = vperm.xlu0 %384, %v382
      %v386 = vpop.permute.xlu0 %385
      %v388 = vmul.f32 %v380, %v386
      %v389 = vmul.f32 %v381, %v386
      %v390 = vadd.f32 %v356, %v388
      %v391 = vadd.f32 %v357, %v389
      %vm392 = vcmp.ge.s32.totalorder %v309, 1
      %vm393 = vcmp.lt.s32.totalorder %v309, 17
      %vm394 = vmand %vm392, %vm393
      %395 = vrot.lane.b32.xlu0 %v306, 49
      %v396 = vpop.permute.xlu0 %395
      %397 = vrot.lane.b32.xlu0 %v323, 49
      %v398 = vpop.permute.xlu0 %397
      %vm399 = vcmp.lt.s32.totalorder %v330, 49
      %v400 = vsel %vm399, %v396, %v398
      %v401 = vsel %vm399, %v398, %v396
      %vm402 = vmand %vm318, %vm394
      %v403 = vsel %vm402, 1, 0
      %v404 = vlaneseq
      %v405 = vshrl.u32 %v404, 7
      %v406 = vsub.s32 0, %v405
      %v407 = vrot.slane %v403, %v406
      %v408 = vlaneseq
      %v409 = vshrl.u32 %v408, 7
      %v410 = vsub.s32 1, %v409
      %v411 = vrot.slane %v403, %v410
      %vm412 = vcmp.eq.s32.totalorder %v407, 1
      %vm413 = vcmp.eq.s32.totalorder %v411, 1
      %v414 = vsel %vm412, %v401, 0.0
      %v415 = vsel %vm413, %v400, 0.0
      %v416 = vld [vmem:[%s2] sm:$0xf]
      %418 = vset.pattern.permute.xlu0 2
      %419 = vperm.xlu0 %418, %v416
      %v420 = vpop.permute.xlu0 %419
      %v422 = vmul.f32 %v414, %v420
      %v423 = vmul.f32 %v415, %v420
      %v424 = vadd.f32 %v390, %v422
      %v425 = vadd.f32 %v391, %v423
      %vm426 = vcmp.ge.s32.totalorder %v309, 0
      %vm427 = vcmp.lt.s32.totalorder %v309, 16
      %vm428 = vmand %vm426, %vm427
      %429 = vrot.lane.b32.xlu0 %v306, 48
      %v430 = vpop.permute.xlu0 %429
      %431 = vrot.lane.b32.xlu0 %v323, 48
      %v432 = vpop.permute.xlu0 %431
      %vm433 = vcmp.lt.s32.totalorder %v330, 48
      %v434 = vsel %vm433, %v430, %v432
      %v435 = vsel %vm433, %v432, %v430
      %vm436 = vmand %vm318, %vm428
      %v437 = vsel %vm436, 1, 0
      %v438 = vlaneseq
      %v439 = vshrl.u32 %v438, 7
      %v440 = vsub.s32 0, %v439
      %v441 = vrot.slane %v437, %v440
      %v442 = vlaneseq
      %v443 = vshrl.u32 %v442, 7
      %v444 = vsub.s32 1, %v443
      %v445 = vrot.slane %v437, %v444
      %vm446 = vcmp.eq.s32.totalorder %v441, 1
      %vm447 = vcmp.eq.s32.totalorder %v445, 1
      %v448 = vsel %vm446, %v435, 0.0
      %v449 = vsel %vm447, %v434, 0.0
      %v450 = vld [vmem:[%s2] sm:$0xf]
      %452 = vset.pattern.permute.xlu0 3
      %453 = vperm.xlu0 %452, %v450
      %v454 = vpop.permute.xlu0 %453
      %v456 = vmul.f32 %v448, %v454
      %v457 = vmul.f32 %v449, %v454
      %v458 = vadd.f32 %v424, %v456
      %v459 = vadd.f32 %v425, %v457
      %vm460 = vcmp.ge.s32.totalorder %v309, 4294967295
      %vm461 = vcmp.lt.s32.totalorder %v309, 15
      %vm462 = vmand %vm460, %vm461
      %463 = vrot.lane.b32.xlu0 %v306, 47
      %v464 = vpop.permute.xlu0 %463
      %465 = vrot.lane.b32.xlu0 %v323, 47
      %v466 = vpop.permute.xlu0 %465
      %vm467 = vcmp.lt.s32.totalorder %v330, 47
      %v468 = vsel %vm467, %v464, %v466
      %v469 = vsel %vm467, %v466, %v464
      %vm470 = vmand %vm318, %vm462
      %v471 = vsel %vm470, 1, 0
      %v472 = vlaneseq
      %v473 = vshrl.u32 %v472, 7
      %v474 = vsub.s32 0, %v473
      %v475 = vrot.slane %v471, %v474
      %v476 = vlaneseq
      %v477 = vshrl.u32 %v476, 7
      %v478 = vsub.s32 1, %v477
      %v479 = vrot.slane %v471, %v478
      %vm480 = vcmp.eq.s32.totalorder %v475, 1
      %vm481 = vcmp.eq.s32.totalorder %v479, 1
      %v482 = vsel %vm480, %v469, 0.0
      %v483 = vsel %vm481, %v468, 0.0
      %v484 = vld [vmem:[%s2] sm:$0xf]
      %486 = vset.pattern.permute.xlu0 4
      %487 = vperm.xlu0 %486, %v484
      %v488 = vpop.permute.xlu0 %487
      %v490 = vmul.f32 %v482, %v488
      %v491 = vmul.f32 %v483, %v488
      %v492 = vadd.f32 %v458, %v490
      %v493 = vadd.f32 %v459, %v491
      %vm494 = vcmp.ge.s32.totalorder %v309, 4294967294
      %vm495 = vcmp.lt.s32.totalorder %v309, 14
      %vm496 = vmand %vm494, %vm495
      %497 = vrot.lane.b32.xlu0 %v306, 46
      %v498 = vpop.permute.xlu0 %497
      %499 = vrot.lane.b32.xlu0 %v323, 46
      %v500 = vpop.permute.xlu0 %499
      %vm501 = vcmp.lt.s32.totalorder %v330, 46
      %v502 = vsel %vm501, %v498, %v500
      %v503 = vsel %vm501, %v500, %v498
      %vm504 = vmand %vm318, %vm496
      %v505 = vsel %vm504, 1, 0
      %v506 = vlaneseq
      %v507 = vshrl.u32 %v506, 7
      %v508 = vsub.s32 0, %v507
      %v509 = vrot.slane %v505, %v508
      %v510 = vlaneseq
      %v511 = vshrl.u32 %v510, 7
      %v512 = vsub.s32 1, %v511
      %v513 = vrot.slane %v505, %v512
      %vm514 = vcmp.eq.s32.totalorder %v509, 1
      %vm515 = vcmp.eq.s32.totalorder %v513, 1
      %v516 = vsel %vm514, %v503, 0.0
      %v517 = vsel %vm515, %v502, 0.0
      %v518 = vld [vmem:[%s2] sm:$0xf]
      %520 = vset.pattern.permute.xlu0 5
      %521 = vperm.xlu0 %520, %v518
      %v522 = vpop.permute.xlu0 %521
      %v524 = vmul.f32 %v516, %v522
      %v525 = vmul.f32 %v517, %v522
      %v526 = vadd.f32 %v492, %v524
      %v527 = vadd.f32 %v493, %v525
      %vm528 = vcmp.ge.s32.totalorder %v309, 4294967293
      %vm529 = vcmp.lt.s32.totalorder %v309, 13
      %vm530 = vmand %vm528, %vm529
      %531 = vrot.lane.b32.xlu0 %v306, 45
      %v532 = vpop.permute.xlu0 %531
      %533 = vrot.lane.b32.xlu0 %v323, 45
      %v534 = vpop.permute.xlu0 %533
      %vm535 = vcmp.lt.s32.totalorder %v330, 45
      %v536 = vsel %vm535, %v532, %v534
      %v537 = vsel %vm535, %v534, %v532
      %vm538 = vmand %vm318, %vm530
      %v539 = vsel %vm538, 1, 0
      %v540 = vlaneseq
      %v541 = vshrl.u32 %v540, 7
      %v542 = vsub.s32 0, %v541
      %v543 = vrot.slane %v539, %v542
      %v544 = vlaneseq
      %v545 = vshrl.u32 %v544, 7
      %v546 = vsub.s32 1, %v545
      %v547 = vrot.slane %v539, %v546
      %vm548 = vcmp.eq.s32.totalorder %v543, 1
      %vm549 = vcmp.eq.s32.totalorder %v547, 1
      %v550 = vsel %vm548, %v537, 0.0
      %v551 = vsel %vm549, %v536, 0.0
      %v552 = vld [vmem:[%s2] sm:$0xf]
      %554 = vset.pattern.permute.xlu0 6
      %555 = vperm.xlu0 %554, %v552
      %v556 = vpop.permute.xlu0 %555
      %v558 = vmul.f32 %v550, %v556
      %v559 = vmul.f32 %v551, %v556
      %v560 = vadd.f32 %v526, %v558
      %v561 = vadd.f32 %v527, %v559
      %vm562 = vcmp.ge.s32.totalorder %v307, 2
      %vm563 = vcmp.lt.s32.totalorder %v307, 18
      %vm564 = vmand %vm562, %vm563
      %565 = vrot.lane.b32.xlu0 %v306, 35
      %v566 = vpop.permute.xlu0 %565
      %567 = vrot.lane.b32.xlu0 %v323, 35
      %v568 = vpop.permute.xlu0 %567
      %vm569 = vcmp.lt.s32.totalorder %v330, 35
      %v570 = vsel %vm569, %v566, %v568
      %v571 = vsel %vm569, %v568, %v566
      %vm572 = vmand %vm564, %vm321
      %v573 = vsel %vm572, 1, 0
      %v574 = vlaneseq
      %v575 = vshrl.u32 %v574, 7
      %v576 = vsub.s32 0, %v575
      %v577 = vrot.slane %v573, %v576
      %v578 = vlaneseq
      %v579 = vshrl.u32 %v578, 7
      %v580 = vsub.s32 1, %v579
      %v581 = vrot.slane %v573, %v580
      %vm582 = vcmp.eq.s32.totalorder %v577, 1
      %vm583 = vcmp.eq.s32.totalorder %v581, 1
      %v584 = vsel %vm582, %v571, 0.0
      %v585 = vsel %vm583, %v570, 0.0
      %v586 = vld [vmem:[%s2] sm:$0xf]
      %588 = vset.pattern.permute.xlu0 7
      %589 = vperm.xlu0 %588, %v586
      %v590 = vpop.permute.xlu0 %589
      %v592 = vmul.f32 %v584, %v590
      %v593 = vmul.f32 %v585, %v590
      %v594 = vadd.f32 %v560, %v592
      %v595 = vadd.f32 %v561, %v593
      %596 = vrot.lane.b32.xlu0 %v306, 34
      %v597 = vpop.permute.xlu0 %596
      %598 = vrot.lane.b32.xlu0 %v323, 34
      %v599 = vpop.permute.xlu0 %598
      %vm600 = vcmp.lt.s32.totalorder %v330, 34
      %v601 = vsel %vm600, %v597, %v599
      %v602 = vsel %vm600, %v599, %v597
      %vm603 = vmand %vm564, %vm360
      %v604 = vsel %vm603, 1, 0
      %v605 = vlaneseq
      %v606 = vshrl.u32 %v605, 7
      %v607 = vsub.s32 0, %v606
      %v608 = vrot.slane %v604, %v607
      %v609 = vlaneseq
      %v610 = vshrl.u32 %v609, 7
      %v611 = vsub.s32 1, %v610
      %v612 = vrot.slane %v604, %v611
      %vm613 = vcmp.eq.s32.totalorder %v608, 1
      %vm614 = vcmp.eq.s32.totalorder %v612, 1
      %v615 = vsel %vm613, %v602, 0.0
      %v616 = vsel %vm614, %v601, 0.0
      %v617 = vld [vmem:[%s2] sm:$0xf]
      %619 = vset.pattern.permute.xlu0 8
      %620 = vperm.xlu0 %619, %v617
      %v621 = vpop.permute.xlu0 %620
      %v623 = vmul.f32 %v615, %v621
      %v624 = vmul.f32 %v616, %v621
      %v625 = vadd.f32 %v594, %v623
      %v626 = vadd.f32 %v595, %v624
      %627 = vrot.lane.b32.xlu0 %v306, 33
      %v628 = vpop.permute.xlu0 %627
      %629 = vrot.lane.b32.xlu0 %v323, 33
      %v630 = vpop.permute.xlu0 %629
      %vm631 = vcmp.lt.s32.totalorder %v330, 33
      %v632 = vsel %vm631, %v628, %v630
      %v633 = vsel %vm631, %v630, %v628
      %vm634 = vmand %vm564, %vm394
      %v635 = vsel %vm634, 1, 0
      %v636 = vlaneseq
      %v637 = vshrl.u32 %v636, 7
      %v638 = vsub.s32 0, %v637
      %v639 = vrot.slane %v635, %v638
      %v640 = vlaneseq
      %v641 = vshrl.u32 %v640, 7
      %v642 = vsub.s32 1, %v641
      %v643 = vrot.slane %v635, %v642
      %vm644 = vcmp.eq.s32.totalorder %v639, 1
      %vm645 = vcmp.eq.s32.totalorder %v643, 1
      %v646 = vsel %vm644, %v633, 0.0
      %v647 = vsel %vm645, %v632, 0.0
      %v648 = vld [vmem:[%s2] sm:$0xf]
      %650 = vset.pattern.permute.xlu0 9
      %651 = vperm.xlu0 %650, %v648
      %v652 = vpop.permute.xlu0 %651
      %v654 = vmul.f32 %v646, %v652
      %v655 = vmul.f32 %v647, %v652
      %v656 = vadd.f32 %v625, %v654
      %v657 = vadd.f32 %v626, %v655
      %658 = vrot.lane.b32.xlu0 %v306, 32
      %v659 = vpop.permute.xlu0 %658
      %660 = vrot.lane.b32.xlu0 %v323, 32
      %v661 = vpop.permute.xlu0 %660
      %vm662 = vcmp.lt.s32.totalorder %v330, 32
      %v663 = vsel %vm662, %v659, %v661
      %v664 = vsel %vm662, %v661, %v659
      %vm665 = vmand %vm564, %vm428
      %v666 = vsel %vm665, 1, 0
      %v667 = vlaneseq
      %v668 = vshrl.u32 %v667, 7
      %v669 = vsub.s32 0, %v668
      %v670 = vrot.slane %v666, %v669
      %v671 = vlaneseq
      %v672 = vshrl.u32 %v671, 7
      %v673 = vsub.s32 1, %v672
      %v674 = vrot.slane %v666, %v673
      %vm675 = vcmp.eq.s32.totalorder %v670, 1
      %vm676 = vcmp.eq.s32.totalorder %v674, 1
      %v677 = vsel %vm675, %v664, 0.0
      %v678 = vsel %vm676, %v663, 0.0
      %v679 = vld [vmem:[%s2] sm:$0xf]
      %681 = vset.pattern.permute.xlu0 10
      %682 = vperm.xlu0 %681, %v679
      %v683 = vpop.permute.xlu0 %682
      %v685 = vmul.f32 %v677, %v683
      %v686 = vmul.f32 %v678, %v683
      %v687 = vadd.f32 %v656, %v685
      %v688 = vadd.f32 %v657, %v686
      %689 = vrot.lane.b32.xlu0 %v306, 31
      %v690 = vpop.permute.xlu0 %689
      %691 = vrot.lane.b32.xlu0 %v323, 31
      %v692 = vpop.permute.xlu0 %691
      %vm693 = vcmp.lt.s32.totalorder %v330, 31
      %v694 = vsel %vm693, %v690, %v692
      %v695 = vsel %vm693, %v692, %v690
      %vm696 = vmand %vm564, %vm462
      %v697 = vsel %vm696, 1, 0
      %v698 = vlaneseq
      %v699 = vshrl.u32 %v698, 7
      %v700 = vsub.s32 0, %v699
      %v701 = vrot.slane %v697, %v700
      %v702 = vlaneseq
      %v703 = vshrl.u32 %v702, 7
      %v704 = vsub.s32 1, %v703
      %v705 = vrot.slane %v697, %v704
      %vm706 = vcmp.eq.s32.totalorder %v701, 1
      %vm707 = vcmp.eq.s32.totalorder %v705, 1
      %v708 = vsel %vm706, %v695, 0.0
      %v709 = vsel %vm707, %v694, 0.0
      %v710 = vld [vmem:[%s2] sm:$0xf]
      %712 = vset.pattern.permute.xlu0 11
      %713 = vperm.xlu0 %712, %v710
      %v714 = vpop.permute.xlu0 %713
      %v716 = vmul.f32 %v708, %v714
      %v717 = vmul.f32 %v709, %v714
      %v718 = vadd.f32 %v687, %v716
      %v719 = vadd.f32 %v688, %v717
      %720 = vrot.lane.b32.xlu0 %v306, 30
      %v721 = vpop.permute.xlu0 %720
      %722 = vrot.lane.b32.xlu0 %v323, 30
      %v723 = vpop.permute.xlu0 %722
      %vm724 = vcmp.lt.s32.totalorder %v330, 30
      %v725 = vsel %vm724, %v721, %v723
      %v726 = vsel %vm724, %v723, %v721
      %vm727 = vmand %vm564, %vm496
      %v728 = vsel %vm727, 1, 0
      %v729 = vlaneseq
      %v730 = vshrl.u32 %v729, 7
      %v731 = vsub.s32 0, %v730
      %v732 = vrot.slane %v728, %v731
      %v733 = vlaneseq
      %v734 = vshrl.u32 %v733, 7
      %v735 = vsub.s32 1, %v734
      %v736 = vrot.slane %v728, %v735
      %vm737 = vcmp.eq.s32.totalorder %v732, 1
      %vm738 = vcmp.eq.s32.totalorder %v736, 1
      %v739 = vsel %vm737, %v726, 0.0
      %v740 = vsel %vm738, %v725, 0.0
      %v741 = vld [vmem:[%s2] sm:$0xf]
      %743 = vset.pattern.permute.xlu0 12
      %744 = vperm.xlu0 %743, %v741
      %v745 = vpop.permute.xlu0 %744
      %v747 = vmul.f32 %v739, %v745
      %v748 = vmul.f32 %v740, %v745
      %v749 = vadd.f32 %v718, %v747
      %v750 = vadd.f32 %v719, %v748
      %751 = vrot.lane.b32.xlu0 %v306, 29
      %v752 = vpop.permute.xlu0 %751
      %753 = vrot.lane.b32.xlu0 %v323, 29
      %v754 = vpop.permute.xlu0 %753
      %vm755 = vcmp.lt.s32.totalorder %v330, 29
      %v756 = vsel %vm755, %v752, %v754
      %v757 = vsel %vm755, %v754, %v752
      %vm758 = vmand %vm564, %vm530
      %v759 = vsel %vm758, 1, 0
      %v760 = vlaneseq
      %v761 = vshrl.u32 %v760, 7
      %v762 = vsub.s32 0, %v761
      %v763 = vrot.slane %v759, %v762
      %v764 = vlaneseq
      %v765 = vshrl.u32 %v764, 7
      %v766 = vsub.s32 1, %v765
      %v767 = vrot.slane %v759, %v766
      %vm768 = vcmp.eq.s32.totalorder %v763, 1
      %vm769 = vcmp.eq.s32.totalorder %v767, 1
      %v770 = vsel %vm768, %v757, 0.0
      %v771 = vsel %vm769, %v756, 0.0
      %v772 = vld [vmem:[%s2] sm:$0xf]
      %774 = vset.pattern.permute.xlu0 13
      %775 = vperm.xlu0 %774, %v772
      %v776 = vpop.permute.xlu0 %775
      %v778 = vmul.f32 %v770, %v776
      %v779 = vmul.f32 %v771, %v776
      %v780 = vadd.f32 %v749, %v778
      %v781 = vadd.f32 %v750, %v779
      %vm782 = vcmp.ge.s32.totalorder %v307, 1
      %vm783 = vcmp.lt.s32.totalorder %v307, 17
      %vm784 = vmand %vm782, %vm783
      %785 = vrot.lane.b32.xlu0 %v306, 19
      %v786 = vpop.permute.xlu0 %785
      %787 = vrot.lane.b32.xlu0 %v323, 19
      %v788 = vpop.permute.xlu0 %787
      %vm789 = vcmp.lt.s32.totalorder %v330, 19
      %v790 = vsel %vm789, %v786, %v788
      %v791 = vsel %vm789, %v788, %v786
      %vm792 = vmand %vm784, %vm321
      %v793 = vsel %vm792, 1, 0
      %v794 = vlaneseq
      %v795 = vshrl.u32 %v794, 7
      %v796 = vsub.s32 0, %v795
      %v797 = vrot.slane %v793, %v796
      %v798 = vlaneseq
      %v799 = vshrl.u32 %v798, 7
      %v800 = vsub.s32 1, %v799
      %v801 = vrot.slane %v793, %v800
      %vm802 = vcmp.eq.s32.totalorder %v797, 1
      %vm803 = vcmp.eq.s32.totalorder %v801, 1
      %v804 = vsel %vm802, %v791, 0.0
      %v805 = vsel %vm803, %v790, 0.0
      %v806 = vld [vmem:[%s2] sm:$0xf]
      %808 = vset.pattern.permute.xlu0 14
      %809 = vperm.xlu0 %808, %v806
      %v810 = vpop.permute.xlu0 %809
      %v812 = vmul.f32 %v804, %v810
      %v813 = vmul.f32 %v805, %v810
      %v814 = vadd.f32 %v780, %v812
      %v815 = vadd.f32 %v781, %v813
      %816 = vrot.lane.b32.xlu0 %v306, 18
      %v817 = vpop.permute.xlu0 %816
      %818 = vrot.lane.b32.xlu0 %v323, 18
      %v819 = vpop.permute.xlu0 %818
      %vm820 = vcmp.lt.s32.totalorder %v330, 18
      %v821 = vsel %vm820, %v817, %v819
      %v822 = vsel %vm820, %v819, %v817
      %vm823 = vmand %vm784, %vm360
      %v824 = vsel %vm823, 1, 0
      %v825 = vlaneseq
      %v826 = vshrl.u32 %v825, 7
      %v827 = vsub.s32 0, %v826
      %v828 = vrot.slane %v824, %v827
      %v829 = vlaneseq
      %v830 = vshrl.u32 %v829, 7
      %v831 = vsub.s32 1, %v830
      %v832 = vrot.slane %v824, %v831
      %vm833 = vcmp.eq.s32.totalorder %v828, 1
      %vm834 = vcmp.eq.s32.totalorder %v832, 1
      %v835 = vsel %vm833, %v822, 0.0
      %v836 = vsel %vm834, %v821, 0.0
      %v837 = vld [vmem:[%s2] sm:$0xf]
      %839 = vset.pattern.permute.xlu0 15
      %840 = vperm.xlu0 %839, %v837
      %v841 = vpop.permute.xlu0 %840
      %v843 = vmul.f32 %v835, %v841
      %v844 = vmul.f32 %v836, %v841
      %v845 = vadd.f32 %v814, %v843
      %v846 = vadd.f32 %v815, %v844
      %847 = vrot.lane.b32.xlu0 %v306, 17
      %v848 = vpop.permute.xlu0 %847
      %849 = vrot.lane.b32.xlu0 %v323, 17
      %v850 = vpop.permute.xlu0 %849
      %vm851 = vcmp.lt.s32.totalorder %v330, 17
      %v852 = vsel %vm851, %v848, %v850
      %v853 = vsel %vm851, %v850, %v848
      %vm854 = vmand %vm784, %vm394
      %v855 = vsel %vm854, 1, 0
      %v856 = vlaneseq
      %v857 = vshrl.u32 %v856, 7
      %v858 = vsub.s32 0, %v857
      %v859 = vrot.slane %v855, %v858
      %v860 = vlaneseq
      %v861 = vshrl.u32 %v860, 7
      %v862 = vsub.s32 1, %v861
      %v863 = vrot.slane %v855, %v862
      %vm864 = vcmp.eq.s32.totalorder %v859, 1
      %vm865 = vcmp.eq.s32.totalorder %v863, 1
      %v866 = vsel %vm864, %v853, 0.0
      %v867 = vsel %vm865, %v852, 0.0
      %v868 = vld [vmem:[%s2] sm:$0xf]
      %870 = vset.pattern.permute.xlu0 16
      %871 = vperm.xlu0 %870, %v868
      %v872 = vpop.permute.xlu0 %871
      %v874 = vmul.f32 %v866, %v872
      %v875 = vmul.f32 %v867, %v872
      %v876 = vadd.f32 %v845, %v874
      %v877 = vadd.f32 %v846, %v875
      %878 = vrot.lane.b32.xlu0 %v306, 16
      %v879 = vpop.permute.xlu0 %878
      %880 = vrot.lane.b32.xlu0 %v323, 16
      %v881 = vpop.permute.xlu0 %880
      %vm882 = vcmp.lt.s32.totalorder %v330, 16
      %v883 = vsel %vm882, %v879, %v881
      %v884 = vsel %vm882, %v881, %v879
      %vm885 = vmand %vm784, %vm428
      %v886 = vsel %vm885, 1, 0
      %v887 = vlaneseq
      %v888 = vshrl.u32 %v887, 7
      %v889 = vsub.s32 0, %v888
      %v890 = vrot.slane %v886, %v889
      %v891 = vlaneseq
      %v892 = vshrl.u32 %v891, 7
      %v893 = vsub.s32 1, %v892
      %v894 = vrot.slane %v886, %v893
      %vm895 = vcmp.eq.s32.totalorder %v890, 1
      %vm896 = vcmp.eq.s32.totalorder %v894, 1
      %v897 = vsel %vm895, %v884, 0.0
      %v898 = vsel %vm896, %v883, 0.0
      %v899 = vld [vmem:[%s2] sm:$0xf]
      %901 = vset.pattern.permute.xlu0 17
      %902 = vperm.xlu0 %901, %v899
      %v903 = vpop.permute.xlu0 %902
      %v905 = vmul.f32 %v897, %v903
      %v906 = vmul.f32 %v898, %v903
      %v907 = vadd.f32 %v876, %v905
      %v908 = vadd.f32 %v877, %v906
      %909 = vrot.lane.b32.xlu0 %v306, 15
      %v910 = vpop.permute.xlu0 %909
      %911 = vrot.lane.b32.xlu0 %v323, 15
      %v912 = vpop.permute.xlu0 %911
      %vm913 = vcmp.lt.s32.totalorder %v330, 15
      %v914 = vsel %vm913, %v910, %v912
      %v915 = vsel %vm913, %v912, %v910
      %vm916 = vmand %vm784, %vm462
      %v917 = vsel %vm916, 1, 0
      %v918 = vlaneseq
      %v919 = vshrl.u32 %v918, 7
      %v920 = vsub.s32 0, %v919
      %v921 = vrot.slane %v917, %v920
      %v922 = vlaneseq
      %v923 = vshrl.u32 %v922, 7
      %v924 = vsub.s32 1, %v923
      %v925 = vrot.slane %v917, %v924
      %vm926 = vcmp.eq.s32.totalorder %v921, 1
      %vm927 = vcmp.eq.s32.totalorder %v925, 1
      %v928 = vsel %vm926, %v915, 0.0
      %v929 = vsel %vm927, %v914, 0.0
      %v930 = vld [vmem:[%s2] sm:$0xf]
      %932 = vset.pattern.permute.xlu0 18
      %933 = vperm.xlu0 %932, %v930
      %v934 = vpop.permute.xlu0 %933
      %v936 = vmul.f32 %v928, %v934
      %v937 = vmul.f32 %v929, %v934
      %v938 = vadd.f32 %v907, %v936
      %v939 = vadd.f32 %v908, %v937
      %940 = vrot.lane.b32.xlu0 %v306, 14
      %v941 = vpop.permute.xlu0 %940
      %942 = vrot.lane.b32.xlu0 %v323, 14
      %v943 = vpop.permute.xlu0 %942
      %vm944 = vcmp.lt.s32.totalorder %v330, 14
      %v945 = vsel %vm944, %v941, %v943
      %v946 = vsel %vm944, %v943, %v941
      %vm947 = vmand %vm784, %vm496
      %v948 = vsel %vm947, 1, 0
      %v949 = vlaneseq
      %v950 = vshrl.u32 %v949, 7
      %v951 = vsub.s32 0, %v950
      %v952 = vrot.slane %v948, %v951
      %v953 = vlaneseq
      %v954 = vshrl.u32 %v953, 7
      %v955 = vsub.s32 1, %v954
      %v956 = vrot.slane %v948, %v955
      %vm957 = vcmp.eq.s32.totalorder %v952, 1
      %vm958 = vcmp.eq.s32.totalorder %v956, 1
      %v959 = vsel %vm957, %v946, 0.0
      %v960 = vsel %vm958, %v945, 0.0
      %v961 = vld [vmem:[%s2] sm:$0xf]
      %963 = vset.pattern.permute.xlu0 19
      %964 = vperm.xlu0 %963, %v961
      %v965 = vpop.permute.xlu0 %964
      %v967 = vmul.f32 %v959, %v965
      %v968 = vmul.f32 %v960, %v965
      %v969 = vadd.f32 %v938, %v967
      %v970 = vadd.f32 %v939, %v968
      %971 = vrot.lane.b32.xlu0 %v306, 13
      %v972 = vpop.permute.xlu0 %971
      %973 = vrot.lane.b32.xlu0 %v323, 13
      %v974 = vpop.permute.xlu0 %973
      %vm975 = vcmp.lt.s32.totalorder %v330, 13
      %v976 = vsel %vm975, %v972, %v974
      %v977 = vsel %vm975, %v974, %v972
      %vm978 = vmand %vm784, %vm530
      %v979 = vsel %vm978, 1, 0
      %v980 = vlaneseq
      %v981 = vshrl.u32 %v980, 7
      %v982 = vsub.s32 0, %v981
      %v983 = vrot.slane %v979, %v982
      %v984 = vlaneseq
      %v985 = vshrl.u32 %v984, 7
      %v986 = vsub.s32 1, %v985
      %v987 = vrot.slane %v979, %v986
      %vm988 = vcmp.eq.s32.totalorder %v983, 1
      %vm989 = vcmp.eq.s32.totalorder %v987, 1
      %v990 = vsel %vm988, %v977, 0.0
      %v991 = vsel %vm989, %v976, 0.0
      %v992 = vld [vmem:[%s2] sm:$0xf]
      %994 = vset.pattern.permute.xlu0 20
      %995 = vperm.xlu0 %994, %v992
      %v996 = vpop.permute.xlu0 %995
      %v998 = vmul.f32 %v990, %v996
      %v999 = vmul.f32 %v991, %v996
      %v1000 = vadd.f32 %v969, %v998
      %v1001 = vadd.f32 %v970, %v999
      %vm1002 = vcmp.ge.s32.totalorder %v307, 0
      %vm1003 = vcmp.lt.s32.totalorder %v307, 16
      %vm1004 = vmand %vm1002, %vm1003
      %1005 = vrot.lane.b32.xlu0 %v306, 3
      %v1006 = vpop.permute.xlu0 %1005
      %1007 = vrot.lane.b32.xlu0 %v323, 3
      %v1008 = vpop.permute.xlu0 %1007
      %vm1009 = vcmp.lt.s32.totalorder %v330, 3
      %v1010 = vsel %vm1009, %v1006, %v1008
      %v1011 = vsel %vm1009, %v1008, %v1006
      %vm1012 = vmand %vm1004, %vm321
      %v1013 = vsel %vm1012, 1, 0
      %v1014 = vlaneseq
      %v1015 = vshrl.u32 %v1014, 7
      %v1016 = vsub.s32 0, %v1015
      %v1017 = vrot.slane %v1013, %v1016
      %v1018 = vlaneseq
      %v1019 = vshrl.u32 %v1018, 7
      %v1020 = vsub.s32 1, %v1019
      %v1021 = vrot.slane %v1013, %v1020
      %vm1022 = vcmp.eq.s32.totalorder %v1017, 1
      %vm1023 = vcmp.eq.s32.totalorder %v1021, 1
      %v1024 = vsel %vm1022, %v1011, 0.0
      %v1025 = vsel %vm1023, %v1010, 0.0
      %v1026 = vld [vmem:[%s2] sm:$0xf]
      %1028 = vset.pattern.permute.xlu0 21
      %1029 = vperm.xlu0 %1028, %v1026
      %v1030 = vpop.permute.xlu0 %1029
      %v1032 = vmul.f32 %v1024, %v1030
      %v1033 = vmul.f32 %v1025, %v1030
      %v1034 = vadd.f32 %v1000, %v1032
      %v1035 = vadd.f32 %v1001, %v1033
      %1036 = vrot.lane.b32.xlu0 %v306, 2
      %v1037 = vpop.permute.xlu0 %1036
      %1038 = vrot.lane.b32.xlu0 %v323, 2
      %v1039 = vpop.permute.xlu0 %1038
      %vm1040 = vcmp.lt.s32.totalorder %v330, 2
      %v1041 = vsel %vm1040, %v1037, %v1039
      %v1042 = vsel %vm1040, %v1039, %v1037
      %vm1043 = vmand %vm1004, %vm360
      %v1044 = vsel %vm1043, 1, 0
      %v1045 = vlaneseq
      %v1046 = vshrl.u32 %v1045, 7
      %v1047 = vsub.s32 0, %v1046
      %v1048 = vrot.slane %v1044, %v1047
      %v1049 = vlaneseq
      %v1050 = vshrl.u32 %v1049, 7
      %v1051 = vsub.s32 1, %v1050
      %v1052 = vrot.slane %v1044, %v1051
      %vm1053 = vcmp.eq.s32.totalorder %v1048, 1
      %vm1054 = vcmp.eq.s32.totalorder %v1052, 1
      %v1055 = vsel %vm1053, %v1042, 0.0
      %v1056 = vsel %vm1054, %v1041, 0.0
      %v1057 = vld [vmem:[%s2] sm:$0xf]
      %1059 = vset.pattern.permute.xlu0 22
      %1060 = vperm.xlu0 %1059, %v1057
      %v1061 = vpop.permute.xlu0 %1060
      %v1063 = vmul.f32 %v1055, %v1061
      %v1064 = vmul.f32 %v1056, %v1061
      %v1065 = vadd.f32 %v1034, %v1063
      %v1066 = vadd.f32 %v1035, %v1064
      %1067 = vrot.lane.b32.xlu0 %v306, 1
      %v1068 = vpop.permute.xlu0 %1067
      %1069 = vrot.lane.b32.xlu0 %v323, 1
      %v1070 = vpop.permute.xlu0 %1069
      %vm1071 = vcmp.lt.s32.totalorder %v330, 1
      %v1072 = vsel %vm1071, %v1068, %v1070
      %v1073 = vsel %vm1071, %v1070, %v1068
      %vm1074 = vmand %vm1004, %vm394
      %v1075 = vsel %vm1074, 1, 0
      %v1076 = vlaneseq
      %v1077 = vshrl.u32 %v1076, 7
      %v1078 = vsub.s32 0, %v1077
      %v1079 = vrot.slane %v1075, %v1078
      %v1080 = vlaneseq
      %v1081 = vshrl.u32 %v1080, 7
      %v1082 = vsub.s32 1, %v1081
      %v1083 = vrot.slane %v1075, %v1082
      %vm1084 = vcmp.eq.s32.totalorder %v1079, 1
      %vm1085 = vcmp.eq.s32.totalorder %v1083, 1
      %v1086 = vsel %vm1084, %v1073, 0.0
      %v1087 = vsel %vm1085, %v1072, 0.0
      %v1088 = vld [vmem:[%s2] sm:$0xf]
      %1090 = vset.pattern.permute.xlu0 23
      %1091 = vperm.xlu0 %1090, %v1088
      %v1092 = vpop.permute.xlu0 %1091
      %v1094 = vmul.f32 %v1086, %v1092
      %v1095 = vmul.f32 %v1087, %v1092
      %v1096 = vadd.f32 %v1065, %v1094
      %v1097 = vadd.f32 %v1066, %v1095
      %vm1098 = vmand %vm1004, %vm428
      %v1099 = vsel %vm1098, 1, 0
      %v1100 = vlaneseq
      %v1101 = vshrl.u32 %v1100, 7
      %v1102 = vsub.s32 0, %v1101
      %v1103 = vrot.slane %v1099, %v1102
      %v1104 = vlaneseq
      %v1105 = vshrl.u32 %v1104, 7
      %v1106 = vsub.s32 1, %v1105
      %v1107 = vrot.slane %v1099, %v1106
      %vm1108 = vcmp.eq.s32.totalorder %v1103, 1
      %vm1109 = vcmp.eq.s32.totalorder %v1107, 1
      %v1110 = vsel %vm1108, %v306, 0.0
      %v1111 = vsel %vm1109, %v323, 0.0
      %v1112 = vld [vmem:[%s2] sm:$0xf]
      %1114 = vset.pattern.permute.xlu0 24
      %1115 = vperm.xlu0 %1114, %v1112
      %v1116 = vpop.permute.xlu0 %1115
      %v1118 = vmul.f32 %v1110, %v1116
      %v1119 = vmul.f32 %v1111, %v1116
      %v1120 = vadd.f32 %v1096, %v1118
      %v1121 = vadd.f32 %v1097, %v1119
      %1122 = vrot.lane.b32.xlu0 %v306, 127
      %v1123 = vpop.permute.xlu0 %1122
      %1124 = vrot.lane.b32.xlu0 %v323, 127
      %v1125 = vpop.permute.xlu0 %1124
      %vm1126 = vcmp.lt.s32.totalorder %v330, 127
      %v1127 = vsel %vm1126, %v1123, %v1125
      %v1128 = vsel %vm1126, %v1125, %v1123
      %vm1129 = vmand %vm1004, %vm462
      %v1130 = vsel %vm1129, 1, 0
      %v1131 = vlaneseq
      %v1132 = vshrl.u32 %v1131, 7
      %v1133 = vsub.s32 0, %v1132
      %v1134 = vrot.slane %v1130, %v1133
      %v1135 = vlaneseq
      %v1136 = vshrl.u32 %v1135, 7
      %v1137 = vsub.s32 1, %v1136
      %v1138 = vrot.slane %v1130, %v1137
      %vm1139 = vcmp.eq.s32.totalorder %v1134, 1
      %vm1140 = vcmp.eq.s32.totalorder %v1138, 1
      %v1141 = vsel %vm1139, %v1127, 0.0
      %v1142 = vsel %vm1140, %v1128, 0.0
      %v1143 = vld [vmem:[%s2] sm:$0xf]
      %1145 = vset.pattern.permute.xlu0 25
      %1146 = vperm.xlu0 %1145, %v1143
      %v1147 = vpop.permute.xlu0 %1146
      %v1149 = vmul.f32 %v1141, %v1147
      %v1150 = vmul.f32 %v1142, %v1147
      %v1151 = vadd.f32 %v1120, %v1149
      %v1152 = vadd.f32 %v1121, %v1150
      %1153 = vrot.lane.b32.xlu0 %v306, 126
      %v1154 = vpop.permute.xlu0 %1153
      %1155 = vrot.lane.b32.xlu0 %v323, 126
      %v1156 = vpop.permute.xlu0 %1155
      %vm1157 = vcmp.lt.s32.totalorder %v330, 126
      %v1158 = vsel %vm1157, %v1154, %v1156
      %v1159 = vsel %vm1157, %v1156, %v1154
      %vm1160 = vmand %vm1004, %vm496
      %v1161 = vsel %vm1160, 1, 0
      %v1162 = vlaneseq
      %v1163 = vshrl.u32 %v1162, 7
      %v1164 = vsub.s32 0, %v1163
      %v1165 = vrot.slane %v1161, %v1164
      %v1166 = vlaneseq
      %v1167 = vshrl.u32 %v1166, 7
      %v1168 = vsub.s32 1, %v1167
      %v1169 = vrot.slane %v1161, %v1168
      %vm1170 = vcmp.eq.s32.totalorder %v1165, 1
      %vm1171 = vcmp.eq.s32.totalorder %v1169, 1
      %v1172 = vsel %vm1170, %v1158, 0.0
      %v1173 = vsel %vm1171, %v1159, 0.0
      %v1174 = vld [vmem:[%s2] sm:$0xf]
      %1176 = vset.pattern.permute.xlu0 26
      %1177 = vperm.xlu0 %1176, %v1174
      %v1178 = vpop.permute.xlu0 %1177
      %v1180 = vmul.f32 %v1172, %v1178
      %v1181 = vmul.f32 %v1173, %v1178
      %v1182 = vadd.f32 %v1151, %v1180
      %v1183 = vadd.f32 %v1152, %v1181
      %1184 = vrot.lane.b32.xlu0 %v306, 125
      %v1185 = vpop.permute.xlu0 %1184
      %1186 = vrot.lane.b32.xlu0 %v323, 125
      %v1187 = vpop.permute.xlu0 %1186
      %vm1188 = vcmp.lt.s32.totalorder %v330, 125
      %v1189 = vsel %vm1188, %v1185, %v1187
      %v1190 = vsel %vm1188, %v1187, %v1185
      %vm1191 = vmand %vm1004, %vm530
      %v1192 = vsel %vm1191, 1, 0
      %v1193 = vlaneseq
      %v1194 = vshrl.u32 %v1193, 7
      %v1195 = vsub.s32 0, %v1194
      %v1196 = vrot.slane %v1192, %v1195
      %v1197 = vlaneseq
      %v1198 = vshrl.u32 %v1197, 7
      %v1199 = vsub.s32 1, %v1198
      %v1200 = vrot.slane %v1192, %v1199
      %vm1201 = vcmp.eq.s32.totalorder %v1196, 1
      %vm1202 = vcmp.eq.s32.totalorder %v1200, 1
      %v1203 = vsel %vm1201, %v1189, 0.0
      %v1204 = vsel %vm1202, %v1190, 0.0
      %v1205 = vld [vmem:[%s2] sm:$0xf]
      %1207 = vset.pattern.permute.xlu0 27
      %1208 = vperm.xlu0 %1207, %v1205
      %v1209 = vpop.permute.xlu0 %1208
      %v1211 = vmul.f32 %v1203, %v1209
      %v1212 = vmul.f32 %v1204, %v1209
      %v1213 = vadd.f32 %v1182, %v1211
      %v1214 = vadd.f32 %v1183, %v1212
      %vm1215 = vcmp.ge.s32.totalorder %v307, 4294967295
      %vm1216 = vcmp.lt.s32.totalorder %v307, 15
      %vm1217 = vmand %vm1215, %vm1216
      %1218 = vrot.lane.b32.xlu0 %v306, 115
      %v1219 = vpop.permute.xlu0 %1218
      %1220 = vrot.lane.b32.xlu0 %v323, 115
      %v1221 = vpop.permute.xlu0 %1220
      %vm1222 = vcmp.lt.s32.totalorder %v330, 115
      %v1223 = vsel %vm1222, %v1219, %v1221
      %v1224 = vsel %vm1222, %v1221, %v1219
      %vm1225 = vmand %vm1217, %vm321
      %v1226 = vsel %vm1225, 1, 0
      %v1227 = vlaneseq
      %v1228 = vshrl.u32 %v1227, 7
      %v1229 = vsub.s32 0, %v1228
      %v1230 = vrot.slane %v1226, %v1229
      %v1231 = vlaneseq
      %v1232 = vshrl.u32 %v1231, 7
      %v1233 = vsub.s32 1, %v1232
      %v1234 = vrot.slane %v1226, %v1233
      %vm1235 = vcmp.eq.s32.totalorder %v1230, 1
      %vm1236 = vcmp.eq.s32.totalorder %v1234, 1
      %v1237 = vsel %vm1235, %v1223, 0.0
      %v1238 = vsel %vm1236, %v1224, 0.0
      %v1239 = vld [vmem:[%s2] sm:$0xf]
      %1241 = vset.pattern.permute.xlu0 28
      %1242 = vperm.xlu0 %1241, %v1239
      %v1243 = vpop.permute.xlu0 %1242
      %v1245 = vmul.f32 %v1237, %v1243
      %v1246 = vmul.f32 %v1238, %v1243
      %v1247 = vadd.f32 %v1213, %v1245
      %v1248 = vadd.f32 %v1214, %v1246
      %1249 = vrot.lane.b32.xlu0 %v306, 114
      %v1250 = vpop.permute.xlu0 %1249
      %1251 = vrot.lane.b32.xlu0 %v323, 114
      %v1252 = vpop.permute.xlu0 %1251
      %vm1253 = vcmp.lt.s32.totalorder %v330, 114
      %v1254 = vsel %vm1253, %v1250, %v1252
      %v1255 = vsel %vm1253, %v1252, %v1250
      %vm1256 = vmand %vm1217, %vm360
      %v1257 = vsel %vm1256, 1, 0
      %v1258 = vlaneseq
      %v1259 = vshrl.u32 %v1258, 7
      %v1260 = vsub.s32 0, %v1259
      %v1261 = vrot.slane %v1257, %v1260
      %v1262 = vlaneseq
      %v1263 = vshrl.u32 %v1262, 7
      %v1264 = vsub.s32 1, %v1263
      %v1265 = vrot.slane %v1257, %v1264
      %vm1266 = vcmp.eq.s32.totalorder %v1261, 1
      %vm1267 = vcmp.eq.s32.totalorder %v1265, 1
      %v1268 = vsel %vm1266, %v1254, 0.0
      %v1269 = vsel %vm1267, %v1255, 0.0
      %v1270 = vld [vmem:[%s2] sm:$0xf]
      %1272 = vset.pattern.permute.xlu0 29
      %1273 = vperm.xlu0 %1272, %v1270
      %v1274 = vpop.permute.xlu0 %1273
      %v1276 = vmul.f32 %v1268, %v1274
      %v1277 = vmul.f32 %v1269, %v1274
      %v1278 = vadd.f32 %v1247, %v1276
      %v1279 = vadd.f32 %v1248, %v1277
      %1280 = vrot.lane.b32.xlu0 %v306, 113
      %v1281 = vpop.permute.xlu0 %1280
      %1282 = vrot.lane.b32.xlu0 %v323, 113
      %v1283 = vpop.permute.xlu0 %1282
      %vm1284 = vcmp.lt.s32.totalorder %v330, 113
      %v1285 = vsel %vm1284, %v1281, %v1283
      %v1286 = vsel %vm1284, %v1283, %v1281
      %vm1287 = vmand %vm1217, %vm394
      %v1288 = vsel %vm1287, 1, 0
      %v1289 = vlaneseq
      %v1290 = vshrl.u32 %v1289, 7
      %v1291 = vsub.s32 0, %v1290
      %v1292 = vrot.slane %v1288, %v1291
      %v1293 = vlaneseq
      %v1294 = vshrl.u32 %v1293, 7
      %v1295 = vsub.s32 1, %v1294
      %v1296 = vrot.slane %v1288, %v1295
      %vm1297 = vcmp.eq.s32.totalorder %v1292, 1
      %vm1298 = vcmp.eq.s32.totalorder %v1296, 1
      %v1299 = vsel %vm1297, %v1285, 0.0
      %v1300 = vsel %vm1298, %v1286, 0.0
      %v1301 = vld [vmem:[%s2] sm:$0xf]
      %1303 = vset.pattern.permute.xlu0 30
      %1304 = vperm.xlu0 %1303, %v1301
      %v1305 = vpop.permute.xlu0 %1304
      %v1307 = vmul.f32 %v1299, %v1305
      %v1308 = vmul.f32 %v1300, %v1305
      %v1309 = vadd.f32 %v1278, %v1307
      %v1310 = vadd.f32 %v1279, %v1308
      %1311 = vrot.lane.b32.xlu0 %v306, 112
      %v1312 = vpop.permute.xlu0 %1311
      %1313 = vrot.lane.b32.xlu0 %v323, 112
      %v1314 = vpop.permute.xlu0 %1313
      %vm1315 = vcmp.lt.s32.totalorder %v330, 112
      %v1316 = vsel %vm1315, %v1312, %v1314
      %v1317 = vsel %vm1315, %v1314, %v1312
      %vm1318 = vmand %vm1217, %vm428
      %v1319 = vsel %vm1318, 1, 0
      %v1320 = vlaneseq
      %v1321 = vshrl.u32 %v1320, 7
      %v1322 = vsub.s32 0, %v1321
      %v1323 = vrot.slane %v1319, %v1322
      %v1324 = vlaneseq
      %v1325 = vshrl.u32 %v1324, 7
      %v1326 = vsub.s32 1, %v1325
      %v1327 = vrot.slane %v1319, %v1326
      %vm1328 = vcmp.eq.s32.totalorder %v1323, 1
      %vm1329 = vcmp.eq.s32.totalorder %v1327, 1
      %v1330 = vsel %vm1328, %v1316, 0.0
      %v1331 = vsel %vm1329, %v1317, 0.0
      %v1332 = vld [vmem:[%s2] sm:$0xf]
      %1334 = vset.pattern.permute.xlu0 31
      %1335 = vperm.xlu0 %1334, %v1332
      %v1336 = vpop.permute.xlu0 %1335
      %v1338 = vmul.f32 %v1330, %v1336
      %v1339 = vmul.f32 %v1331, %v1336
      %v1340 = vadd.f32 %v1309, %v1338
      %v1341 = vadd.f32 %v1310, %v1339
      %1342 = vrot.lane.b32.xlu0 %v306, 111
      %v1343 = vpop.permute.xlu0 %1342
      %1344 = vrot.lane.b32.xlu0 %v323, 111
      %v1345 = vpop.permute.xlu0 %1344
      %vm1346 = vcmp.lt.s32.totalorder %v330, 111
      %v1347 = vsel %vm1346, %v1343, %v1345
      %v1348 = vsel %vm1346, %v1345, %v1343
      %vm1349 = vmand %vm1217, %vm462
      %v1350 = vsel %vm1349, 1, 0
      %v1351 = vlaneseq
      %v1352 = vshrl.u32 %v1351, 7
      %v1353 = vsub.s32 0, %v1352
      %v1354 = vrot.slane %v1350, %v1353
      %v1355 = vlaneseq
      %v1356 = vshrl.u32 %v1355, 7
      %v1357 = vsub.s32 1, %v1356
      %v1358 = vrot.slane %v1350, %v1357
      %vm1359 = vcmp.eq.s32.totalorder %v1354, 1
      %vm1360 = vcmp.eq.s32.totalorder %v1358, 1
      %v1361 = vsel %vm1359, %v1347, 0.0
      %v1362 = vsel %vm1360, %v1348, 0.0
      %v1363 = vld [vmem:[%s2] sm:$0xf]
      %1365 = vset.pattern.permute.xlu0 32
      %1366 = vperm.xlu0 %1365, %v1363
      %v1367 = vpop.permute.xlu0 %1366
      %v1369 = vmul.f32 %v1361, %v1367
      %v1370 = vmul.f32 %v1362, %v1367
      %v1371 = vadd.f32 %v1340, %v1369
      %v1372 = vadd.f32 %v1341, %v1370
      %1373 = vrot.lane.b32.xlu0 %v306, 110
      %v1374 = vpop.permute.xlu0 %1373
      %1375 = vrot.lane.b32.xlu0 %v323, 110
      %v1376 = vpop.permute.xlu0 %1375
      %vm1377 = vcmp.lt.s32.totalorder %v330, 110
      %v1378 = vsel %vm1377, %v1374, %v1376
      %v1379 = vsel %vm1377, %v1376, %v1374
      %vm1380 = vmand %vm1217, %vm496
      %v1381 = vsel %vm1380, 1, 0
      %v1382 = vlaneseq
      %v1383 = vshrl.u32 %v1382, 7
      %v1384 = vsub.s32 0, %v1383
      %v1385 = vrot.slane %v1381, %v1384
      %v1386 = vlaneseq
      %v1387 = vshrl.u32 %v1386, 7
      %v1388 = vsub.s32 1, %v1387
      %v1389 = vrot.slane %v1381, %v1388
      %vm1390 = vcmp.eq.s32.totalorder %v1385, 1
      %vm1391 = vcmp.eq.s32.totalorder %v1389, 1
      %v1392 = vsel %vm1390, %v1378, 0.0
      %v1393 = vsel %vm1391, %v1379, 0.0
      %v1394 = vld [vmem:[%s2] sm:$0xf]
      %1396 = vset.pattern.permute.xlu0 33
      %1397 = vperm.xlu0 %1396, %v1394
      %v1398 = vpop.permute.xlu0 %1397
      %v1400 = vmul.f32 %v1392, %v1398
      %v1401 = vmul.f32 %v1393, %v1398
      %v1402 = vadd.f32 %v1371, %v1400
      %v1403 = vadd.f32 %v1372, %v1401
      %1404 = vrot.lane.b32.xlu0 %v306, 109
      %v1405 = vpop.permute.xlu0 %1404
      %1406 = vrot.lane.b32.xlu0 %v323, 109
      %v1407 = vpop.permute.xlu0 %1406
      %vm1408 = vcmp.lt.s32.totalorder %v330, 109
      %v1409 = vsel %vm1408, %v1405, %v1407
      %v1410 = vsel %vm1408, %v1407, %v1405
      %vm1411 = vmand %vm1217, %vm530
      %v1412 = vsel %vm1411, 1, 0
      %v1413 = vlaneseq
      %v1414 = vshrl.u32 %v1413, 7
      %v1415 = vsub.s32 0, %v1414
      %v1416 = vrot.slane %v1412, %v1415
      %v1417 = vlaneseq
      %v1418 = vshrl.u32 %v1417, 7
      %v1419 = vsub.s32 1, %v1418
      %v1420 = vrot.slane %v1412, %v1419
      %vm1421 = vcmp.eq.s32.totalorder %v1416, 1
      %vm1422 = vcmp.eq.s32.totalorder %v1420, 1
      %v1423 = vsel %vm1421, %v1409, 0.0
      %v1424 = vsel %vm1422, %v1410, 0.0
      %v1425 = vld [vmem:[%s2] sm:$0xf]
      %1427 = vset.pattern.permute.xlu0 34
      %1428 = vperm.xlu0 %1427, %v1425
      %v1429 = vpop.permute.xlu0 %1428
      %v1431 = vmul.f32 %v1423, %v1429
      %v1432 = vmul.f32 %v1424, %v1429
      %v1433 = vadd.f32 %v1402, %v1431
      %v1434 = vadd.f32 %v1403, %v1432
      %vm1435 = vcmp.ge.s32.totalorder %v307, 4294967294
      %vm1436 = vcmp.lt.s32.totalorder %v307, 14
      %vm1437 = vmand %vm1435, %vm1436
      %1438 = vrot.lane.b32.xlu0 %v306, 99
      %v1439 = vpop.permute.xlu0 %1438
      %1440 = vrot.lane.b32.xlu0 %v323, 99
      %v1441 = vpop.permute.xlu0 %1440
      %vm1442 = vcmp.lt.s32.totalorder %v330, 99
      %v1443 = vsel %vm1442, %v1439, %v1441
      %v1444 = vsel %vm1442, %v1441, %v1439
      %vm1445 = vmand %vm1437, %vm321
      %v1446 = vsel %vm1445, 1, 0
      %v1447 = vlaneseq
      %v1448 = vshrl.u32 %v1447, 7
      %v1449 = vsub.s32 0, %v1448
      %v1450 = vrot.slane %v1446, %v1449
      %v1451 = vlaneseq
      %v1452 = vshrl.u32 %v1451, 7
      %v1453 = vsub.s32 1, %v1452
      %v1454 = vrot.slane %v1446, %v1453
      %vm1455 = vcmp.eq.s32.totalorder %v1450, 1
      %vm1456 = vcmp.eq.s32.totalorder %v1454, 1
      %v1457 = vsel %vm1455, %v1443, 0.0
      %v1458 = vsel %vm1456, %v1444, 0.0
      %v1459 = vld [vmem:[%s2] sm:$0xf]
      %1461 = vset.pattern.permute.xlu0 35
      %1462 = vperm.xlu0 %1461, %v1459
      %v1463 = vpop.permute.xlu0 %1462
      %v1465 = vmul.f32 %v1457, %v1463
      %v1466 = vmul.f32 %v1458, %v1463
      %v1467 = vadd.f32 %v1433, %v1465
      %v1468 = vadd.f32 %v1434, %v1466
      %1469 = vrot.lane.b32.xlu0 %v306, 98
      %v1470 = vpop.permute.xlu0 %1469
      %1471 = vrot.lane.b32.xlu0 %v323, 98
      %v1472 = vpop.permute.xlu0 %1471
      %vm1473 = vcmp.lt.s32.totalorder %v330, 98
      %v1474 = vsel %vm1473, %v1470, %v1472
      %v1475 = vsel %vm1473, %v1472, %v1470
      %vm1476 = vmand %vm1437, %vm360
      %v1477 = vsel %vm1476, 1, 0
      %v1478 = vlaneseq
      %v1479 = vshrl.u32 %v1478, 7
      %v1480 = vsub.s32 0, %v1479
      %v1481 = vrot.slane %v1477, %v1480
      %v1482 = vlaneseq
      %v1483 = vshrl.u32 %v1482, 7
      %v1484 = vsub.s32 1, %v1483
      %v1485 = vrot.slane %v1477, %v1484
      %vm1486 = vcmp.eq.s32.totalorder %v1481, 1
      %vm1487 = vcmp.eq.s32.totalorder %v1485, 1
      %v1488 = vsel %vm1486, %v1474, 0.0
      %v1489 = vsel %vm1487, %v1475, 0.0
      %v1490 = vld [vmem:[%s2] sm:$0xf]
      %1492 = vset.pattern.permute.xlu0 36
      %1493 = vperm.xlu0 %1492, %v1490
      %v1494 = vpop.permute.xlu0 %1493
      %v1496 = vmul.f32 %v1488, %v1494
      %v1497 = vmul.f32 %v1489, %v1494
      %v1498 = vadd.f32 %v1467, %v1496
      %v1499 = vadd.f32 %v1468, %v1497
      %1500 = vrot.lane.b32.xlu0 %v306, 97
      %v1501 = vpop.permute.xlu0 %1500
      %1502 = vrot.lane.b32.xlu0 %v323, 97
      %v1503 = vpop.permute.xlu0 %1502
      %vm1504 = vcmp.lt.s32.totalorder %v330, 97
      %v1505 = vsel %vm1504, %v1501, %v1503
      %v1506 = vsel %vm1504, %v1503, %v1501
      %vm1507 = vmand %vm1437, %vm394
      %v1508 = vsel %vm1507, 1, 0
      %v1509 = vlaneseq
      %v1510 = vshrl.u32 %v1509, 7
      %v1511 = vsub.s32 0, %v1510
      %v1512 = vrot.slane %v1508, %v1511
      %v1513 = vlaneseq
      %v1514 = vshrl.u32 %v1513, 7
      %v1515 = vsub.s32 1, %v1514
      %v1516 = vrot.slane %v1508, %v1515
      %vm1517 = vcmp.eq.s32.totalorder %v1512, 1
      %vm1518 = vcmp.eq.s32.totalorder %v1516, 1
      %v1519 = vsel %vm1517, %v1505, 0.0
      %v1520 = vsel %vm1518, %v1506, 0.0
      %v1521 = vld [vmem:[%s2] sm:$0xf]
      %1523 = vset.pattern.permute.xlu0 37
      %1524 = vperm.xlu0 %1523, %v1521
      %v1525 = vpop.permute.xlu0 %1524
      %v1527 = vmul.f32 %v1519, %v1525
      %v1528 = vmul.f32 %v1520, %v1525
      %v1529 = vadd.f32 %v1498, %v1527
      %v1530 = vadd.f32 %v1499, %v1528
      %1531 = vrot.lane.b32.xlu0 %v306, 96
      %v1532 = vpop.permute.xlu0 %1531
      %1533 = vrot.lane.b32.xlu0 %v323, 96
      %v1534 = vpop.permute.xlu0 %1533
      %vm1535 = vcmp.lt.s32.totalorder %v330, 96
      %v1536 = vsel %vm1535, %v1532, %v1534
      %v1537 = vsel %vm1535, %v1534, %v1532
      %vm1538 = vmand %vm1437, %vm428
      %v1539 = vsel %vm1538, 1, 0
      %v1540 = vlaneseq
      %v1541 = vshrl.u32 %v1540, 7
      %v1542 = vsub.s32 0, %v1541
      %v1543 = vrot.slane %v1539, %v1542
      %v1544 = vlaneseq
      %v1545 = vshrl.u32 %v1544, 7
      %v1546 = vsub.s32 1, %v1545
      %v1547 = vrot.slane %v1539, %v1546
      %vm1548 = vcmp.eq.s32.totalorder %v1543, 1
      %vm1549 = vcmp.eq.s32.totalorder %v1547, 1
      %v1550 = vsel %vm1548, %v1536, 0.0
      %v1551 = vsel %vm1549, %v1537, 0.0
      %v1552 = vld [vmem:[%s2] sm:$0xf]
      %1554 = vset.pattern.permute.xlu0 38
      %1555 = vperm.xlu0 %1554, %v1552
      %v1556 = vpop.permute.xlu0 %1555
      %v1558 = vmul.f32 %v1550, %v1556
      %v1559 = vmul.f32 %v1551, %v1556
      %v1560 = vadd.f32 %v1529, %v1558
      %v1561 = vadd.f32 %v1530, %v1559
      %1562 = vrot.lane.b32.xlu0 %v306, 95
      %v1563 = vpop.permute.xlu0 %1562
      %1564 = vrot.lane.b32.xlu0 %v323, 95
      %v1565 = vpop.permute.xlu0 %1564
      %vm1566 = vcmp.lt.s32.totalorder %v330, 95
      %v1567 = vsel %vm1566, %v1563, %v1565
      %v1568 = vsel %vm1566, %v1565, %v1563
      %vm1569 = vmand %vm1437, %vm462
      %v1570 = vsel %vm1569, 1, 0
      %v1571 = vlaneseq
      %v1572 = vshrl.u32 %v1571, 7
      %v1573 = vsub.s32 0, %v1572
      %v1574 = vrot.slane %v1570, %v1573
      %v1575 = vlaneseq
      %v1576 = vshrl.u32 %v1575, 7
      %v1577 = vsub.s32 1, %v1576
      %v1578 = vrot.slane %v1570, %v1577
      %vm1579 = vcmp.eq.s32.totalorder %v1574, 1
      %vm1580 = vcmp.eq.s32.totalorder %v1578, 1
      %v1581 = vsel %vm1579, %v1567, 0.0
      %v1582 = vsel %vm1580, %v1568, 0.0
      %v1583 = vld [vmem:[%s2] sm:$0xf]
      %1585 = vset.pattern.permute.xlu0 39
      %1586 = vperm.xlu0 %1585, %v1583
      %v1587 = vpop.permute.xlu0 %1586
      %v1589 = vmul.f32 %v1581, %v1587
      %v1590 = vmul.f32 %v1582, %v1587
      %v1591 = vadd.f32 %v1560, %v1589
      %v1592 = vadd.f32 %v1561, %v1590
      %1593 = vrot.lane.b32.xlu0 %v306, 94
      %v1594 = vpop.permute.xlu0 %1593
      %1595 = vrot.lane.b32.xlu0 %v323, 94
      %v1596 = vpop.permute.xlu0 %1595
      %vm1597 = vcmp.lt.s32.totalorder %v330, 94
      %v1598 = vsel %vm1597, %v1594, %v1596
      %v1599 = vsel %vm1597, %v1596, %v1594
      %vm1600 = vmand %vm1437, %vm496
      %v1601 = vsel %vm1600, 1, 0
      %v1602 = vlaneseq
      %v1603 = vshrl.u32 %v1602, 7
      %v1604 = vsub.s32 0, %v1603
      %v1605 = vrot.slane %v1601, %v1604
      %v1606 = vlaneseq
      %v1607 = vshrl.u32 %v1606, 7
      %v1608 = vsub.s32 1, %v1607
      %v1609 = vrot.slane %v1601, %v1608
      %vm1610 = vcmp.eq.s32.totalorder %v1605, 1
      %vm1611 = vcmp.eq.s32.totalorder %v1609, 1
      %v1612 = vsel %vm1610, %v1598, 0.0
      %v1613 = vsel %vm1611, %v1599, 0.0
      %v1614 = vld [vmem:[%s2] sm:$0xf]
      %1616 = vset.pattern.permute.xlu0 40
      %1617 = vperm.xlu0 %1616, %v1614
      %v1618 = vpop.permute.xlu0 %1617
      %v1620 = vmul.f32 %v1612, %v1618
      %v1621 = vmul.f32 %v1613, %v1618
      %v1622 = vadd.f32 %v1591, %v1620
      %v1623 = vadd.f32 %v1592, %v1621
      %1624 = vrot.lane.b32.xlu0 %v306, 93
      %v1625 = vpop.permute.xlu0 %1624
      %1626 = vrot.lane.b32.xlu0 %v323, 93
      %v1627 = vpop.permute.xlu0 %1626
      %vm1628 = vcmp.lt.s32.totalorder %v330, 93
      %v1629 = vsel %vm1628, %v1625, %v1627
      %v1630 = vsel %vm1628, %v1627, %v1625
      %vm1631 = vmand %vm1437, %vm530
      %v1632 = vsel %vm1631, 1, 0
      %v1633 = vlaneseq
      %v1634 = vshrl.u32 %v1633, 7
      %v1635 = vsub.s32 0, %v1634
      %v1636 = vrot.slane %v1632, %v1635
      %v1637 = vlaneseq
      %v1638 = vshrl.u32 %v1637, 7
      %v1639 = vsub.s32 1, %v1638
      %v1640 = vrot.slane %v1632, %v1639
      %vm1641 = vcmp.eq.s32.totalorder %v1636, 1
      %vm1642 = vcmp.eq.s32.totalorder %v1640, 1
      %v1643 = vsel %vm1641, %v1629, 0.0
      %v1644 = vsel %vm1642, %v1630, 0.0
      %v1645 = vld [vmem:[%s2] sm:$0xf]
      %1647 = vset.pattern.permute.xlu0 41
      %1648 = vperm.xlu0 %1647, %v1645
      %v1649 = vpop.permute.xlu0 %1648
      %v1651 = vmul.f32 %v1643, %v1649
      %v1652 = vmul.f32 %v1644, %v1649
      %v1653 = vadd.f32 %v1622, %v1651
      %v1654 = vadd.f32 %v1623, %v1652
      %vm1655 = vcmp.ge.s32.totalorder %v307, 4294967293
      %vm1656 = vcmp.lt.s32.totalorder %v307, 13
      %vm1657 = vmand %vm1655, %vm1656
      %1658 = vrot.lane.b32.xlu0 %v306, 83
      %v1659 = vpop.permute.xlu0 %1658
      %1660 = vrot.lane.b32.xlu0 %v323, 83
      %v1661 = vpop.permute.xlu0 %1660
      %vm1662 = vcmp.lt.s32.totalorder %v330, 83
      %v1663 = vsel %vm1662, %v1659, %v1661
      %v1664 = vsel %vm1662, %v1661, %v1659
      %vm1665 = vmand %vm1657, %vm321
      %v1666 = vsel %vm1665, 1, 0
      %v1667 = vlaneseq
      %v1668 = vshrl.u32 %v1667, 7
      %v1669 = vsub.s32 0, %v1668
      %v1670 = vrot.slane %v1666, %v1669
      %v1671 = vlaneseq
      %v1672 = vshrl.u32 %v1671, 7
      %v1673 = vsub.s32 1, %v1672
      %v1674 = vrot.slane %v1666, %v1673
      %vm1675 = vcmp.eq.s32.totalorder %v1670, 1
      %vm1676 = vcmp.eq.s32.totalorder %v1674, 1
      %v1677 = vsel %vm1675, %v1663, 0.0
      %v1678 = vsel %vm1676, %v1664, 0.0
      %v1679 = vld [vmem:[%s2] sm:$0xf]
      %1681 = vset.pattern.permute.xlu0 42
      %1682 = vperm.xlu0 %1681, %v1679
      %v1683 = vpop.permute.xlu0 %1682
      %v1685 = vmul.f32 %v1677, %v1683
      %v1686 = vmul.f32 %v1678, %v1683
      %v1687 = vadd.f32 %v1653, %v1685
      %v1688 = vadd.f32 %v1654, %v1686
      %1689 = vrot.lane.b32.xlu0 %v306, 82
      %v1690 = vpop.permute.xlu0 %1689
      %1691 = vrot.lane.b32.xlu0 %v323, 82
      %v1692 = vpop.permute.xlu0 %1691
      %vm1693 = vcmp.lt.s32.totalorder %v330, 82
      %v1694 = vsel %vm1693, %v1690, %v1692
      %v1695 = vsel %vm1693, %v1692, %v1690
      %vm1696 = vmand %vm1657, %vm360
      %v1697 = vsel %vm1696, 1, 0
      %v1698 = vlaneseq
      %v1699 = vshrl.u32 %v1698, 7
      %v1700 = vsub.s32 0, %v1699
      %v1701 = vrot.slane %v1697, %v1700
      %v1702 = vlaneseq
      %v1703 = vshrl.u32 %v1702, 7
      %v1704 = vsub.s32 1, %v1703
      %v1705 = vrot.slane %v1697, %v1704
      %vm1706 = vcmp.eq.s32.totalorder %v1701, 1
      %vm1707 = vcmp.eq.s32.totalorder %v1705, 1
      %v1708 = vsel %vm1706, %v1694, 0.0
      %v1709 = vsel %vm1707, %v1695, 0.0
      %v1710 = vld [vmem:[%s2] sm:$0xf]
      %1712 = vset.pattern.permute.xlu0 43
      %1713 = vperm.xlu0 %1712, %v1710
      %v1714 = vpop.permute.xlu0 %1713
      %v1716 = vmul.f32 %v1708, %v1714
      %v1717 = vmul.f32 %v1709, %v1714
      %v1718 = vadd.f32 %v1687, %v1716
      %v1719 = vadd.f32 %v1688, %v1717
      %1720 = vrot.lane.b32.xlu0 %v306, 81
      %v1721 = vpop.permute.xlu0 %1720
      %1722 = vrot.lane.b32.xlu0 %v323, 81
      %v1723 = vpop.permute.xlu0 %1722
      %vm1724 = vcmp.lt.s32.totalorder %v330, 81
      %v1725 = vsel %vm1724, %v1721, %v1723
      %v1726 = vsel %vm1724, %v1723, %v1721
      %vm1727 = vmand %vm1657, %vm394
      %v1728 = vsel %vm1727, 1, 0
      %v1729 = vlaneseq
      %v1730 = vshrl.u32 %v1729, 7
      %v1731 = vsub.s32 0, %v1730
      %v1732 = vrot.slane %v1728, %v1731
      %v1733 = vlaneseq
      %v1734 = vshrl.u32 %v1733, 7
      %v1735 = vsub.s32 1, %v1734
      %v1736 = vrot.slane %v1728, %v1735
      %vm1737 = vcmp.eq.s32.totalorder %v1732, 1
      %vm1738 = vcmp.eq.s32.totalorder %v1736, 1
      %v1739 = vsel %vm1737, %v1725, 0.0
      %v1740 = vsel %vm1738, %v1726, 0.0
      %v1741 = vld [vmem:[%s2] sm:$0xf]
      %1743 = vset.pattern.permute.xlu0 44
      %1744 = vperm.xlu0 %1743, %v1741
      %v1745 = vpop.permute.xlu0 %1744
      %v1747 = vmul.f32 %v1739, %v1745
      %v1748 = vmul.f32 %v1740, %v1745
      %v1749 = vadd.f32 %v1718, %v1747
      %v1750 = vadd.f32 %v1719, %v1748
      %1751 = vrot.lane.b32.xlu0 %v306, 80
      %v1752 = vpop.permute.xlu0 %1751
      %1753 = vrot.lane.b32.xlu0 %v323, 80
      %v1754 = vpop.permute.xlu0 %1753
      %vm1755 = vcmp.lt.s32.totalorder %v330, 80
      %v1756 = vsel %vm1755, %v1752, %v1754
      %v1757 = vsel %vm1755, %v1754, %v1752
      %vm1758 = vmand %vm1657, %vm428
      %v1759 = vsel %vm1758, 1, 0
      %v1760 = vlaneseq
      %v1761 = vshrl.u32 %v1760, 7
      %v1762 = vsub.s32 0, %v1761
      %v1763 = vrot.slane %v1759, %v1762
      %v1764 = vlaneseq
      %v1765 = vshrl.u32 %v1764, 7
      %v1766 = vsub.s32 1, %v1765
      %v1767 = vrot.slane %v1759, %v1766
      %vm1768 = vcmp.eq.s32.totalorder %v1763, 1
      %vm1769 = vcmp.eq.s32.totalorder %v1767, 1
      %v1770 = vsel %vm1768, %v1756, 0.0
      %v1771 = vsel %vm1769, %v1757, 0.0
      %v1772 = vld [vmem:[%s2] sm:$0xf]
      %1774 = vset.pattern.permute.xlu0 45
      %1775 = vperm.xlu0 %1774, %v1772
      %v1776 = vpop.permute.xlu0 %1775
      %v1778 = vmul.f32 %v1770, %v1776
      %v1779 = vmul.f32 %v1771, %v1776
      %v1780 = vadd.f32 %v1749, %v1778
      %v1781 = vadd.f32 %v1750, %v1779
      %1782 = vrot.lane.b32.xlu0 %v306, 79
      %v1783 = vpop.permute.xlu0 %1782
      %1784 = vrot.lane.b32.xlu0 %v323, 79
      %v1785 = vpop.permute.xlu0 %1784
      %vm1786 = vcmp.lt.s32.totalorder %v330, 79
      %v1787 = vsel %vm1786, %v1783, %v1785
      %v1788 = vsel %vm1786, %v1785, %v1783
      %vm1789 = vmand %vm1657, %vm462
      %v1790 = vsel %vm1789, 1, 0
      %v1791 = vlaneseq
      %v1792 = vshrl.u32 %v1791, 7
      %v1793 = vsub.s32 0, %v1792
      %v1794 = vrot.slane %v1790, %v1793
      %v1795 = vlaneseq
      %v1796 = vshrl.u32 %v1795, 7
      %v1797 = vsub.s32 1, %v1796
      %v1798 = vrot.slane %v1790, %v1797
      %vm1799 = vcmp.eq.s32.totalorder %v1794, 1
      %vm1800 = vcmp.eq.s32.totalorder %v1798, 1
      %v1801 = vsel %vm1799, %v1787, 0.0
      %v1802 = vsel %vm1800, %v1788, 0.0
      %v1803 = vld [vmem:[%s2] sm:$0xf]
      %1805 = vset.pattern.permute.xlu0 46
      %1806 = vperm.xlu0 %1805, %v1803
      %v1807 = vpop.permute.xlu0 %1806
      %v1809 = vmul.f32 %v1801, %v1807
      %v1810 = vmul.f32 %v1802, %v1807
      %v1811 = vadd.f32 %v1780, %v1809
      %v1812 = vadd.f32 %v1781, %v1810
      %1813 = vrot.lane.b32.xlu0 %v306, 78
      %v1814 = vpop.permute.xlu0 %1813
      %1815 = vrot.lane.b32.xlu0 %v323, 78
      %v1816 = vpop.permute.xlu0 %1815
      %vm1817 = vcmp.lt.s32.totalorder %v330, 78
      %v1818 = vsel %vm1817, %v1814, %v1816
      %v1819 = vsel %vm1817, %v1816, %v1814
      %vm1820 = vmand %vm1657, %vm496
      %v1821 = vsel %vm1820, 1, 0
      %v1822 = vlaneseq
      %v1823 = vshrl.u32 %v1822, 7
      %v1824 = vsub.s32 0, %v1823
      %v1825 = vrot.slane %v1821, %v1824
      %v1826 = vlaneseq
      %v1827 = vshrl.u32 %v1826, 7
      %v1828 = vsub.s32 1, %v1827
      %v1829 = vrot.slane %v1821, %v1828
      %vm1830 = vcmp.eq.s32.totalorder %v1825, 1
      %vm1831 = vcmp.eq.s32.totalorder %v1829, 1
      %v1832 = vsel %vm1830, %v1818, 0.0
      %v1833 = vsel %vm1831, %v1819, 0.0
      %v1834 = vld [vmem:[%s2] sm:$0xf]
      %1836 = vset.pattern.permute.xlu0 47
      %1837 = vperm.xlu0 %1836, %v1834
      %v1838 = vpop.permute.xlu0 %1837
      %v1840 = vmul.f32 %v1832, %v1838
      %v1841 = vmul.f32 %v1833, %v1838
      %v1842 = vadd.f32 %v1811, %v1840
      %v1843 = vadd.f32 %v1812, %v1841
      %1844 = vrot.lane.b32.xlu0 %v306, 77
      %v1845 = vpop.permute.xlu0 %1844
      %1846 = vrot.lane.b32.xlu0 %v323, 77
      %v1847 = vpop.permute.xlu0 %1846
      %vm1848 = vcmp.lt.s32.totalorder %v330, 77
      %v1849 = vsel %vm1848, %v1845, %v1847
      %v1850 = vsel %vm1848, %v1847, %v1845
      %vm1851 = vmand %vm1657, %vm530
      %v1852 = vsel %vm1851, 1, 0
      %v1853 = vlaneseq
      %v1854 = vshrl.u32 %v1853, 7
      %v1855 = vsub.s32 0, %v1854
      %v1856 = vrot.slane %v1852, %v1855
      %v1857 = vlaneseq
      %v1858 = vshrl.u32 %v1857, 7
      %v1859 = vsub.s32 1, %v1858
      %v1860 = vrot.slane %v1852, %v1859
      %vm1861 = vcmp.eq.s32.totalorder %v1856, 1
      %vm1862 = vcmp.eq.s32.totalorder %v1860, 1
      %v1863 = vsel %vm1861, %v1849, 0.0
      %v1864 = vsel %vm1862, %v1850, 0.0
      %v1865 = vld [vmem:[%s2] sm:$0xf]
      %1867 = vset.pattern.permute.xlu0 48
      %1868 = vperm.xlu0 %1867, %v1865
      %v1869 = vpop.permute.xlu0 %1868
      %v1871 = vmul.f32 %v1863, %v1869
      %v1872 = vmul.f32 %v1864, %v1869
      %v1873 = vadd.f32 %v1842, %v1871
      %v1874 = vadd.f32 %v1843, %v1872
      %v1875 = vld [vmem:[%s4] sm:$0xff]
      %v1876 = vld [vmem:[%s4 + $0x8] sm:$0xff]
      %v1877 = vld [vmem:[%s4 + $0x10] sm:$0xff]
      %v1878 = vld [vmem:[%s4 + $0x18] sm:$0xff]
      %v1879 = vld [vmem:[%s5] sm:$0xff]
      %v1880 = vld [vmem:[%s5 + $0x8] sm:$0xff]
      %v1881 = vld [vmem:[%s5 + $0x10] sm:$0xff]
      %v1882 = vld [vmem:[%s5 + $0x18] sm:$0xff]
      %1884 = vset.pattern.permute.xlu0 0
      %1885 = vperm.xlu0 %1884, %v1879
      %v1886 = vpop.permute.xlu0 %1885
      %1889 = vset.pattern.permute.xlu0 0
      %1890 = vperm.xlu0 %1889, %v1880
      %v1891 = vpop.permute.xlu0 %1890
      %1894 = vset.pattern.permute.xlu0 0
      %1895 = vperm.xlu0 %1894, %v1881
      %v1896 = vpop.permute.xlu0 %1895
      %1899 = vset.pattern.permute.xlu0 0
      %1900 = vperm.xlu0 %1899, %v1882
      %v1901 = vpop.permute.xlu0 %1900
      %vm1903 = vcmask 31744
      %v1905 = vsel %vm1903, %v1875, 0
      %v1908 = vsel %vm1903, %v1876, 0
      %v1911 = vsel %vm1903, %v1877, 0
      %v1914 = vsel %vm1903, %v1878, 0
      %vm1916 = vcmask 1043456
      %v1918 = vsel %vm1916, %v1873, 0
      %v1921 = vsel %vm1916, %v1874, 0
      %1923 = vmatprep.subr.mxu0 0.0
      %1924 = vmatpush1.msra.mxu0 0.0
      %1925 = vmatprep.subr.mxu0 0.0
      %1926 = vmatpush1.msra.mxu0 0.0
      %1927 = vmatprep.subr.mxu0 0.0
      %1928 = vmatpush1.msra.mxu0 0.0
      %1929 = vmatprep.subr.mxu0 0.0
      %1930 = vmatpush1.msra.mxu0 0.0
      %1931 = vmatprep.subr.mxu0 0.0
      %1932 = vmatpush1.msra.mxu0 0.0
      %1933 = vmatprep.subr.mxu0 0.0
      %1934 = vmatpush1.msra.mxu0 0.0
      %1935 = vmatprep.subr.mxu0 0.0
      %1936 = vmatpush1.msra.mxu0 0.0
      %1937 = vmatprep.subr.mxu0 0.0
      %1938 = vmatpush1.msra.mxu0 0.0
      %1939 = vmatprep.subr.mxu0 0.0
      %1940 = vmatpush1.msra.mxu0 0.0
      %1941 = vmatprep.subr.mxu0 0.0
      %1942 = vmatpush1.msra.mxu0 0.0
      %1943 = vmatprep.subr.mxu0 0.0
      %1944 = vmatpush1.msra.mxu0 0.0
      %1945 = vmatprep.subr.mxu0 0.0
      %1946 = vmatpush1.msra.mxu0 0.0
      %1947 = vmatprep.subr.mxu0 0.0
      %1948 = vmatpush1.msra.mxu0 0.0
      %1949 = vmatprep.subr.mxu0 0.0
      %1950 = vmatpush1.msra.mxu0 0.0
      %1951 = vmatprep.subr.mxu0 0.0
      %1952 = vmatpush1.msra.mxu0 0.0
      %1953 = vmatprep.subr.mxu0 %v1921
      %1954 = vmatpush1.msra.mxu0 %v1918
      %1955 = vmatprep.subr.mxu0 0.0
      %1956 = vmatpush2.msra.mxu0 0.0
      %1957 = vmatprep.subr.mxu0 0.0
      %1958 = vmatpush2.msra.mxu0 0.0
      %1959 = vmatprep.subr.mxu0 0.0
      %1960 = vmatpush2.msra.mxu0 0.0
      %1961 = vmatprep.subr.mxu0 0.0
      %1962 = vmatpush2.msra.mxu0 0.0
      %1963 = vmatprep.subr.mxu0 0.0
      %1964 = vmatpush2.msra.mxu0 0.0
      %1965 = vmatprep.subr.mxu0 0.0
      %1966 = vmatpush2.msra.mxu0 0.0
      %1967 = vmatprep.subr.mxu0 0.0
      %1968 = vmatpush2.msra.mxu0 0.0
      %1969 = vmatprep.subr.mxu0 0.0
      %1970 = vmatpush2.msra.mxu0 0.0
      %1971 = vmatprep.subr.mxu0 0.0
      %1972 = vmatpush2.msra.mxu0 0.0
      %1973 = vmatprep.subr.mxu0 0.0
      %1974 = vmatpush2.msra.mxu0 0.0
      %1975 = vmatprep.subr.mxu0 0.0
      %1976 = vmatpush2.msra.mxu0 0.0
      %1977 = vmatprep.subr.mxu0 0.0
      %1978 = vmatpush2.msra.mxu0 0.0
      %1979 = vmatprep.subr.mxu0 0.0
      %1980 = vmatpush2.msra.mxu0 0.0
      %1981 = vmatprep.subr.mxu0 0.0
      %1982 = vmatpush2.msra.mxu0 0.0
      %1983 = vmatprep.subr.mxu0 0.0
      %1984 = vmatpush2.msra.mxu0 0.0
      %1985 = vmatprep.subr.mxu0 0.0
      %1986 = vmatpush2.msra.mxu0 0.0
      %1987 = vmatprep.mubr.f32.mxu0 0.0
      %1988 = vmatmul.mubr.f32.gmra.mxu0 %v1905
      %v1989 = vpop.f32.mrf.mxu0
      %v1990 = vadd.f32 %v1886, %v1989
      %v1991 = vpop.f32.mrf.mxu0
      %v1992 = vadd.f32 %v1886, %v1991
      %1993 = vmatprep.mubr.f32.mxu0 0.0
      %1994 = vmatmul.mubr.f32.gmra.mxu0 %v1908
      %v1995 = vpop.f32.mrf.mxu0
      %v1996 = vadd.f32 %v1891, %v1995
      %v1997 = vpop.f32.mrf.mxu0
      %v1998 = vadd.f32 %v1891, %v1997
      %1999 = vmatprep.mubr.f32.mxu0 0.0
      %2000 = vmatmul.mubr.f32.gmra.mxu0 %v1911
      %v2001 = vpop.f32.mrf.mxu0
      %v2002 = vadd.f32 %v1896, %v2001
      %v2003 = vpop.f32.mrf.mxu0
      %v2004 = vadd.f32 %v1896, %v2003
      %2005 = vmatprep.mubr.f32.mxu0 0.0
      %2006 = vmatmul.mubr.f32.gmra.mxu0 %v1914
      %v2007 = vpop.f32.mrf.mxu0
      %v2008 = vadd.f32 %v1901, %v2007
      %v2009 = vpop.f32.mrf.mxu0
      %v2010 = vadd.f32 %v1901, %v2009
      %2011 = vdwg.mxu0
      %v2012 = vmax.f32 %v1990, 0.0
      %v2013 = vmax.f32 %v1992, 0.0
      %v2014 = vmax.f32 %v1996, 0.0
      %v2015 = vmax.f32 %v1998, 0.0
      %v2016 = vmin.f32 %v2012, 6.0
      %v2017 = vmin.f32 %v2013, 6.0
      %v2018 = vmin.f32 %v2014, 6.0
      %v2019 = vmin.f32 %v2015, 6.0
      %v2020 = vmul.f32 %v2016, %v2002
      %v2021 = vmul.f32 %v2017, %v2004
      %v2022 = vmul.f32 %v2018, %v2008
      %v2023 = vmul.f32 %v2019, %v2010
      %v2024 = vld [vmem:[%s6] sm:$0xf]
      %v2025 = vld [vmem:[%s7] sm:$0xf]
      %2027 = vset.pattern.permute.xlu0 0
      %2028 = vperm.xlu0 %2027, %v2025
      %v2029 = vpop.permute.xlu0 %2028
      %vm2031 = vcmask 130048
      %v2033 = vsel %vm2031, %v2024, 0
      %2035 = vmatprep.subr.mxu0 0.0
      %2036 = vmatpush1.msra.mxu0 0.0
      %2037 = vmatprep.subr.mxu0 0.0
      %2038 = vmatpush1.msra.mxu0 0.0
      %2039 = vmatprep.subr.mxu0 0.0
      %2040 = vmatpush1.msra.mxu0 0.0
      %2041 = vmatprep.subr.mxu0 0.0
      %2042 = vmatpush1.msra.mxu0 0.0
      %2043 = vmatprep.subr.mxu0 0.0
      %2044 = vmatpush1.msra.mxu0 0.0
      %2045 = vmatprep.subr.mxu0 0.0
      %2046 = vmatpush1.msra.mxu0 0.0
      %2047 = vmatprep.subr.mxu0 0.0
      %2048 = vmatpush1.msra.mxu0 0.0
      %2049 = vmatprep.subr.mxu0 0.0
      %2050 = vmatpush1.msra.mxu0 0.0
      %2051 = vmatprep.subr.mxu0 0.0
      %2052 = vmatpush1.msra.mxu0 0.0
      %2053 = vmatprep.subr.mxu0 0.0
      %2054 = vmatpush1.msra.mxu0 0.0
      %2055 = vmatprep.subr.mxu0 0.0
      %2056 = vmatpush1.msra.mxu0 0.0
      %2057 = vmatprep.subr.mxu0 0.0
      %2058 = vmatpush1.msra.mxu0 0.0
      %2059 = vmatprep.subr.mxu0 0.0
      %2060 = vmatpush1.msra.mxu0 0.0
      %2061 = vmatprep.subr.mxu0 0.0
      %2062 = vmatpush1.msra.mxu0 0.0
      %2063 = vmatprep.subr.mxu0 %v2023
      %2064 = vmatpush1.msra.mxu0 %v2022
      %2065 = vmatprep.subr.mxu0 %v2021
      %2066 = vmatpush1.msra.mxu0 %v2020
      %2067 = vmatprep.subr.mxu0 0.0
      %2068 = vmatpush2.msra.mxu0 0.0
      %2069 = vmatprep.subr.mxu0 0.0
      %2070 = vmatpush2.msra.mxu0 0.0
      %2071 = vmatprep.subr.mxu0 0.0
      %2072 = vmatpush2.msra.mxu0 0.0
      %2073 = vmatprep.subr.mxu0 0.0
      %2074 = vmatpush2.msra.mxu0 0.0
      %2075 = vmatprep.subr.mxu0 0.0
      %2076 = vmatpush2.msra.mxu0 0.0
      %2077 = vmatprep.subr.mxu0 0.0
      %2078 = vmatpush2.msra.mxu0 0.0
      %2079 = vmatprep.subr.mxu0 0.0
      %2080 = vmatpush2.msra.mxu0 0.0
      %2081 = vmatprep.subr.mxu0 0.0
      %2082 = vmatpush2.msra.mxu0 0.0
      %2083 = vmatprep.subr.mxu0 0.0
      %2084 = vmatpush2.msra.mxu0 0.0
      %2085 = vmatprep.subr.mxu0 0.0
      %2086 = vmatpush2.msra.mxu0 0.0
      %2087 = vmatprep.subr.mxu0 0.0
      %2088 = vmatpush2.msra.mxu0 0.0
      %2089 = vmatprep.subr.mxu0 0.0
      %2090 = vmatpush2.msra.mxu0 0.0
      %2091 = vmatprep.subr.mxu0 0.0
      %2092 = vmatpush2.msra.mxu0 0.0
      %2093 = vmatprep.subr.mxu0 0.0
      %2094 = vmatpush2.msra.mxu0 0.0
      %2095 = vmatprep.subr.mxu0 0.0
      %2096 = vmatpush2.msra.mxu0 0.0
      %2097 = vmatprep.subr.mxu0 0.0
      %2098 = vmatpush2.msra.mxu0 0.0
      %2099 = vmatprep.mubr.f32.mxu0 0.0
      %2100 = vmatmul.mubr.f32.gmra.mxu0 %v2033
      %v2101 = vpop.f32.mrf.mxu0
      %v2102 = vadd.f32 %v2029, %v2101
      %v2103 = vpop.f32.mrf.mxu0
      %v2104 = vadd.f32 %v2029, %v2103
      %2105 = vdwg.mxu0
      %v2108 = vcombine.low %v2102, %v2104
      %2110 = vst [vmem:[%s305] sm:$0xff] %v2108
      %p2111 = scmp.lt.s32.totalorder %s19, 1
      %s2112 = scalar_select %p2111, %s19, 1
      %s2113 = smul.addr %s2112, 2
      %s2114 = smul.addr %s2113, 4
      %s2115 = scalar_lea.vmem %s8, %s2114
      // Predicated region
      $region53: #{star_block_forward.2} parent=51 // pred_check
        %p2116 = pneg %p210
      $region54: #{star_block_forward.2} parent=51 // pred_check_branch
        %2118 = sbr.rel (%p2116) target = $region56
      $region55: #{star_block_forward.2} parent=51 // pred_region
        _
      $region56: #{star_block_forward.2} parent=51 // pred_fallthru
        _
    $region52: #{star_block_forward.2} parent=5 // pred_fallthru
      _
    %p2119 = scmp.le.s32.totalorder 2, %s14
    // Predicated region
    $region57: #{star_block_forward.2} parent=5 // pred_check
      %p2120 = pneg %p2119
    $region58: #{star_block_forward.2} parent=5 // pred_check_branch
      %2122 = sbr.rel (%p2120) target = $region60
    $region59: #{star_block_forward.2} parent=5 // pred_region
      %s2123 = ssub.s32 %s14, 2
      // Predicated region
      $region61: #{star_block_forward.2} parent=59 // pred_check
        %p2124 = pneg %p216
      $region62: #{star_block_forward.2} parent=59 // pred_check_branch
        %2126 = sbr.rel (%p2124) target = $region64
      $region63: #{star_block_forward.2} parent=59 // pred_region
        %p2127 = scmp.lt.s32.totalorder %s20, 1
        %s2128 = scalar_select %p2127, %s20, 1
        %s2129 = smul.addr %s2128, 2
        %s2130 = smul.addr %s2129, 4
        %s2131 = scalar_lea.vmem %s8, %s2130
      $region64: #{star_block_forward.2} parent=59 // pred_fallthru
        _
    $region60: #{star_block_forward.2} parent=5 // pred_fallthru
      _
  $region6: #{star_block_forward.2} parent=0 // loop_footer
    %s18 = sadd.s32 1, %s14
  $region7: #{star_block_forward.2} parent=0 // loop_footer_branch
    %13 = sbr.rel target = $region3
  $region8: #{star_block_forward.2} parent=0 // loop_exit
    _

</llo_original>
